<compile_context>
chip_gen: v7x
topology: tpu7x:2x2x1
jax: 0.10.0
libtpu: 0.0.40
codegen_flags: <defaults>
</compile_context>

<pallas_src>
import functools

import jax
import jax.numpy as jnp
from jax.experimental import pallas as pl
from jax.experimental.pallas import tpu as pltpu

EMB = 64
NUM_RATE, NUM_GENRE, NUM_DIRECTOR, NUM_ACTOR = 6, 25, 2186, 8030
NUM_GENDER, NUM_AGE, NUM_OCC, NUM_ZIP = 98, 7, 21, 3402
# lane-padded widths for the multi-hot blocks (multiples of 128)
PG, PD, PA = 128, 2304, 8064


def _round_up(v, m):
    return ((v + m - 1) // m) * m


def _leaky(v, slope=0.01):
    return jnp.where(v > 0, v, slope * v)


# --------------------------------------------------------------------------- pass 1
def gln_pass1_kernel(user_cat, rate_e, genre_x, director_x, actor_x, inv_cnt,
                     user_w, user_b, item_w0, item_b,
                     wg, wd, wa, edge_row, rvecs,
                     xy_out, scal_out, part_out):
    f32 = jnp.float32
    a = jnp.float32(0.12)
    b = jnp.float32(0.12)
    dot = functools.partial(jnp.dot, preferred_element_type=f32)

    # UserEmb: one lane-aligned K=256 matmul (concat done in the wrapper)
    x = (dot(user_cat[...], user_w[...]) + user_b[...]) * a

    # ItemEmb: bf16 multi-hot matmuls against weights pre-folded with item_w blocks.
    # The per-row 1/count scaling (precomputed in the wrapper, zero-guarded) commutes
    # with the fold, so this is mathematically identical to the reference.
    inv = inv_cnt[...]                                  # (tb, 4): [1/cg, 1/cd, 1/ca, mask]
    ge = dot(genre_x[...], wg[...]) * inv[:, 0:1]
    de = dot(director_x[...], wd[...]) * inv[:, 1:2]
    ae = dot(actor_x[...], wa[...]) * inv[:, 2:3]
    y = (dot(rate_e[...], item_w0[...]) + ge + de + ae + item_b[...]) * a

    edge = edge_row[...] * b                            # (1, 64), broadcast over the tile
    xe = x * edge
    ye = y * edge

    rv = rvecs[...]                                     # (4, 64): [uu, ui, iu, ii]
    uu = rv[0:1, :]
    ui = rv[1:2, :]
    iu = rv[2:3, :]
    ii = rv[3:4, :]
    xx = jnp.sum(xe * uu, axis=1, keepdims=True)        # (tb, 1)
    xyx = jnp.sum(xe * ui, axis=1, keepdims=True)
    xyy = jnp.sum(ye * ui, axis=1, keepdims=True)
    yy = jnp.sum(ye * ii, axis=1, keepdims=True)
    yxx = jnp.sum(ye * iu, axis=1, keepdims=True)
    yxy = jnp.sum(xe * iu, axis=1, keepdims=True)

    # partial batch sums for the outer-product contractions; mask kills batch-pad rows
    m = inv[:, 3:4]
    p1 = jnp.sum((m * xx) * x, axis=0, keepdims=True)   # (1, 64)
    p2 = jnp.sum((m * xyy) * y, axis=0, keepdims=True)
    p3 = jnp.sum((m * yy) * y, axis=0, keepdims=True)
    p4 = jnp.sum((m * yxy) * x, axis=0, keepdims=True)

    xy_out[...] = jnp.concatenate([x, y], axis=1)                      # lane-dense (tb, 128)
    scal_out[...] = jnp.concatenate([xx, xyx, yy, yxx], axis=1)        # (tb, 4)
    zeros4 = jnp.zeros((4, EMB), f32)
    part_out[...] = jnp.concatenate([p1, p2, p3, p4, zeros4], axis=0)  # (8, 64) per tile


# --------------------------------------------------------------------------- pass 2
def gln_pass2_kernel(xy, scal, sums, uu1, ui1, iu1, ii1, edges_w, edge_row, out_ref):
    f32 = jnp.float32
    b = jnp.float32(0.12)
    dot = functools.partial(jnp.dot, preferred_element_type=f32)

    xyv = xy[...]
    x = xyv[:, 0:EMB]
    y = xyv[:, EMB:2 * EMB]
    sc = scal[...]
    xx = sc[:, 0:1]
    xyx = sc[:, 1:2]
    yy = sc[:, 2:3]
    yxx = sc[:, 3:4]
    S = sums[...]                                       # (8, 64): rows 0..3 = S1..S4

    # outer(v1, v2) @ M  ==  v1 * sum_k(v2_k * M_k)  (the sum is the global batch sum S)
    x_buy1 = _leaky(dot(xx * S[0:1, :], uu1[...]))
    x_buy2 = _leaky(dot(xyx * S[1:2, :], ui1[...]))
    y_buy1 = _leaky(dot(yy * S[2:3, :], ii1[...]))
    y_buy2 = _leaky(dot(yxx * S[3:4, :], iu1[...]))

    edge = edge_row[...] * b                            # (1, 64)
    new = _leaky(dot(edge, edges_w[...]))
    e_row = (new + edge) * 0.5

    x_out = ((x_buy1 + x_buy2) * 0.5 + x) * 0.5
    y_out = ((y_buy1 + y_buy2) * 0.5 + y) * 0.5
    tbn = x_out.shape[0]
    e_out = jnp.broadcast_to(e_row, (tbn, EMB))
    pad = jnp.zeros((tbn, EMB), f32)
    out_ref[...] = jnp.concatenate([x_out, y_out, e_out, pad], axis=1)  # lane-dense (tb, 256)


# --------------------------------------------------------------------------- wrapper
def gln_feat_forward(params, user_emb, item_emb, edge_emb, *, tb_max=256):
    f32 = jnp.float32
    bf16 = jnp.bfloat16
    n = user_emb.shape[0]

    # batch tile: multiple of 16 (bf16 sublane packing); pad batch to a tile multiple
    tb = min(tb_max, _round_up(n, 16))
    npad = _round_up(n, tb)
    ntiles = npad // tb
    pad_rows = npad - n

    # ---- glue: tiny embedding-table row gathers + batch padding ----
    user_p = jnp.pad(user_emb, ((0, pad_rows), (0, 0)))
    user_cat = jnp.concatenate(
        [params["emb_gender"][user_p[:, 0]],
         params["emb_age"][user_p[:, 1]],
         params["emb_occ"][user_p[:, 2]],
         params["emb_area"][user_p[:, 3]]], axis=1).astype(f32)

    rate_e = params["emb_rate"][jnp.pad(item_emb[:, 0], (0, pad_rows))].astype(f32)

    genre = item_emb[:, 1:26]
    director = item_emb[:, 26:2212]
    actor = item_emb[:, 2212:10242]

    # per-row reciprocal counts (zero-guarded) + validity mask, packed into (N, 4)
    def _inv(m):
        c = jnp.sum(m, axis=1).astype(f32)
        return jnp.where(c > 0, 1.0 / c, 0.0)

    inv_cnt = jnp.stack([_inv(genre), _inv(director), _inv(actor),
                         jnp.ones((n,), f32)], axis=1)
    inv_cnt = jnp.pad(inv_cnt, ((0, pad_rows), (0, 0)))   # pad rows: inv = 0, mask = 0

    # 0/1 multi-hot activations: exact in bf16; lane-pad to multiples of 128
    genre_x = jnp.pad(genre.astype(bf16), ((0, pad_rows), (0, PG - NUM_GENRE)))
    director_x = jnp.pad(director.astype(bf16), ((0, pad_rows), (0, PD - NUM_DIRECTOR)))
    actor_x = jnp.pad(actor.astype(bf16), ((0, pad_rows), (0, PA - NUM_ACTOR)))

    # fold item_w blocks into the multi-hot weights (static; commutes with 1/count)
    iw = params["item_w"]
    wg_f = jnp.pad(params["w_genre"] @ iw[64:128], ((0, PG - NUM_GENRE), (0, 0))).astype(bf16)
    wd_f = jnp.pad(params["w_dir"] @ iw[128:192], ((0, PD - NUM_DIRECTOR), (0, 0))).astype(bf16)
    wa_f = jnp.pad(params["w_act"] @ iw[192:256], ((0, PA - NUM_ACTOR), (0, 0))).astype(bf16)
    item_w0 = iw[0:64]

    rvecs = jnp.concatenate([params["uu_w"], params["ui_w"],
                             params["iu_w"], params["ii_w"]], axis=0)   # (4, 64)
    edge_row = params["emb_edges"][0:1]   # edges vocab size is 1 in the module spec

    def row_spec(w):
        return pl.BlockSpec((tb, w), lambda i: (i, 0))

    def res_spec(shp):
        return pl.BlockSpec(shp, lambda i: (0, 0))

    # ---- pass 1: per-row embeddings, rating scalars, partial batch sums ----
    xy, scal, parts = pl.pallas_call(
        gln_pass1_kernel,
        grid=(ntiles,),
        out_shape=(jax.ShapeDtypeStruct((npad, 2 * EMB), f32),
                   jax.ShapeDtypeStruct((npad, 4), f32),
                   jax.ShapeDtypeStruct((ntiles * 8, EMB), f32)),
        in_specs=[row_spec(4 * EMB), row_spec(EMB),
                  row_spec(PG), row_spec(PD), row_spec(PA), row_spec(4),
                  res_spec((4 * EMB, EMB)), res_spec((1, EMB)),
                  res_spec((EMB, EMB)), res_spec((1, EMB)),
                  res_spec((PG, EMB)), res_spec((PD, EMB)), res_spec((PA, EMB)),
                  res_spec((1, EMB)), res_spec((4, EMB))],
        out_specs=(row_spec(2 * EMB), row_spec(4),
                   pl.BlockSpec((8, EMB), lambda i: (i, 0))),
        compiler_params=pltpu.CompilerParams(
            dimension_semantics=("parallel",),
            vmem_limit_bytes=40 << 20),
    )(user_cat, rate_e, genre_x, director_x, actor_x, inv_cnt,
      params["user_w"], params["user_b"], item_w0, params["item_b"],
      wg_f, wd_f, wa_f, edge_row, rvecs)

    # tiny cross-tile reduction of the four (1,64) batch sums (glue)
    sums = parts.reshape(ntiles, 8, EMB).sum(axis=0)

    # ---- pass 2: blends, LeakyReLU, final outputs (lane-dense slab) ----
    xye = pl.pallas_call(
        gln_pass2_kernel,
        grid=(ntiles,),
        out_shape=jax.ShapeDtypeStruct((npad, 4 * EMB), f32),
        in_specs=[row_spec(2 * EMB), row_spec(4), res_spec((8, EMB)),
                  res_spec((EMB, EMB)), res_spec((EMB, EMB)),
                  res_spec((EMB, EMB)), res_spec((EMB, EMB)),
                  res_spec((EMB, EMB)), res_spec((1, EMB))],
        out_specs=row_spec(4 * EMB),
        compiler_params=pltpu.CompilerParams(dimension_semantics=("parallel",)),
    )(xy, scal, sums, params["uu1"], params["ui1"], params["iu1"], params["ii1"],
      params["edges_w"], edge_row)

    return xye[:n, 0:EMB], xye[:n, EMB:2 * EMB], xye[:n, 2 * EMB:3 * EMB]


# --------------------------------------------------------------------------- pure-JAX reference
def gln_feat_ref(params, user_emb, item_emb, edge_emb):
    a = b = 0.12
    leaky = lambda v: jnp.where(v > 0, v, 0.01 * v)
    f32 = jnp.float32

    gender_e = params["emb_gender"][user_emb[:, 0]]
    age_e = params["emb_age"][user_emb[:, 1]]
    occ_e = params["emb_occ"][user_emb[:, 2]]
    area_e = params["emb_area"][user_emb[:, 3]]
    x = (jnp.concatenate([gender_e, age_e, occ_e, area_e], 1) @ params["user_w"]
         + params["user_b"][0]) * a

    rate_e = params["emb_rate"][item_emb[:, 0]]
    genre = item_emb[:, 1:26].astype(f32)
    director = item_emb[:, 26:2212].astype(f32)
    actor = item_emb[:, 2212:10242].astype(f32)
    genre_e = (genre @ params["w_genre"]) / genre.sum(1, keepdims=True)
    dir_e = (director @ params["w_dir"]) / director.sum(1, keepdims=True)
    act_e = (actor @ params["w_act"]) / actor.sum(1, keepdims=True)
    y = (jnp.concatenate([rate_e, genre_e, dir_e, act_e], 1) @ params["item_w"]
         + params["item_b"][0]) * a

    edge = params["emb_edges"][edge_emb] * b

    uu = params["uu_w"][0]
    ui = params["ui_w"][0]
    iu = params["iu_w"][0]
    ii = params["ii_w"][0]

    x_buy_xx1 = (x * edge) @ uu
    x_buy_xx2 = (x * edge) @ uu
    x_buy_xyx = (x * edge) @ ui
    x_buy_xyy = (y * edge) @ ui
    x_temp1 = jnp.outer(x_buy_xx1, x_buy_xx2) @ x
    x_temp2 = jnp.outer(x_buy_xyx, x_buy_xyy) @ y
    x_buy1 = leaky(x_temp1 @ params["uu1"])
    x_buy2 = leaky(x_temp2 @ params["ui1"])

    y_buy_yy1 = (y * edge) @ ii
    y_buy_yy2 = (y * edge) @ ii
    y_buy_yxx = (y * edge) @ iu
    y_buy_yxy = (x * edge) @ iu
    y_temp1 = jnp.outer(y_buy_yy1, y_buy_yy2) @ y
    y_temp2 = jnp.outer(y_buy_yxx, y_buy_yxy) @ x
    y_buy1 = leaky(y_temp1 @ params["ii1"])
    y_buy2 = leaky(y_temp2 @ params["iu1"])

    new = leaky(edge @ params["edges_w"])
    x_buy = (x_buy1 + x_buy2) / 2
    y_buy = (y_buy1 + y_buy2) / 2
    return (x_buy + x) / 2, (y_buy + y) / 2, (new + edge) / 2


# --------------------------------------------------------------------------- params / main
def init_params(key):
    ks = iter(jax.random.split(key, 32))
    f32 = jnp.float32
    nrm = lambda shape, scale: jax.random.normal(next(ks), shape, f32) * scale
    return {
        "emb_gender": nrm((NUM_GENDER, EMB), 1.0),
        "emb_age": nrm((NUM_AGE, EMB), 1.0),
        "emb_occ": nrm((NUM_OCC, EMB), 1.0),
        "emb_area": nrm((NUM_ZIP, EMB), 1.0),
        "emb_rate": nrm((NUM_RATE, EMB), 1.0),
        "emb_edges": nrm((1, EMB), 1.0),
        "w_genre": nrm((NUM_GENRE, EMB), 0.06),
        "w_dir": nrm((NUM_DIRECTOR, EMB), 0.06),
        "w_act": nrm((NUM_ACTOR, EMB), 0.06),
        "user_w": nrm((4 * EMB, EMB), 0.06),
        "user_b": nrm((1, EMB), 0.06),
        "item_w": nrm((4 * EMB, EMB), 0.06),
        "item_b": nrm((1, EMB), 0.06),
        "uu_w": nrm((1, EMB), 0.5),
        "ui_w": nrm((1, EMB), 0.5),
        "iu_w": nrm((1, EMB), 0.5),
        "ii_w": nrm((1, EMB), 0.5),
        "edges_w": nrm((EMB, EMB), 0.5),
        "uu1": nrm((EMB, EMB), 0.5),
        "ui1": nrm((EMB, EMB), 0.5),
        "iu1": nrm((EMB, EMB), 0.5),
        "ii1": nrm((EMB, EMB), 0.5),
    }


if __name__ == "__main__":
    key = jax.random.PRNGKey(0)
    kp, ku, ki1, ki2, ki3, ki4 = jax.random.split(key, 6)
    params = init_params(kp)

    N = 8
    user_emb = jnp.stack(
        [
            jax.random.randint(ku, (N,), 0, NUM_GENDER),
            jax.random.randint(ki1, (N,), 0, NUM_AGE),
            jax.random.randint(ki2, (N,), 0, NUM_OCC),
            jax.random.randint(ki3, (N,), 0, NUM_ZIP),
        ],
        axis=1,
    ).astype(jnp.int32)

    rate_idx = jax.random.randint(ki4, (N, 1), 0, NUM_RATE)
    kg, kd, ka = jax.random.split(ki4, 3)
    genre = jax.random.bernoulli(kg, 0.3, (N, NUM_GENRE)).astype(jnp.int32).at[:, 0].set(1)
    director = jax.random.bernoulli(kd, 0.01, (N, NUM_DIRECTOR)).astype(jnp.int32).at[:, 0].set(1)
    actor = jax.random.bernoulli(ka, 0.005, (N, NUM_ACTOR)).astype(jnp.int32).at[:, 0].set(1)
    item_emb = jnp.concatenate([rate_idx.astype(jnp.int32), genre, director, actor], axis=1)
    edge_emb = jnp.zeros((N,), jnp.int32)  # vocab size 1 -> all zeros

    fwd = jax.jit(gln_feat_forward)
    x_k, y_k, e_k = jax.block_until_ready(fwd(params, user_emb, item_emb, edge_emb))
    x_r, y_r, e_r = gln_feat_ref(params, user_emb, item_emb, edge_emb)

    # bf16 is used on the multi-hot path (activations + folded weights) -> ~1e-3-level
    # relative tolerance; everything else is f32.
    assert jnp.allclose(x_k, x_r, rtol=1e-2, atol=1e-3), "x mismatch"
    assert jnp.allclose(y_k, y_r, rtol=1e-2, atol=1e-3), "y mismatch"
    assert jnp.allclose(e_k, e_r, rtol=1e-2, atol=1e-3), "e mismatch"
    print("KERNEL_OK")
</pallas_src>

<mosaic_0001>
module attributes {stable_mosaic.version = 11 : i64} {
  func.func @gln_pass2_kernel(%arg0: i32, %arg1: memref<16x128xf32, #tpu.memory_space<vmem>>, %arg2: memref<16x4xf32, #tpu.memory_space<vmem>>, %arg3: memref<8x64xf32, #tpu.memory_space<vmem>>, %arg4: memref<64x64xf32, #tpu.memory_space<vmem>>, %arg5: memref<64x64xf32, #tpu.memory_space<vmem>>, %arg6: memref<64x64xf32, #tpu.memory_space<vmem>>, %arg7: memref<64x64xf32, #tpu.memory_space<vmem>>, %arg8: memref<64x64xf32, #tpu.memory_space<vmem>>, %arg9: memref<1x64xf32, #tpu.memory_space<vmem>>, %arg10: memref<16x256xf32, #tpu.memory_space<vmem>>) attributes {dimension_semantics = [#tpu.dimension_semantics<parallel>], iteration_bounds = array<i64: 1>, scalar_prefetch = 0 : i64, scratch_operands = 0 : i64, tpu.core_type = #tpu.core_type<tc>, window_params = [{transform_indices = @transform_0, window_bounds = array<i64: 16, 128>}, {transform_indices = @transform_1, window_bounds = array<i64: 16, 4>}, {pipeline_mode = #tpu.pipeline_mode<synchronous>, transform_indices = @transform_2, window_bounds = array<i64: 8, 64>}, {pipeline_mode = #tpu.pipeline_mode<synchronous>, transform_indices = @transform_3, window_bounds = array<i64: 64, 64>}, {pipeline_mode = #tpu.pipeline_mode<synchronous>, transform_indices = @transform_4, window_bounds = array<i64: 64, 64>}, {pipeline_mode = #tpu.pipeline_mode<synchronous>, transform_indices = @transform_5, window_bounds = array<i64: 64, 64>}, {pipeline_mode = #tpu.pipeline_mode<synchronous>, transform_indices = @transform_6, window_bounds = array<i64: 64, 64>}, {pipeline_mode = #tpu.pipeline_mode<synchronous>, transform_indices = @transform_7, window_bounds = array<i64: 64, 64>}, {pipeline_mode = #tpu.pipeline_mode<synchronous>, transform_indices = @transform_8, window_bounds = array<i64: 1, 64>}, {transform_indices = @transform_9, window_bounds = array<i64: 16, 256>}]} {
    %c0 = arith.constant 0 : index
    %c0_0 = arith.constant 0 : index
    %0 = vector.load %arg1[%c0, %c0_0] : memref<16x128xf32, #tpu.memory_space<vmem>>, vector<16x128xf32>
    %1 = vector.extract_strided_slice %0 {offsets = [0, 0], sizes = [16, 64], strides = [1, 1]} : vector<16x128xf32> to vector<16x64xf32>
    %2 = vector.extract_strided_slice %0 {offsets = [0, 64], sizes = [16, 64], strides = [1, 1]} : vector<16x128xf32> to vector<16x64xf32>
    %c0_1 = arith.constant 0 : index
    %c0_2 = arith.constant 0 : index
    %3 = vector.load %arg2[%c0_1, %c0_2] : memref<16x4xf32, #tpu.memory_space<vmem>>, vector<16x4xf32>
    %4 = vector.extract_strided_slice %3 {offsets = [0, 0], sizes = [16, 1], strides = [1, 1]} : vector<16x4xf32> to vector<16x1xf32>
    %5 = vector.extract_strided_slice %3 {offsets = [0, 1], sizes = [16, 1], strides = [1, 1]} : vector<16x4xf32> to vector<16x1xf32>
    %6 = vector.extract_strided_slice %3 {offsets = [0, 2], sizes = [16, 1], strides = [1, 1]} : vector<16x4xf32> to vector<16x1xf32>
    %7 = vector.extract_strided_slice %3 {offsets = [0, 3], sizes = [16, 1], strides = [1, 1]} : vector<16x4xf32> to vector<16x1xf32>
    %c0_3 = arith.constant 0 : index
    %c0_4 = arith.constant 0 : index
    %8 = vector.load %arg3[%c0_3, %c0_4] : memref<8x64xf32, #tpu.memory_space<vmem>>, vector<8x64xf32>
    %9 = vector.extract_strided_slice %8 {offsets = [0, 0], sizes = [1, 64], strides = [1, 1]} : vector<8x64xf32> to vector<1x64xf32>
    %10 = vector.broadcast %4 : vector<16x1xf32> to vector<16x64xf32>
    %11 = vector.broadcast %9 : vector<1x64xf32> to vector<16x64xf32>
    %12 = arith.mulf %10, %11 : vector<16x64xf32>
    %c0_5 = arith.constant 0 : index
    %c0_6 = arith.constant 0 : index
    %13 = vector.load %arg4[%c0_5, %c0_6] : memref<64x64xf32, #tpu.memory_space<vmem>>, vector<64x64xf32>
    %cst = arith.constant dense<0.000000e+00> : vector<16x64xf32>
    %14 = tpu.matmul %12, %13, %cst {dimension_numbers = #tpu.dot_dimension_numbers<[1], [0], [0], [1], [0, 0, 1, 1], [], []>} : vector<16x64xf32>, vector<64x64xf32>, vector<16x64xf32> -> vector<16x64xf32>
    %cst_7 = arith.constant 0.000000e+00 : f32
    %15 = vector.broadcast %cst_7 : f32 to vector<16x64xf32>
    %16 = arith.cmpf ogt, %14, %15 : vector<16x64xf32>
    %cst_8 = arith.constant 0.00999999977 : f32
    %17 = vector.broadcast %cst_8 : f32 to vector<16x64xf32>
    %18 = arith.mulf %17, %14 : vector<16x64xf32>
    %19 = arith.select %16, %14, %18 : vector<16x64xi1>, vector<16x64xf32>
    %20 = vector.extract_strided_slice %8 {offsets = [1, 0], sizes = [1, 64], strides = [1, 1]} : vector<8x64xf32> to vector<1x64xf32>
    %21 = vector.broadcast %5 : vector<16x1xf32> to vector<16x64xf32>
    %22 = vector.broadcast %20 : vector<1x64xf32> to vector<16x64xf32>
    %23 = arith.mulf %21, %22 : vector<16x64xf32>
    %c0_9 = arith.constant 0 : index
    %c0_10 = arith.constant 0 : index
    %24 = vector.load %arg5[%c0_9, %c0_10] : memref<64x64xf32, #tpu.memory_space<vmem>>, vector<64x64xf32>
    %cst_11 = arith.constant dense<0.000000e+00> : vector<16x64xf32>
    %25 = tpu.matmul %23, %24, %cst_11 {dimension_numbers = #tpu.dot_dimension_numbers<[1], [0], [0], [1], [0, 0, 1, 1], [], []>} : vector<16x64xf32>, vector<64x64xf32>, vector<16x64xf32> -> vector<16x64xf32>
    %cst_12 = arith.constant 0.000000e+00 : f32
    %26 = vector.broadcast %cst_12 : f32 to vector<16x64xf32>
    %27 = arith.cmpf ogt, %25, %26 : vector<16x64xf32>
    %cst_13 = arith.constant 0.00999999977 : f32
    %28 = vector.broadcast %cst_13 : f32 to vector<16x64xf32>
    %29 = arith.mulf %28, %25 : vector<16x64xf32>
    %30 = arith.select %27, %25, %29 : vector<16x64xi1>, vector<16x64xf32>
    %31 = vector.extract_strided_slice %8 {offsets = [2, 0], sizes = [1, 64], strides = [1, 1]} : vector<8x64xf32> to vector<1x64xf32>
    %32 = vector.broadcast %6 : vector<16x1xf32> to vector<16x64xf32>
    %33 = vector.broadcast %31 : vector<1x64xf32> to vector<16x64xf32>
    %34 = arith.mulf %32, %33 : vector<16x64xf32>
    %c0_14 = arith.constant 0 : index
    %c0_15 = arith.constant 0 : index
    %35 = vector.load %arg7[%c0_14, %c0_15] : memref<64x64xf32, #tpu.memory_space<vmem>>, vector<64x64xf32>
    %cst_16 = arith.constant dense<0.000000e+00> : vector<16x64xf32>
    %36 = tpu.matmul %34, %35, %cst_16 {dimension_numbers = #tpu.dot_dimension_numbers<[1], [0], [0], [1], [0, 0, 1, 1], [], []>} : vector<16x64xf32>, vector<64x64xf32>, vector<16x64xf32> -> vector<16x64xf32>
    %cst_17 = arith.constant 0.000000e+00 : f32
    %37 = vector.broadcast %cst_17 : f32 to vector<16x64xf32>
    %38 = arith.cmpf ogt, %36, %37 : vector<16x64xf32>
    %cst_18 = arith.constant 0.00999999977 : f32
    %39 = vector.broadcast %cst_18 : f32 to vector<16x64xf32>
    %40 = arith.mulf %39, %36 : vector<16x64xf32>
    %41 = arith.select %38, %36, %40 : vector<16x64xi1>, vector<16x64xf32>
    %42 = vector.extract_strided_slice %8 {offsets = [3, 0], sizes = [1, 64], strides = [1, 1]} : vector<8x64xf32> to vector<1x64xf32>
    %43 = vector.broadcast %7 : vector<16x1xf32> to vector<16x64xf32>
    %44 = vector.broadcast %42 : vector<1x64xf32> to vector<16x64xf32>
    %45 = arith.mulf %43, %44 : vector<16x64xf32>
    %c0_19 = arith.constant 0 : index
    %c0_20 = arith.constant 0 : index
    %46 = vector.load %arg6[%c0_19, %c0_20] : memref<64x64xf32, #tpu.memory_space<vmem>>, vector<64x64xf32>
    %cst_21 = arith.constant dense<0.000000e+00> : vector<16x64xf32>
    %47 = tpu.matmul %45, %46, %cst_21 {dimension_numbers = #tpu.dot_dimension_numbers<[1], [0], [0], [1], [0, 0, 1, 1], [], []>} : vector<16x64xf32>, vector<64x64xf32>, vector<16x64xf32> -> vector<16x64xf32>
    %cst_22 = arith.constant 0.000000e+00 : f32
    %48 = vector.broadcast %cst_22 : f32 to vector<16x64xf32>
    %49 = arith.cmpf ogt, %47, %48 : vector<16x64xf32>
    %cst_23 = arith.constant 0.00999999977 : f32
    %50 = vector.broadcast %cst_23 : f32 to vector<16x64xf32>
    %51 = arith.mulf %50, %47 : vector<16x64xf32>
    %52 = arith.select %49, %47, %51 : vector<16x64xi1>, vector<16x64xf32>
    %c0_24 = arith.constant 0 : index
    %c0_25 = arith.constant 0 : index
    %53 = vector.load %arg9[%c0_24, %c0_25] : memref<1x64xf32, #tpu.memory_space<vmem>>, vector<1x64xf32>
    %cst_26 = arith.constant 1.200000e-01 : f32
    %54 = vector.broadcast %cst_26 : f32 to vector<1x64xf32>
    %55 = arith.mulf %53, %54 : vector<1x64xf32>
    %c0_27 = arith.constant 0 : index
    %c0_28 = arith.constant 0 : index
    %56 = vector.load %arg8[%c0_27, %c0_28] : memref<64x64xf32, #tpu.memory_space<vmem>>, vector<64x64xf32>
    %cst_29 = arith.constant dense<0.000000e+00> : vector<1x64xf32>
    %57 = tpu.matmul %55, %56, %cst_29 {dimension_numbers = #tpu.dot_dimension_numbers<[1], [0], [0], [1], [0, 0, 1, 1], [], []>} : vector<1x64xf32>, vector<64x64xf32>, vector<1x64xf32> -> vector<1x64xf32>
    %cst_30 = arith.constant 0.000000e+00 : f32
    %58 = vector.broadcast %cst_30 : f32 to vector<1x64xf32>
    %59 = arith.cmpf ogt, %57, %58 : vector<1x64xf32>
    %cst_31 = arith.constant 0.00999999977 : f32
    %60 = vector.broadcast %cst_31 : f32 to vector<1x64xf32>
    %61 = arith.mulf %60, %57 : vector<1x64xf32>
    %62 = arith.select %59, %57, %61 : vector<1x64xi1>, vector<1x64xf32>
    %63 = arith.addf %62, %55 : vector<1x64xf32>
    %cst_32 = arith.constant 5.000000e-01 : f32
    %64 = vector.broadcast %cst_32 : f32 to vector<1x64xf32>
    %65 = arith.mulf %63, %64 : vector<1x64xf32>
    %66 = arith.addf %19, %30 : vector<16x64xf32>
    %cst_33 = arith.constant 5.000000e-01 : f32
    %67 = vector.broadcast %cst_33 : f32 to vector<16x64xf32>
    %68 = arith.mulf %66, %67 : vector<16x64xf32>
    %69 = arith.addf %68, %1 : vector<16x64xf32>
    %cst_34 = arith.constant 5.000000e-01 : f32
    %70 = vector.broadcast %cst_34 : f32 to vector<16x64xf32>
    %71 = arith.mulf %69, %70 : vector<16x64xf32>
    %72 = arith.addf %41, %52 : vector<16x64xf32>
    %cst_35 = arith.constant 5.000000e-01 : f32
    %73 = vector.broadcast %cst_35 : f32 to vector<16x64xf32>
    %74 = arith.mulf %72, %73 : vector<16x64xf32>
    %75 = arith.addf %74, %2 : vector<16x64xf32>
    %cst_36 = arith.constant 5.000000e-01 : f32
    %76 = vector.broadcast %cst_36 : f32 to vector<16x64xf32>
    %77 = arith.mulf %75, %76 : vector<16x64xf32>
    %78 = vector.shape_cast %65 : vector<1x64xf32> to vector<1x64xf32>
    %79 = vector.broadcast %78 : vector<1x64xf32> to vector<16x64xf32>
    %cst_37 = arith.constant 0.000000e+00 : f32
    %80 = vector.broadcast %cst_37 : f32 to vector<16x64xf32>
    %81 = tpu.concatenate %71, %77, %79, %80 in 1 : vector<16x64xf32>, vector<16x64xf32>, vector<16x64xf32>, vector<16x64xf32> -> vector<16x256xf32>
    %c0_38 = arith.constant 0 : index
    %c0_39 = arith.constant 0 : index
    %82 = vector.load %arg10[%c0_38, %c0_39] : memref<16x256xf32, #tpu.memory_space<vmem>>, vector<16x256xf32>
    tpu.vector_store %arg10[%c0_38, %c0_39], %81 {strides = array<i32>} : memref<16x256xf32, #tpu.memory_space<vmem>>, vector<16x256xf32>,
    return
  }
  func.func @transform_0(%arg0: i32) -> (i32, i32) {
    %c0_i32 = arith.constant 0 : i32
    %c0_i32_0 = arith.constant 0 : i32
    return %arg0, %c0_i32 : i32, i32
  }
  func.func @transform_1(%arg0: i32) -> (i32, i32) {
    %c0_i32 = arith.constant 0 : i32
    %c0_i32_0 = arith.constant 0 : i32
    return %arg0, %c0_i32 : i32, i32
  }
  func.func @transform_2(%arg0: i32) -> (i32, i32) {
    %c0_i32 = arith.constant 0 : i32
    %c0_i32_0 = arith.constant 0 : i32
    %c0_i32_1 = arith.constant 0 : i32
    return %c0_i32, %c0_i32_0 : i32, i32
  }
  func.func @transform_3(%arg0: i32) -> (i32, i32) {
    %c0_i32 = arith.constant 0 : i32
    %c0_i32_0 = arith.constant 0 : i32
    %c0_i32_1 = arith.constant 0 : i32
    return %c0_i32, %c0_i32_0 : i32, i32
  }
  func.func @transform_4(%arg0: i32) -> (i32, i32) {
    %c0_i32 = arith.constant 0 : i32
    %c0_i32_0 = arith.constant 0 : i32
    %c0_i32_1 = arith.constant 0 : i32
    return %c0_i32, %c0_i32_0 : i32, i32
  }
  func.func @transform_5(%arg0: i32) -> (i32, i32) {
    %c0_i32 = arith.constant 0 : i32
    %c0_i32_0 = arith.constant 0 : i32
    %c0_i32_1 = arith.constant 0 : i32
    return %c0_i32, %c0_i32_0 : i32, i32
  }
  func.func @transform_6(%arg0: i32) -> (i32, i32) {
    %c0_i32 = arith.constant 0 : i32
    %c0_i32_0 = arith.constant 0 : i32
    %c0_i32_1 = arith.constant 0 : i32
    return %c0_i32, %c0_i32_0 : i32, i32
  }
  func.func @transform_7(%arg0: i32) -> (i32, i32) {
    %c0_i32 = arith.constant 0 : i32
    %c0_i32_0 = arith.constant 0 : i32
    %c0_i32_1 = arith.constant 0 : i32
    return %c0_i32, %c0_i32_0 : i32, i32
  }
  func.func @transform_8(%arg0: i32) -> (i32, i32) {
    %c0_i32 = arith.constant 0 : i32
    %c0_i32_0 = arith.constant 0 : i32
    %c0_i32_1 = arith.constant 0 : i32
    return %c0_i32, %c0_i32_0 : i32, i32
  }
  func.func @transform_9(%arg0: i32) -> (i32, i32) {
    %c0_i32 = arith.constant 0 : i32
    %c0_i32_0 = arith.constant 0 : i32
    return %arg0, %c0_i32 : i32, i32
  }
}

module attributes {stable_mosaic.version = 11 : i64} {
  func.func @gln_pass1_kernel(%arg0: i32, %arg1: memref<16x256xf32, #tpu.memory_space<vmem>>, %arg2: memref<16x64xf32, #tpu.memory_space<vmem>>, %arg3: memref<16x128xbf16, #tpu.memory_space<vmem>>, %arg4: memref<16x2304xbf16, #tpu.memory_space<vmem>>, %arg5: memref<16x8064xbf16, #tpu.memory_space<vmem>>, %arg6: memref<16x4xf32, #tpu.memory_space<vmem>>, %arg7: memref<256x64xf32, #tpu.memory_space<vmem>>, %arg8: memref<1x64xf32, #tpu.memory_space<vmem>>, %arg9: memref<64x64xf32, #tpu.memory_space<vmem>>, %arg10: memref<1x64xf32, #tpu.memory_space<vmem>>, %arg11: memref<128x64xbf16, #tpu.memory_space<vmem>>, %arg12: memref<2304x64xbf16, #tpu.memory_space<vmem>>, %arg13: memref<8064x64xbf16, #tpu.memory_space<vmem>>, %arg14: memref<1x64xf32, #tpu.memory_space<vmem>>, %arg15: memref<4x64xf32, #tpu.memory_space<vmem>>, %arg16: memref<16x128xf32, #tpu.memory_space<vmem>>, %arg17: memref<16x4xf32, #tpu.memory_space<vmem>>, %arg18: memref<8x64xf32, #tpu.memory_space<vmem>>) attributes {dimension_semantics = [#tpu.dimension_semantics<parallel>], iteration_bounds = array<i64: 1>, scalar_prefetch = 0 : i64, scratch_operands = 0 : i64, tpu.core_type = #tpu.core_type<tc>, window_params = [{transform_indices = @transform_0, window_bounds = array<i64: 16, 256>}, {transform_indices = @transform_1, window_bounds = array<i64: 16, 64>}, {transform_indices = @transform_2, window_bounds = array<i64: 16, 128>}, {transform_indices = @transform_3, window_bounds = array<i64: 16, 2304>}, {transform_indices = @transform_4, window_bounds = array<i64: 16, 8064>}, {transform_indices = @transform_5, window_bounds = array<i64: 16, 4>}, {pipeline_mode = #tpu.pipeline_mode<synchronous>, transform_indices = @transform_6, window_bounds = array<i64: 256, 64>}, {pipeline_mode = #tpu.pipeline_mode<synchronous>, transform_indices = @transform_7, window_bounds = array<i64: 1, 64>}, {pipeline_mode = #tpu.pipeline_mode<synchronous>, transform_indices = @transform_8, window_bounds = array<i64: 64, 64>}, {pipeline_mode = #tpu.pipeline_mode<synchronous>, transform_indices = @transform_9, window_bounds = array<i64: 1, 64>}, {pipeline_mode = #tpu.pipeline_mode<synchronous>, transform_indices = @transform_10, window_bounds = array<i64: 128, 64>}, {pipeline_mode = #tpu.pipeline_mode<synchronous>, transform_indices = @transform_11, window_bounds = array<i64: 2304, 64>}, {pipeline_mode = #tpu.pipeline_mode<synchronous>, transform_indices = @transform_12, window_bounds = array<i64: 8064, 64>}, {pipeline_mode = #tpu.pipeline_mode<synchronous>, transform_indices = @transform_13, window_bounds = array<i64: 1, 64>}, {pipeline_mode = #tpu.pipeline_mode<synchronous>, transform_indices = @transform_14, window_bounds = array<i64: 4, 64>}, {transform_indices = @transform_15, window_bounds = array<i64: 16, 128>}, {transform_indices = @transform_16, window_bounds = array<i64: 16, 4>}, {transform_indices = @transform_17, window_bounds = array<i64: 8, 64>}]} {
    %c0 = arith.constant 0 : index
    %c0_0 = arith.constant 0 : index
    %0 = vector.load %arg1[%c0, %c0_0] : memref<16x256xf32, #tpu.memory_space<vmem>>, vector<16x256xf32>
    %c0_1 = arith.constant 0 : index
    %c0_2 = arith.constant 0 : index
    %1 = vector.load %arg7[%c0_1, %c0_2] : memref<256x64xf32, #tpu.memory_space<vmem>>, vector<256x64xf32>
    %cst = arith.constant dense<0.000000e+00> : vector<16x64xf32>
    %2 = tpu.matmul %0, %1, %cst {dimension_numbers = #tpu.dot_dimension_numbers<[1], [0], [0], [1], [0, 0, 1, 1], [], []>} : vector<16x256xf32>, vector<256x64xf32>, vector<16x64xf32> -> vector<16x64xf32>
    %c0_3 = arith.constant 0 : index
    %c0_4 = arith.constant 0 : index
    %3 = vector.load %arg8[%c0_3, %c0_4] : memref<1x64xf32, #tpu.memory_space<vmem>>, vector<1x64xf32>
    %4 = vector.broadcast %3 : vector<1x64xf32> to vector<16x64xf32>
    %5 = arith.addf %2, %4 : vector<16x64xf32>
    %cst_5 = arith.constant 1.200000e-01 : f32
    %6 = vector.broadcast %cst_5 : f32 to vector<16x64xf32>
    %7 = arith.mulf %5, %6 : vector<16x64xf32>
    %c0_6 = arith.constant 0 : index
    %c0_7 = arith.constant 0 : index
    %8 = vector.load %arg6[%c0_6, %c0_7] : memref<16x4xf32, #tpu.memory_space<vmem>>, vector<16x4xf32>
    %c0_8 = arith.constant 0 : index
    %c0_9 = arith.constant 0 : index
    %9 = vector.load %arg3[%c0_8, %c0_9] : memref<16x128xbf16, #tpu.memory_space<vmem>>, vector<16x128xbf16>
    %c0_10 = arith.constant 0 : index
    %c0_11 = arith.constant 0 : index
    %10 = vector.load %arg11[%c0_10, %c0_11] : memref<128x64xbf16, #tpu.memory_space<vmem>>, vector<128x64xbf16>
    %cst_12 = arith.constant dense<0.000000e+00> : vector<16x64xf32>
    %11 = tpu.matmul %9, %10, %cst_12 {dimension_numbers = #tpu.dot_dimension_numbers<[1], [0], [0], [1], [0, 0, 1, 1], [], []>} : vector<16x128xbf16>, vector<128x64xbf16>, vector<16x64xf32> -> vector<16x64xf32>
    %12 = vector.extract_strided_slice %8 {offsets = [0, 0], sizes = [16, 1], strides = [1, 1]} : vector<16x4xf32> to vector<16x1xf32>
    %13 = vector.broadcast %12 : vector<16x1xf32> to vector<16x64xf32>
    %14 = arith.mulf %11, %13 : vector<16x64xf32>
    %c0_13 = arith.constant 0 : index
    %c0_14 = arith.constant 0 : index
    %15 = vector.load %arg4[%c0_13, %c0_14] : memref<16x2304xbf16, #tpu.memory_space<vmem>>, vector<16x2304xbf16>
    %c0_15 = arith.constant 0 : index
    %c0_16 = arith.constant 0 : index
    %16 = vector.load %arg12[%c0_15, %c0_16] : memref<2304x64xbf16, #tpu.memory_space<vmem>>, vector<2304x64xbf16>
    %cst_17 = arith.constant dense<0.000000e+00> : vector<16x64xf32>
    %17 = tpu.matmul %15, %16, %cst_17 {dimension_numbers = #tpu.dot_dimension_numbers<[1], [0], [0], [1], [0, 0, 1, 1], [], []>} : vector<16x2304xbf16>, vector<2304x64xbf16>, vector<16x64xf32> -> vector<16x64xf32>
    %18 = vector.extract_strided_slice %8 {offsets = [0, 1], sizes = [16, 1], strides = [1, 1]} : vector<16x4xf32> to vector<16x1xf32>
    %19 = vector.broadcast %18 : vector<16x1xf32> to vector<16x64xf32>
    %20 = arith.mulf %17, %19 : vector<16x64xf32>
    %c0_18 = arith.constant 0 : index
    %c0_19 = arith.constant 0 : index
    %21 = vector.load %arg5[%c0_18, %c0_19] : memref<16x8064xbf16, #tpu.memory_space<vmem>>, vector<16x8064xbf16>
    %c0_20 = arith.constant 0 : index
    %c0_21 = arith.constant 0 : index
    %22 = vector.load %arg13[%c0_20, %c0_21] : memref<8064x64xbf16, #tpu.memory_space<vmem>>, vector<8064x64xbf16>
    %cst_22 = arith.constant dense<0.000000e+00> : vector<16x64xf32>
    %23 = tpu.matmul %21, %22, %cst_22 {dimension_numbers = #tpu.dot_dimension_numbers<[1], [0], [0], [1], [0, 0, 1, 1], [], []>} : vector<16x8064xbf16>, vector<8064x64xbf16>, vector<16x64xf32> -> vector<16x64xf32>
    %24 = vector.extract_strided_slice %8 {offsets = [0, 2], sizes = [16, 1], strides = [1, 1]} : vector<16x4xf32> to vector<16x1xf32>
    %25 = vector.broadcast %24 : vector<16x1xf32> to vector<16x64xf32>
    %26 = arith.mulf %23, %25 : vector<16x64xf32>
    %c0_23 = arith.constant 0 : index
    %c0_24 = arith.constant 0 : index
    %27 = vector.load %arg2[%c0_23, %c0_24] : memref<16x64xf32, #tpu.memory_space<vmem>>, vector<16x64xf32>
    %c0_25 = arith.constant 0 : index
    %c0_26 = arith.constant 0 : index
    %28 = vector.load %arg9[%c0_25, %c0_26] : memref<64x64xf32, #tpu.memory_space<vmem>>, vector<64x64xf32>
    %cst_27 = arith.constant dense<0.000000e+00> : vector<16x64xf32>
    %29 = tpu.matmul %27, %28, %cst_27 {dimension_numbers = #tpu.dot_dimension_numbers<[1], [0], [0], [1], [0, 0, 1, 1], [], []>} : vector<16x64xf32>, vector<64x64xf32>, vector<16x64xf32> -> vector<16x64xf32>
    %30 = arith.addf %29, %14 : vector<16x64xf32>
    %31 = arith.addf %30, %20 : vector<16x64xf32>
    %32 = arith.addf %31, %26 : vector<16x64xf32>
    %c0_28 = arith.constant 0 : index
    %c0_29 = arith.constant 0 : index
    %33 = vector.load %arg10[%c0_28, %c0_29] : memref<1x64xf32, #tpu.memory_space<vmem>>, vector<1x64xf32>
    %34 = vector.broadcast %33 : vector<1x64xf32> to vector<16x64xf32>
    %35 = arith.addf %32, %34 : vector<16x64xf32>
    %cst_30 = arith.constant 1.200000e-01 : f32
    %36 = vector.broadcast %cst_30 : f32 to vector<16x64xf32>
    %37 = arith.mulf %35, %36 : vector<16x64xf32>
    %c0_31 = arith.constant 0 : index
    %c0_32 = arith.constant 0 : index
    %38 = vector.load %arg14[%c0_31, %c0_32] : memref<1x64xf32, #tpu.memory_space<vmem>>, vector<1x64xf32>
    %cst_33 = arith.constant 1.200000e-01 : f32
    %39 = vector.broadcast %cst_33 : f32 to vector<1x64xf32>
    %40 = arith.mulf %38, %39 : vector<1x64xf32>
    %41 = vector.broadcast %40 : vector<1x64xf32> to vector<16x64xf32>
    %42 = arith.mulf %7, %41 : vector<16x64xf32>
    %43 = vector.broadcast %40 : vector<1x64xf32> to vector<16x64xf32>
    %44 = arith.mulf %37, %43 : vector<16x64xf32>
    %c0_34 = arith.constant 0 : index
    %c0_35 = arith.constant 0 : index
    %45 = vector.load %arg15[%c0_34, %c0_35] : memref<4x64xf32, #tpu.memory_space<vmem>>, vector<4x64xf32>
    %46 = vector.extract_strided_slice %45 {offsets = [0, 0], sizes = [1, 64], strides = [1, 1]} : vector<4x64xf32> to vector<1x64xf32>
    %47 = vector.extract_strided_slice %45 {offsets = [1, 0], sizes = [1, 64], strides = [1, 1]} : vector<4x64xf32> to vector<1x64xf32>
    %48 = vector.extract_strided_slice %45 {offsets = [2, 0], sizes = [1, 64], strides = [1, 1]} : vector<4x64xf32> to vector<1x64xf32>
    %49 = vector.extract_strided_slice %45 {offsets = [3, 0], sizes = [1, 64], strides = [1, 1]} : vector<4x64xf32> to vector<1x64xf32>
    %50 = vector.broadcast %46 : vector<1x64xf32> to vector<16x64xf32>
    %51 = arith.mulf %42, %50 : vector<16x64xf32>
    %cst_36 = arith.constant dense<0.000000e+00> : vector<16xf32>
    %52 = vector.multi_reduction <add>, %51, %cst_36 [1] : vector<16x64xf32> to vector<16xf32>
    %53 = vector.shape_cast %52 : vector<16xf32> to vector<16x1xf32>
    %54 = vector.broadcast %47 : vector<1x64xf32> to vector<16x64xf32>
    %55 = arith.mulf %42, %54 : vector<16x64xf32>
    %cst_37 = arith.constant dense<0.000000e+00> : vector<16xf32>
    %56 = vector.multi_reduction <add>, %55, %cst_37 [1] : vector<16x64xf32> to vector<16xf32>
    %57 = vector.shape_cast %56 : vector<16xf32> to vector<16x1xf32>
    %58 = vector.broadcast %47 : vector<1x64xf32> to vector<16x64xf32>
    %59 = arith.mulf %44, %58 : vector<16x64xf32>
    %cst_38 = arith.constant dense<0.000000e+00> : vector<16xf32>
    %60 = vector.multi_reduction <add>, %59, %cst_38 [1] : vector<16x64xf32> to vector<16xf32>
    %61 = vector.shape_cast %60 : vector<16xf32> to vector<16x1xf32>
    %62 = vector.broadcast %49 : vector<1x64xf32> to vector<16x64xf32>
    %63 = arith.mulf %44, %62 : vector<16x64xf32>
    %cst_39 = arith.constant dense<0.000000e+00> : vector<16xf32>
    %64 = vector.multi_reduction <add>, %63, %cst_39 [1] : vector<16x64xf32> to vector<16xf32>
    %65 = vector.shape_cast %64 : vector<16xf32> to vector<16x1xf32>
    %66 = vector.broadcast %48 : vector<1x64xf32> to vector<16x64xf32>
    %67 = arith.mulf %44, %66 : vector<16x64xf32>
    %cst_40 = arith.constant dense<0.000000e+00> : vector<16xf32>
    %68 = vector.multi_reduction <add>, %67, %cst_40 [1] : vector<16x64xf32> to vector<16xf32>
    %69 = vector.shape_cast %68 : vector<16xf32> to vector<16x1xf32>
    %70 = vector.broadcast %48 : vector<1x64xf32> to vector<16x64xf32>
    %71 = arith.mulf %42, %70 : vector<16x64xf32>
    %cst_41 = arith.constant dense<0.000000e+00> : vector<16xf32>
    %72 = vector.multi_reduction <add>, %71, %cst_41 [1] : vector<16x64xf32> to vector<16xf32>
    %73 = vector.shape_cast %72 : vector<16xf32> to vector<16x1xf32>
    %74 = vector.extract_strided_slice %8 {offsets = [0, 3], sizes = [16, 1], strides = [1, 1]} : vector<16x4xf32> to vector<16x1xf32>
    %75 = arith.mulf %74, %53 : vector<16x1xf32>
    %76 = vector.broadcast %75 : vector<16x1xf32> to vector<16x64xf32>
    %77 = arith.mulf %76, %7 : vector<16x64xf32>
    %cst_42 = arith.constant dense<0.000000e+00> : vector<64xf32>
    %78 = vector.multi_reduction <add>, %77, %cst_42 [0] : vector<16x64xf32> to vector<64xf32>
    %79 = vector.shape_cast %78 : vector<64xf32> to vector<1x64xf32>
    %80 = arith.mulf %74, %61 : vector<16x1xf32>
    %81 = vector.broadcast %80 : vector<16x1xf32> to vector<16x64xf32>
    %82 = arith.mulf %81, %37 : vector<16x64xf32>
    %cst_43 = arith.constant dense<0.000000e+00> : vector<64xf32>
    %83 = vector.multi_reduction <add>, %82, %cst_43 [0] : vector<16x64xf32> to vector<64xf32>
    %84 = vector.shape_cast %83 : vector<64xf32> to vector<1x64xf32>
    %85 = arith.mulf %74, %65 : vector<16x1xf32>
    %86 = vector.broadcast %85 : vector<16x1xf32> to vector<16x64xf32>
    %87 = arith.mulf %86, %37 : vector<16x64xf32>
    %cst_44 = arith.constant dense<0.000000e+00> : vector<64xf32>
    %88 = vector.multi_reduction <add>, %87, %cst_44 [0] : vector<16x64xf32> to vector<64xf32>
    %89 = vector.shape_cast %88 : vector<64xf32> to vector<1x64xf32>
    %90 = arith.mulf %74, %73 : vector<16x1xf32>
    %91 = vector.broadcast %90 : vector<16x1xf32> to vector<16x64xf32>
    %92 = arith.mulf %91, %7 : vector<16x64xf32>
    %cst_45 = arith.constant dense<0.000000e+00> : vector<64xf32>
    %93 = vector.multi_reduction <add>, %92, %cst_45 [0] : vector<16x64xf32> to vector<64xf32>
    %94 = vector.shape_cast %93 : vector<64xf32> to vector<1x64xf32>
    %95 = tpu.concatenate %7, %37 in 1 : vector<16x64xf32>, vector<16x64xf32> -> vector<16x128xf32>
    %c0_46 = arith.constant 0 : index
    %c0_47 = arith.constant 0 : index
    %96 = vector.load %arg16[%c0_46, %c0_47] : memref<16x128xf32, #tpu.memory_space<vmem>>, vector<16x128xf32>
    tpu.vector_store %arg16[%c0_46, %c0_47], %95 {strides = array<i32>} : memref<16x128xf32, #tpu.memory_space<vmem>>, vector<16x128xf32>,
    %97 = tpu.concatenate %53, %57, %65, %69 in 1 : vector<16x1xf32>, vector<16x1xf32>, vector<16x1xf32>, vector<16x1xf32> -> vector<16x4xf32>
    %c0_48 = arith.constant 0 : index
    %c0_49 = arith.constant 0 : index
    %98 = vector.load %arg17[%c0_48, %c0_49] : memref<16x4xf32, #tpu.memory_space<vmem>>, vector<16x4xf32>
    tpu.vector_store %arg17[%c0_48, %c0_49], %97 {strides = array<i32>} : memref<16x4xf32, #tpu.memory_space<vmem>>, vector<16x4xf32>,
    %cst_50 = arith.constant 0.000000e+00 : f32
    %99 = vector.broadcast %cst_50 : f32 to vector<4x64xf32>
    %100 = tpu.concatenate %79, %84, %89, %94, %99 in 0 : vector<1x64xf32>, vector<1x64xf32>, vector<1x64xf32>, vector<1x64xf32>, vector<4x64xf32> -> vector<8x64xf32>
    %c0_51 = arith.constant 0 : index
    %c0_52 = arith.constant 0 : index
    %101 = vector.load %arg18[%c0_51, %c0_52] : memref<8x64xf32, #tpu.memory_space<vmem>>, vector<8x64xf32>
    tpu.vector_store %arg18[%c0_51, %c0_52], %100 {strides = array<i32>} : memref<8x64xf32, #tpu.memory_space<vmem>>, vector<8x64xf32>,
    return
  }
  func.func @transform_0(%arg0: i32) -> (i32, i32) {
    %c0_i32 = arith.constant 0 : i32
    %c0_i32_0 = arith.constant 0 : i32
    return %arg0, %c0_i32 : i32, i32
  }
  func.func @transform_1(%arg0: i32) -> (i32, i32) {
    %c0_i32 = arith.constant 0 : i32
    %c0_i32_0 = arith.constant 0 : i32
    return %arg0, %c0_i32 : i32, i32
  }
  func.func @transform_2(%arg0: i32) -> (i32, i32) {
    %c0_i32 = arith.constant 0 : i32
    %c0_i32_0 = arith.constant 0 : i32
    return %arg0, %c0_i32 : i32, i32
  }
  func.func @transform_3(%arg0: i32) -> (i32, i32) {
    %c0_i32 = arith.constant 0 : i32
    %c0_i32_0 = arith.constant 0 : i32
    return %arg0, %c0_i32 : i32, i32
  }
  func.func @transform_4(%arg0: i32) -> (i32, i32) {
    %c0_i32 = arith.constant 0 : i32
    %c0_i32_0 = arith.constant 0 : i32
    return %arg0, %c0_i32 : i32, i32
  }
  func.func @transform_5(%arg0: i32) -> (i32, i32) {
    %c0_i32 = arith.constant 0 : i32
    %c0_i32_0 = arith.constant 0 : i32
    return %arg0, %c0_i32 : i32, i32
  }
  func.func @transform_6(%arg0: i32) -> (i32, i32) {
    %c0_i32 = arith.constant 0 : i32
    %c0_i32_0 = arith.constant 0 : i32
    %c0_i32_1 = arith.constant 0 : i32
    return %c0_i32, %c0_i32_0 : i32, i32
  }
  func.func @transform_7(%arg0: i32) -> (i32, i32) {
    %c0_i32 = arith.constant 0 : i32
    %c0_i32_0 = arith.constant 0 : i32
    %c0_i32_1 = arith.constant 0 : i32
    return %c0_i32, %c0_i32_0 : i32, i32
  }
  func.func @transform_8(%arg0: i32) -> (i32, i32) {
    %c0_i32 = arith.constant 0 : i32
    %c0_i32_0 = arith.constant 0 : i32
    %c0_i32_1 = arith.constant 0 : i32
    return %c0_i32, %c0_i32_0 : i32, i32
  }
  func.func @transform_9(%arg0: i32) -> (i32, i32) {
    %c0_i32 = arith.constant 0 : i32
    %c0_i32_0 = arith.constant 0 : i32
    %c0_i32_1 = arith.constant 0 : i32
    return %c0_i32, %c0_i32_0 : i32, i32
  }
  func.func @transform_10(%arg0: i32) -> (i32, i32) {
    %c0_i32 = arith.constant 0 : i32
    %c0_i32_0 = arith.constant 0 : i32
    %c0_i32_1 = arith.constant 0 : i32
    return %c0_i32, %c0_i32_0 : i32, i32
  }
  func.func @transform_11(%arg0: i32) -> (i32, i32) {
    %c0_i32 = arith.constant 0 : i32
    %c0_i32_0 = arith.constant 0 : i32
    %c0_i32_1 = arith.constant 0 : i32
    return %c0_i32, %c0_i32_0 : i32, i32
  }
  func.func @transform_12(%arg0: i32) -> (i32, i32) {
    %c0_i32 = arith.constant 0 : i32
    %c0_i32_0 = arith.constant 0 : i32
    %c0_i32_1 = arith.constant 0 : i32
    return %c0_i32, %c0_i32_0 : i32, i32
  }
  func.func @transform_13(%arg0: i32) -> (i32, i32) {
    %c0_i32 = arith.constant 0 : i32
    %c0_i32_0 = arith.constant 0 : i32
    %c0_i32_1 = arith.constant 0 : i32
    return %c0_i32, %c0_i32_0 : i32, i32
  }
  func.func @transform_14(%arg0: i32) -> (i32, i32) {
    %c0_i32 = arith.constant 0 : i32
    %c0_i32_0 = arith.constant 0 : i32
    %c0_i32_1 = arith.constant 0 : i32
    return %c0_i32, %c0_i32_0 : i32, i32
  }
  func.func @transform_15(%arg0: i32) -> (i32, i32) {
    %c0_i32 = arith.constant 0 : i32
    %c0_i32_0 = arith.constant 0 : i32
    return %arg0, %c0_i32 : i32, i32
  }
  func.func @transform_16(%arg0: i32) -> (i32, i32) {
    %c0_i32 = arith.constant 0 : i32
    %c0_i32_0 = arith.constant 0 : i32
    return %arg0, %c0_i32 : i32, i32
  }
  func.func @transform_17(%arg0: i32) -> (i32, i32) {
    %c0_i32 = arith.constant 0 : i32
    %c0_i32_0 = arith.constant 0 : i32
    return %arg0, %c0_i32 : i32, i32
  }
}

</mosaic_0001>

<llo_original>
// kernel: gln_feat_forward.3
$region0: #{gln_feat_forward.3}
  #allocation0 [shape = 'u32[]', space=smem, size = 0x4, offset = 0x4, fixed_abs, tag = 'smem constant byte address 0x4 - core index']
  #allocation1 [shape = 'u32[144,128]{1,0:T(1,128)}', space=vmem, size = 0x12000, scoped, tag = 'internal scratch']
  %s0 = inlined_call_operand.vmem [shape: f32[16,128], index: 0, kind: input, shape index: {}]
  %s1 = inlined_call_operand.vmem [shape: f32[16,4], index: 1, kind: input, shape index: {}]
  %s2 = inlined_call_operand.vmem [shape: f32[8,64], index: 2, kind: input, shape index: {}]
  %s3 = inlined_call_operand.vmem [shape: f32[64,64], index: 3, kind: input, shape index: {}]
  %s4 = inlined_call_operand.vmem [shape: f32[64,64], index: 4, kind: input, shape index: {}]
  %s5 = inlined_call_operand.vmem [shape: f32[64,64], index: 5, kind: input, shape index: {}]
  %s6 = inlined_call_operand.vmem [shape: f32[64,64], index: 6, kind: input, shape index: {}]
  %s7 = inlined_call_operand.vmem [shape: f32[64,64], index: 7, kind: input, shape index: {}]
  %s8 = inlined_call_operand.vmem [shape: f32[1,64], index: 8, kind: input, shape index: {}]
  %s9 = inlined_call_operand.vmem [shape: f32[16,256], index: 9, kind: output, shape index: {}]
  %s10 = sld [smem:[#allocation0]]
  $region46: #{gln_feat_forward.3} parent=0
    _
  %s12 = ssub.s32 1, %s10
  %s13 = scalar_select 0, %s12, %s10
  // Predicated region
  $region2: #{gln_feat_forward.3} parent=0 // pred_check
    _
  $region3: #{gln_feat_forward.3} parent=0 // pred_check_branch
    %15 = sbr.rel (0) target = $region5
  $region4: #{gln_feat_forward.3} parent=0 // pred_region
    _
  $region5: #{gln_feat_forward.3} parent=0 // pred_fallthru
    _
  // Predicated region
  $region6: #{gln_feat_forward.3} parent=0 // pred_check
    _
  $region7: #{gln_feat_forward.3} parent=0 // pred_check_branch
    %17 = sbr.rel (0) target = $region9
  $region8: #{gln_feat_forward.3} parent=0 // pred_region
    _
  $region9: #{gln_feat_forward.3} parent=0 // pred_fallthru
    _
  // Predicated region
  $region10: #{gln_feat_forward.3} parent=0 // pred_check
    _
  $region11: #{gln_feat_forward.3} parent=0 // pred_check_branch
    %19 = sbr.rel (0) target = $region13
  $region12: #{gln_feat_forward.3} parent=0 // pred_region
    _
  $region13: #{gln_feat_forward.3} parent=0 // pred_fallthru
    _
  // Predicated region
  $region14: #{gln_feat_forward.3} parent=0 // pred_check
    _
  $region15: #{gln_feat_forward.3} parent=0 // pred_check_branch
    %21 = sbr.rel (0) target = $region17
  $region16: #{gln_feat_forward.3} parent=0 // pred_region
    _
  $region17: #{gln_feat_forward.3} parent=0 // pred_fallthru
    _
  // Predicated region
  $region18: #{gln_feat_forward.3} parent=0 // pred_check
    _
  $region19: #{gln_feat_forward.3} parent=0 // pred_check_branch
    %23 = sbr.rel (0) target = $region21
  $region20: #{gln_feat_forward.3} parent=0 // pred_region
    _
  $region21: #{gln_feat_forward.3} parent=0 // pred_fallthru
    _
  // Predicated region
  $region22: #{gln_feat_forward.3} parent=0 // pred_check
    _
  $region23: #{gln_feat_forward.3} parent=0 // pred_check_branch
    %25 = sbr.rel (0) target = $region25
  $region24: #{gln_feat_forward.3} parent=0 // pred_region
    _
  $region25: #{gln_feat_forward.3} parent=0 // pred_fallthru
    _
  // Predicated region
  $region26: #{gln_feat_forward.3} parent=0 // pred_check
    _
  $region27: #{gln_feat_forward.3} parent=0 // pred_check_branch
    %27 = sbr.rel (0) target = $region29
  $region28: #{gln_feat_forward.3} parent=0 // pred_region
    _
  $region29: #{gln_feat_forward.3} parent=0 // pred_fallthru
    _
  // Predicated region
  $region30: #{gln_feat_forward.3} parent=0 // pred_check
    _
  $region31: #{gln_feat_forward.3} parent=0 // pred_check_branch
    %29 = sbr.rel (0) target = $region33
  $region32: #{gln_feat_forward.3} parent=0 // pred_region
    _
  $region33: #{gln_feat_forward.3} parent=0 // pred_fallthru
    _
  // Predicated region
  $region34: #{gln_feat_forward.3} parent=0 // pred_check
    _
  $region35: #{gln_feat_forward.3} parent=0 // pred_check_branch
    %31 = sbr.rel (0) target = $region37
  $region36: #{gln_feat_forward.3} parent=0 // pred_region
    _
  $region37: #{gln_feat_forward.3} parent=0 // pred_fallthru
    _
  %v32 = vld [vmem:[%s0] sm:$0xff]
  %v33 = vld [vmem:[%s0 + $0x8] sm:$0xff]
  %v34 = vld [vmem:[%s1] sm:$0xff]
  %v35 = vld [vmem:[%s1 + $0x8] sm:$0xff]
  %v36 = vld [vmem:[%s2] sm:$0xff]
  %38 = vset.pattern.permute.xlu0 0
  %39 = vperm.xlu0 %38, %v34
  %v40 = vpop.permute.xlu0 %39
  %43 = vset.pattern.permute.xlu0 0
  %44 = vperm.xlu0 %43, %v35
  %v45 = vpop.permute.xlu0 %44
  %v47 = vlaneseq
  %v48 = vshrl.u32 %v47, 7
  %v49 = vsub.s32 0, %v48
  %v50 = vrot.slane %v36, %v49
  %v51 = vmul.f32 %v40, %v50
  %v52 = vmul.f32 %v45, %v50
  %v53 = vld [vmem:[%s3] sm:$0xff]
  %v54 = vld [vmem:[%s3 + $0x8] sm:$0xff]
  %v55 = vld [vmem:[%s3 + $0x10] sm:$0xff]
  %v56 = vld [vmem:[%s3 + $0x18] sm:$0xff]
  %v57 = vld [vmem:[%s3 + $0x20] sm:$0xff]
  %v58 = vld [vmem:[%s3 + $0x28] sm:$0xff]
  %v59 = vld [vmem:[%s3 + $0x30] sm:$0xff]
  %v60 = vld [vmem:[%s3 + $0x38] sm:$0xff]
  %vm61 = vcmask 523264
  %v63 = vsel %vm61, %v51, 0
  %v66 = vsel %vm61, %v52, 0
  %68 = vmatprep.subr.mxu0 0.0
  %69 = vmatpush1.msra.mxu0 %v53
  %70 = vmatprep.subr.mxu0 0.0
  %71 = vmatpush1.msra.mxu0 %v54
  %72 = vmatprep.subr.mxu0 0.0
  %73 = vmatpush1.msra.mxu0 %v55
  %74 = vmatprep.subr.mxu0 0.0
  %75 = vmatpush1.msra.mxu0 %v56
  %76 = vmatprep.subr.mxu0 0.0
  %77 = vmatpush1.msra.mxu0 %v57
  %78 = vmatprep.subr.mxu0 0.0
  %79 = vmatpush1.msra.mxu0 %v58
  %80 = vmatprep.subr.mxu0 0.0
  %81 = vmatpush1.msra.mxu0 %v59
  %82 = vmatprep.subr.mxu0 0.0
  %83 = vmatpush1.msra.mxu0 %v60
  %84 = vmatprep.subr.mxu0 0.0
  %85 = vmatpush1.msra.mxu0 0.0
  %86 = vmatprep.subr.mxu0 0.0
  %87 = vmatpush1.msra.mxu0 0.0
  %88 = vmatprep.subr.mxu0 0.0
  %89 = vmatpush1.msra.mxu0 0.0
  %90 = vmatprep.subr.mxu0 0.0
  %91 = vmatpush1.msra.mxu0 0.0
  %92 = vmatprep.subr.mxu0 0.0
  %93 = vmatpush1.msra.mxu0 0.0
  %94 = vmatprep.subr.mxu0 0.0
  %95 = vmatpush1.msra.mxu0 0.0
  %96 = vmatprep.subr.mxu0 0.0
  %97 = vmatpush1.msra.mxu0 0.0
  %98 = vmatprep.subr.mxu0 0.0
  %99 = vmatpush1.msra.mxu0 0.0
  %100 = vmatprep.subr.mxu0 0.0
  %101 = vmatpush1.msra.mxu0 0.0
  %102 = vmatprep.subr.mxu0 0.0
  %103 = vmatpush1.msra.mxu0 0.0
  %104 = vmatprep.subr.mxu0 0.0
  %105 = vmatpush1.msra.mxu0 0.0
  %106 = vmatprep.subr.mxu0 0.0
  %107 = vmatpush1.msra.mxu0 0.0
  %108 = vmatprep.subr.mxu0 0.0
  %109 = vmatpush1.msra.mxu0 0.0
  %110 = vmatprep.subr.mxu0 0.0
  %111 = vmatpush1.msra.mxu0 0.0
  %112 = vmatprep.subr.mxu0 0.0
  %113 = vmatpush1.msra.mxu0 0.0
  %114 = vmatprep.subr.mxu0 0.0
  %115 = vmatpush1.msra.mxu0 0.0
  %116 = vmatprep.subr.mxu0 0.0
  %117 = vmatpush1.msra.mxu0 0.0
  %118 = vmatprep.subr.mxu0 0.0
  %119 = vmatpush1.msra.mxu0 0.0
  %120 = vmatprep.subr.mxu0 0.0
  %121 = vmatpush1.msra.mxu0 0.0
  %122 = vmatprep.subr.mxu0 0.0
  %123 = vmatpush1.msra.mxu0 0.0
  %124 = vmatprep.subr.mxu0 0.0
  %125 = vmatpush1.msra.mxu0 0.0
  %126 = vmatprep.subr.mxu0 0.0
  %127 = vmatpush1.msra.mxu0 0.0
  %128 = vmatprep.subr.mxu0 0.0
  %129 = vmatpush1.msra.mxu0 0.0
  %130 = vmatprep.subr.mxu0 0.0
  %131 = vmatpush1.msra.mxu0 0.0
  %132 = vmatprep.mubr.f32.mxu0 0.0
  %133 = vmatmul.mubr.f32.gmra.mrb[0].mxu0 %v63
  %v134 = vpop.f32.mrb[0].mxu0
  %v135 = vadd.f32 0.0, %v134
  %v136 = vpop.f32.mrb[0].mxu0
  %137 = vmatprep.mubr.f32.mxu0 0.0
  %138 = vmatmul.mubr.f32.gmra.mrb[0].mxu0 %v66
  %v139 = vpop.f32.mrb[0].mxu0
  %v140 = vadd.f32 0.0, %v139
  %v141 = vpop.f32.mrb[0].mxu0
  %142 = vdwg.mxu0
  %vm143 = vcmp.gt.f32.partialorder %v135, 0.0
  %vm144 = vcmp.gt.f32.partialorder %v140, 0.0
  %v145 = vmul.f32 %v135, 0.01
  %v146 = vmul.f32 %v140, 0.01
  %v147 = vsel %vm143, %v135, %v145
  %v148 = vsel %vm144, %v140, %v146
  %149 = vset.pattern.permute.xlu0 1
  %150 = vperm.xlu0 %149, %v34
  %v151 = vpop.permute.xlu0 %150
  %153 = vset.pattern.permute.xlu0 1
  %154 = vperm.xlu0 %153, %v35
  %v155 = vpop.permute.xlu0 %154
  %v157 = vlaneseq
  %v158 = vshrl.u32 %v157, 7
  %v159 = vsub.s32 1, %v158
  %v160 = vrot.slane %v36, %v159
  %v161 = vmul.f32 %v151, %v160
  %v162 = vmul.f32 %v155, %v160
  %v163 = vld [vmem:[%s4] sm:$0xff]
  %v164 = vld [vmem:[%s4 + $0x8] sm:$0xff]
  %v165 = vld [vmem:[%s4 + $0x10] sm:$0xff]
  %v166 = vld [vmem:[%s4 + $0x18] sm:$0xff]
  %v167 = vld [vmem:[%s4 + $0x20] sm:$0xff]
  %v168 = vld [vmem:[%s4 + $0x28] sm:$0xff]
  %v169 = vld [vmem:[%s4 + $0x30] sm:$0xff]
  %v170 = vld [vmem:[%s4 + $0x38] sm:$0xff]
  %v172 = vsel %vm61, %v161, 0
  %v175 = vsel %vm61, %v162, 0
  %177 = vmatprep.subr.mxu0 0.0
  %178 = vmatpush1.msra.mxu0 %v163
  %179 = vmatprep.subr.mxu0 0.0
  %180 = vmatpush1.msra.mxu0 %v164
  %181 = vmatprep.subr.mxu0 0.0
  %182 = vmatpush1.msra.mxu0 %v165
  %183 = vmatprep.subr.mxu0 0.0
  %184 = vmatpush1.msra.mxu0 %v166
  %185 = vmatprep.subr.mxu0 0.0
  %186 = vmatpush1.msra.mxu0 %v167
  %187 = vmatprep.subr.mxu0 0.0
  %188 = vmatpush1.msra.mxu0 %v168
  %189 = vmatprep.subr.mxu0 0.0
  %190 = vmatpush1.msra.mxu0 %v169
  %191 = vmatprep.subr.mxu0 0.0
  %192 = vmatpush1.msra.mxu0 %v170
  %193 = vmatprep.subr.mxu0 0.0
  %194 = vmatpush1.msra.mxu0 0.0
  %195 = vmatprep.subr.mxu0 0.0
  %196 = vmatpush1.msra.mxu0 0.0
  %197 = vmatprep.subr.mxu0 0.0
  %198 = vmatpush1.msra.mxu0 0.0
  %199 = vmatprep.subr.mxu0 0.0
  %200 = vmatpush1.msra.mxu0 0.0
  %201 = vmatprep.subr.mxu0 0.0
  %202 = vmatpush1.msra.mxu0 0.0
  %203 = vmatprep.subr.mxu0 0.0
  %204 = vmatpush1.msra.mxu0 0.0
  %205 = vmatprep.subr.mxu0 0.0
  %206 = vmatpush1.msra.mxu0 0.0
  %207 = vmatprep.subr.mxu0 0.0
  %208 = vmatpush1.msra.mxu0 0.0
  %209 = vmatprep.subr.mxu0 0.0
  %210 = vmatpush1.msra.mxu0 0.0
  %211 = vmatprep.subr.mxu0 0.0
  %212 = vmatpush1.msra.mxu0 0.0
  %213 = vmatprep.subr.mxu0 0.0
  %214 = vmatpush1.msra.mxu0 0.0
  %215 = vmatprep.subr.mxu0 0.0
  %216 = vmatpush1.msra.mxu0 0.0
  %217 = vmatprep.subr.mxu0 0.0
  %218 = vmatpush1.msra.mxu0 0.0
  %219 = vmatprep.subr.mxu0 0.0
  %220 = vmatpush1.msra.mxu0 0.0
  %221 = vmatprep.subr.mxu0 0.0
  %222 = vmatpush1.msra.mxu0 0.0
  %223 = vmatprep.subr.mxu0 0.0
  %224 = vmatpush1.msra.mxu0 0.0
  %225 = vmatprep.subr.mxu0 0.0
  %226 = vmatpush1.msra.mxu0 0.0
  %227 = vmatprep.subr.mxu0 0.0
  %228 = vmatpush1.msra.mxu0 0.0
  %229 = vmatprep.subr.mxu0 0.0
  %230 = vmatpush1.msra.mxu0 0.0
  %231 = vmatprep.subr.mxu0 0.0
  %232 = vmatpush1.msra.mxu0 0.0
  %233 = vmatprep.subr.mxu0 0.0
  %234 = vmatpush1.msra.mxu0 0.0
  %235 = vmatprep.subr.mxu0 0.0
  %236 = vmatpush1.msra.mxu0 0.0
  %237 = vmatprep.subr.mxu0 0.0
  %238 = vmatpush1.msra.mxu0 0.0
  %239 = vmatprep.subr.mxu0 0.0
  %240 = vmatpush1.msra.mxu0 0.0
  %241 = vmatprep.mubr.f32.mxu0 0.0
  %242 = vmatmul.mubr.f32.gmra.mrb[0].mxu0 %v172
  %v243 = vpop.f32.mrb[0].mxu0
  %v244 = vadd.f32 0.0, %v243
  %v245 = vpop.f32.mrb[0].mxu0
  %246 = vmatprep.mubr.f32.mxu0 0.0
  %247 = vmatmul.mubr.f32.gmra.mrb[0].mxu0 %v175
  %v248 = vpop.f32.mrb[0].mxu0
  %v249 = vadd.f32 0.0, %v248
  %v250 = vpop.f32.mrb[0].mxu0
  %251 = vdwg.mxu0
  %vm252 = vcmp.gt.f32.partialorder %v244, 0.0
  %vm253 = vcmp.gt.f32.partialorder %v249, 0.0
  %v254 = vmul.f32 %v244, 0.01
  %v255 = vmul.f32 %v249, 0.01
  %v256 = vsel %vm252, %v244, %v254
  %v257 = vsel %vm253, %v249, %v255
  %258 = vset.pattern.permute.xlu0 2
  %259 = vperm.xlu0 %258, %v34
  %v260 = vpop.permute.xlu0 %259
  %262 = vset.pattern.permute.xlu0 2
  %263 = vperm.xlu0 %262, %v35
  %v264 = vpop.permute.xlu0 %263
  %v266 = vlaneseq
  %v267 = vshrl.u32 %v266, 7
  %v268 = vsub.s32 2, %v267
  %v269 = vrot.slane %v36, %v268
  %v270 = vmul.f32 %v260, %v269
  %v271 = vmul.f32 %v264, %v269
  %v272 = vld [vmem:[%s6] sm:$0xff]
  %v273 = vld [vmem:[%s6 + $0x8] sm:$0xff]
  %v274 = vld [vmem:[%s6 + $0x10] sm:$0xff]
  %v275 = vld [vmem:[%s6 + $0x18] sm:$0xff]
  %v276 = vld [vmem:[%s6 + $0x20] sm:$0xff]
  %v277 = vld [vmem:[%s6 + $0x28] sm:$0xff]
  %v278 = vld [vmem:[%s6 + $0x30] sm:$0xff]
  %v279 = vld [vmem:[%s6 + $0x38] sm:$0xff]
  %v281 = vsel %vm61, %v270, 0
  %v284 = vsel %vm61, %v271, 0
  %286 = vmatprep.subr.mxu0 0.0
  %287 = vmatpush1.msra.mxu0 %v272
  %288 = vmatprep.subr.mxu0 0.0
  %289 = vmatpush1.msra.mxu0 %v273
  %290 = vmatprep.subr.mxu0 0.0
  %291 = vmatpush1.msra.mxu0 %v274
  %292 = vmatprep.subr.mxu0 0.0
  %293 = vmatpush1.msra.mxu0 %v275
  %294 = vmatprep.subr.mxu0 0.0
  %295 = vmatpush1.msra.mxu0 %v276
  %296 = vmatprep.subr.mxu0 0.0
  %297 = vmatpush1.msra.mxu0 %v277
  %298 = vmatprep.subr.mxu0 0.0
  %299 = vmatpush1.msra.mxu0 %v278
  %300 = vmatprep.subr.mxu0 0.0
  %301 = vmatpush1.msra.mxu0 %v279
  %302 = vmatprep.subr.mxu0 0.0
  %303 = vmatpush1.msra.mxu0 0.0
  %304 = vmatprep.subr.mxu0 0.0
  %305 = vmatpush1.msra.mxu0 0.0
  %306 = vmatprep.subr.mxu0 0.0
  %307 = vmatpush1.msra.mxu0 0.0
  %308 = vmatprep.subr.mxu0 0.0
  %309 = vmatpush1.msra.mxu0 0.0
  %310 = vmatprep.subr.mxu0 0.0
  %311 = vmatpush1.msra.mxu0 0.0
  %312 = vmatprep.subr.mxu0 0.0
  %313 = vmatpush1.msra.mxu0 0.0
  %314 = vmatprep.subr.mxu0 0.0
  %315 = vmatpush1.msra.mxu0 0.0
  %316 = vmatprep.subr.mxu0 0.0
  %317 = vmatpush1.msra.mxu0 0.0
  %318 = vmatprep.subr.mxu0 0.0
  %319 = vmatpush1.msra.mxu0 0.0
  %320 = vmatprep.subr.mxu0 0.0
  %321 = vmatpush1.msra.mxu0 0.0
  %322 = vmatprep.subr.mxu0 0.0
  %323 = vmatpush1.msra.mxu0 0.0
  %324 = vmatprep.subr.mxu0 0.0
  %325 = vmatpush1.msra.mxu0 0.0
  %326 = vmatprep.subr.mxu0 0.0
  %327 = vmatpush1.msra.mxu0 0.0
  %328 = vmatprep.subr.mxu0 0.0
  %329 = vmatpush1.msra.mxu0 0.0
  %330 = vmatprep.subr.mxu0 0.0
  %331 = vmatpush1.msra.mxu0 0.0
  %332 = vmatprep.subr.mxu0 0.0
  %333 = vmatpush1.msra.mxu0 0.0
  %334 = vmatprep.subr.mxu0 0.0
  %335 = vmatpush1.msra.mxu0 0.0
  %336 = vmatprep.subr.mxu0 0.0
  %337 = vmatpush1.msra.mxu0 0.0
  %338 = vmatprep.subr.mxu0 0.0
  %339 = vmatpush1.msra.mxu0 0.0
  %340 = vmatprep.subr.mxu0 0.0
  %341 = vmatpush1.msra.mxu0 0.0
  %342 = vmatprep.subr.mxu0 0.0
  %343 = vmatpush1.msra.mxu0 0.0
  %344 = vmatprep.subr.mxu0 0.0
  %345 = vmatpush1.msra.mxu0 0.0
  %346 = vmatprep.subr.mxu0 0.0
  %347 = vmatpush1.msra.mxu0 0.0
  %348 = vmatprep.subr.mxu0 0.0
  %349 = vmatpush1.msra.mxu0 0.0
  %350 = vmatprep.mubr.f32.mxu0 0.0
  %351 = vmatmul.mubr.f32.gmra.mrb[0].mxu0 %v281
  %v352 = vpop.f32.mrb[0].mxu0
  %v353 = vadd.f32 0.0, %v352
  %v354 = vpop.f32.mrb[0].mxu0
  %355 = vmatprep.mubr.f32.mxu0 0.0
  %356 = vmatmul.mubr.f32.gmra.mrb[0].mxu0 %v284
  %v357 = vpop.f32.mrb[0].mxu0
  %v358 = vadd.f32 0.0, %v357
  %v359 = vpop.f32.mrb[0].mxu0
  %360 = vdwg.mxu0
  %vm361 = vcmp.gt.f32.partialorder %v353, 0.0
  %vm362 = vcmp.gt.f32.partialorder %v358, 0.0
  %v363 = vmul.f32 %v353, 0.01
  %v364 = vmul.f32 %v358, 0.01
  %v365 = vsel %vm361, %v353, %v363
  %v366 = vsel %vm362, %v358, %v364
  %367 = vset.pattern.permute.xlu0 3
  %368 = vperm.xlu0 %367, %v34
  %v369 = vpop.permute.xlu0 %368
  %371 = vset.pattern.permute.xlu0 3
  %372 = vperm.xlu0 %371, %v35
  %v373 = vpop.permute.xlu0 %372
  %v375 = vlaneseq
  %v376 = vshrl.u32 %v375, 7
  %v377 = vsub.s32 3, %v376
  %v378 = vrot.slane %v36, %v377
  %v379 = vmul.f32 %v369, %v378
  %v380 = vmul.f32 %v373, %v378
  %v381 = vld [vmem:[%s5] sm:$0xff]
  %v382 = vld [vmem:[%s5 + $0x8] sm:$0xff]
  %v383 = vld [vmem:[%s5 + $0x10] sm:$0xff]
  %v384 = vld [vmem:[%s5 + $0x18] sm:$0xff]
  %v385 = vld [vmem:[%s5 + $0x20] sm:$0xff]
  %v386 = vld [vmem:[%s5 + $0x28] sm:$0xff]
  %v387 = vld [vmem:[%s5 + $0x30] sm:$0xff]
  %v388 = vld [vmem:[%s5 + $0x38] sm:$0xff]
  %v390 = vsel %vm61, %v379, 0
  %v393 = vsel %vm61, %v380, 0
  %395 = vmatprep.subr.mxu0 0.0
  %396 = vmatpush1.msra.mxu0 %v381
  %397 = vmatprep.subr.mxu0 0.0
  %398 = vmatpush1.msra.mxu0 %v382
  %399 = vmatprep.subr.mxu0 0.0
  %400 = vmatpush1.msra.mxu0 %v383
  %401 = vmatprep.subr.mxu0 0.0
  %402 = vmatpush1.msra.mxu0 %v384
  %403 = vmatprep.subr.mxu0 0.0
  %404 = vmatpush1.msra.mxu0 %v385
  %405 = vmatprep.subr.mxu0 0.0
  %406 = vmatpush1.msra.mxu0 %v386
  %407 = vmatprep.subr.mxu0 0.0
  %408 = vmatpush1.msra.mxu0 %v387
  %409 = vmatprep.subr.mxu0 0.0
  %410 = vmatpush1.msra.mxu0 %v388
  %411 = vmatprep.subr.mxu0 0.0
  %412 = vmatpush1.msra.mxu0 0.0
  %413 = vmatprep.subr.mxu0 0.0
  %414 = vmatpush1.msra.mxu0 0.0
  %415 = vmatprep.subr.mxu0 0.0
  %416 = vmatpush1.msra.mxu0 0.0
  %417 = vmatprep.subr.mxu0 0.0
  %418 = vmatpush1.msra.mxu0 0.0
  %419 = vmatprep.subr.mxu0 0.0
  %420 = vmatpush1.msra.mxu0 0.0
  %421 = vmatprep.subr.mxu0 0.0
  %422 = vmatpush1.msra.mxu0 0.0
  %423 = vmatprep.subr.mxu0 0.0
  %424 = vmatpush1.msra.mxu0 0.0
  %425 = vmatprep.subr.mxu0 0.0
  %426 = vmatpush1.msra.mxu0 0.0
  %427 = vmatprep.subr.mxu0 0.0
  %428 = vmatpush1.msra.mxu0 0.0
  %429 = vmatprep.subr.mxu0 0.0
  %430 = vmatpush1.msra.mxu0 0.0
  %431 = vmatprep.subr.mxu0 0.0
  %432 = vmatpush1.msra.mxu0 0.0
  %433 = vmatprep.subr.mxu0 0.0
  %434 = vmatpush1.msra.mxu0 0.0
  %435 = vmatprep.subr.mxu0 0.0
  %436 = vmatpush1.msra.mxu0 0.0
  %437 = vmatprep.subr.mxu0 0.0
  %438 = vmatpush1.msra.mxu0 0.0
  %439 = vmatprep.subr.mxu0 0.0
  %440 = vmatpush1.msra.mxu0 0.0
  %441 = vmatprep.subr.mxu0 0.0
  %442 = vmatpush1.msra.mxu0 0.0
  %443 = vmatprep.subr.mxu0 0.0
  %444 = vmatpush1.msra.mxu0 0.0
  %445 = vmatprep.subr.mxu0 0.0
  %446 = vmatpush1.msra.mxu0 0.0
  %447 = vmatprep.subr.mxu0 0.0
  %448 = vmatpush1.msra.mxu0 0.0
  %449 = vmatprep.subr.mxu0 0.0
  %450 = vmatpush1.msra.mxu0 0.0
  %451 = vmatprep.subr.mxu0 0.0
  %452 = vmatpush1.msra.mxu0 0.0
  %453 = vmatprep.subr.mxu0 0.0
  %454 = vmatpush1.msra.mxu0 0.0
  %455 = vmatprep.subr.mxu0 0.0
  %456 = vmatpush1.msra.mxu0 0.0
  %457 = vmatprep.subr.mxu0 0.0
  %458 = vmatpush1.msra.mxu0 0.0
  %459 = vmatprep.mubr.f32.mxu0 0.0
  %460 = vmatmul.mubr.f32.gmra.mrb[0].mxu0 %v390
  %v461 = vpop.f32.mrb[0].mxu0
  %v462 = vadd.f32 0.0, %v461
  %v463 = vpop.f32.mrb[0].mxu0
  %464 = vmatprep.mubr.f32.mxu0 0.0
  %465 = vmatmul.mubr.f32.gmra.mrb[0].mxu0 %v393
  %v466 = vpop.f32.mrb[0].mxu0
  %v467 = vadd.f32 0.0, %v466
  %v468 = vpop.f32.mrb[0].mxu0
  %469 = vdwg.mxu0
  %vm470 = vcmp.gt.f32.partialorder %v462, 0.0
  %vm471 = vcmp.gt.f32.partialorder %v467, 0.0
  %v472 = vmul.f32 %v462, 0.01
  %v473 = vmul.f32 %v467, 0.01
  %v474 = vsel %vm470, %v462, %v472
  %v475 = vsel %vm471, %v467, %v473
  %v476 = vld [vmem:[%s8] sm:$0x1]
  %v477 = vmul.f32 %v476, 0.12
  %v478 = vld [vmem:[%s7] sm:$0xff]
  %v479 = vld [vmem:[%s7 + $0x8] sm:$0xff]
  %v480 = vld [vmem:[%s7 + $0x10] sm:$0xff]
  %v481 = vld [vmem:[%s7 + $0x18] sm:$0xff]
  %v482 = vld [vmem:[%s7 + $0x20] sm:$0xff]
  %v483 = vld [vmem:[%s7 + $0x28] sm:$0xff]
  %v484 = vld [vmem:[%s7 + $0x30] sm:$0xff]
  %v485 = vld [vmem:[%s7 + $0x38] sm:$0xff]
  %v487 = vsel %vm61, %v477, 0
  %489 = vmatprep.subr.mxu0 0.0
  %490 = vmatpush1.msra.mxu0 %v478
  %491 = vmatprep.subr.mxu0 0.0
  %492 = vmatpush1.msra.mxu0 %v479
  %493 = vmatprep.subr.mxu0 0.0
  %494 = vmatpush1.msra.mxu0 %v480
  %495 = vmatprep.subr.mxu0 0.0
  %496 = vmatpush1.msra.mxu0 %v481
  %497 = vmatprep.subr.mxu0 0.0
  %498 = vmatpush1.msra.mxu0 %v482
  %499 = vmatprep.subr.mxu0 0.0
  %500 = vmatpush1.msra.mxu0 %v483
  %501 = vmatprep.subr.mxu0 0.0
  %502 = vmatpush1.msra.mxu0 %v484
  %503 = vmatprep.subr.mxu0 0.0
  %504 = vmatpush1.msra.mxu0 %v485
  %505 = vmatprep.subr.mxu0 0.0
  %506 = vmatpush1.msra.mxu0 0.0
  %507 = vmatprep.subr.mxu0 0.0
  %508 = vmatpush1.msra.mxu0 0.0
  %509 = vmatprep.subr.mxu0 0.0
  %510 = vmatpush1.msra.mxu0 0.0
  %511 = vmatprep.subr.mxu0 0.0
  %512 = vmatpush1.msra.mxu0 0.0
  %513 = vmatprep.subr.mxu0 0.0
  %514 = vmatpush1.msra.mxu0 0.0
  %515 = vmatprep.subr.mxu0 0.0
  %516 = vmatpush1.msra.mxu0 0.0
  %517 = vmatprep.subr.mxu0 0.0
  %518 = vmatpush1.msra.mxu0 0.0
  %519 = vmatprep.subr.mxu0 0.0
  %520 = vmatpush1.msra.mxu0 0.0
  %521 = vmatprep.subr.mxu0 0.0
  %522 = vmatpush1.msra.mxu0 0.0
  %523 = vmatprep.subr.mxu0 0.0
  %524 = vmatpush1.msra.mxu0 0.0
  %525 = vmatprep.subr.mxu0 0.0
  %526 = vmatpush1.msra.mxu0 0.0
  %527 = vmatprep.subr.mxu0 0.0
  %528 = vmatpush1.msra.mxu0 0.0
  %529 = vmatprep.subr.mxu0 0.0
  %530 = vmatpush1.msra.mxu0 0.0
  %531 = vmatprep.subr.mxu0 0.0
  %532 = vmatpush1.msra.mxu0 0.0
  %533 = vmatprep.subr.mxu0 0.0
  %534 = vmatpush1.msra.mxu0 0.0
  %535 = vmatprep.subr.mxu0 0.0
  %536 = vmatpush1.msra.mxu0 0.0
  %537 = vmatprep.subr.mxu0 0.0
  %538 = vmatpush1.msra.mxu0 0.0
  %539 = vmatprep.subr.mxu0 0.0
  %540 = vmatpush1.msra.mxu0 0.0
  %541 = vmatprep.subr.mxu0 0.0
  %542 = vmatpush1.msra.mxu0 0.0
  %543 = vmatprep.subr.mxu0 0.0
  %544 = vmatpush1.msra.mxu0 0.0
  %545 = vmatprep.subr.mxu0 0.0
  %546 = vmatpush1.msra.mxu0 0.0
  %547 = vmatprep.subr.mxu0 0.0
  %548 = vmatpush1.msra.mxu0 0.0
  %549 = vmatprep.subr.mxu0 0.0
  %550 = vmatpush1.msra.mxu0 0.0
  %551 = vmatprep.subr.mxu0 0.0
  %552 = vmatpush1.msra.mxu0 0.0
  %553 = vmatprep.mubr.f32.mxu0 0.0
  %554 = vmatmul.mubr.f32.gmra.mrb[0].mxu0 %v487
  %v555 = vpop.f32.mrb[0].mxu0
  %v556 = vadd.f32 0.0, %v555
  %v557 = vpop.f32.mrb[0].mxu0
  %558 = vdwg.mxu0
  %vm559 = vcmp.gt.f32.partialorder %v556, 0.0
  %v560 = vmul.f32 %v556, 0.01
  %v561 = vsel %vm559, %v556, %v560
  %v562 = vadd.f32 %v561, %v477
  %v563 = vmul.f32 %v562, 0.5
  %v564 = vadd.f32 %v147, %v256
  %v565 = vadd.f32 %v148, %v257
  %v566 = vmul.f32 %v564, 0.5
  %v567 = vmul.f32 %v565, 0.5
  %v568 = vadd.f32 %v566, %v32
  %v569 = vadd.f32 %v567, %v33
  %v570 = vmul.f32 %v568, 0.5
  %v571 = vmul.f32 %v569, 0.5
  %v572 = vadd.f32 %v365, %v474
  %v573 = vadd.f32 %v366, %v475
  %v574 = vmul.f32 %v572, 0.5
  %v575 = vmul.f32 %v573, 0.5
  %578 = vrot.lane.b32.xlu0 %v32, 64
  %v579 = vpop.permute.xlu0 %578
  %580 = vrot.lane.b32.xlu0 %v33, 64
  %v581 = vpop.permute.xlu0 %580
  %v584 = vadd.f32 %v574, %v579
  %v585 = vadd.f32 %v575, %v581
  %v586 = vmul.f32 %v584, 0.5
  %v587 = vmul.f32 %v585, 0.5
  %v588 = vlaneseq
  %v589 = vshrl.u32 %v588, 7
  %v590 = vsub.s32 0, %v589
  %v591 = vrot.slane %v563, %v590
  %594 = vrot.lane.b32.xlu0 %v586, 64
  %v595 = vpop.permute.xlu0 %594
  %596 = vrot.lane.b32.xlu0 %v587, 64
  %v597 = vpop.permute.xlu0 %596
  %v600 = vsel %vm61, %v570, %v595
  %v601 = vsel %vm61, %v571, %v597
  %v602 = vsel %vm61, %v591, 0.0
  %603 = vst [vmem:[%s9] sm:$0xff] %v600
  %604 = vst [vmem:[%s9 + $0x8] sm:$0xff] %v602
  %605 = vst [vmem:[%s9 + $0x10] sm:$0xff] %v601
  %606 = vst [vmem:[%s9 + $0x18] sm:$0xff] %v602
  // Predicated region
  $region38: #{gln_feat_forward.3} parent=0 // pred_check
    _
  $region39: #{gln_feat_forward.3} parent=0 // pred_check_branch
    %608 = sbr.rel (0) target = $region41
  $region40: #{gln_feat_forward.3} parent=0 // pred_region
    _
  $region41: #{gln_feat_forward.3} parent=0 // pred_fallthru
    _
  // Predicated region
  $region42: #{gln_feat_forward.3} parent=0 // pred_check
    _
  $region43: #{gln_feat_forward.3} parent=0 // pred_check_branch
    %610 = sbr.rel (0) target = $region45
  $region44: #{gln_feat_forward.3} parent=0 // pred_region
    _
  $region45: #{gln_feat_forward.3} parent=0 // pred_fallthru
    _

// kernel: gln_feat_forward.2
$region0: #{gln_feat_forward.2}
  #allocation0 [shape = 'u32[]', space=smem, size = 0x4, offset = 0x4, fixed_abs, tag = 'smem constant byte address 0x4 - core index']
  #allocation1 [shape = 'u32[144,128]{1,0:T(1,128)}', space=vmem, size = 0x12000, scoped, tag = 'internal scratch']
  %s0 = inlined_call_operand.vmem [shape: f32[16,256], index: 0, kind: input, shape index: {}]
  %s1 = inlined_call_operand.vmem [shape: f32[16,64], index: 1, kind: input, shape index: {}]
  %s2 = inlined_call_operand.vmem [shape: bf16[16,128], index: 2, kind: input, shape index: {}]
  %s3 = inlined_call_operand.vmem [shape: bf16[16,2304], index: 3, kind: input, shape index: {}]
  %s4 = inlined_call_operand.vmem [shape: bf16[16,8064], index: 4, kind: input, shape index: {}]
  %s5 = inlined_call_operand.vmem [shape: f32[16,4], index: 5, kind: input, shape index: {}]
  %s6 = inlined_call_operand.vmem [shape: f32[256,64], index: 6, kind: input, shape index: {}]
  %s7 = inlined_call_operand.vmem [shape: f32[1,64], index: 7, kind: input, shape index: {}]
  %s8 = inlined_call_operand.vmem [shape: f32[64,64], index: 8, kind: input, shape index: {}]
  %s9 = inlined_call_operand.vmem [shape: f32[1,64], index: 9, kind: input, shape index: {}]
  %s10 = inlined_call_operand.vmem [shape: bf16[128,64], index: 10, kind: input, shape index: {}]
  %s11 = inlined_call_operand.vmem [shape: bf16[2304,64], index: 11, kind: input, shape index: {}]
  %s12 = inlined_call_operand.vmem [shape: bf16[8064,64], index: 12, kind: input, shape index: {}]
  %s13 = inlined_call_operand.vmem [shape: f32[1,64], index: 13, kind: input, shape index: {}]
  %s14 = inlined_call_operand.vmem [shape: f32[4,64], index: 14, kind: input, shape index: {}]
  %s15 = inlined_call_operand.vmem [shape: f32[16,128], index: 15, kind: output, shape index: {0}]
  %s16 = inlined_call_operand.vmem [shape: f32[16,4], index: 16, kind: output, shape index: {1}]
  %s17 = inlined_call_operand.vmem [shape: f32[8,64], index: 17, kind: output, shape index: {2}]
  %18 = xla_tuple %s15, %s16, %s17
  %s19 = sld [smem:[#allocation0]]
  $region86: #{gln_feat_forward.2} parent=0
    _
  %s21 = ssub.s32 1, %s19
  %s22 = scalar_select 0, %s21, %s19
  // Predicated region
  $region2: #{gln_feat_forward.2} parent=0 // pred_check
    _
  $region3: #{gln_feat_forward.2} parent=0 // pred_check_branch
    %24 = sbr.rel (0) target = $region5
  $region4: #{gln_feat_forward.2} parent=0 // pred_region
    _
  $region5: #{gln_feat_forward.2} parent=0 // pred_fallthru
    _
  // Predicated region
  $region6: #{gln_feat_forward.2} parent=0 // pred_check
    _
  $region7: #{gln_feat_forward.2} parent=0 // pred_check_branch
    %26 = sbr.rel (0) target = $region9
  $region8: #{gln_feat_forward.2} parent=0 // pred_region
    _
  $region9: #{gln_feat_forward.2} parent=0 // pred_fallthru
    _
  // Predicated region
  $region10: #{gln_feat_forward.2} parent=0 // pred_check
    _
  $region11: #{gln_feat_forward.2} parent=0 // pred_check_branch
    %28 = sbr.rel (0) target = $region13
  $region12: #{gln_feat_forward.2} parent=0 // pred_region
    _
  $region13: #{gln_feat_forward.2} parent=0 // pred_fallthru
    _
  // Predicated region
  $region14: #{gln_feat_forward.2} parent=0 // pred_check
    _
  $region15: #{gln_feat_forward.2} parent=0 // pred_check_branch
    %30 = sbr.rel (0) target = $region17
  $region16: #{gln_feat_forward.2} parent=0 // pred_region
    _
  $region17: #{gln_feat_forward.2} parent=0 // pred_fallthru
    _
  // Predicated region
  $region18: #{gln_feat_forward.2} parent=0 // pred_check
    _
  $region19: #{gln_feat_forward.2} parent=0 // pred_check_branch
    %32 = sbr.rel (0) target = $region21
  $region20: #{gln_feat_forward.2} parent=0 // pred_region
    _
  $region21: #{gln_feat_forward.2} parent=0 // pred_fallthru
    _
  // Predicated region
  $region22: #{gln_feat_forward.2} parent=0 // pred_check
    _
  $region23: #{gln_feat_forward.2} parent=0 // pred_check_branch
    %34 = sbr.rel (0) target = $region25
  $region24: #{gln_feat_forward.2} parent=0 // pred_region
    _
  $region25: #{gln_feat_forward.2} parent=0 // pred_fallthru
    _
  // Predicated region
  $region26: #{gln_feat_forward.2} parent=0 // pred_check
    _
  $region27: #{gln_feat_forward.2} parent=0 // pred_check_branch
    %36 = sbr.rel (0) target = $region29
  $region28: #{gln_feat_forward.2} parent=0 // pred_region
    _
  $region29: #{gln_feat_forward.2} parent=0 // pred_fallthru
    _
  // Predicated region
  $region30: #{gln_feat_forward.2} parent=0 // pred_check
    _
  $region31: #{gln_feat_forward.2} parent=0 // pred_check_branch
    %38 = sbr.rel (0) target = $region33
  $region32: #{gln_feat_forward.2} parent=0 // pred_region
    _
  $region33: #{gln_feat_forward.2} parent=0 // pred_fallthru
    _
  // Predicated region
  $region34: #{gln_feat_forward.2} parent=0 // pred_check
    _
  $region35: #{gln_feat_forward.2} parent=0 // pred_check_branch
    %40 = sbr.rel (0) target = $region37
  $region36: #{gln_feat_forward.2} parent=0 // pred_region
    _
  $region37: #{gln_feat_forward.2} parent=0 // pred_fallthru
    _
  // Predicated region
  $region38: #{gln_feat_forward.2} parent=0 // pred_check
    _
  $region39: #{gln_feat_forward.2} parent=0 // pred_check_branch
    %42 = sbr.rel (0) target = $region41
  $region40: #{gln_feat_forward.2} parent=0 // pred_region
    _
  $region41: #{gln_feat_forward.2} parent=0 // pred_fallthru
    _
  // Predicated region
  $region42: #{gln_feat_forward.2} parent=0 // pred_check
    _
  $region43: #{gln_feat_forward.2} parent=0 // pred_check_branch
    %44 = sbr.rel (0) target = $region45
  $region44: #{gln_feat_forward.2} parent=0 // pred_region
    _
  $region45: #{gln_feat_forward.2} parent=0 // pred_fallthru
    _
  // Predicated region
  $region46: #{gln_feat_forward.2} parent=0 // pred_check
    _
  $region47: #{gln_feat_forward.2} parent=0 // pred_check_branch
    %46 = sbr.rel (0) target = $region49
  $region48: #{gln_feat_forward.2} parent=0 // pred_region
    _
  $region49: #{gln_feat_forward.2} parent=0 // pred_fallthru
    _
  // Predicated region
  $region50: #{gln_feat_forward.2} parent=0 // pred_check
    _
  $region51: #{gln_feat_forward.2} parent=0 // pred_check_branch
    %48 = sbr.rel (0) target = $region53
  $region52: #{gln_feat_forward.2} parent=0 // pred_region
    _
  $region53: #{gln_feat_forward.2} parent=0 // pred_fallthru
    _
  // Predicated region
  $region54: #{gln_feat_forward.2} parent=0 // pred_check
    _
  $region55: #{gln_feat_forward.2} parent=0 // pred_check_branch
    %50 = sbr.rel (0) target = $region57
  $region56: #{gln_feat_forward.2} parent=0 // pred_region
    _
  $region57: #{gln_feat_forward.2} parent=0 // pred_fallthru
    _
  // Predicated region
  $region58: #{gln_feat_forward.2} parent=0 // pred_check
    _
  $region59: #{gln_feat_forward.2} parent=0 // pred_check_branch
    %52 = sbr.rel (0) target = $region61
  $region60: #{gln_feat_forward.2} parent=0 // pred_region
    _
  $region61: #{gln_feat_forward.2} parent=0 // pred_fallthru
    _
  %v54 = vld [vmem:[%s0] sm:$0xff]
  %v55 = vld [vmem:[%s0 + $0x8] sm:$0xff]
  %v56 = vld [vmem:[%s0 + $0x10] sm:$0xff]
  %v57 = vld [vmem:[%s0 + $0x18] sm:$0xff]
  %v58 = vld [vmem:[%s6] sm:$0xff]
  %v59 = vld [vmem:[%s6 + $0x8] sm:$0xff]
  %v60 = vld [vmem:[%s6 + $0x10] sm:$0xff]
  %v61 = vld [vmem:[%s6 + $0x18] sm:$0xff]
  %v62 = vld [vmem:[%s6 + $0x20] sm:$0xff]
  %v63 = vld [vmem:[%s6 + $0x28] sm:$0xff]
  %v64 = vld [vmem:[%s6 + $0x30] sm:$0xff]
  %v65 = vld [vmem:[%s6 + $0x38] sm:$0xff]
  %v66 = vld [vmem:[%s6 + $0x40] sm:$0xff]
  %v67 = vld [vmem:[%s6 + $0x48] sm:$0xff]
  %v68 = vld [vmem:[%s6 + $0x50] sm:$0xff]
  %v69 = vld [vmem:[%s6 + $0x58] sm:$0xff]
  %v70 = vld [vmem:[%s6 + $0x60] sm:$0xff]
  %v71 = vld [vmem:[%s6 + $0x68] sm:$0xff]
  %v72 = vld [vmem:[%s6 + $0x70] sm:$0xff]
  %v73 = vld [vmem:[%s6 + $0x78] sm:$0xff]
  %v74 = vld [vmem:[%s6 + $0x80] sm:$0xff]
  %v75 = vld [vmem:[%s6 + $0x88] sm:$0xff]
  %v76 = vld [vmem:[%s6 + $0x90] sm:$0xff]
  %v77 = vld [vmem:[%s6 + $0x98] sm:$0xff]
  %v78 = vld [vmem:[%s6 + $0xa0] sm:$0xff]
  %v79 = vld [vmem:[%s6 + $0xa8] sm:$0xff]
  %v80 = vld [vmem:[%s6 + $0xb0] sm:$0xff]
  %v81 = vld [vmem:[%s6 + $0xb8] sm:$0xff]
  %v82 = vld [vmem:[%s6 + $0xc0] sm:$0xff]
  %v83 = vld [vmem:[%s6 + $0xc8] sm:$0xff]
  %v84 = vld [vmem:[%s6 + $0xd0] sm:$0xff]
  %v85 = vld [vmem:[%s6 + $0xd8] sm:$0xff]
  %v86 = vld [vmem:[%s6 + $0xe0] sm:$0xff]
  %v87 = vld [vmem:[%s6 + $0xe8] sm:$0xff]
  %v88 = vld [vmem:[%s6 + $0xf0] sm:$0xff]
  %v89 = vld [vmem:[%s6 + $0xf8] sm:$0xff]
  %v90 = vld [vmem:[%s7] sm:$0x1]
  %v92 = vlaneseq
  %v93 = vshrl.u32 %v92, 7
  %v94 = vsub.s32 0, %v93
  %v95 = vrot.slane %v90, %v94
  %97 = vmatprep.subr.mxu0 0.0
  %98 = vmatpush1.msra.mxu0 %v58
  %99 = vmatprep.subr.mxu0 0.0
  %100 = vmatpush1.msra.mxu0 %v59
  %101 = vmatprep.subr.mxu0 0.0
  %102 = vmatpush1.msra.mxu0 %v60
  %103 = vmatprep.subr.mxu0 0.0
  %104 = vmatpush1.msra.mxu0 %v61
  %105 = vmatprep.subr.mxu0 0.0
  %106 = vmatpush1.msra.mxu0 %v62
  %107 = vmatprep.subr.mxu0 0.0
  %108 = vmatpush1.msra.mxu0 %v63
  %109 = vmatprep.subr.mxu0 0.0
  %110 = vmatpush1.msra.mxu0 %v64
  %111 = vmatprep.subr.mxu0 0.0
  %112 = vmatpush1.msra.mxu0 %v65
  %113 = vmatprep.subr.mxu0 0.0
  %114 = vmatpush1.msra.mxu0 %v66
  %115 = vmatprep.subr.mxu0 0.0
  %116 = vmatpush1.msra.mxu0 %v67
  %117 = vmatprep.subr.mxu0 0.0
  %118 = vmatpush1.msra.mxu0 %v68
  %119 = vmatprep.subr.mxu0 0.0
  %120 = vmatpush1.msra.mxu0 %v69
  %121 = vmatprep.subr.mxu0 0.0
  %122 = vmatpush1.msra.mxu0 %v70
  %123 = vmatprep.subr.mxu0 0.0
  %124 = vmatpush1.msra.mxu0 %v71
  %125 = vmatprep.subr.mxu0 0.0
  %126 = vmatpush1.msra.mxu0 %v72
  %127 = vmatprep.subr.mxu0 0.0
  %128 = vmatpush1.msra.mxu0 %v73
  %129 = vmatprep.subr.mxu0 0.0
  %130 = vmatpush1.msra.mxu0 %v74
  %131 = vmatprep.subr.mxu0 0.0
  %132 = vmatpush1.msra.mxu0 %v75
  %133 = vmatprep.subr.mxu0 0.0
  %134 = vmatpush1.msra.mxu0 %v76
  %135 = vmatprep.subr.mxu0 0.0
  %136 = vmatpush1.msra.mxu0 %v77
  %137 = vmatprep.subr.mxu0 0.0
  %138 = vmatpush1.msra.mxu0 %v78
  %139 = vmatprep.subr.mxu0 0.0
  %140 = vmatpush1.msra.mxu0 %v79
  %141 = vmatprep.subr.mxu0 0.0
  %142 = vmatpush1.msra.mxu0 %v80
  %143 = vmatprep.subr.mxu0 0.0
  %144 = vmatpush1.msra.mxu0 %v81
  %145 = vmatprep.subr.mxu0 0.0
  %146 = vmatpush1.msra.mxu0 %v82
  %147 = vmatprep.subr.mxu0 0.0
  %148 = vmatpush1.msra.mxu0 %v83
  %149 = vmatprep.subr.mxu0 0.0
  %150 = vmatpush1.msra.mxu0 %v84
  %151 = vmatprep.subr.mxu0 0.0
  %152 = vmatpush1.msra.mxu0 %v85
  %153 = vmatprep.subr.mxu0 0.0
  %154 = vmatpush1.msra.mxu0 %v86
  %155 = vmatprep.subr.mxu0 0.0
  %156 = vmatpush1.msra.mxu0 %v87
  %157 = vmatprep.subr.mxu0 0.0
  %158 = vmatpush1.msra.mxu0 %v88
  %159 = vmatprep.subr.mxu0 0.0
  %160 = vmatpush1.msra.mxu0 %v89
  %161 = vmatprep.mubr.f32.mxu0 %v55
  %162 = vmatmul.mubr.f32.gmra.mrb[0].mxu0 %v54
  %v163 = vpop.f32.mrb[0].mxu0
  %v164 = vadd.f32 %v95, %v163
  %v165 = vpop.f32.mrb[0].mxu0
  %166 = vmatprep.mubr.f32.mxu0 %v57
  %167 = vmatmul.mubr.f32.gmra.mrb[0].mxu0 %v56
  %v168 = vpop.f32.mrb[0].mxu0
  %v169 = vadd.f32 %v95, %v168
  %v170 = vpop.f32.mrb[0].mxu0
  %171 = vdwg.mxu0
  %v172 = vmul.f32 %v164, 0.12
  %v173 = vmul.f32 %v169, 0.12
  %v174 = vld [vmem:[%s5] sm:$0xff]
  %v175 = vld [vmem:[%s5 + $0x8] sm:$0xff]
  %v176 = vld [vmem:[%s2] sm:$0xf]
  %v177 = vld [vmem:[%s2 + $0x4] sm:$0xf]
  %v178 = vld [vmem:[%s10] sm:$0xf]
  %v179 = vld [vmem:[%s10 + $0x4] sm:$0xf]
  %v180 = vld [vmem:[%s10 + $0x8] sm:$0xf]
  %v181 = vld [vmem:[%s10 + $0xc] sm:$0xf]
  %v182 = vld [vmem:[%s10 + $0x10] sm:$0xf]
  %v183 = vld [vmem:[%s10 + $0x14] sm:$0xf]
  %v184 = vld [vmem:[%s10 + $0x18] sm:$0xf]
  %v185 = vld [vmem:[%s10 + $0x1c] sm:$0xf]
  %v186 = vld [vmem:[%s10 + $0x20] sm:$0xf]
  %v187 = vld [vmem:[%s10 + $0x24] sm:$0xf]
  %v188 = vld [vmem:[%s10 + $0x28] sm:$0xf]
  %v189 = vld [vmem:[%s10 + $0x2c] sm:$0xf]
  %v190 = vld [vmem:[%s10 + $0x30] sm:$0xf]
  %v191 = vld [vmem:[%s10 + $0x34] sm:$0xf]
  %v192 = vld [vmem:[%s10 + $0x38] sm:$0xf]
  %v193 = vld [vmem:[%s10 + $0x3c] sm:$0xf]
  %v196 = vunpack.c.l.b16 %v176
  %v197 = vunpack.c.l.b16 %v177
  %v198 = vpack.c.b16 %v197, %v196
  %v216 = vunpack.c.l.b16 %v178
  %v217 = vunpack.c.l.b16 %v179
  %v218 = vunpack.c.l.b16 %v180
  %v219 = vunpack.c.l.b16 %v181
  %v220 = vunpack.c.l.b16 %v182
  %v221 = vunpack.c.l.b16 %v183
  %v222 = vunpack.c.l.b16 %v184
  %v223 = vunpack.c.l.b16 %v185
  %v224 = vunpack.c.l.b16 %v186
  %v225 = vunpack.c.l.b16 %v187
  %v226 = vunpack.c.l.b16 %v188
  %v227 = vunpack.c.l.b16 %v189
  %v228 = vunpack.c.l.b16 %v190
  %v229 = vunpack.c.l.b16 %v191
  %v230 = vunpack.c.l.b16 %v192
  %v231 = vunpack.c.l.b16 %v193
  %v232 = vpack.c.b16 %v217, %v216
  %v233 = vpack.c.b16 %v219, %v218
  %v234 = vpack.c.b16 %v221, %v220
  %v235 = vpack.c.b16 %v223, %v222
  %v236 = vpack.c.b16 %v225, %v224
  %v237 = vpack.c.b16 %v227, %v226
  %v238 = vpack.c.b16 %v229, %v228
  %v239 = vpack.c.b16 %v231, %v230
  %248 = vmatprep.subr.bf16.mxu0 0
  %249 = vmatpush1.bf16.msra.mxu0 %v232
  %250 = vmatprep.subr.bf16.mxu0 0
  %251 = vmatpush1.bf16.msra.mxu0 %v233
  %252 = vmatprep.subr.bf16.mxu0 0
  %253 = vmatpush1.bf16.msra.mxu0 %v234
  %254 = vmatprep.subr.bf16.mxu0 0
  %255 = vmatpush1.bf16.msra.mxu0 %v235
  %256 = vmatprep.subr.bf16.mxu0 0
  %257 = vmatpush1.bf16.msra.mxu0 %v236
  %258 = vmatprep.subr.bf16.mxu0 0
  %259 = vmatpush1.bf16.msra.mxu0 %v237
  %260 = vmatprep.subr.bf16.mxu0 0
  %261 = vmatpush1.bf16.msra.mxu0 %v238
  %262 = vmatprep.subr.bf16.mxu0 0
  %263 = vmatpush1.bf16.msra.mxu0 %v239
  %264 = vmatprep.subr.bf16.mxu0 0
  %265 = vmatpush1.bf16.msra.mxu0 0
  %266 = vmatprep.subr.bf16.mxu0 0
  %267 = vmatpush1.bf16.msra.mxu0 0
  %268 = vmatprep.subr.bf16.mxu0 0
  %269 = vmatpush1.bf16.msra.mxu0 0
  %270 = vmatprep.subr.bf16.mxu0 0
  %271 = vmatpush1.bf16.msra.mxu0 0
  %272 = vmatprep.subr.bf16.mxu0 0
  %273 = vmatpush1.bf16.msra.mxu0 0
  %274 = vmatprep.subr.bf16.mxu0 0
  %275 = vmatpush1.bf16.msra.mxu0 0
  %276 = vmatprep.subr.bf16.mxu0 0
  %277 = vmatpush1.bf16.msra.mxu0 0
  %278 = vmatprep.subr.bf16.mxu0 0
  %279 = vmatpush1.bf16.msra.mxu0 0
  %280 = vmatprep.mubr.bf16.mxu0 0
  %281 = vmatmul.mubr.bf16.gmra.mrb[0].mxu0 %v198
  %v282 = vpop.f32.mrb[0].mxu0
  %v283 = vadd.f32 0.0, %v282
  %v284 = vpop.f32.mrb[0].mxu0
  %v285 = vpop.f32.mrb[0].mxu0
  %v286 = vadd.f32 0.0, %v285
  %v287 = vpop.f32.mrb[0].mxu0
  %288 = vdwg.mxu0
  %290 = vset.pattern.permute.xlu0 0
  %291 = vperm.xlu0 %290, %v174
  %v292 = vpop.permute.xlu0 %291
  %295 = vset.pattern.permute.xlu0 0
  %296 = vperm.xlu0 %295, %v175
  %v297 = vpop.permute.xlu0 %296
  %v299 = vmul.f32 %v283, %v292
  %v300 = vmul.f32 %v286, %v297
  %v301 = vld [vmem:[%s3] sm:$0xff]
  %v302 = vld [vmem:[%s3 + $0x8] sm:$0xff]
  %v303 = vld [vmem:[%s3 + $0x10] sm:$0xff]
  %v304 = vld [vmem:[%s3 + $0x18] sm:$0xff]
  %v305 = vld [vmem:[%s3 + $0x20] sm:$0xff]
  %v306 = vld [vmem:[%s3 + $0x28] sm:$0xff]
  %v307 = vld [vmem:[%s3 + $0x30] sm:$0xff]
  %v308 = vld [vmem:[%s3 + $0x38] sm:$0xff]
  %v309 = vld [vmem:[%s3 + $0x40] sm:$0xff]
  %v310 = vld [vmem:[%s3 + $0x48] sm:$0xff]
  %v311 = vld [vmem:[%s3 + $0x50] sm:$0xff]
  %v312 = vld [vmem:[%s3 + $0x58] sm:$0xff]
  %v313 = vld [vmem:[%s3 + $0x60] sm:$0xff]
  %v314 = vld [vmem:[%s3 + $0x68] sm:$0xff]
  %v315 = vld [vmem:[%s3 + $0x70] sm:$0xff]
  %v316 = vld [vmem:[%s3 + $0x78] sm:$0xff]
  %v317 = vld [vmem:[%s3 + $0x80] sm:$0xff]
  %v318 = vld [vmem:[%s3 + $0x88] sm:$0xff]
  %v319 = vld [vmem:[%s11] sm:$0xf]
  %v320 = vld [vmem:[%s11 + $0x4] sm:$0xf]
  %v321 = vld [vmem:[%s11 + $0x8] sm:$0xf]
  %v322 = vld [vmem:[%s11 + $0xc] sm:$0xf]
  %v323 = vld [vmem:[%s11 + $0x10] sm:$0xf]
  %v324 = vld [vmem:[%s11 + $0x14] sm:$0xf]
  %v325 = vld [vmem:[%s11 + $0x18] sm:$0xf]
  %v326 = vld [vmem:[%s11 + $0x1c] sm:$0xf]
  %v327 = vld [vmem:[%s11 + $0x20] sm:$0xf]
  %v328 = vld [vmem:[%s11 + $0x24] sm:$0xf]
  %v329 = vld [vmem:[%s11 + $0x28] sm:$0xf]
  %v330 = vld [vmem:[%s11 + $0x2c] sm:$0xf]
  %v331 = vld [vmem:[%s11 + $0x30] sm:$0xf]
  %v332 = vld [vmem:[%s11 + $0x34] sm:$0xf]
  %v333 = vld [vmem:[%s11 + $0x38] sm:$0xf]
  %v334 = vld [vmem:[%s11 + $0x3c] sm:$0xf]
  %v335 = vld [vmem:[%s11 + $0x40] sm:$0xf]
  %v336 = vld [vmem:[%s11 + $0x44] sm:$0xf]
  %v337 = vld [vmem:[%s11 + $0x48] sm:$0xf]
  %v338 = vld [vmem:[%s11 + $0x4c] sm:$0xf]
  %v339 = vld [vmem:[%s11 + $0x50] sm:$0xf]
  %v340 = vld [vmem:[%s11 + $0x54] sm:$0xf]
  %v341 = vld [vmem:[%s11 + $0x58] sm:$0xf]
  %v342 = vld [vmem:[%s11 + $0x5c] sm:$0xf]
  %v343 = vld [vmem:[%s11 + $0x60] sm:$0xf]
  %v344 = vld [vmem:[%s11 + $0x64] sm:$0xf]
  %v345 = vld [vmem:[%s11 + $0x68] sm:$0xf]
  %v346 = vld [vmem:[%s11 + $0x6c] sm:$0xf]
  %v347 = vld [vmem:[%s11 + $0x70] sm:$0xf]
  %v348 = vld [vmem:[%s11 + $0x74] sm:$0xf]
  %v349 = vld [vmem:[%s11 + $0x78] sm:$0xf]
  %v350 = vld [vmem:[%s11 + $0x7c] sm:$0xf]
  %v351 = vld [vmem:[%s11 + $0x80] sm:$0xf]
  %v352 = vld [vmem:[%s11 + $0x84] sm:$0xf]
  %v353 = vld [vmem:[%s11 + $0x88] sm:$0xf]
  %v354 = vld [vmem:[%s11 + $0x8c] sm:$0xf]
  %v355 = vld [vmem:[%s11 + $0x90] sm:$0xf]
  %v356 = vld [vmem:[%s11 + $0x94] sm:$0xf]
  %v357 = vld [vmem:[%s11 + $0x98] sm:$0xf]
  %v358 = vld [vmem:[%s11 + $0x9c] sm:$0xf]
  %v359 = vld [vmem:[%s11 + $0xa0] sm:$0xf]
  %v360 = vld [vmem:[%s11 + $0xa4] sm:$0xf]
  %v361 = vld [vmem:[%s11 + $0xa8] sm:$0xf]
  %v362 = vld [vmem:[%s11 + $0xac] sm:$0xf]
  %v363 = vld [vmem:[%s11 + $0xb0] sm:$0xf]
  %v364 = vld [vmem:[%s11 + $0xb4] sm:$0xf]
  %v365 = vld [vmem:[%s11 + $0xb8] sm:$0xf]
  %v366 = vld [vmem:[%s11 + $0xbc] sm:$0xf]
  %v367 = vld [vmem:[%s11 + $0xc0] sm:$0xf]
  %v368 = vld [vmem:[%s11 + $0xc4] sm:$0xf]
  %v369 = vld [vmem:[%s11 + $0xc8] sm:$0xf]
  %v370 = vld [vmem:[%s11 + $0xcc] sm:$0xf]
  %v371 = vld [vmem:[%s11 + $0xd0] sm:$0xf]
  %v372 = vld [vmem:[%s11 + $0xd4] sm:$0xf]
  %v373 = vld [vmem:[%s11 + $0xd8] sm:$0xf]
  %v374 = vld [vmem:[%s11 + $0xdc] sm:$0xf]
  %v375 = vld [vmem:[%s11 + $0xe0] sm:$0xf]
  %v376 = vld [vmem:[%s11 + $0xe4] sm:$0xf]
  %v377 = vld [vmem:[%s11 + $0xe8] sm:$0xf]
  %v378 = vld [vmem:[%s11 + $0xec] sm:$0xf]
  %v379 = vld [vmem:[%s11 + $0xf0] sm:$0xf]
  %v380 = vld [vmem:[%s11 + $0xf4] sm:$0xf]
  %v381 = vld [vmem:[%s11 + $0xf8] sm:$0xf]
  %v382 = vld [vmem:[%s11 + $0xfc] sm:$0xf]
  %v383 = vld [vmem:[%s11 + $0x100] sm:$0xf]
  %v384 = vld [vmem:[%s11 + $0x104] sm:$0xf]
  %v385 = vld [vmem:[%s11 + $0x108] sm:$0xf]
  %v386 = vld [vmem:[%s11 + $0x10c] sm:$0xf]
  %v387 = vld [vmem:[%s11 + $0x110] sm:$0xf]
  %v388 = vld [vmem:[%s11 + $0x114] sm:$0xf]
  %v389 = vld [vmem:[%s11 + $0x118] sm:$0xf]
  %v390 = vld [vmem:[%s11 + $0x11c] sm:$0xf]
  %v391 = vld [vmem:[%s11 + $0x120] sm:$0xf]
  %v392 = vld [vmem:[%s11 + $0x124] sm:$0xf]
  %v393 = vld [vmem:[%s11 + $0x128] sm:$0xf]
  %v394 = vld [vmem:[%s11 + $0x12c] sm:$0xf]
  %v395 = vld [vmem:[%s11 + $0x130] sm:$0xf]
  %v396 = vld [vmem:[%s11 + $0x134] sm:$0xf]
  %v397 = vld [vmem:[%s11 + $0x138] sm:$0xf]
  %v398 = vld [vmem:[%s11 + $0x13c] sm:$0xf]
  %v399 = vld [vmem:[%s11 + $0x140] sm:$0xf]
  %v400 = vld [vmem:[%s11 + $0x144] sm:$0xf]
  %v401 = vld [vmem:[%s11 + $0x148] sm:$0xf]
  %v402 = vld [vmem:[%s11 + $0x14c] sm:$0xf]
  %v403 = vld [vmem:[%s11 + $0x150] sm:$0xf]
  %v404 = vld [vmem:[%s11 + $0x154] sm:$0xf]
  %v405 = vld [vmem:[%s11 + $0x158] sm:$0xf]
  %v406 = vld [vmem:[%s11 + $0x15c] sm:$0xf]
  %v407 = vld [vmem:[%s11 + $0x160] sm:$0xf]
  %v408 = vld [vmem:[%s11 + $0x164] sm:$0xf]
  %v409 = vld [vmem:[%s11 + $0x168] sm:$0xf]
  %v410 = vld [vmem:[%s11 + $0x16c] sm:$0xf]
  %v411 = vld [vmem:[%s11 + $0x170] sm:$0xf]
  %v412 = vld [vmem:[%s11 + $0x174] sm:$0xf]
  %v413 = vld [vmem:[%s11 + $0x178] sm:$0xf]
  %v414 = vld [vmem:[%s11 + $0x17c] sm:$0xf]
  %v415 = vld [vmem:[%s11 + $0x180] sm:$0xf]
  %v416 = vld [vmem:[%s11 + $0x184] sm:$0xf]
  %v417 = vld [vmem:[%s11 + $0x188] sm:$0xf]
  %v418 = vld [vmem:[%s11 + $0x18c] sm:$0xf]
  %v419 = vld [vmem:[%s11 + $0x190] sm:$0xf]
  %v420 = vld [vmem:[%s11 + $0x194] sm:$0xf]
  %v421 = vld [vmem:[%s11 + $0x198] sm:$0xf]
  %v422 = vld [vmem:[%s11 + $0x19c] sm:$0xf]
  %v423 = vld [vmem:[%s11 + $0x1a0] sm:$0xf]
  %v424 = vld [vmem:[%s11 + $0x1a4] sm:$0xf]
  %v425 = vld [vmem:[%s11 + $0x1a8] sm:$0xf]
  %v426 = vld [vmem:[%s11 + $0x1ac] sm:$0xf]
  %v427 = vld [vmem:[%s11 + $0x1b0] sm:$0xf]
  %v428 = vld [vmem:[%s11 + $0x1b4] sm:$0xf]
  %v429 = vld [vmem:[%s11 + $0x1b8] sm:$0xf]
  %v430 = vld [vmem:[%s11 + $0x1bc] sm:$0xf]
  %v431 = vld [vmem:[%s11 + $0x1c0] sm:$0xf]
  %v432 = vld [vmem:[%s11 + $0x1c4] sm:$0xf]
  %v433 = vld [vmem:[%s11 + $0x1c8] sm:$0xf]
  %v434 = vld [vmem:[%s11 + $0x1cc] sm:$0xf]
  %v435 = vld [vmem:[%s11 + $0x1d0] sm:$0xf]
  %v436 = vld [vmem:[%s11 + $0x1d4] sm:$0xf]
  %v437 = vld [vmem:[%s11 + $0x1d8] sm:$0xf]
  %v438 = vld [vmem:[%s11 + $0x1dc] sm:$0xf]
  %v439 = vld [vmem:[%s11 + $0x1e0] sm:$0xf]
  %v440 = vld [vmem:[%s11 + $0x1e4] sm:$0xf]
  %v441 = vld [vmem:[%s11 + $0x1e8] sm:$0xf]
  %v442 = vld [vmem:[%s11 + $0x1ec] sm:$0xf]
  %v443 = vld [vmem:[%s11 + $0x1f0] sm:$0xf]
  %v444 = vld [vmem:[%s11 + $0x1f4] sm:$0xf]
  %v445 = vld [vmem:[%s11 + $0x1f8] sm:$0xf]
  %v446 = vld [vmem:[%s11 + $0x1fc] sm:$0xf]
  %v447 = vld [vmem:[%s11 + $0x200] sm:$0xf]
  %v448 = vld [vmem:[%s11 + $0x204] sm:$0xf]
  %v449 = vld [vmem:[%s11 + $0x208] sm:$0xf]
  %v450 = vld [vmem:[%s11 + $0x20c] sm:$0xf]
  %v451 = vld [vmem:[%s11 + $0x210] sm:$0xf]
  %v452 = vld [vmem:[%s11 + $0x214] sm:$0xf]
  %v453 = vld [vmem:[%s11 + $0x218] sm:$0xf]
  %v454 = vld [vmem:[%s11 + $0x21c] sm:$0xf]
  %v455 = vld [vmem:[%s11 + $0x220] sm:$0xf]
  %v456 = vld [vmem:[%s11 + $0x224] sm:$0xf]
  %v457 = vld [vmem:[%s11 + $0x228] sm:$0xf]
  %v458 = vld [vmem:[%s11 + $0x22c] sm:$0xf]
  %v459 = vld [vmem:[%s11 + $0x230] sm:$0xf]
  %v460 = vld [vmem:[%s11 + $0x234] sm:$0xf]
  %v461 = vld [vmem:[%s11 + $0x238] sm:$0xf]
  %v462 = vld [vmem:[%s11 + $0x23c] sm:$0xf]
  %v463 = vld [vmem:[%s11 + $0x240] sm:$0xf]
  %v464 = vld [vmem:[%s11 + $0x244] sm:$0xf]
  %v465 = vld [vmem:[%s11 + $0x248] sm:$0xf]
  %v466 = vld [vmem:[%s11 + $0x24c] sm:$0xf]
  %v467 = vld [vmem:[%s11 + $0x250] sm:$0xf]
  %v468 = vld [vmem:[%s11 + $0x254] sm:$0xf]
  %v469 = vld [vmem:[%s11 + $0x258] sm:$0xf]
  %v470 = vld [vmem:[%s11 + $0x25c] sm:$0xf]
  %v471 = vld [vmem:[%s11 + $0x260] sm:$0xf]
  %v472 = vld [vmem:[%s11 + $0x264] sm:$0xf]
  %v473 = vld [vmem:[%s11 + $0x268] sm:$0xf]
  %v474 = vld [vmem:[%s11 + $0x26c] sm:$0xf]
  %v475 = vld [vmem:[%s11 + $0x270] sm:$0xf]
  %v476 = vld [vmem:[%s11 + $0x274] sm:$0xf]
  %v477 = vld [vmem:[%s11 + $0x278] sm:$0xf]
  %v478 = vld [vmem:[%s11 + $0x27c] sm:$0xf]
  %v479 = vld [vmem:[%s11 + $0x280] sm:$0xf]
  %v480 = vld [vmem:[%s11 + $0x284] sm:$0xf]
  %v481 = vld [vmem:[%s11 + $0x288] sm:$0xf]
  %v482 = vld [vmem:[%s11 + $0x28c] sm:$0xf]
  %v483 = vld [vmem:[%s11 + $0x290] sm:$0xf]
  %v484 = vld [vmem:[%s11 + $0x294] sm:$0xf]
  %v485 = vld [vmem:[%s11 + $0x298] sm:$0xf]
  %v486 = vld [vmem:[%s11 + $0x29c] sm:$0xf]
  %v487 = vld [vmem:[%s11 + $0x2a0] sm:$0xf]
  %v488 = vld [vmem:[%s11 + $0x2a4] sm:$0xf]
  %v489 = vld [vmem:[%s11 + $0x2a8] sm:$0xf]
  %v490 = vld [vmem:[%s11 + $0x2ac] sm:$0xf]
  %v491 = vld [vmem:[%s11 + $0x2b0] sm:$0xf]
  %v492 = vld [vmem:[%s11 + $0x2b4] sm:$0xf]
  %v493 = vld [vmem:[%s11 + $0x2b8] sm:$0xf]
  %v494 = vld [vmem:[%s11 + $0x2bc] sm:$0xf]
  %v495 = vld [vmem:[%s11 + $0x2c0] sm:$0xf]
  %v496 = vld [vmem:[%s11 + $0x2c4] sm:$0xf]
  %v497 = vld [vmem:[%s11 + $0x2c8] sm:$0xf]
  %v498 = vld [vmem:[%s11 + $0x2cc] sm:$0xf]
  %v499 = vld [vmem:[%s11 + $0x2d0] sm:$0xf]
  %v500 = vld [vmem:[%s11 + $0x2d4] sm:$0xf]
  %v501 = vld [vmem:[%s11 + $0x2d8] sm:$0xf]
  %v502 = vld [vmem:[%s11 + $0x2dc] sm:$0xf]
  %v503 = vld [vmem:[%s11 + $0x2e0] sm:$0xf]
  %v504 = vld [vmem:[%s11 + $0x2e4] sm:$0xf]
  %v505 = vld [vmem:[%s11 + $0x2e8] sm:$0xf]
  %v506 = vld [vmem:[%s11 + $0x2ec] sm:$0xf]
  %v507 = vld [vmem:[%s11 + $0x2f0] sm:$0xf]
  %v508 = vld [vmem:[%s11 + $0x2f4] sm:$0xf]
  %v509 = vld [vmem:[%s11 + $0x2f8] sm:$0xf]
  %v510 = vld [vmem:[%s11 + $0x2fc] sm:$0xf]
  %v511 = vld [vmem:[%s11 + $0x300] sm:$0xf]
  %v512 = vld [vmem:[%s11 + $0x304] sm:$0xf]
  %v513 = vld [vmem:[%s11 + $0x308] sm:$0xf]
  %v514 = vld [vmem:[%s11 + $0x30c] sm:$0xf]
  %v515 = vld [vmem:[%s11 + $0x310] sm:$0xf]
  %v516 = vld [vmem:[%s11 + $0x314] sm:$0xf]
  %v517 = vld [vmem:[%s11 + $0x318] sm:$0xf]
  %v518 = vld [vmem:[%s11 + $0x31c] sm:$0xf]
  %v519 = vld [vmem:[%s11 + $0x320] sm:$0xf]
  %v520 = vld [vmem:[%s11 + $0x324] sm:$0xf]
  %v521 = vld [vmem:[%s11 + $0x328] sm:$0xf]
  %v522 = vld [vmem:[%s11 + $0x32c] sm:$0xf]
  %v523 = vld [vmem:[%s11 + $0x330] sm:$0xf]
  %v524 = vld [vmem:[%s11 + $0x334] sm:$0xf]
  %v525 = vld [vmem:[%s11 + $0x338] sm:$0xf]
  %v526 = vld [vmem:[%s11 + $0x33c] sm:$0xf]
  %v527 = vld [vmem:[%s11 + $0x340] sm:$0xf]
  %v528 = vld [vmem:[%s11 + $0x344] sm:$0xf]
  %v529 = vld [vmem:[%s11 + $0x348] sm:$0xf]
  %v530 = vld [vmem:[%s11 + $0x34c] sm:$0xf]
  %v531 = vld [vmem:[%s11 + $0x350] sm:$0xf]
  %v532 = vld [vmem:[%s11 + $0x354] sm:$0xf]
  %v533 = vld [vmem:[%s11 + $0x358] sm:$0xf]
  %v534 = vld [vmem:[%s11 + $0x35c] sm:$0xf]
  %v535 = vld [vmem:[%s11 + $0x360] sm:$0xf]
  %v536 = vld [vmem:[%s11 + $0x364] sm:$0xf]
  %v537 = vld [vmem:[%s11 + $0x368] sm:$0xf]
  %v538 = vld [vmem:[%s11 + $0x36c] sm:$0xf]
  %v539 = vld [vmem:[%s11 + $0x370] sm:$0xf]
  %v540 = vld [vmem:[%s11 + $0x374] sm:$0xf]
  %v541 = vld [vmem:[%s11 + $0x378] sm:$0xf]
  %v542 = vld [vmem:[%s11 + $0x37c] sm:$0xf]
  %v543 = vld [vmem:[%s11 + $0x380] sm:$0xf]
  %v544 = vld [vmem:[%s11 + $0x384] sm:$0xf]
  %v545 = vld [vmem:[%s11 + $0x388] sm:$0xf]
  %v546 = vld [vmem:[%s11 + $0x38c] sm:$0xf]
  %v547 = vld [vmem:[%s11 + $0x390] sm:$0xf]
  %v548 = vld [vmem:[%s11 + $0x394] sm:$0xf]
  %v549 = vld [vmem:[%s11 + $0x398] sm:$0xf]
  %v550 = vld [vmem:[%s11 + $0x39c] sm:$0xf]
  %v551 = vld [vmem:[%s11 + $0x3a0] sm:$0xf]
  %v552 = vld [vmem:[%s11 + $0x3a4] sm:$0xf]
  %v553 = vld [vmem:[%s11 + $0x3a8] sm:$0xf]
  %v554 = vld [vmem:[%s11 + $0x3ac] sm:$0xf]
  %v555 = vld [vmem:[%s11 + $0x3b0] sm:$0xf]
  %v556 = vld [vmem:[%s11 + $0x3b4] sm:$0xf]
  %v557 = vld [vmem:[%s11 + $0x3b8] sm:$0xf]
  %v558 = vld [vmem:[%s11 + $0x3bc] sm:$0xf]
  %v559 = vld [vmem:[%s11 + $0x3c0] sm:$0xf]
  %v560 = vld [vmem:[%s11 + $0x3c4] sm:$0xf]
  %v561 = vld [vmem:[%s11 + $0x3c8] sm:$0xf]
  %v562 = vld [vmem:[%s11 + $0x3cc] sm:$0xf]
  %v563 = vld [vmem:[%s11 + $0x3d0] sm:$0xf]
  %v564 = vld [vmem:[%s11 + $0x3d4] sm:$0xf]
  %v565 = vld [vmem:[%s11 + $0x3d8] sm:$0xf]
  %v566 = vld [vmem:[%s11 + $0x3dc] sm:$0xf]
  %v567 = vld [vmem:[%s11 + $0x3e0] sm:$0xf]
  %v568 = vld [vmem:[%s11 + $0x3e4] sm:$0xf]
  %v569 = vld [vmem:[%s11 + $0x3e8] sm:$0xf]
  %v570 = vld [vmem:[%s11 + $0x3ec] sm:$0xf]
  %v571 = vld [vmem:[%s11 + $0x3f0] sm:$0xf]
  %v572 = vld [vmem:[%s11 + $0x3f4] sm:$0xf]
  %v573 = vld [vmem:[%s11 + $0x3f8] sm:$0xf]
  %v574 = vld [vmem:[%s11 + $0x3fc] sm:$0xf]
  %v575 = vld [vmem:[%s11 + $0x400] sm:$0xf]
  %v576 = vld [vmem:[%s11 + $0x404] sm:$0xf]
  %v577 = vld [vmem:[%s11 + $0x408] sm:$0xf]
  %v578 = vld [vmem:[%s11 + $0x40c] sm:$0xf]
  %v579 = vld [vmem:[%s11 + $0x410] sm:$0xf]
  %v580 = vld [vmem:[%s11 + $0x414] sm:$0xf]
  %v581 = vld [vmem:[%s11 + $0x418] sm:$0xf]
  %v582 = vld [vmem:[%s11 + $0x41c] sm:$0xf]
  %v583 = vld [vmem:[%s11 + $0x420] sm:$0xf]
  %v584 = vld [vmem:[%s11 + $0x424] sm:$0xf]
  %v585 = vld [vmem:[%s11 + $0x428] sm:$0xf]
  %v586 = vld [vmem:[%s11 + $0x42c] sm:$0xf]
  %v587 = vld [vmem:[%s11 + $0x430] sm:$0xf]
  %v588 = vld [vmem:[%s11 + $0x434] sm:$0xf]
  %v589 = vld [vmem:[%s11 + $0x438] sm:$0xf]
  %v590 = vld [vmem:[%s11 + $0x43c] sm:$0xf]
  %v591 = vld [vmem:[%s11 + $0x440] sm:$0xf]
  %v592 = vld [vmem:[%s11 + $0x444] sm:$0xf]
  %v593 = vld [vmem:[%s11 + $0x448] sm:$0xf]
  %v594 = vld [vmem:[%s11 + $0x44c] sm:$0xf]
  %v595 = vld [vmem:[%s11 + $0x450] sm:$0xf]
  %v596 = vld [vmem:[%s11 + $0x454] sm:$0xf]
  %v597 = vld [vmem:[%s11 + $0x458] sm:$0xf]
  %v598 = vld [vmem:[%s11 + $0x45c] sm:$0xf]
  %v599 = vld [vmem:[%s11 + $0x460] sm:$0xf]
  %v600 = vld [vmem:[%s11 + $0x464] sm:$0xf]
  %v601 = vld [vmem:[%s11 + $0x468] sm:$0xf]
  %v602 = vld [vmem:[%s11 + $0x46c] sm:$0xf]
  %v603 = vld [vmem:[%s11 + $0x470] sm:$0xf]
  %v604 = vld [vmem:[%s11 + $0x474] sm:$0xf]
  %v605 = vld [vmem:[%s11 + $0x478] sm:$0xf]
  %v606 = vld [vmem:[%s11 + $0x47c] sm:$0xf]
  %v625 = vunpack.c.l.b16 %v301
  %v626 = vunpack.c.h.b16 %v301
  %v627 = vunpack.c.l.b16 %v302
  %v628 = vunpack.c.h.b16 %v302
  %v629 = vunpack.c.l.b16 %v303
  %v630 = vunpack.c.h.b16 %v303
  %v631 = vunpack.c.l.b16 %v304
  %v632 = vunpack.c.h.b16 %v304
  %v633 = vunpack.c.l.b16 %v305
  %v634 = vunpack.c.h.b16 %v305
  %v635 = vunpack.c.l.b16 %v306
  %v636 = vunpack.c.h.b16 %v306
  %v637 = vunpack.c.l.b16 %v307
  %v638 = vunpack.c.h.b16 %v307
  %v639 = vunpack.c.l.b16 %v308
  %v640 = vunpack.c.h.b16 %v308
  %v641 = vunpack.c.l.b16 %v309
  %v642 = vunpack.c.h.b16 %v309
  %v643 = vunpack.c.l.b16 %v310
  %v644 = vunpack.c.h.b16 %v310
  %v645 = vunpack.c.l.b16 %v311
  %v646 = vunpack.c.h.b16 %v311
  %v647 = vunpack.c.l.b16 %v312
  %v648 = vunpack.c.h.b16 %v312
  %v649 = vunpack.c.l.b16 %v313
  %v650 = vunpack.c.h.b16 %v313
  %v651 = vunpack.c.l.b16 %v314
  %v652 = vunpack.c.h.b16 %v314
  %v653 = vunpack.c.l.b16 %v315
  %v654 = vunpack.c.h.b16 %v315
  %v655 = vunpack.c.l.b16 %v316
  %v656 = vunpack.c.h.b16 %v316
  %v657 = vunpack.c.l.b16 %v317
  %v658 = vunpack.c.h.b16 %v317
  %v659 = vunpack.c.l.b16 %v318
  %v660 = vunpack.c.h.b16 %v318
  %v661 = vpack.c.b16 %v643, %v625
  %v662 = vpack.c.b16 %v644, %v626
  %v663 = vpack.c.b16 %v645, %v627
  %v664 = vpack.c.b16 %v646, %v628
  %v665 = vpack.c.b16 %v647, %v629
  %v666 = vpack.c.b16 %v648, %v630
  %v667 = vpack.c.b16 %v649, %v631
  %v668 = vpack.c.b16 %v650, %v632
  %v669 = vpack.c.b16 %v651, %v633
  %v670 = vpack.c.b16 %v652, %v634
  %v671 = vpack.c.b16 %v653, %v635
  %v672 = vpack.c.b16 %v654, %v636
  %v673 = vpack.c.b16 %v655, %v637
  %v674 = vpack.c.b16 %v656, %v638
  %v675 = vpack.c.b16 %v657, %v639
  %v676 = vpack.c.b16 %v658, %v640
  %v677 = vpack.c.b16 %v659, %v641
  %v678 = vpack.c.b16 %v660, %v642
  %v985 = vunpack.c.l.b16 %v319
  %v986 = vunpack.c.l.b16 %v320
  %v987 = vunpack.c.l.b16 %v321
  %v988 = vunpack.c.l.b16 %v322
  %v989 = vunpack.c.l.b16 %v323
  %v990 = vunpack.c.l.b16 %v324
  %v991 = vunpack.c.l.b16 %v325
  %v992 = vunpack.c.l.b16 %v326
  %v993 = vunpack.c.l.b16 %v327
  %v994 = vunpack.c.l.b16 %v328
  %v995 = vunpack.c.l.b16 %v329
  %v996 = vunpack.c.l.b16 %v330
  %v997 = vunpack.c.l.b16 %v331
  %v998 = vunpack.c.l.b16 %v332
  %v999 = vunpack.c.l.b16 %v333
  %v1000 = vunpack.c.l.b16 %v334
  %v1001 = vunpack.c.l.b16 %v335
  %v1002 = vunpack.c.l.b16 %v336
  %v1003 = vunpack.c.l.b16 %v337
  %v1004 = vunpack.c.l.b16 %v338
  %v1005 = vunpack.c.l.b16 %v339
  %v1006 = vunpack.c.l.b16 %v340
  %v1007 = vunpack.c.l.b16 %v341
  %v1008 = vunpack.c.l.b16 %v342
  %v1009 = vunpack.c.l.b16 %v343
  %v1010 = vunpack.c.l.b16 %v344
  %v1011 = vunpack.c.l.b16 %v345
  %v1012 = vunpack.c.l.b16 %v346
  %v1013 = vunpack.c.l.b16 %v347
  %v1014 = vunpack.c.l.b16 %v348
  %v1015 = vunpack.c.l.b16 %v349
  %v1016 = vunpack.c.l.b16 %v350
  %v1017 = vunpack.c.l.b16 %v351
  %v1018 = vunpack.c.l.b16 %v352
  %v1019 = vunpack.c.l.b16 %v353
  %v1020 = vunpack.c.l.b16 %v354
  %v1021 = vunpack.c.l.b16 %v355
  %v1022 = vunpack.c.l.b16 %v356
  %v1023 = vunpack.c.l.b16 %v357
  %v1024 = vunpack.c.l.b16 %v358
  %v1025 = vunpack.c.l.b16 %v359
  %v1026 = vunpack.c.l.b16 %v360
  %v1027 = vunpack.c.l.b16 %v361
  %v1028 = vunpack.c.l.b16 %v362
  %v1029 = vunpack.c.l.b16 %v363
  %v1030 = vunpack.c.l.b16 %v364
  %v1031 = vunpack.c.l.b16 %v365
  %v1032 = vunpack.c.l.b16 %v366
  %v1033 = vunpack.c.l.b16 %v367
  %v1034 = vunpack.c.l.b16 %v368
  %v1035 = vunpack.c.l.b16 %v369
  %v1036 = vunpack.c.l.b16 %v370
  %v1037 = vunpack.c.l.b16 %v371
  %v1038 = vunpack.c.l.b16 %v372
  %v1039 = vunpack.c.l.b16 %v373
  %v1040 = vunpack.c.l.b16 %v374
  %v1041 = vunpack.c.l.b16 %v375
  %v1042 = vunpack.c.l.b16 %v376
  %v1043 = vunpack.c.l.b16 %v377
  %v1044 = vunpack.c.l.b16 %v378
  %v1045 = vunpack.c.l.b16 %v379
  %v1046 = vunpack.c.l.b16 %v380
  %v1047 = vunpack.c.l.b16 %v381
  %v1048 = vunpack.c.l.b16 %v382
  %v1049 = vunpack.c.l.b16 %v383
  %v1050 = vunpack.c.l.b16 %v384
  %v1051 = vunpack.c.l.b16 %v385
  %v1052 = vunpack.c.l.b16 %v386
  %v1053 = vunpack.c.l.b16 %v387
  %v1054 = vunpack.c.l.b16 %v388
  %v1055 = vunpack.c.l.b16 %v389
  %v1056 = vunpack.c.l.b16 %v390
  %v1057 = vunpack.c.l.b16 %v391
  %v1058 = vunpack.c.l.b16 %v392
  %v1059 = vunpack.c.l.b16 %v393
  %v1060 = vunpack.c.l.b16 %v394
  %v1061 = vunpack.c.l.b16 %v395
  %v1062 = vunpack.c.l.b16 %v396
  %v1063 = vunpack.c.l.b16 %v397
  %v1064 = vunpack.c.l.b16 %v398
  %v1065 = vunpack.c.l.b16 %v399
  %v1066 = vunpack.c.l.b16 %v400
  %v1067 = vunpack.c.l.b16 %v401
  %v1068 = vunpack.c.l.b16 %v402
  %v1069 = vunpack.c.l.b16 %v403
  %v1070 = vunpack.c.l.b16 %v404
  %v1071 = vunpack.c.l.b16 %v405
  %v1072 = vunpack.c.l.b16 %v406
  %v1073 = vunpack.c.l.b16 %v407
  %v1074 = vunpack.c.l.b16 %v408
  %v1075 = vunpack.c.l.b16 %v409
  %v1076 = vunpack.c.l.b16 %v410
  %v1077 = vunpack.c.l.b16 %v411
  %v1078 = vunpack.c.l.b16 %v412
  %v1079 = vunpack.c.l.b16 %v413
  %v1080 = vunpack.c.l.b16 %v414
  %v1081 = vunpack.c.l.b16 %v415
  %v1082 = vunpack.c.l.b16 %v416
  %v1083 = vunpack.c.l.b16 %v417
  %v1084 = vunpack.c.l.b16 %v418
  %v1085 = vunpack.c.l.b16 %v419
  %v1086 = vunpack.c.l.b16 %v420
  %v1087 = vunpack.c.l.b16 %v421
  %v1088 = vunpack.c.l.b16 %v422
  %v1089 = vunpack.c.l.b16 %v423
  %v1090 = vunpack.c.l.b16 %v424
  %v1091 = vunpack.c.l.b16 %v425
  %v1092 = vunpack.c.l.b16 %v426
  %v1093 = vunpack.c.l.b16 %v427
  %v1094 = vunpack.c.l.b16 %v428
  %v1095 = vunpack.c.l.b16 %v429
  %v1096 = vunpack.c.l.b16 %v430
  %v1097 = vunpack.c.l.b16 %v431
  %v1098 = vunpack.c.l.b16 %v432
  %v1099 = vunpack.c.l.b16 %v433
  %v1100 = vunpack.c.l.b16 %v434
  %v1101 = vunpack.c.l.b16 %v435
  %v1102 = vunpack.c.l.b16 %v436
  %v1103 = vunpack.c.l.b16 %v437
  %v1104 = vunpack.c.l.b16 %v438
  %v1105 = vunpack.c.l.b16 %v439
  %v1106 = vunpack.c.l.b16 %v440
  %v1107 = vunpack.c.l.b16 %v441
  %v1108 = vunpack.c.l.b16 %v442
  %v1109 = vunpack.c.l.b16 %v443
  %v1110 = vunpack.c.l.b16 %v444
  %v1111 = vunpack.c.l.b16 %v445
  %v1112 = vunpack.c.l.b16 %v446
  %v1113 = vunpack.c.l.b16 %v447
  %v1114 = vunpack.c.l.b16 %v448
  %v1115 = vunpack.c.l.b16 %v449
  %v1116 = vunpack.c.l.b16 %v450
  %v1117 = vunpack.c.l.b16 %v451
  %v1118 = vunpack.c.l.b16 %v452
  %v1119 = vunpack.c.l.b16 %v453
  %v1120 = vunpack.c.l.b16 %v454
  %v1121 = vunpack.c.l.b16 %v455
  %v1122 = vunpack.c.l.b16 %v456
  %v1123 = vunpack.c.l.b16 %v457
  %v1124 = vunpack.c.l.b16 %v458
  %v1125 = vunpack.c.l.b16 %v459
  %v1126 = vunpack.c.l.b16 %v460
  %v1127 = vunpack.c.l.b16 %v461
  %v1128 = vunpack.c.l.b16 %v462
  %v1129 = vunpack.c.l.b16 %v463
  %v1130 = vunpack.c.l.b16 %v464
  %v1131 = vunpack.c.l.b16 %v465
  %v1132 = vunpack.c.l.b16 %v466
  %v1133 = vunpack.c.l.b16 %v467
  %v1134 = vunpack.c.l.b16 %v468
  %v1135 = vunpack.c.l.b16 %v469
  %v1136 = vunpack.c.l.b16 %v470
  %v1137 = vunpack.c.l.b16 %v471
  %v1138 = vunpack.c.l.b16 %v472
  %v1139 = vunpack.c.l.b16 %v473
  %v1140 = vunpack.c.l.b16 %v474
  %v1141 = vunpack.c.l.b16 %v475
  %v1142 = vunpack.c.l.b16 %v476
  %v1143 = vunpack.c.l.b16 %v477
  %v1144 = vunpack.c.l.b16 %v478
  %v1145 = vunpack.c.l.b16 %v479
  %v1146 = vunpack.c.l.b16 %v480
  %v1147 = vunpack.c.l.b16 %v481
  %v1148 = vunpack.c.l.b16 %v482
  %v1149 = vunpack.c.l.b16 %v483
  %v1150 = vunpack.c.l.b16 %v484
  %v1151 = vunpack.c.l.b16 %v485
  %v1152 = vunpack.c.l.b16 %v486
  %v1153 = vunpack.c.l.b16 %v487
  %v1154 = vunpack.c.l.b16 %v488
  %v1155 = vunpack.c.l.b16 %v489
  %v1156 = vunpack.c.l.b16 %v490
  %v1157 = vunpack.c.l.b16 %v491
  %v1158 = vunpack.c.l.b16 %v492
  %v1159 = vunpack.c.l.b16 %v493
  %v1160 = vunpack.c.l.b16 %v494
  %v1161 = vunpack.c.l.b16 %v495
  %v1162 = vunpack.c.l.b16 %v496
  %v1163 = vunpack.c.l.b16 %v497
  %v1164 = vunpack.c.l.b16 %v498
  %v1165 = vunpack.c.l.b16 %v499
  %v1166 = vunpack.c.l.b16 %v500
  %v1167 = vunpack.c.l.b16 %v501
  %v1168 = vunpack.c.l.b16 %v502
  %v1169 = vunpack.c.l.b16 %v503
  %v1170 = vunpack.c.l.b16 %v504
  %v1171 = vunpack.c.l.b16 %v505
  %v1172 = vunpack.c.l.b16 %v506
  %v1173 = vunpack.c.l.b16 %v507
  %v1174 = vunpack.c.l.b16 %v508
  %v1175 = vunpack.c.l.b16 %v509
  %v1176 = vunpack.c.l.b16 %v510
  %v1177 = vunpack.c.l.b16 %v511
  %v1178 = vunpack.c.l.b16 %v512
  %v1179 = vunpack.c.l.b16 %v513
  %v1180 = vunpack.c.l.b16 %v514
  %v1181 = vunpack.c.l.b16 %v515
  %v1182 = vunpack.c.l.b16 %v516
  %v1183 = vunpack.c.l.b16 %v517
  %v1184 = vunpack.c.l.b16 %v518
  %v1185 = vunpack.c.l.b16 %v519
  %v1186 = vunpack.c.l.b16 %v520
  %v1187 = vunpack.c.l.b16 %v521
  %v1188 = vunpack.c.l.b16 %v522
  %v1189 = vunpack.c.l.b16 %v523
  %v1190 = vunpack.c.l.b16 %v524
  %v1191 = vunpack.c.l.b16 %v525
  %v1192 = vunpack.c.l.b16 %v526
  %v1193 = vunpack.c.l.b16 %v527
  %v1194 = vunpack.c.l.b16 %v528
  %v1195 = vunpack.c.l.b16 %v529
  %v1196 = vunpack.c.l.b16 %v530
  %v1197 = vunpack.c.l.b16 %v531
  %v1198 = vunpack.c.l.b16 %v532
  %v1199 = vunpack.c.l.b16 %v533
  %v1200 = vunpack.c.l.b16 %v534
  %v1201 = vunpack.c.l.b16 %v535
  %v1202 = vunpack.c.l.b16 %v536
  %v1203 = vunpack.c.l.b16 %v537
  %v1204 = vunpack.c.l.b16 %v538
  %v1205 = vunpack.c.l.b16 %v539
  %v1206 = vunpack.c.l.b16 %v540
  %v1207 = vunpack.c.l.b16 %v541
  %v1208 = vunpack.c.l.b16 %v542
  %v1209 = vunpack.c.l.b16 %v543
  %v1210 = vunpack.c.l.b16 %v544
  %v1211 = vunpack.c.l.b16 %v545
  %v1212 = vunpack.c.l.b16 %v546
  %v1213 = vunpack.c.l.b16 %v547
  %v1214 = vunpack.c.l.b16 %v548
  %v1215 = vunpack.c.l.b16 %v549
  %v1216 = vunpack.c.l.b16 %v550
  %v1217 = vunpack.c.l.b16 %v551
  %v1218 = vunpack.c.l.b16 %v552
  %v1219 = vunpack.c.l.b16 %v553
  %v1220 = vunpack.c.l.b16 %v554
  %v1221 = vunpack.c.l.b16 %v555
  %v1222 = vunpack.c.l.b16 %v556
  %v1223 = vunpack.c.l.b16 %v557
  %v1224 = vunpack.c.l.b16 %v558
  %v1225 = vunpack.c.l.b16 %v559
  %v1226 = vunpack.c.l.b16 %v560
  %v1227 = vunpack.c.l.b16 %v561
  %v1228 = vunpack.c.l.b16 %v562
  %v1229 = vunpack.c.l.b16 %v563
  %v1230 = vunpack.c.l.b16 %v564
  %v1231 = vunpack.c.l.b16 %v565
  %v1232 = vunpack.c.l.b16 %v566
  %v1233 = vunpack.c.l.b16 %v567
  %v1234 = vunpack.c.l.b16 %v568
  %v1235 = vunpack.c.l.b16 %v569
  %v1236 = vunpack.c.l.b16 %v570
  %v1237 = vunpack.c.l.b16 %v571
  %v1238 = vunpack.c.l.b16 %v572
  %v1239 = vunpack.c.l.b16 %v573
  %v1240 = vunpack.c.l.b16 %v574
  %v1241 = vunpack.c.l.b16 %v575
  %v1242 = vunpack.c.l.b16 %v576
  %v1243 = vunpack.c.l.b16 %v577
  %v1244 = vunpack.c.l.b16 %v578
  %v1245 = vunpack.c.l.b16 %v579
  %v1246 = vunpack.c.l.b16 %v580
  %v1247 = vunpack.c.l.b16 %v581
  %v1248 = vunpack.c.l.b16 %v582
  %v1249 = vunpack.c.l.b16 %v583
  %v1250 = vunpack.c.l.b16 %v584
  %v1251 = vunpack.c.l.b16 %v585
  %v1252 = vunpack.c.l.b16 %v586
  %v1253 = vunpack.c.l.b16 %v587
  %v1254 = vunpack.c.l.b16 %v588
  %v1255 = vunpack.c.l.b16 %v589
  %v1256 = vunpack.c.l.b16 %v590
  %v1257 = vunpack.c.l.b16 %v591
  %v1258 = vunpack.c.l.b16 %v592
  %v1259 = vunpack.c.l.b16 %v593
  %v1260 = vunpack.c.l.b16 %v594
  %v1261 = vunpack.c.l.b16 %v595
  %v1262 = vunpack.c.l.b16 %v596
  %v1263 = vunpack.c.l.b16 %v597
  %v1264 = vunpack.c.l.b16 %v598
  %v1265 = vunpack.c.l.b16 %v599
  %v1266 = vunpack.c.l.b16 %v600
  %v1267 = vunpack.c.l.b16 %v601
  %v1268 = vunpack.c.l.b16 %v602
  %v1269 = vunpack.c.l.b16 %v603
  %v1270 = vunpack.c.l.b16 %v604
  %v1271 = vunpack.c.l.b16 %v605
  %v1272 = vunpack.c.l.b16 %v606
  %v1273 = vpack.c.b16 %v986, %v985
  %v1274 = vpack.c.b16 %v988, %v987
  %v1275 = vpack.c.b16 %v990, %v989
  %v1276 = vpack.c.b16 %v992, %v991
  %v1277 = vpack.c.b16 %v994, %v993
  %v1278 = vpack.c.b16 %v996, %v995
  %v1279 = vpack.c.b16 %v998, %v997
  %v1280 = vpack.c.b16 %v1000, %v999
  %v1281 = vpack.c.b16 %v1002, %v1001
  %v1282 = vpack.c.b16 %v1004, %v1003
  %v1283 = vpack.c.b16 %v1006, %v1005
  %v1284 = vpack.c.b16 %v1008, %v1007
  %v1285 = vpack.c.b16 %v1010, %v1009
  %v1286 = vpack.c.b16 %v1012, %v1011
  %v1287 = vpack.c.b16 %v1014, %v1013
  %v1288 = vpack.c.b16 %v1016, %v1015
  %v1289 = vpack.c.b16 %v1018, %v1017
  %v1290 = vpack.c.b16 %v1020, %v1019
  %v1291 = vpack.c.b16 %v1022, %v1021
  %v1292 = vpack.c.b16 %v1024, %v1023
  %v1293 = vpack.c.b16 %v1026, %v1025
  %v1294 = vpack.c.b16 %v1028, %v1027
  %v1295 = vpack.c.b16 %v1030, %v1029
  %v1296 = vpack.c.b16 %v1032, %v1031
  %v1297 = vpack.c.b16 %v1034, %v1033
  %v1298 = vpack.c.b16 %v1036, %v1035
  %v1299 = vpack.c.b16 %v1038, %v1037
  %v1300 = vpack.c.b16 %v1040, %v1039
  %v1301 = vpack.c.b16 %v1042, %v1041
  %v1302 = vpack.c.b16 %v1044, %v1043
  %v1303 = vpack.c.b16 %v1046, %v1045
  %v1304 = vpack.c.b16 %v1048, %v1047
  %v1305 = vpack.c.b16 %v1050, %v1049
  %v1306 = vpack.c.b16 %v1052, %v1051
  %v1307 = vpack.c.b16 %v1054, %v1053
  %v1308 = vpack.c.b16 %v1056, %v1055
  %v1309 = vpack.c.b16 %v1058, %v1057
  %v1310 = vpack.c.b16 %v1060, %v1059
  %v1311 = vpack.c.b16 %v1062, %v1061
  %v1312 = vpack.c.b16 %v1064, %v1063
  %v1313 = vpack.c.b16 %v1066, %v1065
  %v1314 = vpack.c.b16 %v1068, %v1067
  %v1315 = vpack.c.b16 %v1070, %v1069
  %v1316 = vpack.c.b16 %v1072, %v1071
  %v1317 = vpack.c.b16 %v1074, %v1073
  %v1318 = vpack.c.b16 %v1076, %v1075
  %v1319 = vpack.c.b16 %v1078, %v1077
  %v1320 = vpack.c.b16 %v1080, %v1079
  %v1321 = vpack.c.b16 %v1082, %v1081
  %v1322 = vpack.c.b16 %v1084, %v1083
  %v1323 = vpack.c.b16 %v1086, %v1085
  %v1324 = vpack.c.b16 %v1088, %v1087
  %v1325 = vpack.c.b16 %v1090, %v1089
  %v1326 = vpack.c.b16 %v1092, %v1091
  %v1327 = vpack.c.b16 %v1094, %v1093
  %v1328 = vpack.c.b16 %v1096, %v1095
  %v1329 = vpack.c.b16 %v1098, %v1097
  %v1330 = vpack.c.b16 %v1100, %v1099
  %v1331 = vpack.c.b16 %v1102, %v1101
  %v1332 = vpack.c.b16 %v1104, %v1103
  %v1333 = vpack.c.b16 %v1106, %v1105
  %v1334 = vpack.c.b16 %v1108, %v1107
  %v1335 = vpack.c.b16 %v1110, %v1109
  %v1336 = vpack.c.b16 %v1112, %v1111
  %v1337 = vpack.c.b16 %v1114, %v1113
  %v1338 = vpack.c.b16 %v1116, %v1115
  %v1339 = vpack.c.b16 %v1118, %v1117
  %v1340 = vpack.c.b16 %v1120, %v1119
  %v1341 = vpack.c.b16 %v1122, %v1121
  %v1342 = vpack.c.b16 %v1124, %v1123
  %v1343 = vpack.c.b16 %v1126, %v1125
  %v1344 = vpack.c.b16 %v1128, %v1127
  %v1345 = vpack.c.b16 %v1130, %v1129
  %v1346 = vpack.c.b16 %v1132, %v1131
  %v1347 = vpack.c.b16 %v1134, %v1133
  %v1348 = vpack.c.b16 %v1136, %v1135
  %v1349 = vpack.c.b16 %v1138, %v1137
  %v1350 = vpack.c.b16 %v1140, %v1139
  %v1351 = vpack.c.b16 %v1142, %v1141
  %v1352 = vpack.c.b16 %v1144, %v1143
  %v1353 = vpack.c.b16 %v1146, %v1145
  %v1354 = vpack.c.b16 %v1148, %v1147
  %v1355 = vpack.c.b16 %v1150, %v1149
  %v1356 = vpack.c.b16 %v1152, %v1151
  %v1357 = vpack.c.b16 %v1154, %v1153
  %v1358 = vpack.c.b16 %v1156, %v1155
  %v1359 = vpack.c.b16 %v1158, %v1157
  %v1360 = vpack.c.b16 %v1160, %v1159
  %v1361 = vpack.c.b16 %v1162, %v1161
  %v1362 = vpack.c.b16 %v1164, %v1163
  %v1363 = vpack.c.b16 %v1166, %v1165
  %v1364 = vpack.c.b16 %v1168, %v1167
  %v1365 = vpack.c.b16 %v1170, %v1169
  %v1366 = vpack.c.b16 %v1172, %v1171
  %v1367 = vpack.c.b16 %v1174, %v1173
  %v1368 = vpack.c.b16 %v1176, %v1175
  %v1369 = vpack.c.b16 %v1178, %v1177
  %v1370 = vpack.c.b16 %v1180, %v1179
  %v1371 = vpack.c.b16 %v1182, %v1181
  %v1372 = vpack.c.b16 %v1184, %v1183
  %v1373 = vpack.c.b16 %v1186, %v1185
  %v1374 = vpack.c.b16 %v1188, %v1187
  %v1375 = vpack.c.b16 %v1190, %v1189
  %v1376 = vpack.c.b16 %v1192, %v1191
  %v1377 = vpack.c.b16 %v1194, %v1193
  %v1378 = vpack.c.b16 %v1196, %v1195
  %v1379 = vpack.c.b16 %v1198, %v1197
  %v1380 = vpack.c.b16 %v1200, %v1199
  %v1381 = vpack.c.b16 %v1202, %v1201
  %v1382 = vpack.c.b16 %v1204, %v1203
  %v1383 = vpack.c.b16 %v1206, %v1205
  %v1384 = vpack.c.b16 %v1208, %v1207
  %v1385 = vpack.c.b16 %v1210, %v1209
  %v1386 = vpack.c.b16 %v1212, %v1211
  %v1387 = vpack.c.b16 %v1214, %v1213
  %v1388 = vpack.c.b16 %v1216, %v1215
  %v1389 = vpack.c.b16 %v1218, %v1217
  %v1390 = vpack.c.b16 %v1220, %v1219
  %v1391 = vpack.c.b16 %v1222, %v1221
  %v1392 = vpack.c.b16 %v1224, %v1223
  %v1393 = vpack.c.b16 %v1226, %v1225
  %v1394 = vpack.c.b16 %v1228, %v1227
  %v1395 = vpack.c.b16 %v1230, %v1229
  %v1396 = vpack.c.b16 %v1232, %v1231
  %v1397 = vpack.c.b16 %v1234, %v1233
  %v1398 = vpack.c.b16 %v1236, %v1235
  %v1399 = vpack.c.b16 %v1238, %v1237
  %v1400 = vpack.c.b16 %v1240, %v1239
  %v1401 = vpack.c.b16 %v1242, %v1241
  %v1402 = vpack.c.b16 %v1244, %v1243
  %v1403 = vpack.c.b16 %v1246, %v1245
  %v1404 = vpack.c.b16 %v1248, %v1247
  %v1405 = vpack.c.b16 %v1250, %v1249
  %v1406 = vpack.c.b16 %v1252, %v1251
  %v1407 = vpack.c.b16 %v1254, %v1253
  %v1408 = vpack.c.b16 %v1256, %v1255
  %v1409 = vpack.c.b16 %v1258, %v1257
  %v1410 = vpack.c.b16 %v1260, %v1259
  %v1411 = vpack.c.b16 %v1262, %v1261
  %v1412 = vpack.c.b16 %v1264, %v1263
  %v1413 = vpack.c.b16 %v1266, %v1265
  %v1414 = vpack.c.b16 %v1268, %v1267
  %v1415 = vpack.c.b16 %v1270, %v1269
  %v1416 = vpack.c.b16 %v1272, %v1271
  %1561 = vmatprep.subr.bf16.mxu0 0
  %1562 = vmatpush1.bf16.msra.mxu0 %v1273
  %1563 = vmatprep.subr.bf16.mxu0 0
  %1564 = vmatpush1.bf16.msra.mxu0 %v1274
  %1565 = vmatprep.subr.bf16.mxu0 0
  %1566 = vmatpush1.bf16.msra.mxu0 %v1275
  %1567 = vmatprep.subr.bf16.mxu0 0
  %1568 = vmatpush1.bf16.msra.mxu0 %v1276
  %1569 = vmatprep.subr.bf16.mxu0 0
  %1570 = vmatpush1.bf16.msra.mxu0 %v1277
  %1571 = vmatprep.subr.bf16.mxu0 0
  %1572 = vmatpush1.bf16.msra.mxu0 %v1278
  %1573 = vmatprep.subr.bf16.mxu0 0
  %1574 = vmatpush1.bf16.msra.mxu0 %v1279
  %1575 = vmatprep.subr.bf16.mxu0 0
  %1576 = vmatpush1.bf16.msra.mxu0 %v1280
  %1577 = vmatprep.subr.bf16.mxu0 0
  %1578 = vmatpush1.bf16.msra.mxu0 %v1281
  %1579 = vmatprep.subr.bf16.mxu0 0
  %1580 = vmatpush1.bf16.msra.mxu0 %v1282
  %1581 = vmatprep.subr.bf16.mxu0 0
  %1582 = vmatpush1.bf16.msra.mxu0 %v1283
  %1583 = vmatprep.subr.bf16.mxu0 0
  %1584 = vmatpush1.bf16.msra.mxu0 %v1284
  %1585 = vmatprep.subr.bf16.mxu0 0
  %1586 = vmatpush1.bf16.msra.mxu0 %v1285
  %1587 = vmatprep.subr.bf16.mxu0 0
  %1588 = vmatpush1.bf16.msra.mxu0 %v1286
  %1589 = vmatprep.subr.bf16.mxu0 0
  %1590 = vmatpush1.bf16.msra.mxu0 %v1287
  %1591 = vmatprep.subr.bf16.mxu0 0
  %1592 = vmatpush1.bf16.msra.mxu0 %v1288
  %1593 = vmatprep.mubr.bf16.mxu0 %v662
  %1594 = vmatmul.mubr.bf16.gmra.mrb[0].mxu0 %v661
  %v1595 = vpop.f32.mrb[0].mxu0
  %v1596 = vadd.f32 0.0, %v1595
  %v1597 = vpop.f32.mrb[0].mxu0
  %v1598 = vpop.f32.mrb[0].mxu0
  %v1599 = vadd.f32 0.0, %v1598
  %v1600 = vpop.f32.mrb[0].mxu0
  %1601 = vdwg.mxu0
  %1602 = vmatprep.subr.bf16.mxu0 0
  %1603 = vmatpush1.bf16.msra.mxu0 %v1289
  %1604 = vmatprep.subr.bf16.mxu0 0
  %1605 = vmatpush1.bf16.msra.mxu0 %v1290
  %1606 = vmatprep.subr.bf16.mxu0 0
  %1607 = vmatpush1.bf16.msra.mxu0 %v1291
  %1608 = vmatprep.subr.bf16.mxu0 0
  %1609 = vmatpush1.bf16.msra.mxu0 %v1292
  %1610 = vmatprep.subr.bf16.mxu0 0
  %1611 = vmatpush1.bf16.msra.mxu0 %v1293
  %1612 = vmatprep.subr.bf16.mxu0 0
  %1613 = vmatpush1.bf16.msra.mxu0 %v1294
  %1614 = vmatprep.subr.bf16.mxu0 0
  %1615 = vmatpush1.bf16.msra.mxu0 %v1295
  %1616 = vmatprep.subr.bf16.mxu0 0
  %1617 = vmatpush1.bf16.msra.mxu0 %v1296
  %1618 = vmatprep.subr.bf16.mxu0 0
  %1619 = vmatpush1.bf16.msra.mxu0 %v1297
  %1620 = vmatprep.subr.bf16.mxu0 0
  %1621 = vmatpush1.bf16.msra.mxu0 %v1298
  %1622 = vmatprep.subr.bf16.mxu0 0
  %1623 = vmatpush1.bf16.msra.mxu0 %v1299
  %1624 = vmatprep.subr.bf16.mxu0 0
  %1625 = vmatpush1.bf16.msra.mxu0 %v1300
  %1626 = vmatprep.subr.bf16.mxu0 0
  %1627 = vmatpush1.bf16.msra.mxu0 %v1301
  %1628 = vmatprep.subr.bf16.mxu0 0
  %1629 = vmatpush1.bf16.msra.mxu0 %v1302
  %1630 = vmatprep.subr.bf16.mxu0 0
  %1631 = vmatpush1.bf16.msra.mxu0 %v1303
  %1632 = vmatprep.subr.bf16.mxu0 0
  %1633 = vmatpush1.bf16.msra.mxu0 %v1304
  %1634 = vmatprep.mubr.bf16.mxu0 %v664
  %1635 = vmatmul.mubr.bf16.gmra.mrb[0].mxu0 %v663
  %v1636 = vpop.f32.mrb[0].mxu0
  %v1637 = vadd.f32 %v1596, %v1636
  %v1638 = vpop.f32.mrb[0].mxu0
  %v1639 = vpop.f32.mrb[0].mxu0
  %v1640 = vadd.f32 %v1599, %v1639
  %v1641 = vpop.f32.mrb[0].mxu0
  %1642 = vdwg.mxu0
  %1643 = vmatprep.subr.bf16.mxu0 0
  %1644 = vmatpush1.bf16.msra.mxu0 %v1305
  %1645 = vmatprep.subr.bf16.mxu0 0
  %1646 = vmatpush1.bf16.msra.mxu0 %v1306
  %1647 = vmatprep.subr.bf16.mxu0 0
  %1648 = vmatpush1.bf16.msra.mxu0 %v1307
  %1649 = vmatprep.subr.bf16.mxu0 0
  %1650 = vmatpush1.bf16.msra.mxu0 %v1308
  %1651 = vmatprep.subr.bf16.mxu0 0
  %1652 = vmatpush1.bf16.msra.mxu0 %v1309
  %1653 = vmatprep.subr.bf16.mxu0 0
  %1654 = vmatpush1.bf16.msra.mxu0 %v1310
  %1655 = vmatprep.subr.bf16.mxu0 0
  %1656 = vmatpush1.bf16.msra.mxu0 %v1311
  %1657 = vmatprep.subr.bf16.mxu0 0
  %1658 = vmatpush1.bf16.msra.mxu0 %v1312
  %1659 = vmatprep.subr.bf16.mxu0 0
  %1660 = vmatpush1.bf16.msra.mxu0 %v1313
  %1661 = vmatprep.subr.bf16.mxu0 0
  %1662 = vmatpush1.bf16.msra.mxu0 %v1314
  %1663 = vmatprep.subr.bf16.mxu0 0
  %1664 = vmatpush1.bf16.msra.mxu0 %v1315
  %1665 = vmatprep.subr.bf16.mxu0 0
  %1666 = vmatpush1.bf16.msra.mxu0 %v1316
  %1667 = vmatprep.subr.bf16.mxu0 0
  %1668 = vmatpush1.bf16.msra.mxu0 %v1317
  %1669 = vmatprep.subr.bf16.mxu0 0
  %1670 = vmatpush1.bf16.msra.mxu0 %v1318
  %1671 = vmatprep.subr.bf16.mxu0 0
  %1672 = vmatpush1.bf16.msra.mxu0 %v1319
  %1673 = vmatprep.subr.bf16.mxu0 0
  %1674 = vmatpush1.bf16.msra.mxu0 %v1320
  %1675 = vmatprep.mubr.bf16.mxu0 %v666
  %1676 = vmatmul.mubr.bf16.gmra.mrb[0].mxu0 %v665
  %v1677 = vpop.f32.mrb[0].mxu0
  %v1678 = vadd.f32 %v1637, %v1677
  %v1679 = vpop.f32.mrb[0].mxu0
  %v1680 = vpop.f32.mrb[0].mxu0
  %v1681 = vadd.f32 %v1640, %v1680
  %v1682 = vpop.f32.mrb[0].mxu0
  %1683 = vdwg.mxu0
  %1684 = vmatprep.subr.bf16.mxu0 0
  %1685 = vmatpush1.bf16.msra.mxu0 %v1321
  %1686 = vmatprep.subr.bf16.mxu0 0
  %1687 = vmatpush1.bf16.msra.mxu0 %v1322
  %1688 = vmatprep.subr.bf16.mxu0 0
  %1689 = vmatpush1.bf16.msra.mxu0 %v1323
  %1690 = vmatprep.subr.bf16.mxu0 0
  %1691 = vmatpush1.bf16.msra.mxu0 %v1324
  %1692 = vmatprep.subr.bf16.mxu0 0
  %1693 = vmatpush1.bf16.msra.mxu0 %v1325
  %1694 = vmatprep.subr.bf16.mxu0 0
  %1695 = vmatpush1.bf16.msra.mxu0 %v1326
  %1696 = vmatprep.subr.bf16.mxu0 0
  %1697 = vmatpush1.bf16.msra.mxu0 %v1327
  %1698 = vmatprep.subr.bf16.mxu0 0
  %1699 = vmatpush1.bf16.msra.mxu0 %v1328
  %1700 = vmatprep.subr.bf16.mxu0 0
  %1701 = vmatpush1.bf16.msra.mxu0 %v1329
  %1702 = vmatprep.subr.bf16.mxu0 0
  %1703 = vmatpush1.bf16.msra.mxu0 %v1330
  %1704 = vmatprep.subr.bf16.mxu0 0
  %1705 = vmatpush1.bf16.msra.mxu0 %v1331
  %1706 = vmatprep.subr.bf16.mxu0 0
  %1707 = vmatpush1.bf16.msra.mxu0 %v1332
  %1708 = vmatprep.subr.bf16.mxu0 0
  %1709 = vmatpush1.bf16.msra.mxu0 %v1333
  %1710 = vmatprep.subr.bf16.mxu0 0
  %1711 = vmatpush1.bf16.msra.mxu0 %v1334
  %1712 = vmatprep.subr.bf16.mxu0 0
  %1713 = vmatpush1.bf16.msra.mxu0 %v1335
  %1714 = vmatprep.subr.bf16.mxu0 0
  %1715 = vmatpush1.bf16.msra.mxu0 %v1336
  %1716 = vmatprep.mubr.bf16.mxu0 %v668
  %1717 = vmatmul.mubr.bf16.gmra.mrb[0].mxu0 %v667
  %v1718 = vpop.f32.mrb[0].mxu0
  %v1719 = vadd.f32 %v1678, %v1718
  %v1720 = vpop.f32.mrb[0].mxu0
  %v1721 = vpop.f32.mrb[0].mxu0
  %v1722 = vadd.f32 %v1681, %v1721
  %v1723 = vpop.f32.mrb[0].mxu0
  %1724 = vdwg.mxu0
  %1725 = vmatprep.subr.bf16.mxu0 0
  %1726 = vmatpush1.bf16.msra.mxu0 %v1337
  %1727 = vmatprep.subr.bf16.mxu0 0
  %1728 = vmatpush1.bf16.msra.mxu0 %v1338
  %1729 = vmatprep.subr.bf16.mxu0 0
  %1730 = vmatpush1.bf16.msra.mxu0 %v1339
  %1731 = vmatprep.subr.bf16.mxu0 0
  %1732 = vmatpush1.bf16.msra.mxu0 %v1340
  %1733 = vmatprep.subr.bf16.mxu0 0
  %1734 = vmatpush1.bf16.msra.mxu0 %v1341
  %1735 = vmatprep.subr.bf16.mxu0 0
  %1736 = vmatpush1.bf16.msra.mxu0 %v1342
  %1737 = vmatprep.subr.bf16.mxu0 0
  %1738 = vmatpush1.bf16.msra.mxu0 %v1343
  %1739 = vmatprep.subr.bf16.mxu0 0
  %1740 = vmatpush1.bf16.msra.mxu0 %v1344
  %1741 = vmatprep.subr.bf16.mxu0 0
  %1742 = vmatpush1.bf16.msra.mxu0 %v1345
  %1743 = vmatprep.subr.bf16.mxu0 0
  %1744 = vmatpush1.bf16.msra.mxu0 %v1346
  %1745 = vmatprep.subr.bf16.mxu0 0
  %1746 = vmatpush1.bf16.msra.mxu0 %v1347
  %1747 = vmatprep.subr.bf16.mxu0 0
  %1748 = vmatpush1.bf16.msra.mxu0 %v1348
  %1749 = vmatprep.subr.bf16.mxu0 0
  %1750 = vmatpush1.bf16.msra.mxu0 %v1349
  %1751 = vmatprep.subr.bf16.mxu0 0
  %1752 = vmatpush1.bf16.msra.mxu0 %v1350
  %1753 = vmatprep.subr.bf16.mxu0 0
  %1754 = vmatpush1.bf16.msra.mxu0 %v1351
  %1755 = vmatprep.subr.bf16.mxu0 0
  %1756 = vmatpush1.bf16.msra.mxu0 %v1352
  %1757 = vmatprep.mubr.bf16.mxu0 %v670
  %1758 = vmatmul.mubr.bf16.gmra.mrb[0].mxu0 %v669
  %v1759 = vpop.f32.mrb[0].mxu0
  %v1760 = vadd.f32 %v1719, %v1759
  %v1761 = vpop.f32.mrb[0].mxu0
  %v1762 = vpop.f32.mrb[0].mxu0
  %v1763 = vadd.f32 %v1722, %v1762
  %v1764 = vpop.f32.mrb[0].mxu0
  %1765 = vdwg.mxu0
  %1766 = vmatprep.subr.bf16.mxu0 0
  %1767 = vmatpush1.bf16.msra.mxu0 %v1353
  %1768 = vmatprep.subr.bf16.mxu0 0
  %1769 = vmatpush1.bf16.msra.mxu0 %v1354
  %1770 = vmatprep.subr.bf16.mxu0 0
  %1771 = vmatpush1.bf16.msra.mxu0 %v1355
  %1772 = vmatprep.subr.bf16.mxu0 0
  %1773 = vmatpush1.bf16.msra.mxu0 %v1356
  %1774 = vmatprep.subr.bf16.mxu0 0
  %1775 = vmatpush1.bf16.msra.mxu0 %v1357
  %1776 = vmatprep.subr.bf16.mxu0 0
  %1777 = vmatpush1.bf16.msra.mxu0 %v1358
  %1778 = vmatprep.subr.bf16.mxu0 0
  %1779 = vmatpush1.bf16.msra.mxu0 %v1359
  %1780 = vmatprep.subr.bf16.mxu0 0
  %1781 = vmatpush1.bf16.msra.mxu0 %v1360
  %1782 = vmatprep.subr.bf16.mxu0 0
  %1783 = vmatpush1.bf16.msra.mxu0 %v1361
  %1784 = vmatprep.subr.bf16.mxu0 0
  %1785 = vmatpush1.bf16.msra.mxu0 %v1362
  %1786 = vmatprep.subr.bf16.mxu0 0
  %1787 = vmatpush1.bf16.msra.mxu0 %v1363
  %1788 = vmatprep.subr.bf16.mxu0 0
  %1789 = vmatpush1.bf16.msra.mxu0 %v1364
  %1790 = vmatprep.subr.bf16.mxu0 0
  %1791 = vmatpush1.bf16.msra.mxu0 %v1365
  %1792 = vmatprep.subr.bf16.mxu0 0
  %1793 = vmatpush1.bf16.msra.mxu0 %v1366
  %1794 = vmatprep.subr.bf16.mxu0 0
  %1795 = vmatpush1.bf16.msra.mxu0 %v1367
  %1796 = vmatprep.subr.bf16.mxu0 0
  %1797 = vmatpush1.bf16.msra.mxu0 %v1368
  %1798 = vmatprep.mubr.bf16.mxu0 %v672
  %1799 = vmatmul.mubr.bf16.gmra.mrb[0].mxu0 %v671
  %v1800 = vpop.f32.mrb[0].mxu0
  %v1801 = vadd.f32 %v1760, %v1800
  %v1802 = vpop.f32.mrb[0].mxu0
  %v1803 = vpop.f32.mrb[0].mxu0
  %v1804 = vadd.f32 %v1763, %v1803
  %v1805 = vpop.f32.mrb[0].mxu0
  %1806 = vdwg.mxu0
  %1807 = vmatprep.subr.bf16.mxu0 0
  %1808 = vmatpush1.bf16.msra.mxu0 %v1369
  %1809 = vmatprep.subr.bf16.mxu0 0
  %1810 = vmatpush1.bf16.msra.mxu0 %v1370
  %1811 = vmatprep.subr.bf16.mxu0 0
  %1812 = vmatpush1.bf16.msra.mxu0 %v1371
  %1813 = vmatprep.subr.bf16.mxu0 0
  %1814 = vmatpush1.bf16.msra.mxu0 %v1372
  %1815 = vmatprep.subr.bf16.mxu0 0
  %1816 = vmatpush1.bf16.msra.mxu0 %v1373
  %1817 = vmatprep.subr.bf16.mxu0 0
  %1818 = vmatpush1.bf16.msra.mxu0 %v1374
  %1819 = vmatprep.subr.bf16.mxu0 0
  %1820 = vmatpush1.bf16.msra.mxu0 %v1375
  %1821 = vmatprep.subr.bf16.mxu0 0
  %1822 = vmatpush1.bf16.msra.mxu0 %v1376
  %1823 = vmatprep.subr.bf16.mxu0 0
  %1824 = vmatpush1.bf16.msra.mxu0 %v1377
  %1825 = vmatprep.subr.bf16.mxu0 0
  %1826 = vmatpush1.bf16.msra.mxu0 %v1378
  %1827 = vmatprep.subr.bf16.mxu0 0
  %1828 = vmatpush1.bf16.msra.mxu0 %v1379
  %1829 = vmatprep.subr.bf16.mxu0 0
  %1830 = vmatpush1.bf16.msra.mxu0 %v1380
  %1831 = vmatprep.subr.bf16.mxu0 0
  %1832 = vmatpush1.bf16.msra.mxu0 %v1381
  %1833 = vmatprep.subr.bf16.mxu0 0
  %1834 = vmatpush1.bf16.msra.mxu0 %v1382
  %1835 = vmatprep.subr.bf16.mxu0 0
  %1836 = vmatpush1.bf16.msra.mxu0 %v1383
  %1837 = vmatprep.subr.bf16.mxu0 0
  %1838 = vmatpush1.bf16.msra.mxu0 %v1384
  %1839 = vmatprep.mubr.bf16.mxu0 %v674
  %1840 = vmatmul.mubr.bf16.gmra.mrb[0].mxu0 %v673
  %v1841 = vpop.f32.mrb[0].mxu0
  %v1842 = vadd.f32 %v1801, %v1841
  %v1843 = vpop.f32.mrb[0].mxu0
  %v1844 = vpop.f32.mrb[0].mxu0
  %v1845 = vadd.f32 %v1804, %v1844
  %v1846 = vpop.f32.mrb[0].mxu0
  %1847 = vdwg.mxu0
  %1848 = vmatprep.subr.bf16.mxu0 0
  %1849 = vmatpush1.bf16.msra.mxu0 %v1385
  %1850 = vmatprep.subr.bf16.mxu0 0
  %1851 = vmatpush1.bf16.msra.mxu0 %v1386
  %1852 = vmatprep.subr.bf16.mxu0 0
  %1853 = vmatpush1.bf16.msra.mxu0 %v1387
  %1854 = vmatprep.subr.bf16.mxu0 0
  %1855 = vmatpush1.bf16.msra.mxu0 %v1388
  %1856 = vmatprep.subr.bf16.mxu0 0
  %1857 = vmatpush1.bf16.msra.mxu0 %v1389
  %1858 = vmatprep.subr.bf16.mxu0 0
  %1859 = vmatpush1.bf16.msra.mxu0 %v1390
  %1860 = vmatprep.subr.bf16.mxu0 0
  %1861 = vmatpush1.bf16.msra.mxu0 %v1391
  %1862 = vmatprep.subr.bf16.mxu0 0
  %1863 = vmatpush1.bf16.msra.mxu0 %v1392
  %1864 = vmatprep.subr.bf16.mxu0 0
  %1865 = vmatpush1.bf16.msra.mxu0 %v1393
  %1866 = vmatprep.subr.bf16.mxu0 0
  %1867 = vmatpush1.bf16.msra.mxu0 %v1394
  %1868 = vmatprep.subr.bf16.mxu0 0
  %1869 = vmatpush1.bf16.msra.mxu0 %v1395
  %1870 = vmatprep.subr.bf16.mxu0 0
  %1871 = vmatpush1.bf16.msra.mxu0 %v1396
  %1872 = vmatprep.subr.bf16.mxu0 0
  %1873 = vmatpush1.bf16.msra.mxu0 %v1397
  %1874 = vmatprep.subr.bf16.mxu0 0
  %1875 = vmatpush1.bf16.msra.mxu0 %v1398
  %1876 = vmatprep.subr.bf16.mxu0 0
  %1877 = vmatpush1.bf16.msra.mxu0 %v1399
  %1878 = vmatprep.subr.bf16.mxu0 0
  %1879 = vmatpush1.bf16.msra.mxu0 %v1400
  %1880 = vmatprep.mubr.bf16.mxu0 %v676
  %1881 = vmatmul.mubr.bf16.gmra.mrb[0].mxu0 %v675
  %v1882 = vpop.f32.mrb[0].mxu0
  %v1883 = vadd.f32 %v1842, %v1882
  %v1884 = vpop.f32.mrb[0].mxu0
  %v1885 = vpop.f32.mrb[0].mxu0
  %v1886 = vadd.f32 %v1845, %v1885
  %v1887 = vpop.f32.mrb[0].mxu0
  %1888 = vdwg.mxu0
  %1889 = vmatprep.subr.bf16.mxu0 0
  %1890 = vmatpush1.bf16.msra.mxu0 %v1401
  %1891 = vmatprep.subr.bf16.mxu0 0
  %1892 = vmatpush1.bf16.msra.mxu0 %v1402
  %1893 = vmatprep.subr.bf16.mxu0 0
  %1894 = vmatpush1.bf16.msra.mxu0 %v1403
  %1895 = vmatprep.subr.bf16.mxu0 0
  %1896 = vmatpush1.bf16.msra.mxu0 %v1404
  %1897 = vmatprep.subr.bf16.mxu0 0
  %1898 = vmatpush1.bf16.msra.mxu0 %v1405
  %1899 = vmatprep.subr.bf16.mxu0 0
  %1900 = vmatpush1.bf16.msra.mxu0 %v1406
  %1901 = vmatprep.subr.bf16.mxu0 0
  %1902 = vmatpush1.bf16.msra.mxu0 %v1407
  %1903 = vmatprep.subr.bf16.mxu0 0
  %1904 = vmatpush1.bf16.msra.mxu0 %v1408
  %1905 = vmatprep.subr.bf16.mxu0 0
  %1906 = vmatpush1.bf16.msra.mxu0 %v1409
  %1907 = vmatprep.subr.bf16.mxu0 0
  %1908 = vmatpush1.bf16.msra.mxu0 %v1410
  %1909 = vmatprep.subr.bf16.mxu0 0
  %1910 = vmatpush1.bf16.msra.mxu0 %v1411
  %1911 = vmatprep.subr.bf16.mxu0 0
  %1912 = vmatpush1.bf16.msra.mxu0 %v1412
  %1913 = vmatprep.subr.bf16.mxu0 0
  %1914 = vmatpush1.bf16.msra.mxu0 %v1413
  %1915 = vmatprep.subr.bf16.mxu0 0
  %1916 = vmatpush1.bf16.msra.mxu0 %v1414
  %1917 = vmatprep.subr.bf16.mxu0 0
  %1918 = vmatpush1.bf16.msra.mxu0 %v1415
  %1919 = vmatprep.subr.bf16.mxu0 0
  %1920 = vmatpush1.bf16.msra.mxu0 %v1416
  %1921 = vmatprep.mubr.bf16.mxu0 %v678
  %1922 = vmatmul.mubr.bf16.gmra.mrb[0].mxu0 %v677
  %v1923 = vpop.f32.mrb[0].mxu0
  %v1924 = vadd.f32 %v1883, %v1923
  %v1925 = vpop.f32.mrb[0].mxu0
  %v1926 = vpop.f32.mrb[0].mxu0
  %v1927 = vadd.f32 %v1886, %v1926
  %v1928 = vpop.f32.mrb[0].mxu0
  %1929 = vdwg.mxu0
  %1930 = vset.pattern.permute.xlu0 1
  %1931 = vperm.xlu0 %1930, %v174
  %v1932 = vpop.permute.xlu0 %1931
  %1934 = vset.pattern.permute.xlu0 1
  %1935 = vperm.xlu0 %1934, %v175
  %v1936 = vpop.permute.xlu0 %1935
  %v1938 = vmul.f32 %v1924, %v1932
  %v1939 = vmul.f32 %v1927, %v1936
  %v1940 = vld [vmem:[%s4] sm:$0xff]
  %v1941 = vld [vmem:[%s4 + $0x8] sm:$0xff]
  %v1942 = vld [vmem:[%s4 + $0x10] sm:$0xff]
  %v1943 = vld [vmem:[%s4 + $0x18] sm:$0xff]
  %v1944 = vld [vmem:[%s4 + $0x20] sm:$0xff]
  %v1945 = vld [vmem:[%s4 + $0x28] sm:$0xff]
  %v1946 = vld [vmem:[%s4 + $0x30] sm:$0xff]
  %v1947 = vld [vmem:[%s4 + $0x38] sm:$0xff]
  %v1948 = vld [vmem:[%s4 + $0x40] sm:$0xff]
  %v1949 = vld [vmem:[%s4 + $0x48] sm:$0xff]
  %v1950 = vld [vmem:[%s4 + $0x50] sm:$0xff]
  %v1951 = vld [vmem:[%s4 + $0x58] sm:$0xff]
  %v1952 = vld [vmem:[%s4 + $0x60] sm:$0xff]
  %v1953 = vld [vmem:[%s4 + $0x68] sm:$0xff]
  %v1954 = vld [vmem:[%s4 + $0x70] sm:$0xff]
  %v1955 = vld [vmem:[%s4 + $0x78] sm:$0xff]
  %v1956 = vld [vmem:[%s4 + $0x80] sm:$0xff]
  %v1957 = vld [vmem:[%s4 + $0x88] sm:$0xff]
  %v1958 = vld [vmem:[%s4 + $0x90] sm:$0xff]
  %v1959 = vld [vmem:[%s4 + $0x98] sm:$0xff]
  %v1960 = vld [vmem:[%s4 + $0xa0] sm:$0xff]
  %v1961 = vld [vmem:[%s4 + $0xa8] sm:$0xff]
  %v1962 = vld [vmem:[%s4 + $0xb0] sm:$0xff]
  %v1963 = vld [vmem:[%s4 + $0xb8] sm:$0xff]
  %v1964 = vld [vmem:[%s4 + $0xc0] sm:$0xff]
  %v1965 = vld [vmem:[%s4 + $0xc8] sm:$0xff]
  %v1966 = vld [vmem:[%s4 + $0xd0] sm:$0xff]
  %v1967 = vld [vmem:[%s4 + $0xd8] sm:$0xff]
  %v1968 = vld [vmem:[%s4 + $0xe0] sm:$0xff]
  %v1969 = vld [vmem:[%s4 + $0xe8] sm:$0xff]
  %v1970 = vld [vmem:[%s4 + $0xf0] sm:$0xff]
  %v1971 = vld [vmem:[%s4 + $0xf8] sm:$0xf]
  %v1972 = vld [vmem:[%s4 + $0xfc] sm:$0xff]
  %v1973 = vld [vmem:[%s4 + $0x104] sm:$0xff]
  %v1974 = vld [vmem:[%s4 + $0x10c] sm:$0xff]
  %v1975 = vld [vmem:[%s4 + $0x114] sm:$0xff]
  %v1976 = vld [vmem:[%s4 + $0x11c] sm:$0xff]
  %v1977 = vld [vmem:[%s4 + $0x124] sm:$0xff]
  %v1978 = vld [vmem:[%s4 + $0x12c] sm:$0xff]
  %v1979 = vld [vmem:[%s4 + $0x134] sm:$0xff]
  %v1980 = vld [vmem:[%s4 + $0x13c] sm:$0xff]
  %v1981 = vld [vmem:[%s4 + $0x144] sm:$0xff]
  %v1982 = vld [vmem:[%s4 + $0x14c] sm:$0xff]
  %v1983 = vld [vmem:[%s4 + $0x154] sm:$0xff]
  %v1984 = vld [vmem:[%s4 + $0x15c] sm:$0xff]
  %v1985 = vld [vmem:[%s4 + $0x164] sm:$0xff]
  %v1986 = vld [vmem:[%s4 + $0x16c] sm:$0xff]
  %v1987 = vld [vmem:[%s4 + $0x174] sm:$0xff]
  %v1988 = vld [vmem:[%s4 + $0x17c] sm:$0xff]
  %v1989 = vld [vmem:[%s4 + $0x184] sm:$0xff]
  %v1990 = vld [vmem:[%s4 + $0x18c] sm:$0xff]
  %v1991 = vld [vmem:[%s4 + $0x194] sm:$0xff]
  %v1992 = vld [vmem:[%s4 + $0x19c] sm:$0xff]
  %v1993 = vld [vmem:[%s4 + $0x1a4] sm:$0xff]
  %v1994 = vld [vmem:[%s4 + $0x1ac] sm:$0xff]
  %v1995 = vld [vmem:[%s4 + $0x1b4] sm:$0xff]
  %v1996 = vld [vmem:[%s4 + $0x1bc] sm:$0xff]
  %v1997 = vld [vmem:[%s4 + $0x1c4] sm:$0xff]
  %v1998 = vld [vmem:[%s4 + $0x1cc] sm:$0xff]
  %v1999 = vld [vmem:[%s4 + $0x1d4] sm:$0xff]
  %v2000 = vld [vmem:[%s4 + $0x1dc] sm:$0xff]
  %v2001 = vld [vmem:[%s4 + $0x1e4] sm:$0xff]
  %v2002 = vld [vmem:[%s4 + $0x1ec] sm:$0xff]
  %v2003 = vld [vmem:[%s4 + $0x1f4] sm:$0xf]
  %v2004 = vld [vmem:[%s12] sm:$0xf]
  %v2005 = vld [vmem:[%s12 + $0x4] sm:$0xf]
  %v2006 = vld [vmem:[%s12 + $0x8] sm:$0xf]
  %v2007 = vld [vmem:[%s12 + $0xc] sm:$0xf]
  %v2008 = vld [vmem:[%s12 + $0x10] sm:$0xf]
  %v2009 = vld [vmem:[%s12 + $0x14] sm:$0xf]
  %v2010 = vld [vmem:[%s12 + $0x18] sm:$0xf]
  %v2011 = vld [vmem:[%s12 + $0x1c] sm:$0xf]
  %v2012 = vld [vmem:[%s12 + $0x20] sm:$0xf]
  %v2013 = vld [vmem:[%s12 + $0x24] sm:$0xf]
  %v2014 = vld [vmem:[%s12 + $0x28] sm:$0xf]
  %v2015 = vld [vmem:[%s12 + $0x2c] sm:$0xf]
  %v2016 = vld [vmem:[%s12 + $0x30] sm:$0xf]
  %v2017 = vld [vmem:[%s12 + $0x34] sm:$0xf]
  %v2018 = vld [vmem:[%s12 + $0x38] sm:$0xf]
  %v2019 = vld [vmem:[%s12 + $0x3c] sm:$0xf]
  %v2020 = vld [vmem:[%s12 + $0x40] sm:$0xf]
  %v2021 = vld [vmem:[%s12 + $0x44] sm:$0xf]
  %v2022 = vld [vmem:[%s12 + $0x48] sm:$0xf]
  %v2023 = vld [vmem:[%s12 + $0x4c] sm:$0xf]
  %v2024 = vld [vmem:[%s12 + $0x50] sm:$0xf]
  %v2025 = vld [vmem:[%s12 + $0x54] sm:$0xf]
  %v2026 = vld [vmem:[%s12 + $0x58] sm:$0xf]
  %v2027 = vld [vmem:[%s12 + $0x5c] sm:$0xf]
  %v2028 = vld [vmem:[%s12 + $0x60] sm:$0xf]
  %v2029 = vld [vmem:[%s12 + $0x64] sm:$0xf]
  %v2030 = vld [vmem:[%s12 + $0x68] sm:$0xf]
  %v2031 = vld [vmem:[%s12 + $0x6c] sm:$0xf]
  %v2032 = vld [vmem:[%s12 + $0x70] sm:$0xf]
  %v2033 = vld [vmem:[%s12 + $0x74] sm:$0xf]
  %v2034 = vld [vmem:[%s12 + $0x78] sm:$0xf]
  %v2035 = vld [vmem:[%s12 + $0x7c] sm:$0xf]
  %v2036 = vld [vmem:[%s12 + $0x80] sm:$0xf]
  %v2037 = vld [vmem:[%s12 + $0x84] sm:$0xf]
  %v2038 = vld [vmem:[%s12 + $0x88] sm:$0xf]
  %v2039 = vld [vmem:[%s12 + $0x8c] sm:$0xf]
  %v2040 = vld [vmem:[%s12 + $0x90] sm:$0xf]
  %v2041 = vld [vmem:[%s12 + $0x94] sm:$0xf]
  %v2042 = vld [vmem:[%s12 + $0x98] sm:$0xf]
  %v2043 = vld [vmem:[%s12 + $0x9c] sm:$0xf]
  %v2044 = vld [vmem:[%s12 + $0xa0] sm:$0xf]
  %v2045 = vld [vmem:[%s12 + $0xa4] sm:$0xf]
  %v2046 = vld [vmem:[%s12 + $0xa8] sm:$0xf]
  %v2047 = vld [vmem:[%s12 + $0xac] sm:$0xf]
  %v2048 = vld [vmem:[%s12 + $0xb0] sm:$0xf]
  %v2049 = vld [vmem:[%s12 + $0xb4] sm:$0xf]
  %v2050 = vld [vmem:[%s12 + $0xb8] sm:$0xf]
  %v2051 = vld [vmem:[%s12 + $0xbc] sm:$0xf]
  %v2052 = vld [vmem:[%s12 + $0xc0] sm:$0xf]
  %v2053 = vld [vmem:[%s12 + $0xc4] sm:$0xf]
  %v2054 = vld [vmem:[%s12 + $0xc8] sm:$0xf]
  %v2055 = vld [vmem:[%s12 + $0xcc] sm:$0xf]
  %v2056 = vld [vmem:[%s12 + $0xd0] sm:$0xf]
  %v2057 = vld [vmem:[%s12 + $0xd4] sm:$0xf]
  %v2058 = vld [vmem:[%s12 + $0xd8] sm:$0xf]
  %v2059 = vld [vmem:[%s12 + $0xdc] sm:$0xf]
  %v2060 = vld [vmem:[%s12 + $0xe0] sm:$0xf]
  %v2061 = vld [vmem:[%s12 + $0xe4] sm:$0xf]
  %v2062 = vld [vmem:[%s12 + $0xe8] sm:$0xf]
  %v2063 = vld [vmem:[%s12 + $0xec] sm:$0xf]
  %v2064 = vld [vmem:[%s12 + $0xf0] sm:$0xf]
  %v2065 = vld [vmem:[%s12 + $0xf4] sm:$0xf]
  %v2066 = vld [vmem:[%s12 + $0xf8] sm:$0xf]
  %v2067 = vld [vmem:[%s12 + $0xfc] sm:$0xf]
  %v2068 = vld [vmem:[%s12 + $0x100] sm:$0xf]
  %v2069 = vld [vmem:[%s12 + $0x104] sm:$0xf]
  %v2070 = vld [vmem:[%s12 + $0x108] sm:$0xf]
  %v2071 = vld [vmem:[%s12 + $0x10c] sm:$0xf]
  %v2072 = vld [vmem:[%s12 + $0x110] sm:$0xf]
  %v2073 = vld [vmem:[%s12 + $0x114] sm:$0xf]
  %v2074 = vld [vmem:[%s12 + $0x118] sm:$0xf]
  %v2075 = vld [vmem:[%s12 + $0x11c] sm:$0xf]
  %v2076 = vld [vmem:[%s12 + $0x120] sm:$0xf]
  %v2077 = vld [vmem:[%s12 + $0x124] sm:$0xf]
  %v2078 = vld [vmem:[%s12 + $0x128] sm:$0xf]
  %v2079 = vld [vmem:[%s12 + $0x12c] sm:$0xf]
  %v2080 = vld [vmem:[%s12 + $0x130] sm:$0xf]
  %v2081 = vld [vmem:[%s12 + $0x134] sm:$0xf]
  %v2082 = vld [vmem:[%s12 + $0x138] sm:$0xf]
  %v2083 = vld [vmem:[%s12 + $0x13c] sm:$0xf]
  %v2084 = vld [vmem:[%s12 + $0x140] sm:$0xf]
  %v2085 = vld [vmem:[%s12 + $0x144] sm:$0xf]
  %v2086 = vld [vmem:[%s12 + $0x148] sm:$0xf]
  %v2087 = vld [vmem:[%s12 + $0x14c] sm:$0xf]
  %v2088 = vld [vmem:[%s12 + $0x150] sm:$0xf]
  %v2089 = vld [vmem:[%s12 + $0x154] sm:$0xf]
  %v2090 = vld [vmem:[%s12 + $0x158] sm:$0xf]
  %v2091 = vld [vmem:[%s12 + $0x15c] sm:$0xf]
  %v2092 = vld [vmem:[%s12 + $0x160] sm:$0xf]
  %v2093 = vld [vmem:[%s12 + $0x164] sm:$0xf]
  %v2094 = vld [vmem:[%s12 + $0x168] sm:$0xf]
  %v2095 = vld [vmem:[%s12 + $0x16c] sm:$0xf]
  %v2096 = vld [vmem:[%s12 + $0x170] sm:$0xf]
  %v2097 = vld [vmem:[%s12 + $0x174] sm:$0xf]
  %v2098 = vld [vmem:[%s12 + $0x178] sm:$0xf]
  %v2099 = vld [vmem:[%s12 + $0x17c] sm:$0xf]
  %v2100 = vld [vmem:[%s12 + $0x180] sm:$0xf]
  %v2101 = vld [vmem:[%s12 + $0x184] sm:$0xf]
  %v2102 = vld [vmem:[%s12 + $0x188] sm:$0xf]
  %v2103 = vld [vmem:[%s12 + $0x18c] sm:$0xf]
  %v2104 = vld [vmem:[%s12 + $0x190] sm:$0xf]
  %v2105 = vld [vmem:[%s12 + $0x194] sm:$0xf]
  %v2106 = vld [vmem:[%s12 + $0x198] sm:$0xf]
  %v2107 = vld [vmem:[%s12 + $0x19c] sm:$0xf]
  %v2108 = vld [vmem:[%s12 + $0x1a0] sm:$0xf]
  %v2109 = vld [vmem:[%s12 + $0x1a4] sm:$0xf]
  %v2110 = vld [vmem:[%s12 + $0x1a8] sm:$0xf]
  %v2111 = vld [vmem:[%s12 + $0x1ac] sm:$0xf]
  %v2112 = vld [vmem:[%s12 + $0x1b0] sm:$0xf]
  %v2113 = vld [vmem:[%s12 + $0x1b4] sm:$0xf]
  %v2114 = vld [vmem:[%s12 + $0x1b8] sm:$0xf]
  %v2115 = vld [vmem:[%s12 + $0x1bc] sm:$0xf]
  %v2116 = vld [vmem:[%s12 + $0x1c0] sm:$0xf]
  %v2117 = vld [vmem:[%s12 + $0x1c4] sm:$0xf]
  %v2118 = vld [vmem:[%s12 + $0x1c8] sm:$0xf]
  %v2119 = vld [vmem:[%s12 + $0x1cc] sm:$0xf]
  %v2120 = vld [vmem:[%s12 + $0x1d0] sm:$0xf]
  %v2121 = vld [vmem:[%s12 + $0x1d4] sm:$0xf]
  %v2122 = vld [vmem:[%s12 + $0x1d8] sm:$0xf]
  %v2123 = vld [vmem:[%s12 + $0x1dc] sm:$0xf]
  %v2124 = vld [vmem:[%s12 + $0x1e0] sm:$0xf]
  %v2125 = vld [vmem:[%s12 + $0x1e4] sm:$0xf]
  %v2126 = vld [vmem:[%s12 + $0x1e8] sm:$0xf]
  %v2127 = vld [vmem:[%s12 + $0x1ec] sm:$0xf]
  %v2128 = vld [vmem:[%s12 + $0x1f0] sm:$0xf]
  %v2129 = vld [vmem:[%s12 + $0x1f4] sm:$0xf]
  %v2130 = vld [vmem:[%s12 + $0x1f8] sm:$0xf]
  %v2131 = vld [vmem:[%s12 + $0x1fc] sm:$0xf]
  %v2132 = vld [vmem:[%s12 + $0x200] sm:$0xf]
  %v2133 = vld [vmem:[%s12 + $0x204] sm:$0xf]
  %v2134 = vld [vmem:[%s12 + $0x208] sm:$0xf]
  %v2135 = vld [vmem:[%s12 + $0x20c] sm:$0xf]
  %v2136 = vld [vmem:[%s12 + $0x210] sm:$0xf]
  %v2137 = vld [vmem:[%s12 + $0x214] sm:$0xf]
  %v2138 = vld [vmem:[%s12 + $0x218] sm:$0xf]
  %v2139 = vld [vmem:[%s12 + $0x21c] sm:$0xf]
  %v2140 = vld [vmem:[%s12 + $0x220] sm:$0xf]
  %v2141 = vld [vmem:[%s12 + $0x224] sm:$0xf]
  %v2142 = vld [vmem:[%s12 + $0x228] sm:$0xf]
  %v2143 = vld [vmem:[%s12 + $0x22c] sm:$0xf]
  %v2144 = vld [vmem:[%s12 + $0x230] sm:$0xf]
  %v2145 = vld [vmem:[%s12 + $0x234] sm:$0xf]
  %v2146 = vld [vmem:[%s12 + $0x238] sm:$0xf]
  %v2147 = vld [vmem:[%s12 + $0x23c] sm:$0xf]
  %v2148 = vld [vmem:[%s12 + $0x240] sm:$0xf]
  %v2149 = vld [vmem:[%s12 + $0x244] sm:$0xf]
  %v2150 = vld [vmem:[%s12 + $0x248] sm:$0xf]
  %v2151 = vld [vmem:[%s12 + $0x24c] sm:$0xf]
  %v2152 = vld [vmem:[%s12 + $0x250] sm:$0xf]
  %v2153 = vld [vmem:[%s12 + $0x254] sm:$0xf]
  %v2154 = vld [vmem:[%s12 + $0x258] sm:$0xf]
  %v2155 = vld [vmem:[%s12 + $0x25c] sm:$0xf]
  %v2156 = vld [vmem:[%s12 + $0x260] sm:$0xf]
  %v2157 = vld [vmem:[%s12 + $0x264] sm:$0xf]
  %v2158 = vld [vmem:[%s12 + $0x268] sm:$0xf]
  %v2159 = vld [vmem:[%s12 + $0x26c] sm:$0xf]
  %v2160 = vld [vmem:[%s12 + $0x270] sm:$0xf]
  %v2161 = vld [vmem:[%s12 + $0x274] sm:$0xf]
  %v2162 = vld [vmem:[%s12 + $0x278] sm:$0xf]
  %v2163 = vld [vmem:[%s12 + $0x27c] sm:$0xf]
  %v2164 = vld [vmem:[%s12 + $0x280] sm:$0xf]
  %v2165 = vld [vmem:[%s12 + $0x284] sm:$0xf]
  %v2166 = vld [vmem:[%s12 + $0x288] sm:$0xf]
  %v2167 = vld [vmem:[%s12 + $0x28c] sm:$0xf]
  %v2168 = vld [vmem:[%s12 + $0x290] sm:$0xf]
  %v2169 = vld [vmem:[%s12 + $0x294] sm:$0xf]
  %v2170 = vld [vmem:[%s12 + $0x298] sm:$0xf]
  %v2171 = vld [vmem:[%s12 + $0x29c] sm:$0xf]
  %v2172 = vld [vmem:[%s12 + $0x2a0] sm:$0xf]
  %v2173 = vld [vmem:[%s12 + $0x2a4] sm:$0xf]
  %v2174 = vld [vmem:[%s12 + $0x2a8] sm:$0xf]
  %v2175 = vld [vmem:[%s12 + $0x2ac] sm:$0xf]
  %v2176 = vld [vmem:[%s12 + $0x2b0] sm:$0xf]
  %v2177 = vld [vmem:[%s12 + $0x2b4] sm:$0xf]
  %v2178 = vld [vmem:[%s12 + $0x2b8] sm:$0xf]
  %v2179 = vld [vmem:[%s12 + $0x2bc] sm:$0xf]
  %v2180 = vld [vmem:[%s12 + $0x2c0] sm:$0xf]
  %v2181 = vld [vmem:[%s12 + $0x2c4] sm:$0xf]
  %v2182 = vld [vmem:[%s12 + $0x2c8] sm:$0xf]
  %v2183 = vld [vmem:[%s12 + $0x2cc] sm:$0xf]
  %v2184 = vld [vmem:[%s12 + $0x2d0] sm:$0xf]
  %v2185 = vld [vmem:[%s12 + $0x2d4] sm:$0xf]
  %v2186 = vld [vmem:[%s12 + $0x2d8] sm:$0xf]
  %v2187 = vld [vmem:[%s12 + $0x2dc] sm:$0xf]
  %v2188 = vld [vmem:[%s12 + $0x2e0] sm:$0xf]
  %v2189 = vld [vmem:[%s12 + $0x2e4] sm:$0xf]
  %v2190 = vld [vmem:[%s12 + $0x2e8] sm:$0xf]
  %v2191 = vld [vmem:[%s12 + $0x2ec] sm:$0xf]
  %v2192 = vld [vmem:[%s12 + $0x2f0] sm:$0xf]
  %v2193 = vld [vmem:[%s12 + $0x2f4] sm:$0xf]
  %v2194 = vld [vmem:[%s12 + $0x2f8] sm:$0xf]
  %v2195 = vld [vmem:[%s12 + $0x2fc] sm:$0xf]
  %v2196 = vld [vmem:[%s12 + $0x300] sm:$0xf]
  %v2197 = vld [vmem:[%s12 + $0x304] sm:$0xf]
  %v2198 = vld [vmem:[%s12 + $0x308] sm:$0xf]
  %v2199 = vld [vmem:[%s12 + $0x30c] sm:$0xf]
  %v2200 = vld [vmem:[%s12 + $0x310] sm:$0xf]
  %v2201 = vld [vmem:[%s12 + $0x314] sm:$0xf]
  %v2202 = vld [vmem:[%s12 + $0x318] sm:$0xf]
  %v2203 = vld [vmem:[%s12 + $0x31c] sm:$0xf]
  %v2204 = vld [vmem:[%s12 + $0x320] sm:$0xf]
  %v2205 = vld [vmem:[%s12 + $0x324] sm:$0xf]
  %v2206 = vld [vmem:[%s12 + $0x328] sm:$0xf]
  %v2207 = vld [vmem:[%s12 + $0x32c] sm:$0xf]
  %v2208 = vld [vmem:[%s12 + $0x330] sm:$0xf]
  %v2209 = vld [vmem:[%s12 + $0x334] sm:$0xf]
  %v2210 = vld [vmem:[%s12 + $0x338] sm:$0xf]
  %v2211 = vld [vmem:[%s12 + $0x33c] sm:$0xf]
  %v2212 = vld [vmem:[%s12 + $0x340] sm:$0xf]
  %v2213 = vld [vmem:[%s12 + $0x344] sm:$0xf]
  %v2214 = vld [vmem:[%s12 + $0x348] sm:$0xf]
  %v2215 = vld [vmem:[%s12 + $0x34c] sm:$0xf]
  %v2216 = vld [vmem:[%s12 + $0x350] sm:$0xf]
  %v2217 = vld [vmem:[%s12 + $0x354] sm:$0xf]
  %v2218 = vld [vmem:[%s12 + $0x358] sm:$0xf]
  %v2219 = vld [vmem:[%s12 + $0x35c] sm:$0xf]
  %v2220 = vld [vmem:[%s12 + $0x360] sm:$0xf]
  %v2221 = vld [vmem:[%s12 + $0x364] sm:$0xf]
  %v2222 = vld [vmem:[%s12 + $0x368] sm:$0xf]
  %v2223 = vld [vmem:[%s12 + $0x36c] sm:$0xf]
  %v2224 = vld [vmem:[%s12 + $0x370] sm:$0xf]
  %v2225 = vld [vmem:[%s12 + $0x374] sm:$0xf]
  %v2226 = vld [vmem:[%s12 + $0x378] sm:$0xf]
  %v2227 = vld [vmem:[%s12 + $0x37c] sm:$0xf]
  %v2228 = vld [vmem:[%s12 + $0x380] sm:$0xf]
  %v2229 = vld [vmem:[%s12 + $0x384] sm:$0xf]
  %v2230 = vld [vmem:[%s12 + $0x388] sm:$0xf]
  %v2231 = vld [vmem:[%s12 + $0x38c] sm:$0xf]
  %v2232 = vld [vmem:[%s12 + $0x390] sm:$0xf]
  %v2233 = vld [vmem:[%s12 + $0x394] sm:$0xf]
  %v2234 = vld [vmem:[%s12 + $0x398] sm:$0xf]
  %v2235 = vld [vmem:[%s12 + $0x39c] sm:$0xf]
  %v2236 = vld [vmem:[%s12 + $0x3a0] sm:$0xf]
  %v2237 = vld [vmem:[%s12 + $0x3a4] sm:$0xf]
  %v2238 = vld [vmem:[%s12 + $0x3a8] sm:$0xf]
  %v2239 = vld [vmem:[%s12 + $0x3ac] sm:$0xf]
  %v2240 = vld [vmem:[%s12 + $0x3b0] sm:$0xf]
  %v2241 = vld [vmem:[%s12 + $0x3b4] sm:$0xf]
  %v2242 = vld [vmem:[%s12 + $0x3b8] sm:$0xf]
  %v2243 = vld [vmem:[%s12 + $0x3bc] sm:$0xf]
  %v2244 = vld [vmem:[%s12 + $0x3c0] sm:$0xf]
  %v2245 = vld [vmem:[%s12 + $0x3c4] sm:$0xf]
  %v2246 = vld [vmem:[%s12 + $0x3c8] sm:$0xf]
  %v2247 = vld [vmem:[%s12 + $0x3cc] sm:$0xf]
  %v2248 = vld [vmem:[%s12 + $0x3d0] sm:$0xf]
  %v2249 = vld [vmem:[%s12 + $0x3d4] sm:$0xf]
  %v2250 = vld [vmem:[%s12 + $0x3d8] sm:$0xf]
  %v2251 = vld [vmem:[%s12 + $0x3dc] sm:$0xf]
  %v2252 = vld [vmem:[%s12 + $0x3e0] sm:$0xf]
  %v2253 = vld [vmem:[%s12 + $0x3e4] sm:$0xf]
  %v2254 = vld [vmem:[%s12 + $0x3e8] sm:$0xf]
  %v2255 = vld [vmem:[%s12 + $0x3ec] sm:$0xf]
  %v2256 = vld [vmem:[%s12 + $0x3f0] sm:$0xf]
  %v2257 = vld [vmem:[%s12 + $0x3f4] sm:$0xf]
  %v2258 = vld [vmem:[%s12 + $0x3f8] sm:$0xf]
  %v2259 = vld [vmem:[%s12 + $0x3fc] sm:$0xf]
  %v2260 = vld [vmem:[%s12 + $0x400] sm:$0xf]
  %v2261 = vld [vmem:[%s12 + $0x404] sm:$0xf]
  %v2262 = vld [vmem:[%s12 + $0x408] sm:$0xf]
  %v2263 = vld [vmem:[%s12 + $0x40c] sm:$0xf]
  %v2264 = vld [vmem:[%s12 + $0x410] sm:$0xf]
  %v2265 = vld [vmem:[%s12 + $0x414] sm:$0xf]
  %v2266 = vld [vmem:[%s12 + $0x418] sm:$0xf]
  %v2267 = vld [vmem:[%s12 + $0x41c] sm:$0xf]
  %v2268 = vld [vmem:[%s12 + $0x420] sm:$0xf]
  %v2269 = vld [vmem:[%s12 + $0x424] sm:$0xf]
  %v2270 = vld [vmem:[%s12 + $0x428] sm:$0xf]
  %v2271 = vld [vmem:[%s12 + $0x42c] sm:$0xf]
  %v2272 = vld [vmem:[%s12 + $0x430] sm:$0xf]
  %v2273 = vld [vmem:[%s12 + $0x434] sm:$0xf]
  %v2274 = vld [vmem:[%s12 + $0x438] sm:$0xf]
  %v2275 = vld [vmem:[%s12 + $0x43c] sm:$0xf]
  %v2276 = vld [vmem:[%s12 + $0x440] sm:$0xf]
  %v2277 = vld [vmem:[%s12 + $0x444] sm:$0xf]
  %v2278 = vld [vmem:[%s12 + $0x448] sm:$0xf]
  %v2279 = vld [vmem:[%s12 + $0x44c] sm:$0xf]
  %v2280 = vld [vmem:[%s12 + $0x450] sm:$0xf]
  %v2281 = vld [vmem:[%s12 + $0x454] sm:$0xf]
  %v2282 = vld [vmem:[%s12 + $0x458] sm:$0xf]
  %v2283 = vld [vmem:[%s12 + $0x45c] sm:$0xf]
  %v2284 = vld [vmem:[%s12 + $0x460] sm:$0xf]
  %v2285 = vld [vmem:[%s12 + $0x464] sm:$0xf]
  %v2286 = vld [vmem:[%s12 + $0x468] sm:$0xf]
  %v2287 = vld [vmem:[%s12 + $0x46c] sm:$0xf]
  %v2288 = vld [vmem:[%s12 + $0x470] sm:$0xf]
  %v2289 = vld [vmem:[%s12 + $0x474] sm:$0xf]
  %v2290 = vld [vmem:[%s12 + $0x478] sm:$0xf]
  %v2291 = vld [vmem:[%s12 + $0x47c] sm:$0xf]
  %v2292 = vld [vmem:[%s12 + $0x480] sm:$0xf]
  %v2293 = vld [vmem:[%s12 + $0x484] sm:$0xf]
  %v2294 = vld [vmem:[%s12 + $0x488] sm:$0xf]
  %v2295 = vld [vmem:[%s12 + $0x48c] sm:$0xf]
  %v2296 = vld [vmem:[%s12 + $0x490] sm:$0xf]
  %v2297 = vld [vmem:[%s12 + $0x494] sm:$0xf]
  %v2298 = vld [vmem:[%s12 + $0x498] sm:$0xf]
  %v2299 = vld [vmem:[%s12 + $0x49c] sm:$0xf]
  %v2300 = vld [vmem:[%s12 + $0x4a0] sm:$0xf]
  %v2301 = vld [vmem:[%s12 + $0x4a4] sm:$0xf]
  %v2302 = vld [vmem:[%s12 + $0x4a8] sm:$0xf]
  %v2303 = vld [vmem:[%s12 + $0x4ac] sm:$0xf]
  %v2304 = vld [vmem:[%s12 + $0x4b0] sm:$0xf]
  %v2305 = vld [vmem:[%s12 + $0x4b4] sm:$0xf]
  %v2306 = vld [vmem:[%s12 + $0x4b8] sm:$0xf]
  %v2307 = vld [vmem:[%s12 + $0x4bc] sm:$0xf]
  %v2308 = vld [vmem:[%s12 + $0x4c0] sm:$0xf]
  %v2309 = vld [vmem:[%s12 + $0x4c4] sm:$0xf]
  %v2310 = vld [vmem:[%s12 + $0x4c8] sm:$0xf]
  %v2311 = vld [vmem:[%s12 + $0x4cc] sm:$0xf]
  %v2312 = vld [vmem:[%s12 + $0x4d0] sm:$0xf]
  %v2313 = vld [vmem:[%s12 + $0x4d4] sm:$0xf]
  %v2314 = vld [vmem:[%s12 + $0x4d8] sm:$0xf]
  %v2315 = vld [vmem:[%s12 + $0x4dc] sm:$0xf]
  %v2316 = vld [vmem:[%s12 + $0x4e0] sm:$0xf]
  %v2317 = vld [vmem:[%s12 + $0x4e4] sm:$0xf]
  %v2318 = vld [vmem:[%s12 + $0x4e8] sm:$0xf]
  %v2319 = vld [vmem:[%s12 + $0x4ec] sm:$0xf]
  %v2320 = vld [vmem:[%s12 + $0x4f0] sm:$0xf]
  %v2321 = vld [vmem:[%s12 + $0x4f4] sm:$0xf]
  %v2322 = vld [vmem:[%s12 + $0x4f8] sm:$0xf]
  %v2323 = vld [vmem:[%s12 + $0x4fc] sm:$0xf]
  %v2324 = vld [vmem:[%s12 + $0x500] sm:$0xf]
  %v2325 = vld [vmem:[%s12 + $0x504] sm:$0xf]
  %v2326 = vld [vmem:[%s12 + $0x508] sm:$0xf]
  %v2327 = vld [vmem:[%s12 + $0x50c] sm:$0xf]
  %v2328 = vld [vmem:[%s12 + $0x510] sm:$0xf]
  %v2329 = vld [vmem:[%s12 + $0x514] sm:$0xf]
  %v2330 = vld [vmem:[%s12 + $0x518] sm:$0xf]
  %v2331 = vld [vmem:[%s12 + $0x51c] sm:$0xf]
  %v2332 = vld [vmem:[%s12 + $0x520] sm:$0xf]
  %v2333 = vld [vmem:[%s12 + $0x524] sm:$0xf]
  %v2334 = vld [vmem:[%s12 + $0x528] sm:$0xf]
  %v2335 = vld [vmem:[%s12 + $0x52c] sm:$0xf]
  %v2336 = vld [vmem:[%s12 + $0x530] sm:$0xf]
  %v2337 = vld [vmem:[%s12 + $0x534] sm:$0xf]
  %v2338 = vld [vmem:[%s12 + $0x538] sm:$0xf]
  %v2339 = vld [vmem:[%s12 + $0x53c] sm:$0xf]
  %v2340 = vld [vmem:[%s12 + $0x540] sm:$0xf]
  %v2341 = vld [vmem:[%s12 + $0x544] sm:$0xf]
  %v2342 = vld [vmem:[%s12 + $0x548] sm:$0xf]
  %v2343 = vld [vmem:[%s12 + $0x54c] sm:$0xf]
  %v2344 = vld [vmem:[%s12 + $0x550] sm:$0xf]
  %v2345 = vld [vmem:[%s12 + $0x554] sm:$0xf]
  %v2346 = vld [vmem:[%s12 + $0x558] sm:$0xf]
  %v2347 = vld [vmem:[%s12 + $0x55c] sm:$0xf]
  %v2348 = vld [vmem:[%s12 + $0x560] sm:$0xf]
  %v2349 = vld [vmem:[%s12 + $0x564] sm:$0xf]
  %v2350 = vld [vmem:[%s12 + $0x568] sm:$0xf]
  %v2351 = vld [vmem:[%s12 + $0x56c] sm:$0xf]
  %v2352 = vld [vmem:[%s12 + $0x570] sm:$0xf]
  %v2353 = vld [vmem:[%s12 + $0x574] sm:$0xf]
  %v2354 = vld [vmem:[%s12 + $0x578] sm:$0xf]
  %v2355 = vld [vmem:[%s12 + $0x57c] sm:$0xf]
  %v2356 = vld [vmem:[%s12 + $0x580] sm:$0xf]
  %v2357 = vld [vmem:[%s12 + $0x584] sm:$0xf]
  %v2358 = vld [vmem:[%s12 + $0x588] sm:$0xf]
  %v2359 = vld [vmem:[%s12 + $0x58c] sm:$0xf]
  %v2360 = vld [vmem:[%s12 + $0x590] sm:$0xf]
  %v2361 = vld [vmem:[%s12 + $0x594] sm:$0xf]
  %v2362 = vld [vmem:[%s12 + $0x598] sm:$0xf]
  %v2363 = vld [vmem:[%s12 + $0x59c] sm:$0xf]
  %v2364 = vld [vmem:[%s12 + $0x5a0] sm:$0xf]
  %v2365 = vld [vmem:[%s12 + $0x5a4] sm:$0xf]
  %v2366 = vld [vmem:[%s12 + $0x5a8] sm:$0xf]
  %v2367 = vld [vmem:[%s12 + $0x5ac] sm:$0xf]
  %v2368 = vld [vmem:[%s12 + $0x5b0] sm:$0xf]
  %v2369 = vld [vmem:[%s12 + $0x5b4] sm:$0xf]
  %v2370 = vld [vmem:[%s12 + $0x5b8] sm:$0xf]
  %v2371 = vld [vmem:[%s12 + $0x5bc] sm:$0xf]
  %v2372 = vld [vmem:[%s12 + $0x5c0] sm:$0xf]
  %v2373 = vld [vmem:[%s12 + $0x5c4] sm:$0xf]
  %v2374 = vld [vmem:[%s12 + $0x5c8] sm:$0xf]
  %v2375 = vld [vmem:[%s12 + $0x5cc] sm:$0xf]
  %v2376 = vld [vmem:[%s12 + $0x5d0] sm:$0xf]
  %v2377 = vld [vmem:[%s12 + $0x5d4] sm:$0xf]
  %v2378 = vld [vmem:[%s12 + $0x5d8] sm:$0xf]
  %v2379 = vld [vmem:[%s12 + $0x5dc] sm:$0xf]
  %v2380 = vld [vmem:[%s12 + $0x5e0] sm:$0xf]
  %v2381 = vld [vmem:[%s12 + $0x5e4] sm:$0xf]
  %v2382 = vld [vmem:[%s12 + $0x5e8] sm:$0xf]
  %v2383 = vld [vmem:[%s12 + $0x5ec] sm:$0xf]
  %v2384 = vld [vmem:[%s12 + $0x5f0] sm:$0xf]
  %v2385 = vld [vmem:[%s12 + $0x5f4] sm:$0xf]
  %v2386 = vld [vmem:[%s12 + $0x5f8] sm:$0xf]
  %v2387 = vld [vmem:[%s12 + $0x5fc] sm:$0xf]
  %v2388 = vld [vmem:[%s12 + $0x600] sm:$0xf]
  %v2389 = vld [vmem:[%s12 + $0x604] sm:$0xf]
  %v2390 = vld [vmem:[%s12 + $0x608] sm:$0xf]
  %v2391 = vld [vmem:[%s12 + $0x60c] sm:$0xf]
  %v2392 = vld [vmem:[%s12 + $0x610] sm:$0xf]
  %v2393 = vld [vmem:[%s12 + $0x614] sm:$0xf]
  %v2394 = vld [vmem:[%s12 + $0x618] sm:$0xf]
  %v2395 = vld [vmem:[%s12 + $0x61c] sm:$0xf]
  %v2396 = vld [vmem:[%s12 + $0x620] sm:$0xf]
  %v2397 = vld [vmem:[%s12 + $0x624] sm:$0xf]
  %v2398 = vld [vmem:[%s12 + $0x628] sm:$0xf]
  %v2399 = vld [vmem:[%s12 + $0x62c] sm:$0xf]
  %v2400 = vld [vmem:[%s12 + $0x630] sm:$0xf]
  %v2401 = vld [vmem:[%s12 + $0x634] sm:$0xf]
  %v2402 = vld [vmem:[%s12 + $0x638] sm:$0xf]
  %v2403 = vld [vmem:[%s12 + $0x63c] sm:$0xf]
  %v2404 = vld [vmem:[%s12 + $0x640] sm:$0xf]
  %v2405 = vld [vmem:[%s12 + $0x644] sm:$0xf]
  %v2406 = vld [vmem:[%s12 + $0x648] sm:$0xf]
  %v2407 = vld [vmem:[%s12 + $0x64c] sm:$0xf]
  %v2408 = vld [vmem:[%s12 + $0x650] sm:$0xf]
  %v2409 = vld [vmem:[%s12 + $0x654] sm:$0xf]
  %v2410 = vld [vmem:[%s12 + $0x658] sm:$0xf]
  %v2411 = vld [vmem:[%s12 + $0x65c] sm:$0xf]
  %v2412 = vld [vmem:[%s12 + $0x660] sm:$0xf]
  %v2413 = vld [vmem:[%s12 + $0x664] sm:$0xf]
  %v2414 = vld [vmem:[%s12 + $0x668] sm:$0xf]
  %v2415 = vld [vmem:[%s12 + $0x66c] sm:$0xf]
  %v2416 = vld [vmem:[%s12 + $0x670] sm:$0xf]
  %v2417 = vld [vmem:[%s12 + $0x674] sm:$0xf]
  %v2418 = vld [vmem:[%s12 + $0x678] sm:$0xf]
  %v2419 = vld [vmem:[%s12 + $0x67c] sm:$0xf]
  %v2420 = vld [vmem:[%s12 + $0x680] sm:$0xf]
  %v2421 = vld [vmem:[%s12 + $0x684] sm:$0xf]
  %v2422 = vld [vmem:[%s12 + $0x688] sm:$0xf]
  %v2423 = vld [vmem:[%s12 + $0x68c] sm:$0xf]
  %v2424 = vld [vmem:[%s12 + $0x690] sm:$0xf]
  %v2425 = vld [vmem:[%s12 + $0x694] sm:$0xf]
  %v2426 = vld [vmem:[%s12 + $0x698] sm:$0xf]
  %v2427 = vld [vmem:[%s12 + $0x69c] sm:$0xf]
  %v2428 = vld [vmem:[%s12 + $0x6a0] sm:$0xf]
  %v2429 = vld [vmem:[%s12 + $0x6a4] sm:$0xf]
  %v2430 = vld [vmem:[%s12 + $0x6a8] sm:$0xf]
  %v2431 = vld [vmem:[%s12 + $0x6ac] sm:$0xf]
  %v2432 = vld [vmem:[%s12 + $0x6b0] sm:$0xf]
  %v2433 = vld [vmem:[%s12 + $0x6b4] sm:$0xf]
  %v2434 = vld [vmem:[%s12 + $0x6b8] sm:$0xf]
  %v2435 = vld [vmem:[%s12 + $0x6bc] sm:$0xf]
  %v2436 = vld [vmem:[%s12 + $0x6c0] sm:$0xf]
  %v2437 = vld [vmem:[%s12 + $0x6c4] sm:$0xf]
  %v2438 = vld [vmem:[%s12 + $0x6c8] sm:$0xf]
  %v2439 = vld [vmem:[%s12 + $0x6cc] sm:$0xf]
  %v2440 = vld [vmem:[%s12 + $0x6d0] sm:$0xf]
  %v2441 = vld [vmem:[%s12 + $0x6d4] sm:$0xf]
  %v2442 = vld [vmem:[%s12 + $0x6d8] sm:$0xf]
  %v2443 = vld [vmem:[%s12 + $0x6dc] sm:$0xf]
  %v2444 = vld [vmem:[%s12 + $0x6e0] sm:$0xf]
  %v2445 = vld [vmem:[%s12 + $0x6e4] sm:$0xf]
  %v2446 = vld [vmem:[%s12 + $0x6e8] sm:$0xf]
  %v2447 = vld [vmem:[%s12 + $0x6ec] sm:$0xf]
  %v2448 = vld [vmem:[%s12 + $0x6f0] sm:$0xf]
  %v2449 = vld [vmem:[%s12 + $0x6f4] sm:$0xf]
  %v2450 = vld [vmem:[%s12 + $0x6f8] sm:$0xf]
  %v2451 = vld [vmem:[%s12 + $0x6fc] sm:$0xf]
  %v2452 = vld [vmem:[%s12 + $0x700] sm:$0xf]
  %v2453 = vld [vmem:[%s12 + $0x704] sm:$0xf]
  %v2454 = vld [vmem:[%s12 + $0x708] sm:$0xf]
  %v2455 = vld [vmem:[%s12 + $0x70c] sm:$0xf]
  %v2456 = vld [vmem:[%s12 + $0x710] sm:$0xf]
  %v2457 = vld [vmem:[%s12 + $0x714] sm:$0xf]
  %v2458 = vld [vmem:[%s12 + $0x718] sm:$0xf]
  %v2459 = vld [vmem:[%s12 + $0x71c] sm:$0xf]
  %v2460 = vld [vmem:[%s12 + $0x720] sm:$0xf]
  %v2461 = vld [vmem:[%s12 + $0x724] sm:$0xf]
  %v2462 = vld [vmem:[%s12 + $0x728] sm:$0xf]
  %v2463 = vld [vmem:[%s12 + $0x72c] sm:$0xf]
  %v2464 = vld [vmem:[%s12 + $0x730] sm:$0xf]
  %v2465 = vld [vmem:[%s12 + $0x734] sm:$0xf]
  %v2466 = vld [vmem:[%s12 + $0x738] sm:$0xf]
  %v2467 = vld [vmem:[%s12 + $0x73c] sm:$0xf]
  %v2468 = vld [vmem:[%s12 + $0x740] sm:$0xf]
  %v2469 = vld [vmem:[%s12 + $0x744] sm:$0xf]
  %v2470 = vld [vmem:[%s12 + $0x748] sm:$0xf]
  %v2471 = vld [vmem:[%s12 + $0x74c] sm:$0xf]
  %v2472 = vld [vmem:[%s12 + $0x750] sm:$0xf]
  %v2473 = vld [vmem:[%s12 + $0x754] sm:$0xf]
  %v2474 = vld [vmem:[%s12 + $0x758] sm:$0xf]
  %v2475 = vld [vmem:[%s12 + $0x75c] sm:$0xf]
  %v2476 = vld [vmem:[%s12 + $0x760] sm:$0xf]
  %v2477 = vld [vmem:[%s12 + $0x764] sm:$0xf]
  %v2478 = vld [vmem:[%s12 + $0x768] sm:$0xf]
  %v2479 = vld [vmem:[%s12 + $0x76c] sm:$0xf]
  %v2480 = vld [vmem:[%s12 + $0x770] sm:$0xf]
  %v2481 = vld [vmem:[%s12 + $0x774] sm:$0xf]
  %v2482 = vld [vmem:[%s12 + $0x778] sm:$0xf]
  %v2483 = vld [vmem:[%s12 + $0x77c] sm:$0xf]
  %v2484 = vld [vmem:[%s12 + $0x780] sm:$0xf]
  %v2485 = vld [vmem:[%s12 + $0x784] sm:$0xf]
  %v2486 = vld [vmem:[%s12 + $0x788] sm:$0xf]
  %v2487 = vld [vmem:[%s12 + $0x78c] sm:$0xf]
  %v2488 = vld [vmem:[%s12 + $0x790] sm:$0xf]
  %v2489 = vld [vmem:[%s12 + $0x794] sm:$0xf]
  %v2490 = vld [vmem:[%s12 + $0x798] sm:$0xf]
  %v2491 = vld [vmem:[%s12 + $0x79c] sm:$0xf]
  %v2492 = vld [vmem:[%s12 + $0x7a0] sm:$0xf]
  %v2493 = vld [vmem:[%s12 + $0x7a4] sm:$0xf]
  %v2494 = vld [vmem:[%s12 + $0x7a8] sm:$0xf]
  %v2495 = vld [vmem:[%s12 + $0x7ac] sm:$0xf]
  %v2496 = vld [vmem:[%s12 + $0x7b0] sm:$0xf]
  %v2497 = vld [vmem:[%s12 + $0x7b4] sm:$0xf]
  %v2498 = vld [vmem:[%s12 + $0x7b8] sm:$0xf]
  %v2499 = vld [vmem:[%s12 + $0x7bc] sm:$0xf]
  %v2500 = vld [vmem:[%s12 + $0x7c0] sm:$0xf]
  %v2501 = vld [vmem:[%s12 + $0x7c4] sm:$0xf]
  %v2502 = vld [vmem:[%s12 + $0x7c8] sm:$0xf]
  %v2503 = vld [vmem:[%s12 + $0x7cc] sm:$0xf]
  %v2504 = vld [vmem:[%s12 + $0x7d0] sm:$0xf]
  %v2505 = vld [vmem:[%s12 + $0x7d4] sm:$0xf]
  %v2506 = vld [vmem:[%s12 + $0x7d8] sm:$0xf]
  %v2507 = vld [vmem:[%s12 + $0x7dc] sm:$0xf]
  %v2508 = vld [vmem:[%s12 + $0x7e0] sm:$0xf]
  %v2509 = vld [vmem:[%s12 + $0x7e4] sm:$0xf]
  %v2510 = vld [vmem:[%s12 + $0x7e8] sm:$0xf]
  %v2511 = vld [vmem:[%s12 + $0x7ec] sm:$0xf]
  %v2512 = vld [vmem:[%s12 + $0x7f0] sm:$0xf]
  %v2513 = vld [vmem:[%s12 + $0x7f4] sm:$0xf]
  %v2514 = vld [vmem:[%s12 + $0x7f8] sm:$0xf]
  %v2515 = vld [vmem:[%s12 + $0x7fc] sm:$0xf]
  %v2516 = vld [vmem:[%s12 + $0x800] sm:$0xf]
  %v2517 = vld [vmem:[%s12 + $0x804] sm:$0xf]
  %v2518 = vld [vmem:[%s12 + $0x808] sm:$0xf]
  %v2519 = vld [vmem:[%s12 + $0x80c] sm:$0xf]
  %v2520 = vld [vmem:[%s12 + $0x810] sm:$0xf]
  %v2521 = vld [vmem:[%s12 + $0x814] sm:$0xf]
  %v2522 = vld [vmem:[%s12 + $0x818] sm:$0xf]
  %v2523 = vld [vmem:[%s12 + $0x81c] sm:$0xf]
  %v2524 = vld [vmem:[%s12 + $0x820] sm:$0xf]
  %v2525 = vld [vmem:[%s12 + $0x824] sm:$0xf]
  %v2526 = vld [vmem:[%s12 + $0x828] sm:$0xf]
  %v2527 = vld [vmem:[%s12 + $0x82c] sm:$0xf]
  %v2528 = vld [vmem:[%s12 + $0x830] sm:$0xf]
  %v2529 = vld [vmem:[%s12 + $0x834] sm:$0xf]
  %v2530 = vld [vmem:[%s12 + $0x838] sm:$0xf]
  %v2531 = vld [vmem:[%s12 + $0x83c] sm:$0xf]
  %v2532 = vld [vmem:[%s12 + $0x840] sm:$0xf]
  %v2533 = vld [vmem:[%s12 + $0x844] sm:$0xf]
  %v2534 = vld [vmem:[%s12 + $0x848] sm:$0xf]
  %v2535 = vld [vmem:[%s12 + $0x84c] sm:$0xf]
  %v2536 = vld [vmem:[%s12 + $0x850] sm:$0xf]
  %v2537 = vld [vmem:[%s12 + $0x854] sm:$0xf]
  %v2538 = vld [vmem:[%s12 + $0x858] sm:$0xf]
  %v2539 = vld [vmem:[%s12 + $0x85c] sm:$0xf]
  %v2540 = vld [vmem:[%s12 + $0x860] sm:$0xf]
  %v2541 = vld [vmem:[%s12 + $0x864] sm:$0xf]
  %v2542 = vld [vmem:[%s12 + $0x868] sm:$0xf]
  %v2543 = vld [vmem:[%s12 + $0x86c] sm:$0xf]
  %v2544 = vld [vmem:[%s12 + $0x870] sm:$0xf]
  %v2545 = vld [vmem:[%s12 + $0x874] sm:$0xf]
  %v2546 = vld [vmem:[%s12 + $0x878] sm:$0xf]
  %v2547 = vld [vmem:[%s12 + $0x87c] sm:$0xf]
  %v2548 = vld [vmem:[%s12 + $0x880] sm:$0xf]
  %v2549 = vld [vmem:[%s12 + $0x884] sm:$0xf]
  %v2550 = vld [vmem:[%s12 + $0x888] sm:$0xf]
  %v2551 = vld [vmem:[%s12 + $0x88c] sm:$0xf]
  %v2552 = vld [vmem:[%s12 + $0x890] sm:$0xf]
  %v2553 = vld [vmem:[%s12 + $0x894] sm:$0xf]
  %v2554 = vld [vmem:[%s12 + $0x898] sm:$0xf]
  %v2555 = vld [vmem:[%s12 + $0x89c] sm:$0xf]
  %v2556 = vld [vmem:[%s12 + $0x8a0] sm:$0xf]
  %v2557 = vld [vmem:[%s12 + $0x8a4] sm:$0xf]
  %v2558 = vld [vmem:[%s12 + $0x8a8] sm:$0xf]
  %v2559 = vld [vmem:[%s12 + $0x8ac] sm:$0xf]
  %v2560 = vld [vmem:[%s12 + $0x8b0] sm:$0xf]
  %v2561 = vld [vmem:[%s12 + $0x8b4] sm:$0xf]
  %v2562 = vld [vmem:[%s12 + $0x8b8] sm:$0xf]
  %v2563 = vld [vmem:[%s12 + $0x8bc] sm:$0xf]
  %v2564 = vld [vmem:[%s12 + $0x8c0] sm:$0xf]
  %v2565 = vld [vmem:[%s12 + $0x8c4] sm:$0xf]
  %v2566 = vld [vmem:[%s12 + $0x8c8] sm:$0xf]
  %v2567 = vld [vmem:[%s12 + $0x8cc] sm:$0xf]
  %v2568 = vld [vmem:[%s12 + $0x8d0] sm:$0xf]
  %v2569 = vld [vmem:[%s12 + $0x8d4] sm:$0xf]
  %v2570 = vld [vmem:[%s12 + $0x8d8] sm:$0xf]
  %v2571 = vld [vmem:[%s12 + $0x8dc] sm:$0xf]
  %v2572 = vld [vmem:[%s12 + $0x8e0] sm:$0xf]
  %v2573 = vld [vmem:[%s12 + $0x8e4] sm:$0xf]
  %v2574 = vld [vmem:[%s12 + $0x8e8] sm:$0xf]
  %v2575 = vld [vmem:[%s12 + $0x8ec] sm:$0xf]
  %v2576 = vld [vmem:[%s12 + $0x8f0] sm:$0xf]
  %v2577 = vld [vmem:[%s12 + $0x8f4] sm:$0xf]
  %v2578 = vld [vmem:[%s12 + $0x8f8] sm:$0xf]
  %v2579 = vld [vmem:[%s12 + $0x8fc] sm:$0xf]
  %v2580 = vld [vmem:[%s12 + $0x900] sm:$0xf]
  %v2581 = vld [vmem:[%s12 + $0x904] sm:$0xf]
  %v2582 = vld [vmem:[%s12 + $0x908] sm:$0xf]
  %v2583 = vld [vmem:[%s12 + $0x90c] sm:$0xf]
  %v2584 = vld [vmem:[%s12 + $0x910] sm:$0xf]
  %v2585 = vld [vmem:[%s12 + $0x914] sm:$0xf]
  %v2586 = vld [vmem:[%s12 + $0x918] sm:$0xf]
  %v2587 = vld [vmem:[%s12 + $0x91c] sm:$0xf]
  %v2588 = vld [vmem:[%s12 + $0x920] sm:$0xf]
  %v2589 = vld [vmem:[%s12 + $0x924] sm:$0xf]
  %v2590 = vld [vmem:[%s12 + $0x928] sm:$0xf]
  %v2591 = vld [vmem:[%s12 + $0x92c] sm:$0xf]
  %v2592 = vld [vmem:[%s12 + $0x930] sm:$0xf]
  %v2593 = vld [vmem:[%s12 + $0x934] sm:$0xf]
  %v2594 = vld [vmem:[%s12 + $0x938] sm:$0xf]
  %v2595 = vld [vmem:[%s12 + $0x93c] sm:$0xf]
  %v2596 = vld [vmem:[%s12 + $0x940] sm:$0xf]
  %v2597 = vld [vmem:[%s12 + $0x944] sm:$0xf]
  %v2598 = vld [vmem:[%s12 + $0x948] sm:$0xf]
  %v2599 = vld [vmem:[%s12 + $0x94c] sm:$0xf]
  %v2600 = vld [vmem:[%s12 + $0x950] sm:$0xf]
  %v2601 = vld [vmem:[%s12 + $0x954] sm:$0xf]
  %v2602 = vld [vmem:[%s12 + $0x958] sm:$0xf]
  %v2603 = vld [vmem:[%s12 + $0x95c] sm:$0xf]
  %v2604 = vld [vmem:[%s12 + $0x960] sm:$0xf]
  %v2605 = vld [vmem:[%s12 + $0x964] sm:$0xf]
  %v2606 = vld [vmem:[%s12 + $0x968] sm:$0xf]
  %v2607 = vld [vmem:[%s12 + $0x96c] sm:$0xf]
  %v2608 = vld [vmem:[%s12 + $0x970] sm:$0xf]
  %v2609 = vld [vmem:[%s12 + $0x974] sm:$0xf]
  %v2610 = vld [vmem:[%s12 + $0x978] sm:$0xf]
  %v2611 = vld [vmem:[%s12 + $0x97c] sm:$0xf]
  %v2612 = vld [vmem:[%s12 + $0x980] sm:$0xf]
  %v2613 = vld [vmem:[%s12 + $0x984] sm:$0xf]
  %v2614 = vld [vmem:[%s12 + $0x988] sm:$0xf]
  %v2615 = vld [vmem:[%s12 + $0x98c] sm:$0xf]
  %v2616 = vld [vmem:[%s12 + $0x990] sm:$0xf]
  %v2617 = vld [vmem:[%s12 + $0x994] sm:$0xf]
  %v2618 = vld [vmem:[%s12 + $0x998] sm:$0xf]
  %v2619 = vld [vmem:[%s12 + $0x99c] sm:$0xf]
  %v2620 = vld [vmem:[%s12 + $0x9a0] sm:$0xf]
  %v2621 = vld [vmem:[%s12 + $0x9a4] sm:$0xf]
  %v2622 = vld [vmem:[%s12 + $0x9a8] sm:$0xf]
  %v2623 = vld [vmem:[%s12 + $0x9ac] sm:$0xf]
  %v2624 = vld [vmem:[%s12 + $0x9b0] sm:$0xf]
  %v2625 = vld [vmem:[%s12 + $0x9b4] sm:$0xf]
  %v2626 = vld [vmem:[%s12 + $0x9b8] sm:$0xf]
  %v2627 = vld [vmem:[%s12 + $0x9bc] sm:$0xf]
  %v2628 = vld [vmem:[%s12 + $0x9c0] sm:$0xf]
  %v2629 = vld [vmem:[%s12 + $0x9c4] sm:$0xf]
  %v2630 = vld [vmem:[%s12 + $0x9c8] sm:$0xf]
  %v2631 = vld [vmem:[%s12 + $0x9cc] sm:$0xf]
  %v2632 = vld [vmem:[%s12 + $0x9d0] sm:$0xf]
  %v2633 = vld [vmem:[%s12 + $0x9d4] sm:$0xf]
  %v2634 = vld [vmem:[%s12 + $0x9d8] sm:$0xf]
  %v2635 = vld [vmem:[%s12 + $0x9dc] sm:$0xf]
  %v2636 = vld [vmem:[%s12 + $0x9e0] sm:$0xf]
  %v2637 = vld [vmem:[%s12 + $0x9e4] sm:$0xf]
  %v2638 = vld [vmem:[%s12 + $0x9e8] sm:$0xf]
  %v2639 = vld [vmem:[%s12 + $0x9ec] sm:$0xf]
  %v2640 = vld [vmem:[%s12 + $0x9f0] sm:$0xf]
  %v2641 = vld [vmem:[%s12 + $0x9f4] sm:$0xf]
  %v2642 = vld [vmem:[%s12 + $0x9f8] sm:$0xf]
  %v2643 = vld [vmem:[%s12 + $0x9fc] sm:$0xf]
  %v2644 = vld [vmem:[%s12 + $0xa00] sm:$0xf]
  %v2645 = vld [vmem:[%s12 + $0xa04] sm:$0xf]
  %v2646 = vld [vmem:[%s12 + $0xa08] sm:$0xf]
  %v2647 = vld [vmem:[%s12 + $0xa0c] sm:$0xf]
  %v2648 = vld [vmem:[%s12 + $0xa10] sm:$0xf]
  %v2649 = vld [vmem:[%s12 + $0xa14] sm:$0xf]
  %v2650 = vld [vmem:[%s12 + $0xa18] sm:$0xf]
  %v2651 = vld [vmem:[%s12 + $0xa1c] sm:$0xf]
  %v2652 = vld [vmem:[%s12 + $0xa20] sm:$0xf]
  %v2653 = vld [vmem:[%s12 + $0xa24] sm:$0xf]
  %v2654 = vld [vmem:[%s12 + $0xa28] sm:$0xf]
  %v2655 = vld [vmem:[%s12 + $0xa2c] sm:$0xf]
  %v2656 = vld [vmem:[%s12 + $0xa30] sm:$0xf]
  %v2657 = vld [vmem:[%s12 + $0xa34] sm:$0xf]
  %v2658 = vld [vmem:[%s12 + $0xa38] sm:$0xf]
  %v2659 = vld [vmem:[%s12 + $0xa3c] sm:$0xf]
  %v2660 = vld [vmem:[%s12 + $0xa40] sm:$0xf]
  %v2661 = vld [vmem:[%s12 + $0xa44] sm:$0xf]
  %v2662 = vld [vmem:[%s12 + $0xa48] sm:$0xf]
  %v2663 = vld [vmem:[%s12 + $0xa4c] sm:$0xf]
  %v2664 = vld [vmem:[%s12 + $0xa50] sm:$0xf]
  %v2665 = vld [vmem:[%s12 + $0xa54] sm:$0xf]
  %v2666 = vld [vmem:[%s12 + $0xa58] sm:$0xf]
  %v2667 = vld [vmem:[%s12 + $0xa5c] sm:$0xf]
  %v2668 = vld [vmem:[%s12 + $0xa60] sm:$0xf]
  %v2669 = vld [vmem:[%s12 + $0xa64] sm:$0xf]
  %v2670 = vld [vmem:[%s12 + $0xa68] sm:$0xf]
  %v2671 = vld [vmem:[%s12 + $0xa6c] sm:$0xf]
  %v2672 = vld [vmem:[%s12 + $0xa70] sm:$0xf]
  %v2673 = vld [vmem:[%s12 + $0xa74] sm:$0xf]
  %v2674 = vld [vmem:[%s12 + $0xa78] sm:$0xf]
  %v2675 = vld [vmem:[%s12 + $0xa7c] sm:$0xf]
  %v2676 = vld [vmem:[%s12 + $0xa80] sm:$0xf]
  %v2677 = vld [vmem:[%s12 + $0xa84] sm:$0xf]
  %v2678 = vld [vmem:[%s12 + $0xa88] sm:$0xf]
  %v2679 = vld [vmem:[%s12 + $0xa8c] sm:$0xf]
  %v2680 = vld [vmem:[%s12 + $0xa90] sm:$0xf]
  %v2681 = vld [vmem:[%s12 + $0xa94] sm:$0xf]
  %v2682 = vld [vmem:[%s12 + $0xa98] sm:$0xf]
  %v2683 = vld [vmem:[%s12 + $0xa9c] sm:$0xf]
  %v2684 = vld [vmem:[%s12 + $0xaa0] sm:$0xf]
  %v2685 = vld [vmem:[%s12 + $0xaa4] sm:$0xf]
  %v2686 = vld [vmem:[%s12 + $0xaa8] sm:$0xf]
  %v2687 = vld [vmem:[%s12 + $0xaac] sm:$0xf]
  %v2688 = vld [vmem:[%s12 + $0xab0] sm:$0xf]
  %v2689 = vld [vmem:[%s12 + $0xab4] sm:$0xf]
  %v2690 = vld [vmem:[%s12 + $0xab8] sm:$0xf]
  %v2691 = vld [vmem:[%s12 + $0xabc] sm:$0xf]
  %v2692 = vld [vmem:[%s12 + $0xac0] sm:$0xf]
  %v2693 = vld [vmem:[%s12 + $0xac4] sm:$0xf]
  %v2694 = vld [vmem:[%s12 + $0xac8] sm:$0xf]
  %v2695 = vld [vmem:[%s12 + $0xacc] sm:$0xf]
  %v2696 = vld [vmem:[%s12 + $0xad0] sm:$0xf]
  %v2697 = vld [vmem:[%s12 + $0xad4] sm:$0xf]
  %v2698 = vld [vmem:[%s12 + $0xad8] sm:$0xf]
  %v2699 = vld [vmem:[%s12 + $0xadc] sm:$0xf]
  %v2700 = vld [vmem:[%s12 + $0xae0] sm:$0xf]
  %v2701 = vld [vmem:[%s12 + $0xae4] sm:$0xf]
  %v2702 = vld [vmem:[%s12 + $0xae8] sm:$0xf]
  %v2703 = vld [vmem:[%s12 + $0xaec] sm:$0xf]
  %v2704 = vld [vmem:[%s12 + $0xaf0] sm:$0xf]
  %v2705 = vld [vmem:[%s12 + $0xaf4] sm:$0xf]
  %v2706 = vld [vmem:[%s12 + $0xaf8] sm:$0xf]
  %v2707 = vld [vmem:[%s12 + $0xafc] sm:$0xf]
  %v2708 = vld [vmem:[%s12 + $0xb00] sm:$0xf]
  %v2709 = vld [vmem:[%s12 + $0xb04] sm:$0xf]
  %v2710 = vld [vmem:[%s12 + $0xb08] sm:$0xf]
  %v2711 = vld [vmem:[%s12 + $0xb0c] sm:$0xf]
  %v2712 = vld [vmem:[%s12 + $0xb10] sm:$0xf]
  %v2713 = vld [vmem:[%s12 + $0xb14] sm:$0xf]
  %v2714 = vld [vmem:[%s12 + $0xb18] sm:$0xf]
  %v2715 = vld [vmem:[%s12 + $0xb1c] sm:$0xf]
  %v2716 = vld [vmem:[%s12 + $0xb20] sm:$0xf]
  %v2717 = vld [vmem:[%s12 + $0xb24] sm:$0xf]
  %v2718 = vld [vmem:[%s12 + $0xb28] sm:$0xf]
  %v2719 = vld [vmem:[%s12 + $0xb2c] sm:$0xf]
  %v2720 = vld [vmem:[%s12 + $0xb30] sm:$0xf]
  %v2721 = vld [vmem:[%s12 + $0xb34] sm:$0xf]
  %v2722 = vld [vmem:[%s12 + $0xb38] sm:$0xf]
  %v2723 = vld [vmem:[%s12 + $0xb3c] sm:$0xf]
  %v2724 = vld [vmem:[%s12 + $0xb40] sm:$0xf]
  %v2725 = vld [vmem:[%s12 + $0xb44] sm:$0xf]
  %v2726 = vld [vmem:[%s12 + $0xb48] sm:$0xf]
  %v2727 = vld [vmem:[%s12 + $0xb4c] sm:$0xf]
  %v2728 = vld [vmem:[%s12 + $0xb50] sm:$0xf]
  %v2729 = vld [vmem:[%s12 + $0xb54] sm:$0xf]
  %v2730 = vld [vmem:[%s12 + $0xb58] sm:$0xf]
  %v2731 = vld [vmem:[%s12 + $0xb5c] sm:$0xf]
  %v2732 = vld [vmem:[%s12 + $0xb60] sm:$0xf]
  %v2733 = vld [vmem:[%s12 + $0xb64] sm:$0xf]
  %v2734 = vld [vmem:[%s12 + $0xb68] sm:$0xf]
  %v2735 = vld [vmem:[%s12 + $0xb6c] sm:$0xf]
  %v2736 = vld [vmem:[%s12 + $0xb70] sm:$0xf]
  %v2737 = vld [vmem:[%s12 + $0xb74] sm:$0xf]
  %v2738 = vld [vmem:[%s12 + $0xb78] sm:$0xf]
  %v2739 = vld [vmem:[%s12 + $0xb7c] sm:$0xf]
  %v2740 = vld [vmem:[%s12 + $0xb80] sm:$0xf]
  %v2741 = vld [vmem:[%s12 + $0xb84] sm:$0xf]
  %v2742 = vld [vmem:[%s12 + $0xb88] sm:$0xf]
  %v2743 = vld [vmem:[%s12 + $0xb8c] sm:$0xf]
  %v2744 = vld [vmem:[%s12 + $0xb90] sm:$0xf]
  %v2745 = vld [vmem:[%s12 + $0xb94] sm:$0xf]
  %v2746 = vld [vmem:[%s12 + $0xb98] sm:$0xf]
  %v2747 = vld [vmem:[%s12 + $0xb9c] sm:$0xf]
  %v2748 = vld [vmem:[%s12 + $0xba0] sm:$0xf]
  %v2749 = vld [vmem:[%s12 + $0xba4] sm:$0xf]
  %v2750 = vld [vmem:[%s12 + $0xba8] sm:$0xf]
  %v2751 = vld [vmem:[%s12 + $0xbac] sm:$0xf]
  %v2752 = vld [vmem:[%s12 + $0xbb0] sm:$0xf]
  %v2753 = vld [vmem:[%s12 + $0xbb4] sm:$0xf]
  %v2754 = vld [vmem:[%s12 + $0xbb8] sm:$0xf]
  %v2755 = vld [vmem:[%s12 + $0xbbc] sm:$0xf]
  %v2756 = vld [vmem:[%s12 + $0xbc0] sm:$0xf]
  %v2757 = vld [vmem:[%s12 + $0xbc4] sm:$0xf]
  %v2758 = vld [vmem:[%s12 + $0xbc8] sm:$0xf]
  %v2759 = vld [vmem:[%s12 + $0xbcc] sm:$0xf]
  %v2760 = vld [vmem:[%s12 + $0xbd0] sm:$0xf]
  %v2761 = vld [vmem:[%s12 + $0xbd4] sm:$0xf]
  %v2762 = vld [vmem:[%s12 + $0xbd8] sm:$0xf]
  %v2763 = vld [vmem:[%s12 + $0xbdc] sm:$0xf]
  %v2764 = vld [vmem:[%s12 + $0xbe0] sm:$0xf]
  %v2765 = vld [vmem:[%s12 + $0xbe4] sm:$0xf]
  %v2766 = vld [vmem:[%s12 + $0xbe8] sm:$0xf]
  %v2767 = vld [vmem:[%s12 + $0xbec] sm:$0xf]
  %v2768 = vld [vmem:[%s12 + $0xbf0] sm:$0xf]
  %v2769 = vld [vmem:[%s12 + $0xbf4] sm:$0xf]
  %v2770 = vld [vmem:[%s12 + $0xbf8] sm:$0xf]
  %v2771 = vld [vmem:[%s12 + $0xbfc] sm:$0xf]
  %v2772 = vld [vmem:[%s12 + $0xc00] sm:$0xf]
  %v2773 = vld [vmem:[%s12 + $0xc04] sm:$0xf]
  %v2774 = vld [vmem:[%s12 + $0xc08] sm:$0xf]
  %v2775 = vld [vmem:[%s12 + $0xc0c] sm:$0xf]
  %v2776 = vld [vmem:[%s12 + $0xc10] sm:$0xf]
  %v2777 = vld [vmem:[%s12 + $0xc14] sm:$0xf]
  %v2778 = vld [vmem:[%s12 + $0xc18] sm:$0xf]
  %v2779 = vld [vmem:[%s12 + $0xc1c] sm:$0xf]
  %v2780 = vld [vmem:[%s12 + $0xc20] sm:$0xf]
  %v2781 = vld [vmem:[%s12 + $0xc24] sm:$0xf]
  %v2782 = vld [vmem:[%s12 + $0xc28] sm:$0xf]
  %v2783 = vld [vmem:[%s12 + $0xc2c] sm:$0xf]
  %v2784 = vld [vmem:[%s12 + $0xc30] sm:$0xf]
  %v2785 = vld [vmem:[%s12 + $0xc34] sm:$0xf]
  %v2786 = vld [vmem:[%s12 + $0xc38] sm:$0xf]
  %v2787 = vld [vmem:[%s12 + $0xc3c] sm:$0xf]
  %v2788 = vld [vmem:[%s12 + $0xc40] sm:$0xf]
  %v2789 = vld [vmem:[%s12 + $0xc44] sm:$0xf]
  %v2790 = vld [vmem:[%s12 + $0xc48] sm:$0xf]
  %v2791 = vld [vmem:[%s12 + $0xc4c] sm:$0xf]
  %v2792 = vld [vmem:[%s12 + $0xc50] sm:$0xf]
  %v2793 = vld [vmem:[%s12 + $0xc54] sm:$0xf]
  %v2794 = vld [vmem:[%s12 + $0xc58] sm:$0xf]
  %v2795 = vld [vmem:[%s12 + $0xc5c] sm:$0xf]
  %v2796 = vld [vmem:[%s12 + $0xc60] sm:$0xf]
  %v2797 = vld [vmem:[%s12 + $0xc64] sm:$0xf]
  %v2798 = vld [vmem:[%s12 + $0xc68] sm:$0xf]
  %v2799 = vld [vmem:[%s12 + $0xc6c] sm:$0xf]
  %v2800 = vld [vmem:[%s12 + $0xc70] sm:$0xf]
  %v2801 = vld [vmem:[%s12 + $0xc74] sm:$0xf]
  %v2802 = vld [vmem:[%s12 + $0xc78] sm:$0xf]
  %v2803 = vld [vmem:[%s12 + $0xc7c] sm:$0xf]
  %v2804 = vld [vmem:[%s12 + $0xc80] sm:$0xf]
  %v2805 = vld [vmem:[%s12 + $0xc84] sm:$0xf]
  %v2806 = vld [vmem:[%s12 + $0xc88] sm:$0xf]
  %v2807 = vld [vmem:[%s12 + $0xc8c] sm:$0xf]
  %v2808 = vld [vmem:[%s12 + $0xc90] sm:$0xf]
  %v2809 = vld [vmem:[%s12 + $0xc94] sm:$0xf]
  %v2810 = vld [vmem:[%s12 + $0xc98] sm:$0xf]
  %v2811 = vld [vmem:[%s12 + $0xc9c] sm:$0xf]
  %v2812 = vld [vmem:[%s12 + $0xca0] sm:$0xf]
  %v2813 = vld [vmem:[%s12 + $0xca4] sm:$0xf]
  %v2814 = vld [vmem:[%s12 + $0xca8] sm:$0xf]
  %v2815 = vld [vmem:[%s12 + $0xcac] sm:$0xf]
  %v2816 = vld [vmem:[%s12 + $0xcb0] sm:$0xf]
  %v2817 = vld [vmem:[%s12 + $0xcb4] sm:$0xf]
  %v2818 = vld [vmem:[%s12 + $0xcb8] sm:$0xf]
  %v2819 = vld [vmem:[%s12 + $0xcbc] sm:$0xf]
  %v2820 = vld [vmem:[%s12 + $0xcc0] sm:$0xf]
  %v2821 = vld [vmem:[%s12 + $0xcc4] sm:$0xf]
  %v2822 = vld [vmem:[%s12 + $0xcc8] sm:$0xf]
  %v2823 = vld [vmem:[%s12 + $0xccc] sm:$0xf]
  %v2824 = vld [vmem:[%s12 + $0xcd0] sm:$0xf]
  %v2825 = vld [vmem:[%s12 + $0xcd4] sm:$0xf]
  %v2826 = vld [vmem:[%s12 + $0xcd8] sm:$0xf]
  %v2827 = vld [vmem:[%s12 + $0xcdc] sm:$0xf]
  %v2828 = vld [vmem:[%s12 + $0xce0] sm:$0xf]
  %v2829 = vld [vmem:[%s12 + $0xce4] sm:$0xf]
  %v2830 = vld [vmem:[%s12 + $0xce8] sm:$0xf]
  %v2831 = vld [vmem:[%s12 + $0xcec] sm:$0xf]
  %v2832 = vld [vmem:[%s12 + $0xcf0] sm:$0xf]
  %v2833 = vld [vmem:[%s12 + $0xcf4] sm:$0xf]
  %v2834 = vld [vmem:[%s12 + $0xcf8] sm:$0xf]
  %v2835 = vld [vmem:[%s12 + $0xcfc] sm:$0xf]
  %v2836 = vld [vmem:[%s12 + $0xd00] sm:$0xf]
  %v2837 = vld [vmem:[%s12 + $0xd04] sm:$0xf]
  %v2838 = vld [vmem:[%s12 + $0xd08] sm:$0xf]
  %v2839 = vld [vmem:[%s12 + $0xd0c] sm:$0xf]
  %v2840 = vld [vmem:[%s12 + $0xd10] sm:$0xf]
  %v2841 = vld [vmem:[%s12 + $0xd14] sm:$0xf]
  %v2842 = vld [vmem:[%s12 + $0xd18] sm:$0xf]
  %v2843 = vld [vmem:[%s12 + $0xd1c] sm:$0xf]
  %v2844 = vld [vmem:[%s12 + $0xd20] sm:$0xf]
  %v2845 = vld [vmem:[%s12 + $0xd24] sm:$0xf]
  %v2846 = vld [vmem:[%s12 + $0xd28] sm:$0xf]
  %v2847 = vld [vmem:[%s12 + $0xd2c] sm:$0xf]
  %v2848 = vld [vmem:[%s12 + $0xd30] sm:$0xf]
  %v2849 = vld [vmem:[%s12 + $0xd34] sm:$0xf]
  %v2850 = vld [vmem:[%s12 + $0xd38] sm:$0xf]
  %v2851 = vld [vmem:[%s12 + $0xd3c] sm:$0xf]
  %v2852 = vld [vmem:[%s12 + $0xd40] sm:$0xf]
  %v2853 = vld [vmem:[%s12 + $0xd44] sm:$0xf]
  %v2854 = vld [vmem:[%s12 + $0xd48] sm:$0xf]
  %v2855 = vld [vmem:[%s12 + $0xd4c] sm:$0xf]
  %v2856 = vld [vmem:[%s12 + $0xd50] sm:$0xf]
  %v2857 = vld [vmem:[%s12 + $0xd54] sm:$0xf]
  %v2858 = vld [vmem:[%s12 + $0xd58] sm:$0xf]
  %v2859 = vld [vmem:[%s12 + $0xd5c] sm:$0xf]
  %v2860 = vld [vmem:[%s12 + $0xd60] sm:$0xf]
  %v2861 = vld [vmem:[%s12 + $0xd64] sm:$0xf]
  %v2862 = vld [vmem:[%s12 + $0xd68] sm:$0xf]
  %v2863 = vld [vmem:[%s12 + $0xd6c] sm:$0xf]
  %v2864 = vld [vmem:[%s12 + $0xd70] sm:$0xf]
  %v2865 = vld [vmem:[%s12 + $0xd74] sm:$0xf]
  %v2866 = vld [vmem:[%s12 + $0xd78] sm:$0xf]
  %v2867 = vld [vmem:[%s12 + $0xd7c] sm:$0xf]
  %v2868 = vld [vmem:[%s12 + $0xd80] sm:$0xf]
  %v2869 = vld [vmem:[%s12 + $0xd84] sm:$0xf]
  %v2870 = vld [vmem:[%s12 + $0xd88] sm:$0xf]
  %v2871 = vld [vmem:[%s12 + $0xd8c] sm:$0xf]
  %v2872 = vld [vmem:[%s12 + $0xd90] sm:$0xf]
  %v2873 = vld [vmem:[%s12 + $0xd94] sm:$0xf]
  %v2874 = vld [vmem:[%s12 + $0xd98] sm:$0xf]
  %v2875 = vld [vmem:[%s12 + $0xd9c] sm:$0xf]
  %v2876 = vld [vmem:[%s12 + $0xda0] sm:$0xf]
  %v2877 = vld [vmem:[%s12 + $0xda4] sm:$0xf]
  %v2878 = vld [vmem:[%s12 + $0xda8] sm:$0xf]
  %v2879 = vld [vmem:[%s12 + $0xdac] sm:$0xf]
  %v2880 = vld [vmem:[%s12 + $0xdb0] sm:$0xf]
  %v2881 = vld [vmem:[%s12 + $0xdb4] sm:$0xf]
  %v2882 = vld [vmem:[%s12 + $0xdb8] sm:$0xf]
  %v2883 = vld [vmem:[%s12 + $0xdbc] sm:$0xf]
  %v2884 = vld [vmem:[%s12 + $0xdc0] sm:$0xf]
  %v2885 = vld [vmem:[%s12 + $0xdc4] sm:$0xf]
  %v2886 = vld [vmem:[%s12 + $0xdc8] sm:$0xf]
  %v2887 = vld [vmem:[%s12 + $0xdcc] sm:$0xf]
  %v2888 = vld [vmem:[%s12 + $0xdd0] sm:$0xf]
  %v2889 = vld [vmem:[%s12 + $0xdd4] sm:$0xf]
  %v2890 = vld [vmem:[%s12 + $0xdd8] sm:$0xf]
  %v2891 = vld [vmem:[%s12 + $0xddc] sm:$0xf]
  %v2892 = vld [vmem:[%s12 + $0xde0] sm:$0xf]
  %v2893 = vld [vmem:[%s12 + $0xde4] sm:$0xf]
  %v2894 = vld [vmem:[%s12 + $0xde8] sm:$0xf]
  %v2895 = vld [vmem:[%s12 + $0xdec] sm:$0xf]
  %v2896 = vld [vmem:[%s12 + $0xdf0] sm:$0xf]
  %v2897 = vld [vmem:[%s12 + $0xdf4] sm:$0xf]
  %v2898 = vld [vmem:[%s12 + $0xdf8] sm:$0xf]
  %v2899 = vld [vmem:[%s12 + $0xdfc] sm:$0xf]
  %v2900 = vld [vmem:[%s12 + $0xe00] sm:$0xf]
  %v2901 = vld [vmem:[%s12 + $0xe04] sm:$0xf]
  %v2902 = vld [vmem:[%s12 + $0xe08] sm:$0xf]
  %v2903 = vld [vmem:[%s12 + $0xe0c] sm:$0xf]
  %v2904 = vld [vmem:[%s12 + $0xe10] sm:$0xf]
  %v2905 = vld [vmem:[%s12 + $0xe14] sm:$0xf]
  %v2906 = vld [vmem:[%s12 + $0xe18] sm:$0xf]
  %v2907 = vld [vmem:[%s12 + $0xe1c] sm:$0xf]
  %v2908 = vld [vmem:[%s12 + $0xe20] sm:$0xf]
  %v2909 = vld [vmem:[%s12 + $0xe24] sm:$0xf]
  %v2910 = vld [vmem:[%s12 + $0xe28] sm:$0xf]
  %v2911 = vld [vmem:[%s12 + $0xe2c] sm:$0xf]
  %v2912 = vld [vmem:[%s12 + $0xe30] sm:$0xf]
  %v2913 = vld [vmem:[%s12 + $0xe34] sm:$0xf]
  %v2914 = vld [vmem:[%s12 + $0xe38] sm:$0xf]
  %v2915 = vld [vmem:[%s12 + $0xe3c] sm:$0xf]
  %v2916 = vld [vmem:[%s12 + $0xe40] sm:$0xf]
  %v2917 = vld [vmem:[%s12 + $0xe44] sm:$0xf]
  %v2918 = vld [vmem:[%s12 + $0xe48] sm:$0xf]
  %v2919 = vld [vmem:[%s12 + $0xe4c] sm:$0xf]
  %v2920 = vld [vmem:[%s12 + $0xe50] sm:$0xf]
  %v2921 = vld [vmem:[%s12 + $0xe54] sm:$0xf]
  %v2922 = vld [vmem:[%s12 + $0xe58] sm:$0xf]
  %v2923 = vld [vmem:[%s12 + $0xe5c] sm:$0xf]
  %v2924 = vld [vmem:[%s12 + $0xe60] sm:$0xf]
  %v2925 = vld [vmem:[%s12 + $0xe64] sm:$0xf]
  %v2926 = vld [vmem:[%s12 + $0xe68] sm:$0xf]
  %v2927 = vld [vmem:[%s12 + $0xe6c] sm:$0xf]
  %v2928 = vld [vmem:[%s12 + $0xe70] sm:$0xf]
  %v2929 = vld [vmem:[%s12 + $0xe74] sm:$0xf]
  %v2930 = vld [vmem:[%s12 + $0xe78] sm:$0xf]
  %v2931 = vld [vmem:[%s12 + $0xe7c] sm:$0xf]
  %v2932 = vld [vmem:[%s12 + $0xe80] sm:$0xf]
  %v2933 = vld [vmem:[%s12 + $0xe84] sm:$0xf]
  %v2934 = vld [vmem:[%s12 + $0xe88] sm:$0xf]
  %v2935 = vld [vmem:[%s12 + $0xe8c] sm:$0xf]
  %v2936 = vld [vmem:[%s12 + $0xe90] sm:$0xf]
  %v2937 = vld [vmem:[%s12 + $0xe94] sm:$0xf]
  %v2938 = vld [vmem:[%s12 + $0xe98] sm:$0xf]
  %v2939 = vld [vmem:[%s12 + $0xe9c] sm:$0xf]
  %v2940 = vld [vmem:[%s12 + $0xea0] sm:$0xf]
  %v2941 = vld [vmem:[%s12 + $0xea4] sm:$0xf]
  %v2942 = vld [vmem:[%s12 + $0xea8] sm:$0xf]
  %v2943 = vld [vmem:[%s12 + $0xeac] sm:$0xf]
  %v2944 = vld [vmem:[%s12 + $0xeb0] sm:$0xf]
  %v2945 = vld [vmem:[%s12 + $0xeb4] sm:$0xf]
  %v2946 = vld [vmem:[%s12 + $0xeb8] sm:$0xf]
  %v2947 = vld [vmem:[%s12 + $0xebc] sm:$0xf]
  %v2948 = vld [vmem:[%s12 + $0xec0] sm:$0xf]
  %v2949 = vld [vmem:[%s12 + $0xec4] sm:$0xf]
  %v2950 = vld [vmem:[%s12 + $0xec8] sm:$0xf]
  %v2951 = vld [vmem:[%s12 + $0xecc] sm:$0xf]
  %v2952 = vld [vmem:[%s12 + $0xed0] sm:$0xf]
  %v2953 = vld [vmem:[%s12 + $0xed4] sm:$0xf]
  %v2954 = vld [vmem:[%s12 + $0xed8] sm:$0xf]
  %v2955 = vld [vmem:[%s12 + $0xedc] sm:$0xf]
  %v2956 = vld [vmem:[%s12 + $0xee0] sm:$0xf]
  %v2957 = vld [vmem:[%s12 + $0xee4] sm:$0xf]
  %v2958 = vld [vmem:[%s12 + $0xee8] sm:$0xf]
  %v2959 = vld [vmem:[%s12 + $0xeec] sm:$0xf]
  %v2960 = vld [vmem:[%s12 + $0xef0] sm:$0xf]
  %v2961 = vld [vmem:[%s12 + $0xef4] sm:$0xf]
  %v2962 = vld [vmem:[%s12 + $0xef8] sm:$0xf]
  %v2963 = vld [vmem:[%s12 + $0xefc] sm:$0xf]
  %v2964 = vld [vmem:[%s12 + $0xf00] sm:$0xf]
  %v2965 = vld [vmem:[%s12 + $0xf04] sm:$0xf]
  %v2966 = vld [vmem:[%s12 + $0xf08] sm:$0xf]
  %v2967 = vld [vmem:[%s12 + $0xf0c] sm:$0xf]
  %v2968 = vld [vmem:[%s12 + $0xf10] sm:$0xf]
  %v2969 = vld [vmem:[%s12 + $0xf14] sm:$0xf]
  %v2970 = vld [vmem:[%s12 + $0xf18] sm:$0xf]
  %v2971 = vld [vmem:[%s12 + $0xf1c] sm:$0xf]
  %v2972 = vld [vmem:[%s12 + $0xf20] sm:$0xf]
  %v2973 = vld [vmem:[%s12 + $0xf24] sm:$0xf]
  %v2974 = vld [vmem:[%s12 + $0xf28] sm:$0xf]
  %v2975 = vld [vmem:[%s12 + $0xf2c] sm:$0xf]
  %v2976 = vld [vmem:[%s12 + $0xf30] sm:$0xf]
  %v2977 = vld [vmem:[%s12 + $0xf34] sm:$0xf]
  %v2978 = vld [vmem:[%s12 + $0xf38] sm:$0xf]
  %v2979 = vld [vmem:[%s12 + $0xf3c] sm:$0xf]
  %v2980 = vld [vmem:[%s12 + $0xf40] sm:$0xf]
  %v2981 = vld [vmem:[%s12 + $0xf44] sm:$0xf]
  %v2982 = vld [vmem:[%s12 + $0xf48] sm:$0xf]
  %v2983 = vld [vmem:[%s12 + $0xf4c] sm:$0xf]
  %v2984 = vld [vmem:[%s12 + $0xf50] sm:$0xf]
  %v2985 = vld [vmem:[%s12 + $0xf54] sm:$0xf]
  %v2986 = vld [vmem:[%s12 + $0xf58] sm:$0xf]
  %v2987 = vld [vmem:[%s12 + $0xf5c] sm:$0xf]
  %v2988 = vld [vmem:[%s12 + $0xf60] sm:$0xf]
  %v2989 = vld [vmem:[%s12 + $0xf64] sm:$0xf]
  %v2990 = vld [vmem:[%s12 + $0xf68] sm:$0xf]
  %v2991 = vld [vmem:[%s12 + $0xf6c] sm:$0xf]
  %v2992 = vld [vmem:[%s12 + $0xf70] sm:$0xf]
  %v2993 = vld [vmem:[%s12 + $0xf74] sm:$0xf]
  %v2994 = vld [vmem:[%s12 + $0xf78] sm:$0xf]
  %v2995 = vld [vmem:[%s12 + $0xf7c] sm:$0xf]
  %v2996 = vld [vmem:[%s12 + $0xf80] sm:$0xf]
  %v2997 = vld [vmem:[%s12 + $0xf84] sm:$0xf]
  %v2998 = vld [vmem:[%s12 + $0xf88] sm:$0xf]
  %v2999 = vld [vmem:[%s12 + $0xf8c] sm:$0xf]
  %v3000 = vld [vmem:[%s12 + $0xf90] sm:$0xf]
  %v3001 = vld [vmem:[%s12 + $0xf94] sm:$0xf]
  %v3002 = vld [vmem:[%s12 + $0xf98] sm:$0xf]
  %v3003 = vld [vmem:[%s12 + $0xf9c] sm:$0xf]
  %v3004 = vld [vmem:[%s12 + $0xfa0] sm:$0xf]
  %v3005 = vld [vmem:[%s12 + $0xfa4] sm:$0xf]
  %v3006 = vld [vmem:[%s12 + $0xfa8] sm:$0xf]
  %v3007 = vld [vmem:[%s12 + $0xfac] sm:$0xf]
  %v3008 = vld [vmem:[%s12 + $0xfb0] sm:$0xf]
  %v3009 = vld [vmem:[%s12 + $0xfb4] sm:$0xf]
  %v3010 = vld [vmem:[%s12 + $0xfb8] sm:$0xf]
  %v3011 = vld [vmem:[%s12 + $0xfbc] sm:$0xf]
  %v3076 = vunpack.c.l.b16 %v1940
  %v3077 = vunpack.c.h.b16 %v1940
  %v3078 = vunpack.c.l.b16 %v1941
  %v3079 = vunpack.c.h.b16 %v1941
  %v3080 = vunpack.c.l.b16 %v1942
  %v3081 = vunpack.c.h.b16 %v1942
  %v3082 = vunpack.c.l.b16 %v1943
  %v3083 = vunpack.c.h.b16 %v1943
  %v3084 = vunpack.c.l.b16 %v1944
  %v3085 = vunpack.c.h.b16 %v1944
  %v3086 = vunpack.c.l.b16 %v1945
  %v3087 = vunpack.c.h.b16 %v1945
  %v3088 = vunpack.c.l.b16 %v1946
  %v3089 = vunpack.c.h.b16 %v1946
  %v3090 = vunpack.c.l.b16 %v1947
  %v3091 = vunpack.c.h.b16 %v1947
  %v3092 = vunpack.c.l.b16 %v1948
  %v3093 = vunpack.c.h.b16 %v1948
  %v3094 = vunpack.c.l.b16 %v1949
  %v3095 = vunpack.c.h.b16 %v1949
  %v3096 = vunpack.c.l.b16 %v1950
  %v3097 = vunpack.c.h.b16 %v1950
  %v3098 = vunpack.c.l.b16 %v1951
  %v3099 = vunpack.c.h.b16 %v1951
  %v3100 = vunpack.c.l.b16 %v1952
  %v3101 = vunpack.c.h.b16 %v1952
  %v3102 = vunpack.c.l.b16 %v1953
  %v3103 = vunpack.c.h.b16 %v1953
  %v3104 = vunpack.c.l.b16 %v1954
  %v3105 = vunpack.c.h.b16 %v1954
  %v3106 = vunpack.c.l.b16 %v1955
  %v3107 = vunpack.c.h.b16 %v1955
  %v3108 = vunpack.c.l.b16 %v1956
  %v3109 = vunpack.c.h.b16 %v1956
  %v3110 = vunpack.c.l.b16 %v1957
  %v3111 = vunpack.c.h.b16 %v1957
  %v3112 = vunpack.c.l.b16 %v1958
  %v3113 = vunpack.c.h.b16 %v1958
  %v3114 = vunpack.c.l.b16 %v1959
  %v3115 = vunpack.c.h.b16 %v1959
  %v3116 = vunpack.c.l.b16 %v1960
  %v3117 = vunpack.c.h.b16 %v1960
  %v3118 = vunpack.c.l.b16 %v1961
  %v3119 = vunpack.c.h.b16 %v1961
  %v3120 = vunpack.c.l.b16 %v1962
  %v3121 = vunpack.c.h.b16 %v1962
  %v3122 = vunpack.c.l.b16 %v1963
  %v3123 = vunpack.c.h.b16 %v1963
  %v3124 = vunpack.c.l.b16 %v1964
  %v3125 = vunpack.c.h.b16 %v1964
  %v3126 = vunpack.c.l.b16 %v1965
  %v3127 = vunpack.c.h.b16 %v1965
  %v3128 = vunpack.c.l.b16 %v1966
  %v3129 = vunpack.c.h.b16 %v1966
  %v3130 = vunpack.c.l.b16 %v1967
  %v3131 = vunpack.c.h.b16 %v1967
  %v3132 = vunpack.c.l.b16 %v1968
  %v3133 = vunpack.c.h.b16 %v1968
  %v3134 = vunpack.c.l.b16 %v1969
  %v3135 = vunpack.c.h.b16 %v1969
  %v3136 = vunpack.c.l.b16 %v1970
  %v3137 = vunpack.c.h.b16 %v1970
  %v3138 = vunpack.c.l.b16 %v1971
  %v3139 = vunpack.c.l.b16 %v1972
  %v3140 = vunpack.c.h.b16 %v1972
  %v3141 = vunpack.c.l.b16 %v1973
  %v3142 = vunpack.c.h.b16 %v1973
  %v3143 = vunpack.c.l.b16 %v1974
  %v3144 = vunpack.c.h.b16 %v1974
  %v3145 = vunpack.c.l.b16 %v1975
  %v3146 = vunpack.c.h.b16 %v1975
  %v3147 = vunpack.c.l.b16 %v1976
  %v3148 = vunpack.c.h.b16 %v1976
  %v3149 = vunpack.c.l.b16 %v1977
  %v3150 = vunpack.c.h.b16 %v1977
  %v3151 = vunpack.c.l.b16 %v1978
  %v3152 = vunpack.c.h.b16 %v1978
  %v3153 = vunpack.c.l.b16 %v1979
  %v3154 = vunpack.c.h.b16 %v1979
  %v3155 = vunpack.c.l.b16 %v1980
  %v3156 = vunpack.c.h.b16 %v1980
  %v3157 = vunpack.c.l.b16 %v1981
  %v3158 = vunpack.c.h.b16 %v1981
  %v3159 = vunpack.c.l.b16 %v1982
  %v3160 = vunpack.c.h.b16 %v1982
  %v3161 = vunpack.c.l.b16 %v1983
  %v3162 = vunpack.c.h.b16 %v1983
  %v3163 = vunpack.c.l.b16 %v1984
  %v3164 = vunpack.c.h.b16 %v1984
  %v3165 = vunpack.c.l.b16 %v1985
  %v3166 = vunpack.c.h.b16 %v1985
  %v3167 = vunpack.c.l.b16 %v1986
  %v3168 = vunpack.c.h.b16 %v1986
  %v3169 = vunpack.c.l.b16 %v1987
  %v3170 = vunpack.c.h.b16 %v1987
  %v3171 = vunpack.c.l.b16 %v1988
  %v3172 = vunpack.c.h.b16 %v1988
  %v3173 = vunpack.c.l.b16 %v1989
  %v3174 = vunpack.c.h.b16 %v1989
  %v3175 = vunpack.c.l.b16 %v1990
  %v3176 = vunpack.c.h.b16 %v1990
  %v3177 = vunpack.c.l.b16 %v1991
  %v3178 = vunpack.c.h.b16 %v1991
  %v3179 = vunpack.c.l.b16 %v1992
  %v3180 = vunpack.c.h.b16 %v1992
  %v3181 = vunpack.c.l.b16 %v1993
  %v3182 = vunpack.c.h.b16 %v1993
  %v3183 = vunpack.c.l.b16 %v1994
  %v3184 = vunpack.c.h.b16 %v1994
  %v3185 = vunpack.c.l.b16 %v1995
  %v3186 = vunpack.c.h.b16 %v1995
  %v3187 = vunpack.c.l.b16 %v1996
  %v3188 = vunpack.c.h.b16 %v1996
  %v3189 = vunpack.c.l.b16 %v1997
  %v3190 = vunpack.c.h.b16 %v1997
  %v3191 = vunpack.c.l.b16 %v1998
  %v3192 = vunpack.c.h.b16 %v1998
  %v3193 = vunpack.c.l.b16 %v1999
  %v3194 = vunpack.c.h.b16 %v1999
  %v3195 = vunpack.c.l.b16 %v2000
  %v3196 = vunpack.c.h.b16 %v2000
  %v3197 = vunpack.c.l.b16 %v2001
  %v3198 = vunpack.c.h.b16 %v2001
  %v3199 = vunpack.c.l.b16 %v2002
  %v3200 = vunpack.c.h.b16 %v2002
  %v3201 = vunpack.c.l.b16 %v2003
  %v3202 = vpack.c.b16 %v3139, %v3076
  %v3203 = vpack.c.b16 %v3140, %v3077
  %v3204 = vpack.c.b16 %v3141, %v3078
  %v3205 = vpack.c.b16 %v3142, %v3079
  %v3206 = vpack.c.b16 %v3143, %v3080
  %v3207 = vpack.c.b16 %v3144, %v3081
  %v3208 = vpack.c.b16 %v3145, %v3082
  %v3209 = vpack.c.b16 %v3146, %v3083
  %v3210 = vpack.c.b16 %v3147, %v3084
  %v3211 = vpack.c.b16 %v3148, %v3085
  %v3212 = vpack.c.b16 %v3149, %v3086
  %v3213 = vpack.c.b16 %v3150, %v3087
  %v3214 = vpack.c.b16 %v3151, %v3088
  %v3215 = vpack.c.b16 %v3152, %v3089
  %v3216 = vpack.c.b16 %v3153, %v3090
  %v3217 = vpack.c.b16 %v3154, %v3091
  %v3218 = vpack.c.b16 %v3155, %v3092
  %v3219 = vpack.c.b16 %v3156, %v3093
  %v3220 = vpack.c.b16 %v3157, %v3094
  %v3221 = vpack.c.b16 %v3158, %v3095
  %v3222 = vpack.c.b16 %v3159, %v3096
  %v3223 = vpack.c.b16 %v3160, %v3097
  %v3224 = vpack.c.b16 %v3161, %v3098
  %v3225 = vpack.c.b16 %v3162, %v3099
  %v3226 = vpack.c.b16 %v3163, %v3100
  %v3227 = vpack.c.b16 %v3164, %v3101
  %v3228 = vpack.c.b16 %v3165, %v3102
  %v3229 = vpack.c.b16 %v3166, %v3103
  %v3230 = vpack.c.b16 %v3167, %v3104
  %v3231 = vpack.c.b16 %v3168, %v3105
  %v3232 = vpack.c.b16 %v3169, %v3106
  %v3233 = vpack.c.b16 %v3170, %v3107
  %v3234 = vpack.c.b16 %v3171, %v3108
  %v3235 = vpack.c.b16 %v3172, %v3109
  %v3236 = vpack.c.b16 %v3173, %v3110
  %v3237 = vpack.c.b16 %v3174, %v3111
  %v3238 = vpack.c.b16 %v3175, %v3112
  %v3239 = vpack.c.b16 %v3176, %v3113
  %v3240 = vpack.c.b16 %v3177, %v3114
  %v3241 = vpack.c.b16 %v3178, %v3115
  %v3242 = vpack.c.b16 %v3179, %v3116
  %v3243 = vpack.c.b16 %v3180, %v3117
  %v3244 = vpack.c.b16 %v3181, %v3118
  %v3245 = vpack.c.b16 %v3182, %v3119
  %v3246 = vpack.c.b16 %v3183, %v3120
  %v3247 = vpack.c.b16 %v3184, %v3121
  %v3248 = vpack.c.b16 %v3185, %v3122
  %v3249 = vpack.c.b16 %v3186, %v3123
  %v3250 = vpack.c.b16 %v3187, %v3124
  %v3251 = vpack.c.b16 %v3188, %v3125
  %v3252 = vpack.c.b16 %v3189, %v3126
  %v3253 = vpack.c.b16 %v3190, %v3127
  %v3254 = vpack.c.b16 %v3191, %v3128
  %v3255 = vpack.c.b16 %v3192, %v3129
  %v3256 = vpack.c.b16 %v3193, %v3130
  %v3257 = vpack.c.b16 %v3194, %v3131
  %v3258 = vpack.c.b16 %v3195, %v3132
  %v3259 = vpack.c.b16 %v3196, %v3133
  %v3260 = vpack.c.b16 %v3197, %v3134
  %v3261 = vpack.c.b16 %v3198, %v3135
  %v3262 = vpack.c.b16 %v3199, %v3136
  %v3263 = vpack.c.b16 %v3200, %v3137
  %v3264 = vpack.c.b16 %v3201, %v3138
  %v4336 = vunpack.c.l.b16 %v2004
  %v4337 = vunpack.c.l.b16 %v2005
  %v4338 = vunpack.c.l.b16 %v2006
  %v4339 = vunpack.c.l.b16 %v2007
  %v4340 = vunpack.c.l.b16 %v2008
  %v4341 = vunpack.c.l.b16 %v2009
  %v4342 = vunpack.c.l.b16 %v2010
  %v4343 = vunpack.c.l.b16 %v2011
  %v4344 = vunpack.c.l.b16 %v2012
  %v4345 = vunpack.c.l.b16 %v2013
  %v4346 = vunpack.c.l.b16 %v2014
  %v4347 = vunpack.c.l.b16 %v2015
  %v4348 = vunpack.c.l.b16 %v2016
  %v4349 = vunpack.c.l.b16 %v2017
  %v4350 = vunpack.c.l.b16 %v2018
  %v4351 = vunpack.c.l.b16 %v2019
  %v4352 = vunpack.c.l.b16 %v2020
  %v4353 = vunpack.c.l.b16 %v2021
  %v4354 = vunpack.c.l.b16 %v2022
  %v4355 = vunpack.c.l.b16 %v2023
  %v4356 = vunpack.c.l.b16 %v2024
  %v4357 = vunpack.c.l.b16 %v2025
  %v4358 = vunpack.c.l.b16 %v2026
  %v4359 = vunpack.c.l.b16 %v2027
  %v4360 = vunpack.c.l.b16 %v2028
  %v4361 = vunpack.c.l.b16 %v2029
  %v4362 = vunpack.c.l.b16 %v2030
  %v4363 = vunpack.c.l.b16 %v2031
  %v4364 = vunpack.c.l.b16 %v2032
  %v4365 = vunpack.c.l.b16 %v2033
  %v4366 = vunpack.c.l.b16 %v2034
  %v4367 = vunpack.c.l.b16 %v2035
  %v4368 = vunpack.c.l.b16 %v2036
  %v4369 = vunpack.c.l.b16 %v2037
  %v4370 = vunpack.c.l.b16 %v2038
  %v4371 = vunpack.c.l.b16 %v2039
  %v4372 = vunpack.c.l.b16 %v2040
  %v4373 = vunpack.c.l.b16 %v2041
  %v4374 = vunpack.c.l.b16 %v2042
  %v4375 = vunpack.c.l.b16 %v2043
  %v4376 = vunpack.c.l.b16 %v2044
  %v4377 = vunpack.c.l.b16 %v2045
  %v4378 = vunpack.c.l.b16 %v2046
  %v4379 = vunpack.c.l.b16 %v2047
  %v4380 = vunpack.c.l.b16 %v2048
  %v4381 = vunpack.c.l.b16 %v2049
  %v4382 = vunpack.c.l.b16 %v2050
  %v4383 = vunpack.c.l.b16 %v2051
  %v4384 = vunpack.c.l.b16 %v2052
  %v4385 = vunpack.c.l.b16 %v2053
  %v4386 = vunpack.c.l.b16 %v2054
  %v4387 = vunpack.c.l.b16 %v2055
  %v4388 = vunpack.c.l.b16 %v2056
  %v4389 = vunpack.c.l.b16 %v2057
  %v4390 = vunpack.c.l.b16 %v2058
  %v4391 = vunpack.c.l.b16 %v2059
  %v4392 = vunpack.c.l.b16 %v2060
  %v4393 = vunpack.c.l.b16 %v2061
  %v4394 = vunpack.c.l.b16 %v2062
  %v4395 = vunpack.c.l.b16 %v2063
  %v4396 = vunpack.c.l.b16 %v2064
  %v4397 = vunpack.c.l.b16 %v2065
  %v4398 = vunpack.c.l.b16 %v2066
  %v4399 = vunpack.c.l.b16 %v2067
  %v4400 = vunpack.c.l.b16 %v2068
  %v4401 = vunpack.c.l.b16 %v2069
  %v4402 = vunpack.c.l.b16 %v2070
  %v4403 = vunpack.c.l.b16 %v2071
  %v4404 = vunpack.c.l.b16 %v2072
  %v4405 = vunpack.c.l.b16 %v2073
  %v4406 = vunpack.c.l.b16 %v2074
  %v4407 = vunpack.c.l.b16 %v2075
  %v4408 = vunpack.c.l.b16 %v2076
  %v4409 = vunpack.c.l.b16 %v2077
  %v4410 = vunpack.c.l.b16 %v2078
  %v4411 = vunpack.c.l.b16 %v2079
  %v4412 = vunpack.c.l.b16 %v2080
  %v4413 = vunpack.c.l.b16 %v2081
  %v4414 = vunpack.c.l.b16 %v2082
  %v4415 = vunpack.c.l.b16 %v2083
  %v4416 = vunpack.c.l.b16 %v2084
  %v4417 = vunpack.c.l.b16 %v2085
  %v4418 = vunpack.c.l.b16 %v2086
  %v4419 = vunpack.c.l.b16 %v2087
  %v4420 = vunpack.c.l.b16 %v2088
  %v4421 = vunpack.c.l.b16 %v2089
  %v4422 = vunpack.c.l.b16 %v2090
  %v4423 = vunpack.c.l.b16 %v2091
  %v4424 = vunpack.c.l.b16 %v2092
  %v4425 = vunpack.c.l.b16 %v2093
  %v4426 = vunpack.c.l.b16 %v2094
  %v4427 = vunpack.c.l.b16 %v2095
  %v4428 = vunpack.c.l.b16 %v2096
  %v4429 = vunpack.c.l.b16 %v2097
  %v4430 = vunpack.c.l.b16 %v2098
  %v4431 = vunpack.c.l.b16 %v2099
  %v4432 = vunpack.c.l.b16 %v2100
  %v4433 = vunpack.c.l.b16 %v2101
  %v4434 = vunpack.c.l.b16 %v2102
  %v4435 = vunpack.c.l.b16 %v2103
  %v4436 = vunpack.c.l.b16 %v2104
  %v4437 = vunpack.c.l.b16 %v2105
  %v4438 = vunpack.c.l.b16 %v2106
  %v4439 = vunpack.c.l.b16 %v2107
  %v4440 = vunpack.c.l.b16 %v2108
  %v4441 = vunpack.c.l.b16 %v2109
  %v4442 = vunpack.c.l.b16 %v2110
  %v4443 = vunpack.c.l.b16 %v2111
  %v4444 = vunpack.c.l.b16 %v2112
  %v4445 = vunpack.c.l.b16 %v2113
  %v4446 = vunpack.c.l.b16 %v2114
  %v4447 = vunpack.c.l.b16 %v2115
  %v4448 = vunpack.c.l.b16 %v2116
  %v4449 = vunpack.c.l.b16 %v2117
  %v4450 = vunpack.c.l.b16 %v2118
  %v4451 = vunpack.c.l.b16 %v2119
  %v4452 = vunpack.c.l.b16 %v2120
  %v4453 = vunpack.c.l.b16 %v2121
  %v4454 = vunpack.c.l.b16 %v2122
  %v4455 = vunpack.c.l.b16 %v2123
  %v4456 = vunpack.c.l.b16 %v2124
  %v4457 = vunpack.c.l.b16 %v2125
  %v4458 = vunpack.c.l.b16 %v2126
  %v4459 = vunpack.c.l.b16 %v2127
  %v4460 = vunpack.c.l.b16 %v2128
  %v4461 = vunpack.c.l.b16 %v2129
  %v4462 = vunpack.c.l.b16 %v2130
  %v4463 = vunpack.c.l.b16 %v2131
  %v4464 = vunpack.c.l.b16 %v2132
  %v4465 = vunpack.c.l.b16 %v2133
  %v4466 = vunpack.c.l.b16 %v2134
  %v4467 = vunpack.c.l.b16 %v2135
  %v4468 = vunpack.c.l.b16 %v2136
  %v4469 = vunpack.c.l.b16 %v2137
  %v4470 = vunpack.c.l.b16 %v2138
  %v4471 = vunpack.c.l.b16 %v2139
  %v4472 = vunpack.c.l.b16 %v2140
  %v4473 = vunpack.c.l.b16 %v2141
  %v4474 = vunpack.c.l.b16 %v2142
  %v4475 = vunpack.c.l.b16 %v2143
  %v4476 = vunpack.c.l.b16 %v2144
  %v4477 = vunpack.c.l.b16 %v2145
  %v4478 = vunpack.c.l.b16 %v2146
  %v4479 = vunpack.c.l.b16 %v2147
  %v4480 = vunpack.c.l.b16 %v2148
  %v4481 = vunpack.c.l.b16 %v2149
  %v4482 = vunpack.c.l.b16 %v2150
  %v4483 = vunpack.c.l.b16 %v2151
  %v4484 = vunpack.c.l.b16 %v2152
  %v4485 = vunpack.c.l.b16 %v2153
  %v4486 = vunpack.c.l.b16 %v2154
  %v4487 = vunpack.c.l.b16 %v2155
  %v4488 = vunpack.c.l.b16 %v2156
  %v4489 = vunpack.c.l.b16 %v2157
  %v4490 = vunpack.c.l.b16 %v2158
  %v4491 = vunpack.c.l.b16 %v2159
  %v4492 = vunpack.c.l.b16 %v2160
  %v4493 = vunpack.c.l.b16 %v2161
  %v4494 = vunpack.c.l.b16 %v2162
  %v4495 = vunpack.c.l.b16 %v2163
  %v4496 = vunpack.c.l.b16 %v2164
  %v4497 = vunpack.c.l.b16 %v2165
  %v4498 = vunpack.c.l.b16 %v2166
  %v4499 = vunpack.c.l.b16 %v2167
  %v4500 = vunpack.c.l.b16 %v2168
  %v4501 = vunpack.c.l.b16 %v2169
  %v4502 = vunpack.c.l.b16 %v2170
  %v4503 = vunpack.c.l.b16 %v2171
  %v4504 = vunpack.c.l.b16 %v2172
  %v4505 = vunpack.c.l.b16 %v2173
  %v4506 = vunpack.c.l.b16 %v2174
  %v4507 = vunpack.c.l.b16 %v2175
  %v4508 = vunpack.c.l.b16 %v2176
  %v4509 = vunpack.c.l.b16 %v2177
  %v4510 = vunpack.c.l.b16 %v2178
  %v4511 = vunpack.c.l.b16 %v2179
  %v4512 = vunpack.c.l.b16 %v2180
  %v4513 = vunpack.c.l.b16 %v2181
  %v4514 = vunpack.c.l.b16 %v2182
  %v4515 = vunpack.c.l.b16 %v2183
  %v4516 = vunpack.c.l.b16 %v2184
  %v4517 = vunpack.c.l.b16 %v2185
  %v4518 = vunpack.c.l.b16 %v2186
  %v4519 = vunpack.c.l.b16 %v2187
  %v4520 = vunpack.c.l.b16 %v2188
  %v4521 = vunpack.c.l.b16 %v2189
  %v4522 = vunpack.c.l.b16 %v2190
  %v4523 = vunpack.c.l.b16 %v2191
  %v4524 = vunpack.c.l.b16 %v2192
  %v4525 = vunpack.c.l.b16 %v2193
  %v4526 = vunpack.c.l.b16 %v2194
  %v4527 = vunpack.c.l.b16 %v2195
  %v4528 = vunpack.c.l.b16 %v2196
  %v4529 = vunpack.c.l.b16 %v2197
  %v4530 = vunpack.c.l.b16 %v2198
  %v4531 = vunpack.c.l.b16 %v2199
  %v4532 = vunpack.c.l.b16 %v2200
  %v4533 = vunpack.c.l.b16 %v2201
  %v4534 = vunpack.c.l.b16 %v2202
  %v4535 = vunpack.c.l.b16 %v2203
  %v4536 = vunpack.c.l.b16 %v2204
  %v4537 = vunpack.c.l.b16 %v2205
  %v4538 = vunpack.c.l.b16 %v2206
  %v4539 = vunpack.c.l.b16 %v2207
  %v4540 = vunpack.c.l.b16 %v2208
  %v4541 = vunpack.c.l.b16 %v2209
  %v4542 = vunpack.c.l.b16 %v2210
  %v4543 = vunpack.c.l.b16 %v2211
  %v4544 = vunpack.c.l.b16 %v2212
  %v4545 = vunpack.c.l.b16 %v2213
  %v4546 = vunpack.c.l.b16 %v2214
  %v4547 = vunpack.c.l.b16 %v2215
  %v4548 = vunpack.c.l.b16 %v2216
  %v4549 = vunpack.c.l.b16 %v2217
  %v4550 = vunpack.c.l.b16 %v2218
  %v4551 = vunpack.c.l.b16 %v2219
  %v4552 = vunpack.c.l.b16 %v2220
  %v4553 = vunpack.c.l.b16 %v2221
  %v4554 = vunpack.c.l.b16 %v2222
  %v4555 = vunpack.c.l.b16 %v2223
  %v4556 = vunpack.c.l.b16 %v2224
  %v4557 = vunpack.c.l.b16 %v2225
  %v4558 = vunpack.c.l.b16 %v2226
  %v4559 = vunpack.c.l.b16 %v2227
  %v4560 = vunpack.c.l.b16 %v2228
  %v4561 = vunpack.c.l.b16 %v2229
  %v4562 = vunpack.c.l.b16 %v2230
  %v4563 = vunpack.c.l.b16 %v2231
  %v4564 = vunpack.c.l.b16 %v2232
  %v4565 = vunpack.c.l.b16 %v2233
  %v4566 = vunpack.c.l.b16 %v2234
  %v4567 = vunpack.c.l.b16 %v2235
  %v4568 = vunpack.c.l.b16 %v2236
  %v4569 = vunpack.c.l.b16 %v2237
  %v4570 = vunpack.c.l.b16 %v2238
  %v4571 = vunpack.c.l.b16 %v2239
  %v4572 = vunpack.c.l.b16 %v2240
  %v4573 = vunpack.c.l.b16 %v2241
  %v4574 = vunpack.c.l.b16 %v2242
  %v4575 = vunpack.c.l.b16 %v2243
  %v4576 = vunpack.c.l.b16 %v2244
  %v4577 = vunpack.c.l.b16 %v2245
  %v4578 = vunpack.c.l.b16 %v2246
  %v4579 = vunpack.c.l.b16 %v2247
  %v4580 = vunpack.c.l.b16 %v2248
  %v4581 = vunpack.c.l.b16 %v2249
  %v4582 = vunpack.c.l.b16 %v2250
  %v4583 = vunpack.c.l.b16 %v2251
  %v4584 = vunpack.c.l.b16 %v2252
  %v4585 = vunpack.c.l.b16 %v2253
  %v4586 = vunpack.c.l.b16 %v2254
  %v4587 = vunpack.c.l.b16 %v2255
  %v4588 = vunpack.c.l.b16 %v2256
  %v4589 = vunpack.c.l.b16 %v2257
  %v4590 = vunpack.c.l.b16 %v2258
  %v4591 = vunpack.c.l.b16 %v2259
  %v4592 = vunpack.c.l.b16 %v2260
  %v4593 = vunpack.c.l.b16 %v2261
  %v4594 = vunpack.c.l.b16 %v2262
  %v4595 = vunpack.c.l.b16 %v2263
  %v4596 = vunpack.c.l.b16 %v2264
  %v4597 = vunpack.c.l.b16 %v2265
  %v4598 = vunpack.c.l.b16 %v2266
  %v4599 = vunpack.c.l.b16 %v2267
  %v4600 = vunpack.c.l.b16 %v2268
  %v4601 = vunpack.c.l.b16 %v2269
  %v4602 = vunpack.c.l.b16 %v2270
  %v4603 = vunpack.c.l.b16 %v2271
  %v4604 = vunpack.c.l.b16 %v2272
  %v4605 = vunpack.c.l.b16 %v2273
  %v4606 = vunpack.c.l.b16 %v2274
  %v4607 = vunpack.c.l.b16 %v2275
  %v4608 = vunpack.c.l.b16 %v2276
  %v4609 = vunpack.c.l.b16 %v2277
  %v4610 = vunpack.c.l.b16 %v2278
  %v4611 = vunpack.c.l.b16 %v2279
  %v4612 = vunpack.c.l.b16 %v2280
  %v4613 = vunpack.c.l.b16 %v2281
  %v4614 = vunpack.c.l.b16 %v2282
  %v4615 = vunpack.c.l.b16 %v2283
  %v4616 = vunpack.c.l.b16 %v2284
  %v4617 = vunpack.c.l.b16 %v2285
  %v4618 = vunpack.c.l.b16 %v2286
  %v4619 = vunpack.c.l.b16 %v2287
  %v4620 = vunpack.c.l.b16 %v2288
  %v4621 = vunpack.c.l.b16 %v2289
  %v4622 = vunpack.c.l.b16 %v2290
  %v4623 = vunpack.c.l.b16 %v2291
  %v4624 = vunpack.c.l.b16 %v2292
  %v4625 = vunpack.c.l.b16 %v2293
  %v4626 = vunpack.c.l.b16 %v2294
  %v4627 = vunpack.c.l.b16 %v2295
  %v4628 = vunpack.c.l.b16 %v2296
  %v4629 = vunpack.c.l.b16 %v2297
  %v4630 = vunpack.c.l.b16 %v2298
  %v4631 = vunpack.c.l.b16 %v2299
  %v4632 = vunpack.c.l.b16 %v2300
  %v4633 = vunpack.c.l.b16 %v2301
  %v4634 = vunpack.c.l.b16 %v2302
  %v4635 = vunpack.c.l.b16 %v2303
  %v4636 = vunpack.c.l.b16 %v2304
  %v4637 = vunpack.c.l.b16 %v2305
  %v4638 = vunpack.c.l.b16 %v2306
  %v4639 = vunpack.c.l.b16 %v2307
  %v4640 = vunpack.c.l.b16 %v2308
  %v4641 = vunpack.c.l.b16 %v2309
  %v4642 = vunpack.c.l.b16 %v2310
  %v4643 = vunpack.c.l.b16 %v2311
  %v4644 = vunpack.c.l.b16 %v2312
  %v4645 = vunpack.c.l.b16 %v2313
  %v4646 = vunpack.c.l.b16 %v2314
  %v4647 = vunpack.c.l.b16 %v2315
  %v4648 = vunpack.c.l.b16 %v2316
  %v4649 = vunpack.c.l.b16 %v2317
  %v4650 = vunpack.c.l.b16 %v2318
  %v4651 = vunpack.c.l.b16 %v2319
  %v4652 = vunpack.c.l.b16 %v2320
  %v4653 = vunpack.c.l.b16 %v2321
  %v4654 = vunpack.c.l.b16 %v2322
  %v4655 = vunpack.c.l.b16 %v2323
  %v4656 = vunpack.c.l.b16 %v2324
  %v4657 = vunpack.c.l.b16 %v2325
  %v4658 = vunpack.c.l.b16 %v2326
  %v4659 = vunpack.c.l.b16 %v2327
  %v4660 = vunpack.c.l.b16 %v2328
  %v4661 = vunpack.c.l.b16 %v2329
  %v4662 = vunpack.c.l.b16 %v2330
  %v4663 = vunpack.c.l.b16 %v2331
  %v4664 = vunpack.c.l.b16 %v2332
  %v4665 = vunpack.c.l.b16 %v2333
  %v4666 = vunpack.c.l.b16 %v2334
  %v4667 = vunpack.c.l.b16 %v2335
  %v4668 = vunpack.c.l.b16 %v2336
  %v4669 = vunpack.c.l.b16 %v2337
  %v4670 = vunpack.c.l.b16 %v2338
  %v4671 = vunpack.c.l.b16 %v2339
  %v4672 = vunpack.c.l.b16 %v2340
  %v4673 = vunpack.c.l.b16 %v2341
  %v4674 = vunpack.c.l.b16 %v2342
  %v4675 = vunpack.c.l.b16 %v2343
  %v4676 = vunpack.c.l.b16 %v2344
  %v4677 = vunpack.c.l.b16 %v2345
  %v4678 = vunpack.c.l.b16 %v2346
  %v4679 = vunpack.c.l.b16 %v2347
  %v4680 = vunpack.c.l.b16 %v2348
  %v4681 = vunpack.c.l.b16 %v2349
  %v4682 = vunpack.c.l.b16 %v2350
  %v4683 = vunpack.c.l.b16 %v2351
  %v4684 = vunpack.c.l.b16 %v2352
  %v4685 = vunpack.c.l.b16 %v2353
  %v4686 = vunpack.c.l.b16 %v2354
  %v4687 = vunpack.c.l.b16 %v2355
  %v4688 = vunpack.c.l.b16 %v2356
  %v4689 = vunpack.c.l.b16 %v2357
  %v4690 = vunpack.c.l.b16 %v2358
  %v4691 = vunpack.c.l.b16 %v2359
  %v4692 = vunpack.c.l.b16 %v2360
  %v4693 = vunpack.c.l.b16 %v2361
  %v4694 = vunpack.c.l.b16 %v2362
  %v4695 = vunpack.c.l.b16 %v2363
  %v4696 = vunpack.c.l.b16 %v2364
  %v4697 = vunpack.c.l.b16 %v2365
  %v4698 = vunpack.c.l.b16 %v2366
  %v4699 = vunpack.c.l.b16 %v2367
  %v4700 = vunpack.c.l.b16 %v2368
  %v4701 = vunpack.c.l.b16 %v2369
  %v4702 = vunpack.c.l.b16 %v2370
  %v4703 = vunpack.c.l.b16 %v2371
  %v4704 = vunpack.c.l.b16 %v2372
  %v4705 = vunpack.c.l.b16 %v2373
  %v4706 = vunpack.c.l.b16 %v2374
  %v4707 = vunpack.c.l.b16 %v2375
  %v4708 = vunpack.c.l.b16 %v2376
  %v4709 = vunpack.c.l.b16 %v2377
  %v4710 = vunpack.c.l.b16 %v2378
  %v4711 = vunpack.c.l.b16 %v2379
  %v4712 = vunpack.c.l.b16 %v2380
  %v4713 = vunpack.c.l.b16 %v2381
  %v4714 = vunpack.c.l.b16 %v2382
  %v4715 = vunpack.c.l.b16 %v2383
  %v4716 = vunpack.c.l.b16 %v2384
  %v4717 = vunpack.c.l.b16 %v2385
  %v4718 = vunpack.c.l.b16 %v2386
  %v4719 = vunpack.c.l.b16 %v2387
  %v4720 = vunpack.c.l.b16 %v2388
  %v4721 = vunpack.c.l.b16 %v2389
  %v4722 = vunpack.c.l.b16 %v2390
  %v4723 = vunpack.c.l.b16 %v2391
  %v4724 = vunpack.c.l.b16 %v2392
  %v4725 = vunpack.c.l.b16 %v2393
  %v4726 = vunpack.c.l.b16 %v2394
  %v4727 = vunpack.c.l.b16 %v2395
  %v4728 = vunpack.c.l.b16 %v2396
  %v4729 = vunpack.c.l.b16 %v2397
  %v4730 = vunpack.c.l.b16 %v2398
  %v4731 = vunpack.c.l.b16 %v2399
  %v4732 = vunpack.c.l.b16 %v2400
  %v4733 = vunpack.c.l.b16 %v2401
  %v4734 = vunpack.c.l.b16 %v2402
  %v4735 = vunpack.c.l.b16 %v2403
  %v4736 = vunpack.c.l.b16 %v2404
  %v4737 = vunpack.c.l.b16 %v2405
  %v4738 = vunpack.c.l.b16 %v2406
  %v4739 = vunpack.c.l.b16 %v2407
  %v4740 = vunpack.c.l.b16 %v2408
  %v4741 = vunpack.c.l.b16 %v2409
  %v4742 = vunpack.c.l.b16 %v2410
  %v4743 = vunpack.c.l.b16 %v2411
  %v4744 = vunpack.c.l.b16 %v2412
  %v4745 = vunpack.c.l.b16 %v2413
  %v4746 = vunpack.c.l.b16 %v2414
  %v4747 = vunpack.c.l.b16 %v2415
  %v4748 = vunpack.c.l.b16 %v2416
  %v4749 = vunpack.c.l.b16 %v2417
  %v4750 = vunpack.c.l.b16 %v2418
  %v4751 = vunpack.c.l.b16 %v2419
  %v4752 = vunpack.c.l.b16 %v2420
  %v4753 = vunpack.c.l.b16 %v2421
  %v4754 = vunpack.c.l.b16 %v2422
  %v4755 = vunpack.c.l.b16 %v2423
  %v4756 = vunpack.c.l.b16 %v2424
  %v4757 = vunpack.c.l.b16 %v2425
  %v4758 = vunpack.c.l.b16 %v2426
  %v4759 = vunpack.c.l.b16 %v2427
  %v4760 = vunpack.c.l.b16 %v2428
  %v4761 = vunpack.c.l.b16 %v2429
  %v4762 = vunpack.c.l.b16 %v2430
  %v4763 = vunpack.c.l.b16 %v2431
  %v4764 = vunpack.c.l.b16 %v2432
  %v4765 = vunpack.c.l.b16 %v2433
  %v4766 = vunpack.c.l.b16 %v2434
  %v4767 = vunpack.c.l.b16 %v2435
  %v4768 = vunpack.c.l.b16 %v2436
  %v4769 = vunpack.c.l.b16 %v2437
  %v4770 = vunpack.c.l.b16 %v2438
  %v4771 = vunpack.c.l.b16 %v2439
  %v4772 = vunpack.c.l.b16 %v2440
  %v4773 = vunpack.c.l.b16 %v2441
  %v4774 = vunpack.c.l.b16 %v2442
  %v4775 = vunpack.c.l.b16 %v2443
  %v4776 = vunpack.c.l.b16 %v2444
  %v4777 = vunpack.c.l.b16 %v2445
  %v4778 = vunpack.c.l.b16 %v2446
  %v4779 = vunpack.c.l.b16 %v2447
  %v4780 = vunpack.c.l.b16 %v2448
  %v4781 = vunpack.c.l.b16 %v2449
  %v4782 = vunpack.c.l.b16 %v2450
  %v4783 = vunpack.c.l.b16 %v2451
  %v4784 = vunpack.c.l.b16 %v2452
  %v4785 = vunpack.c.l.b16 %v2453
  %v4786 = vunpack.c.l.b16 %v2454
  %v4787 = vunpack.c.l.b16 %v2455
  %v4788 = vunpack.c.l.b16 %v2456
  %v4789 = vunpack.c.l.b16 %v2457
  %v4790 = vunpack.c.l.b16 %v2458
  %v4791 = vunpack.c.l.b16 %v2459
  %v4792 = vunpack.c.l.b16 %v2460
  %v4793 = vunpack.c.l.b16 %v2461
  %v4794 = vunpack.c.l.b16 %v2462
  %v4795 = vunpack.c.l.b16 %v2463
  %v4796 = vunpack.c.l.b16 %v2464
  %v4797 = vunpack.c.l.b16 %v2465
  %v4798 = vunpack.c.l.b16 %v2466
  %v4799 = vunpack.c.l.b16 %v2467
  %v4800 = vunpack.c.l.b16 %v2468
  %v4801 = vunpack.c.l.b16 %v2469
  %v4802 = vunpack.c.l.b16 %v2470
  %v4803 = vunpack.c.l.b16 %v2471
  %v4804 = vunpack.c.l.b16 %v2472
  %v4805 = vunpack.c.l.b16 %v2473
  %v4806 = vunpack.c.l.b16 %v2474
  %v4807 = vunpack.c.l.b16 %v2475
  %v4808 = vunpack.c.l.b16 %v2476
  %v4809 = vunpack.c.l.b16 %v2477
  %v4810 = vunpack.c.l.b16 %v2478
  %v4811 = vunpack.c.l.b16 %v2479
  %v4812 = vunpack.c.l.b16 %v2480
  %v4813 = vunpack.c.l.b16 %v2481
  %v4814 = vunpack.c.l.b16 %v2482
  %v4815 = vunpack.c.l.b16 %v2483
  %v4816 = vunpack.c.l.b16 %v2484
  %v4817 = vunpack.c.l.b16 %v2485
  %v4818 = vunpack.c.l.b16 %v2486
  %v4819 = vunpack.c.l.b16 %v2487
  %v4820 = vunpack.c.l.b16 %v2488
  %v4821 = vunpack.c.l.b16 %v2489
  %v4822 = vunpack.c.l.b16 %v2490
  %v4823 = vunpack.c.l.b16 %v2491
  %v4824 = vunpack.c.l.b16 %v2492
  %v4825 = vunpack.c.l.b16 %v2493
  %v4826 = vunpack.c.l.b16 %v2494
  %v4827 = vunpack.c.l.b16 %v2495
  %v4828 = vunpack.c.l.b16 %v2496
  %v4829 = vunpack.c.l.b16 %v2497
  %v4830 = vunpack.c.l.b16 %v2498
  %v4831 = vunpack.c.l.b16 %v2499
  %v4832 = vunpack.c.l.b16 %v2500
  %v4833 = vunpack.c.l.b16 %v2501
  %v4834 = vunpack.c.l.b16 %v2502
  %v4835 = vunpack.c.l.b16 %v2503
  %v4836 = vunpack.c.l.b16 %v2504
  %v4837 = vunpack.c.l.b16 %v2505
  %v4838 = vunpack.c.l.b16 %v2506
  %v4839 = vunpack.c.l.b16 %v2507
  %v4840 = vunpack.c.l.b16 %v2508
  %v4841 = vunpack.c.l.b16 %v2509
  %v4842 = vunpack.c.l.b16 %v2510
  %v4843 = vunpack.c.l.b16 %v2511
  %v4844 = vunpack.c.l.b16 %v2512
  %v4845 = vunpack.c.l.b16 %v2513
  %v4846 = vunpack.c.l.b16 %v2514
  %v4847 = vunpack.c.l.b16 %v2515
  %v4848 = vunpack.c.l.b16 %v2516
  %v4849 = vunpack.c.l.b16 %v2517
  %v4850 = vunpack.c.l.b16 %v2518
  %v4851 = vunpack.c.l.b16 %v2519
  %v4852 = vunpack.c.l.b16 %v2520
  %v4853 = vunpack.c.l.b16 %v2521
  %v4854 = vunpack.c.l.b16 %v2522
  %v4855 = vunpack.c.l.b16 %v2523
  %v4856 = vunpack.c.l.b16 %v2524
  %v4857 = vunpack.c.l.b16 %v2525
  %v4858 = vunpack.c.l.b16 %v2526
  %v4859 = vunpack.c.l.b16 %v2527
  %v4860 = vunpack.c.l.b16 %v2528
  %v4861 = vunpack.c.l.b16 %v2529
  %v4862 = vunpack.c.l.b16 %v2530
  %v4863 = vunpack.c.l.b16 %v2531
  %v4864 = vunpack.c.l.b16 %v2532
  %v4865 = vunpack.c.l.b16 %v2533
  %v4866 = vunpack.c.l.b16 %v2534
  %v4867 = vunpack.c.l.b16 %v2535
  %v4868 = vunpack.c.l.b16 %v2536
  %v4869 = vunpack.c.l.b16 %v2537
  %v4870 = vunpack.c.l.b16 %v2538
  %v4871 = vunpack.c.l.b16 %v2539
  %v4872 = vunpack.c.l.b16 %v2540
  %v4873 = vunpack.c.l.b16 %v2541
  %v4874 = vunpack.c.l.b16 %v2542
  %v4875 = vunpack.c.l.b16 %v2543
  %v4876 = vunpack.c.l.b16 %v2544
  %v4877 = vunpack.c.l.b16 %v2545
  %v4878 = vunpack.c.l.b16 %v2546
  %v4879 = vunpack.c.l.b16 %v2547
  %v4880 = vunpack.c.l.b16 %v2548
  %v4881 = vunpack.c.l.b16 %v2549
  %v4882 = vunpack.c.l.b16 %v2550
  %v4883 = vunpack.c.l.b16 %v2551
  %v4884 = vunpack.c.l.b16 %v2552
  %v4885 = vunpack.c.l.b16 %v2553
  %v4886 = vunpack.c.l.b16 %v2554
  %v4887 = vunpack.c.l.b16 %v2555
  %v4888 = vunpack.c.l.b16 %v2556
  %v4889 = vunpack.c.l.b16 %v2557
  %v4890 = vunpack.c.l.b16 %v2558
  %v4891 = vunpack.c.l.b16 %v2559
  %v4892 = vunpack.c.l.b16 %v2560
  %v4893 = vunpack.c.l.b16 %v2561
  %v4894 = vunpack.c.l.b16 %v2562
  %v4895 = vunpack.c.l.b16 %v2563
  %v4896 = vunpack.c.l.b16 %v2564
  %v4897 = vunpack.c.l.b16 %v2565
  %v4898 = vunpack.c.l.b16 %v2566
  %v4899 = vunpack.c.l.b16 %v2567
  %v4900 = vunpack.c.l.b16 %v2568
  %v4901 = vunpack.c.l.b16 %v2569
  %v4902 = vunpack.c.l.b16 %v2570
  %v4903 = vunpack.c.l.b16 %v2571
  %v4904 = vunpack.c.l.b16 %v2572
  %v4905 = vunpack.c.l.b16 %v2573
  %v4906 = vunpack.c.l.b16 %v2574
  %v4907 = vunpack.c.l.b16 %v2575
  %v4908 = vunpack.c.l.b16 %v2576
  %v4909 = vunpack.c.l.b16 %v2577
  %v4910 = vunpack.c.l.b16 %v2578
  %v4911 = vunpack.c.l.b16 %v2579
  %v4912 = vunpack.c.l.b16 %v2580
  %v4913 = vunpack.c.l.b16 %v2581
  %v4914 = vunpack.c.l.b16 %v2582
  %v4915 = vunpack.c.l.b16 %v2583
  %v4916 = vunpack.c.l.b16 %v2584
  %v4917 = vunpack.c.l.b16 %v2585
  %v4918 = vunpack.c.l.b16 %v2586
  %v4919 = vunpack.c.l.b16 %v2587
  %v4920 = vunpack.c.l.b16 %v2588
  %v4921 = vunpack.c.l.b16 %v2589
  %v4922 = vunpack.c.l.b16 %v2590
  %v4923 = vunpack.c.l.b16 %v2591
  %v4924 = vunpack.c.l.b16 %v2592
  %v4925 = vunpack.c.l.b16 %v2593
  %v4926 = vunpack.c.l.b16 %v2594
  %v4927 = vunpack.c.l.b16 %v2595
  %v4928 = vunpack.c.l.b16 %v2596
  %v4929 = vunpack.c.l.b16 %v2597
  %v4930 = vunpack.c.l.b16 %v2598
  %v4931 = vunpack.c.l.b16 %v2599
  %v4932 = vunpack.c.l.b16 %v2600
  %v4933 = vunpack.c.l.b16 %v2601
  %v4934 = vunpack.c.l.b16 %v2602
  %v4935 = vunpack.c.l.b16 %v2603
  %v4936 = vunpack.c.l.b16 %v2604
  %v4937 = vunpack.c.l.b16 %v2605
  %v4938 = vunpack.c.l.b16 %v2606
  %v4939 = vunpack.c.l.b16 %v2607
  %v4940 = vunpack.c.l.b16 %v2608
  %v4941 = vunpack.c.l.b16 %v2609
  %v4942 = vunpack.c.l.b16 %v2610
  %v4943 = vunpack.c.l.b16 %v2611
  %v4944 = vunpack.c.l.b16 %v2612
  %v4945 = vunpack.c.l.b16 %v2613
  %v4946 = vunpack.c.l.b16 %v2614
  %v4947 = vunpack.c.l.b16 %v2615
  %v4948 = vunpack.c.l.b16 %v2616
  %v4949 = vunpack.c.l.b16 %v2617
  %v4950 = vunpack.c.l.b16 %v2618
  %v4951 = vunpack.c.l.b16 %v2619
  %v4952 = vunpack.c.l.b16 %v2620
  %v4953 = vunpack.c.l.b16 %v2621
  %v4954 = vunpack.c.l.b16 %v2622
  %v4955 = vunpack.c.l.b16 %v2623
  %v4956 = vunpack.c.l.b16 %v2624
  %v4957 = vunpack.c.l.b16 %v2625
  %v4958 = vunpack.c.l.b16 %v2626
  %v4959 = vunpack.c.l.b16 %v2627
  %v4960 = vunpack.c.l.b16 %v2628
  %v4961 = vunpack.c.l.b16 %v2629
  %v4962 = vunpack.c.l.b16 %v2630
  %v4963 = vunpack.c.l.b16 %v2631
  %v4964 = vunpack.c.l.b16 %v2632
  %v4965 = vunpack.c.l.b16 %v2633
  %v4966 = vunpack.c.l.b16 %v2634
  %v4967 = vunpack.c.l.b16 %v2635
  %v4968 = vunpack.c.l.b16 %v2636
  %v4969 = vunpack.c.l.b16 %v2637
  %v4970 = vunpack.c.l.b16 %v2638
  %v4971 = vunpack.c.l.b16 %v2639
  %v4972 = vunpack.c.l.b16 %v2640
  %v4973 = vunpack.c.l.b16 %v2641
  %v4974 = vunpack.c.l.b16 %v2642
  %v4975 = vunpack.c.l.b16 %v2643
  %v4976 = vunpack.c.l.b16 %v2644
  %v4977 = vunpack.c.l.b16 %v2645
  %v4978 = vunpack.c.l.b16 %v2646
  %v4979 = vunpack.c.l.b16 %v2647
  %v4980 = vunpack.c.l.b16 %v2648
  %v4981 = vunpack.c.l.b16 %v2649
  %v4982 = vunpack.c.l.b16 %v2650
  %v4983 = vunpack.c.l.b16 %v2651
  %v4984 = vunpack.c.l.b16 %v2652
  %v4985 = vunpack.c.l.b16 %v2653
  %v4986 = vunpack.c.l.b16 %v2654
  %v4987 = vunpack.c.l.b16 %v2655
  %v4988 = vunpack.c.l.b16 %v2656
  %v4989 = vunpack.c.l.b16 %v2657
  %v4990 = vunpack.c.l.b16 %v2658
  %v4991 = vunpack.c.l.b16 %v2659
  %v4992 = vunpack.c.l.b16 %v2660
  %v4993 = vunpack.c.l.b16 %v2661
  %v4994 = vunpack.c.l.b16 %v2662
  %v4995 = vunpack.c.l.b16 %v2663
  %v4996 = vunpack.c.l.b16 %v2664
  %v4997 = vunpack.c.l.b16 %v2665
  %v4998 = vunpack.c.l.b16 %v2666
  %v4999 = vunpack.c.l.b16 %v2667
  %v5000 = vunpack.c.l.b16 %v2668
  %v5001 = vunpack.c.l.b16 %v2669
  %v5002 = vunpack.c.l.b16 %v2670
  %v5003 = vunpack.c.l.b16 %v2671
  %v5004 = vunpack.c.l.b16 %v2672
  %v5005 = vunpack.c.l.b16 %v2673
  %v5006 = vunpack.c.l.b16 %v2674
  %v5007 = vunpack.c.l.b16 %v2675
  %v5008 = vunpack.c.l.b16 %v2676
  %v5009 = vunpack.c.l.b16 %v2677
  %v5010 = vunpack.c.l.b16 %v2678
  %v5011 = vunpack.c.l.b16 %v2679
  %v5012 = vunpack.c.l.b16 %v2680
  %v5013 = vunpack.c.l.b16 %v2681
  %v5014 = vunpack.c.l.b16 %v2682
  %v5015 = vunpack.c.l.b16 %v2683
  %v5016 = vunpack.c.l.b16 %v2684
  %v5017 = vunpack.c.l.b16 %v2685
  %v5018 = vunpack.c.l.b16 %v2686
  %v5019 = vunpack.c.l.b16 %v2687
  %v5020 = vunpack.c.l.b16 %v2688
  %v5021 = vunpack.c.l.b16 %v2689
  %v5022 = vunpack.c.l.b16 %v2690
  %v5023 = vunpack.c.l.b16 %v2691
  %v5024 = vunpack.c.l.b16 %v2692
  %v5025 = vunpack.c.l.b16 %v2693
  %v5026 = vunpack.c.l.b16 %v2694
  %v5027 = vunpack.c.l.b16 %v2695
  %v5028 = vunpack.c.l.b16 %v2696
  %v5029 = vunpack.c.l.b16 %v2697
  %v5030 = vunpack.c.l.b16 %v2698
  %v5031 = vunpack.c.l.b16 %v2699
  %v5032 = vunpack.c.l.b16 %v2700
  %v5033 = vunpack.c.l.b16 %v2701
  %v5034 = vunpack.c.l.b16 %v2702
  %v5035 = vunpack.c.l.b16 %v2703
  %v5036 = vunpack.c.l.b16 %v2704
  %v5037 = vunpack.c.l.b16 %v2705
  %v5038 = vunpack.c.l.b16 %v2706
  %v5039 = vunpack.c.l.b16 %v2707
  %v5040 = vunpack.c.l.b16 %v2708
  %v5041 = vunpack.c.l.b16 %v2709
  %v5042 = vunpack.c.l.b16 %v2710
  %v5043 = vunpack.c.l.b16 %v2711
  %v5044 = vunpack.c.l.b16 %v2712
  %v5045 = vunpack.c.l.b16 %v2713
  %v5046 = vunpack.c.l.b16 %v2714
  %v5047 = vunpack.c.l.b16 %v2715
  %v5048 = vunpack.c.l.b16 %v2716
  %v5049 = vunpack.c.l.b16 %v2717
  %v5050 = vunpack.c.l.b16 %v2718
  %v5051 = vunpack.c.l.b16 %v2719
  %v5052 = vunpack.c.l.b16 %v2720
  %v5053 = vunpack.c.l.b16 %v2721
  %v5054 = vunpack.c.l.b16 %v2722
  %v5055 = vunpack.c.l.b16 %v2723
  %v5056 = vunpack.c.l.b16 %v2724
  %v5057 = vunpack.c.l.b16 %v2725
  %v5058 = vunpack.c.l.b16 %v2726
  %v5059 = vunpack.c.l.b16 %v2727
  %v5060 = vunpack.c.l.b16 %v2728
  %v5061 = vunpack.c.l.b16 %v2729
  %v5062 = vunpack.c.l.b16 %v2730
  %v5063 = vunpack.c.l.b16 %v2731
  %v5064 = vunpack.c.l.b16 %v2732
  %v5065 = vunpack.c.l.b16 %v2733
  %v5066 = vunpack.c.l.b16 %v2734
  %v5067 = vunpack.c.l.b16 %v2735
  %v5068 = vunpack.c.l.b16 %v2736
  %v5069 = vunpack.c.l.b16 %v2737
  %v5070 = vunpack.c.l.b16 %v2738
  %v5071 = vunpack.c.l.b16 %v2739
  %v5072 = vunpack.c.l.b16 %v2740
  %v5073 = vunpack.c.l.b16 %v2741
  %v5074 = vunpack.c.l.b16 %v2742
  %v5075 = vunpack.c.l.b16 %v2743
  %v5076 = vunpack.c.l.b16 %v2744
  %v5077 = vunpack.c.l.b16 %v2745
  %v5078 = vunpack.c.l.b16 %v2746
  %v5079 = vunpack.c.l.b16 %v2747
  %v5080 = vunpack.c.l.b16 %v2748
  %v5081 = vunpack.c.l.b16 %v2749
  %v5082 = vunpack.c.l.b16 %v2750
  %v5083 = vunpack.c.l.b16 %v2751
  %v5084 = vunpack.c.l.b16 %v2752
  %v5085 = vunpack.c.l.b16 %v2753
  %v5086 = vunpack.c.l.b16 %v2754
  %v5087 = vunpack.c.l.b16 %v2755
  %v5088 = vunpack.c.l.b16 %v2756
  %v5089 = vunpack.c.l.b16 %v2757
  %v5090 = vunpack.c.l.b16 %v2758
  %v5091 = vunpack.c.l.b16 %v2759
  %v5092 = vunpack.c.l.b16 %v2760
  %v5093 = vunpack.c.l.b16 %v2761
  %v5094 = vunpack.c.l.b16 %v2762
  %v5095 = vunpack.c.l.b16 %v2763
  %v5096 = vunpack.c.l.b16 %v2764
  %v5097 = vunpack.c.l.b16 %v2765
  %v5098 = vunpack.c.l.b16 %v2766
  %v5099 = vunpack.c.l.b16 %v2767
  %v5100 = vunpack.c.l.b16 %v2768
  %v5101 = vunpack.c.l.b16 %v2769
  %v5102 = vunpack.c.l.b16 %v2770
  %v5103 = vunpack.c.l.b16 %v2771
  %v5104 = vunpack.c.l.b16 %v2772
  %v5105 = vunpack.c.l.b16 %v2773
  %v5106 = vunpack.c.l.b16 %v2774
  %v5107 = vunpack.c.l.b16 %v2775
  %v5108 = vunpack.c.l.b16 %v2776
  %v5109 = vunpack.c.l.b16 %v2777
  %v5110 = vunpack.c.l.b16 %v2778
  %v5111 = vunpack.c.l.b16 %v2779
  %v5112 = vunpack.c.l.b16 %v2780
  %v5113 = vunpack.c.l.b16 %v2781
  %v5114 = vunpack.c.l.b16 %v2782
  %v5115 = vunpack.c.l.b16 %v2783
  %v5116 = vunpack.c.l.b16 %v2784
  %v5117 = vunpack.c.l.b16 %v2785
  %v5118 = vunpack.c.l.b16 %v2786
  %v5119 = vunpack.c.l.b16 %v2787
  %v5120 = vunpack.c.l.b16 %v2788
  %v5121 = vunpack.c.l.b16 %v2789
  %v5122 = vunpack.c.l.b16 %v2790
  %v5123 = vunpack.c.l.b16 %v2791
  %v5124 = vunpack.c.l.b16 %v2792
  %v5125 = vunpack.c.l.b16 %v2793
  %v5126 = vunpack.c.l.b16 %v2794
  %v5127 = vunpack.c.l.b16 %v2795
  %v5128 = vunpack.c.l.b16 %v2796
  %v5129 = vunpack.c.l.b16 %v2797
  %v5130 = vunpack.c.l.b16 %v2798
  %v5131 = vunpack.c.l.b16 %v2799
  %v5132 = vunpack.c.l.b16 %v2800
  %v5133 = vunpack.c.l.b16 %v2801
  %v5134 = vunpack.c.l.b16 %v2802
  %v5135 = vunpack.c.l.b16 %v2803
  %v5136 = vunpack.c.l.b16 %v2804
  %v5137 = vunpack.c.l.b16 %v2805
  %v5138 = vunpack.c.l.b16 %v2806
  %v5139 = vunpack.c.l.b16 %v2807
  %v5140 = vunpack.c.l.b16 %v2808
  %v5141 = vunpack.c.l.b16 %v2809
  %v5142 = vunpack.c.l.b16 %v2810
  %v5143 = vunpack.c.l.b16 %v2811
  %v5144 = vunpack.c.l.b16 %v2812
  %v5145 = vunpack.c.l.b16 %v2813
  %v5146 = vunpack.c.l.b16 %v2814
  %v5147 = vunpack.c.l.b16 %v2815
  %v5148 = vunpack.c.l.b16 %v2816
  %v5149 = vunpack.c.l.b16 %v2817
  %v5150 = vunpack.c.l.b16 %v2818
  %v5151 = vunpack.c.l.b16 %v2819
  %v5152 = vunpack.c.l.b16 %v2820
  %v5153 = vunpack.c.l.b16 %v2821
  %v5154 = vunpack.c.l.b16 %v2822
  %v5155 = vunpack.c.l.b16 %v2823
  %v5156 = vunpack.c.l.b16 %v2824
  %v5157 = vunpack.c.l.b16 %v2825
  %v5158 = vunpack.c.l.b16 %v2826
  %v5159 = vunpack.c.l.b16 %v2827
  %v5160 = vunpack.c.l.b16 %v2828
  %v5161 = vunpack.c.l.b16 %v2829
  %v5162 = vunpack.c.l.b16 %v2830
  %v5163 = vunpack.c.l.b16 %v2831
  %v5164 = vunpack.c.l.b16 %v2832
  %v5165 = vunpack.c.l.b16 %v2833
  %v5166 = vunpack.c.l.b16 %v2834
  %v5167 = vunpack.c.l.b16 %v2835
  %v5168 = vunpack.c.l.b16 %v2836
  %v5169 = vunpack.c.l.b16 %v2837
  %v5170 = vunpack.c.l.b16 %v2838
  %v5171 = vunpack.c.l.b16 %v2839
  %v5172 = vunpack.c.l.b16 %v2840
  %v5173 = vunpack.c.l.b16 %v2841
  %v5174 = vunpack.c.l.b16 %v2842
  %v5175 = vunpack.c.l.b16 %v2843
  %v5176 = vunpack.c.l.b16 %v2844
  %v5177 = vunpack.c.l.b16 %v2845
  %v5178 = vunpack.c.l.b16 %v2846
  %v5179 = vunpack.c.l.b16 %v2847
  %v5180 = vunpack.c.l.b16 %v2848
  %v5181 = vunpack.c.l.b16 %v2849
  %v5182 = vunpack.c.l.b16 %v2850
  %v5183 = vunpack.c.l.b16 %v2851
  %v5184 = vunpack.c.l.b16 %v2852
  %v5185 = vunpack.c.l.b16 %v2853
  %v5186 = vunpack.c.l.b16 %v2854
  %v5187 = vunpack.c.l.b16 %v2855
  %v5188 = vunpack.c.l.b16 %v2856
  %v5189 = vunpack.c.l.b16 %v2857
  %v5190 = vunpack.c.l.b16 %v2858
  %v5191 = vunpack.c.l.b16 %v2859
  %v5192 = vunpack.c.l.b16 %v2860
  %v5193 = vunpack.c.l.b16 %v2861
  %v5194 = vunpack.c.l.b16 %v2862
  %v5195 = vunpack.c.l.b16 %v2863
  %v5196 = vunpack.c.l.b16 %v2864
  %v5197 = vunpack.c.l.b16 %v2865
  %v5198 = vunpack.c.l.b16 %v2866
  %v5199 = vunpack.c.l.b16 %v2867
  %v5200 = vunpack.c.l.b16 %v2868
  %v5201 = vunpack.c.l.b16 %v2869
  %v5202 = vunpack.c.l.b16 %v2870
  %v5203 = vunpack.c.l.b16 %v2871
  %v5204 = vunpack.c.l.b16 %v2872
  %v5205 = vunpack.c.l.b16 %v2873
  %v5206 = vunpack.c.l.b16 %v2874
  %v5207 = vunpack.c.l.b16 %v2875
  %v5208 = vunpack.c.l.b16 %v2876
  %v5209 = vunpack.c.l.b16 %v2877
  %v5210 = vunpack.c.l.b16 %v2878
  %v5211 = vunpack.c.l.b16 %v2879
  %v5212 = vunpack.c.l.b16 %v2880
  %v5213 = vunpack.c.l.b16 %v2881
  %v5214 = vunpack.c.l.b16 %v2882
  %v5215 = vunpack.c.l.b16 %v2883
  %v5216 = vunpack.c.l.b16 %v2884
  %v5217 = vunpack.c.l.b16 %v2885
  %v5218 = vunpack.c.l.b16 %v2886
  %v5219 = vunpack.c.l.b16 %v2887
  %v5220 = vunpack.c.l.b16 %v2888
  %v5221 = vunpack.c.l.b16 %v2889
  %v5222 = vunpack.c.l.b16 %v2890
  %v5223 = vunpack.c.l.b16 %v2891
  %v5224 = vunpack.c.l.b16 %v2892
  %v5225 = vunpack.c.l.b16 %v2893
  %v5226 = vunpack.c.l.b16 %v2894
  %v5227 = vunpack.c.l.b16 %v2895
  %v5228 = vunpack.c.l.b16 %v2896
  %v5229 = vunpack.c.l.b16 %v2897
  %v5230 = vunpack.c.l.b16 %v2898
  %v5231 = vunpack.c.l.b16 %v2899
  %v5232 = vunpack.c.l.b16 %v2900
  %v5233 = vunpack.c.l.b16 %v2901
  %v5234 = vunpack.c.l.b16 %v2902
  %v5235 = vunpack.c.l.b16 %v2903
  %v5236 = vunpack.c.l.b16 %v2904
  %v5237 = vunpack.c.l.b16 %v2905
  %v5238 = vunpack.c.l.b16 %v2906
  %v5239 = vunpack.c.l.b16 %v2907
  %v5240 = vunpack.c.l.b16 %v2908
  %v5241 = vunpack.c.l.b16 %v2909
  %v5242 = vunpack.c.l.b16 %v2910
  %v5243 = vunpack.c.l.b16 %v2911
  %v5244 = vunpack.c.l.b16 %v2912
  %v5245 = vunpack.c.l.b16 %v2913
  %v5246 = vunpack.c.l.b16 %v2914
  %v5247 = vunpack.c.l.b16 %v2915
  %v5248 = vunpack.c.l.b16 %v2916
  %v5249 = vunpack.c.l.b16 %v2917
  %v5250 = vunpack.c.l.b16 %v2918
  %v5251 = vunpack.c.l.b16 %v2919
  %v5252 = vunpack.c.l.b16 %v2920
  %v5253 = vunpack.c.l.b16 %v2921
  %v5254 = vunpack.c.l.b16 %v2922
  %v5255 = vunpack.c.l.b16 %v2923
  %v5256 = vunpack.c.l.b16 %v2924
  %v5257 = vunpack.c.l.b16 %v2925
  %v5258 = vunpack.c.l.b16 %v2926
  %v5259 = vunpack.c.l.b16 %v2927
  %v5260 = vunpack.c.l.b16 %v2928
  %v5261 = vunpack.c.l.b16 %v2929
  %v5262 = vunpack.c.l.b16 %v2930
  %v5263 = vunpack.c.l.b16 %v2931
  %v5264 = vunpack.c.l.b16 %v2932
  %v5265 = vunpack.c.l.b16 %v2933
  %v5266 = vunpack.c.l.b16 %v2934
  %v5267 = vunpack.c.l.b16 %v2935
  %v5268 = vunpack.c.l.b16 %v2936
  %v5269 = vunpack.c.l.b16 %v2937
  %v5270 = vunpack.c.l.b16 %v2938
  %v5271 = vunpack.c.l.b16 %v2939
  %v5272 = vunpack.c.l.b16 %v2940
  %v5273 = vunpack.c.l.b16 %v2941
  %v5274 = vunpack.c.l.b16 %v2942
  %v5275 = vunpack.c.l.b16 %v2943
  %v5276 = vunpack.c.l.b16 %v2944
  %v5277 = vunpack.c.l.b16 %v2945
  %v5278 = vunpack.c.l.b16 %v2946
  %v5279 = vunpack.c.l.b16 %v2947
  %v5280 = vunpack.c.l.b16 %v2948
  %v5281 = vunpack.c.l.b16 %v2949
  %v5282 = vunpack.c.l.b16 %v2950
  %v5283 = vunpack.c.l.b16 %v2951
  %v5284 = vunpack.c.l.b16 %v2952
  %v5285 = vunpack.c.l.b16 %v2953
  %v5286 = vunpack.c.l.b16 %v2954
  %v5287 = vunpack.c.l.b16 %v2955
  %v5288 = vunpack.c.l.b16 %v2956
  %v5289 = vunpack.c.l.b16 %v2957
  %v5290 = vunpack.c.l.b16 %v2958
  %v5291 = vunpack.c.l.b16 %v2959
  %v5292 = vunpack.c.l.b16 %v2960
  %v5293 = vunpack.c.l.b16 %v2961
  %v5294 = vunpack.c.l.b16 %v2962
  %v5295 = vunpack.c.l.b16 %v2963
  %v5296 = vunpack.c.l.b16 %v2964
  %v5297 = vunpack.c.l.b16 %v2965
  %v5298 = vunpack.c.l.b16 %v2966
  %v5299 = vunpack.c.l.b16 %v2967
  %v5300 = vunpack.c.l.b16 %v2968
  %v5301 = vunpack.c.l.b16 %v2969
  %v5302 = vunpack.c.l.b16 %v2970
  %v5303 = vunpack.c.l.b16 %v2971
  %v5304 = vunpack.c.l.b16 %v2972
  %v5305 = vunpack.c.l.b16 %v2973
  %v5306 = vunpack.c.l.b16 %v2974
  %v5307 = vunpack.c.l.b16 %v2975
  %v5308 = vunpack.c.l.b16 %v2976
  %v5309 = vunpack.c.l.b16 %v2977
  %v5310 = vunpack.c.l.b16 %v2978
  %v5311 = vunpack.c.l.b16 %v2979
  %v5312 = vunpack.c.l.b16 %v2980
  %v5313 = vunpack.c.l.b16 %v2981
  %v5314 = vunpack.c.l.b16 %v2982
  %v5315 = vunpack.c.l.b16 %v2983
  %v5316 = vunpack.c.l.b16 %v2984
  %v5317 = vunpack.c.l.b16 %v2985
  %v5318 = vunpack.c.l.b16 %v2986
  %v5319 = vunpack.c.l.b16 %v2987
  %v5320 = vunpack.c.l.b16 %v2988
  %v5321 = vunpack.c.l.b16 %v2989
  %v5322 = vunpack.c.l.b16 %v2990
  %v5323 = vunpack.c.l.b16 %v2991
  %v5324 = vunpack.c.l.b16 %v2992
  %v5325 = vunpack.c.l.b16 %v2993
  %v5326 = vunpack.c.l.b16 %v2994
  %v5327 = vunpack.c.l.b16 %v2995
  %v5328 = vunpack.c.l.b16 %v2996
  %v5329 = vunpack.c.l.b16 %v2997
  %v5330 = vunpack.c.l.b16 %v2998
  %v5331 = vunpack.c.l.b16 %v2999
  %v5332 = vunpack.c.l.b16 %v3000
  %v5333 = vunpack.c.l.b16 %v3001
  %v5334 = vunpack.c.l.b16 %v3002
  %v5335 = vunpack.c.l.b16 %v3003
  %v5336 = vunpack.c.l.b16 %v3004
  %v5337 = vunpack.c.l.b16 %v3005
  %v5338 = vunpack.c.l.b16 %v3006
  %v5339 = vunpack.c.l.b16 %v3007
  %v5340 = vunpack.c.l.b16 %v3008
  %v5341 = vunpack.c.l.b16 %v3009
  %v5342 = vunpack.c.l.b16 %v3010
  %v5343 = vunpack.c.l.b16 %v3011
  %v5344 = vpack.c.b16 %v4337, %v4336
  %v5345 = vpack.c.b16 %v4339, %v4338
  %v5346 = vpack.c.b16 %v4341, %v4340
  %v5347 = vpack.c.b16 %v4343, %v4342
  %v5348 = vpack.c.b16 %v4345, %v4344
  %v5349 = vpack.c.b16 %v4347, %v4346
  %v5350 = vpack.c.b16 %v4349, %v4348
  %v5351 = vpack.c.b16 %v4351, %v4350
  %v5352 = vpack.c.b16 %v4353, %v4352
  %v5353 = vpack.c.b16 %v4355, %v4354
  %v5354 = vpack.c.b16 %v4357, %v4356
  %v5355 = vpack.c.b16 %v4359, %v4358
  %v5356 = vpack.c.b16 %v4361, %v4360
  %v5357 = vpack.c.b16 %v4363, %v4362
  %v5358 = vpack.c.b16 %v4365, %v4364
  %v5359 = vpack.c.b16 %v4367, %v4366
  %v5360 = vpack.c.b16 %v4369, %v4368
  %v5361 = vpack.c.b16 %v4371, %v4370
  %v5362 = vpack.c.b16 %v4373, %v4372
  %v5363 = vpack.c.b16 %v4375, %v4374
  %v5364 = vpack.c.b16 %v4377, %v4376
  %v5365 = vpack.c.b16 %v4379, %v4378
  %v5366 = vpack.c.b16 %v4381, %v4380
  %v5367 = vpack.c.b16 %v4383, %v4382
  %v5368 = vpack.c.b16 %v4385, %v4384
  %v5369 = vpack.c.b16 %v4387, %v4386
  %v5370 = vpack.c.b16 %v4389, %v4388
  %v5371 = vpack.c.b16 %v4391, %v4390
  %v5372 = vpack.c.b16 %v4393, %v4392
  %v5373 = vpack.c.b16 %v4395, %v4394
  %v5374 = vpack.c.b16 %v4397, %v4396
  %v5375 = vpack.c.b16 %v4399, %v4398
  %v5376 = vpack.c.b16 %v4401, %v4400
  %v5377 = vpack.c.b16 %v4403, %v4402
  %v5378 = vpack.c.b16 %v4405, %v4404
  %v5379 = vpack.c.b16 %v4407, %v4406
  %v5380 = vpack.c.b16 %v4409, %v4408
  %v5381 = vpack.c.b16 %v4411, %v4410
  %v5382 = vpack.c.b16 %v4413, %v4412
  %v5383 = vpack.c.b16 %v4415, %v4414
  %v5384 = vpack.c.b16 %v4417, %v4416
  %v5385 = vpack.c.b16 %v4419, %v4418
  %v5386 = vpack.c.b16 %v4421, %v4420
  %v5387 = vpack.c.b16 %v4423, %v4422
  %v5388 = vpack.c.b16 %v4425, %v4424
  %v5389 = vpack.c.b16 %v4427, %v4426
  %v5390 = vpack.c.b16 %v4429, %v4428
  %v5391 = vpack.c.b16 %v4431, %v4430
  %v5392 = vpack.c.b16 %v4433, %v4432
  %v5393 = vpack.c.b16 %v4435, %v4434
  %v5394 = vpack.c.b16 %v4437, %v4436
  %v5395 = vpack.c.b16 %v4439, %v4438
  %v5396 = vpack.c.b16 %v4441, %v4440
  %v5397 = vpack.c.b16 %v4443, %v4442
  %v5398 = vpack.c.b16 %v4445, %v4444
  %v5399 = vpack.c.b16 %v4447, %v4446
  %v5400 = vpack.c.b16 %v4449, %v4448
  %v5401 = vpack.c.b16 %v4451, %v4450
  %v5402 = vpack.c.b16 %v4453, %v4452
  %v5403 = vpack.c.b16 %v4455, %v4454
  %v5404 = vpack.c.b16 %v4457, %v4456
  %v5405 = vpack.c.b16 %v4459, %v4458
  %v5406 = vpack.c.b16 %v4461, %v4460
  %v5407 = vpack.c.b16 %v4463, %v4462
  %v5408 = vpack.c.b16 %v4465, %v4464
  %v5409 = vpack.c.b16 %v4467, %v4466
  %v5410 = vpack.c.b16 %v4469, %v4468
  %v5411 = vpack.c.b16 %v4471, %v4470
  %v5412 = vpack.c.b16 %v4473, %v4472
  %v5413 = vpack.c.b16 %v4475, %v4474
  %v5414 = vpack.c.b16 %v4477, %v4476
  %v5415 = vpack.c.b16 %v4479, %v4478
  %v5416 = vpack.c.b16 %v4481, %v4480
  %v5417 = vpack.c.b16 %v4483, %v4482
  %v5418 = vpack.c.b16 %v4485, %v4484
  %v5419 = vpack.c.b16 %v4487, %v4486
  %v5420 = vpack.c.b16 %v4489, %v4488
  %v5421 = vpack.c.b16 %v4491, %v4490
  %v5422 = vpack.c.b16 %v4493, %v4492
  %v5423 = vpack.c.b16 %v4495, %v4494
  %v5424 = vpack.c.b16 %v4497, %v4496
  %v5425 = vpack.c.b16 %v4499, %v4498
  %v5426 = vpack.c.b16 %v4501, %v4500
  %v5427 = vpack.c.b16 %v4503, %v4502
  %v5428 = vpack.c.b16 %v4505, %v4504
  %v5429 = vpack.c.b16 %v4507, %v4506
  %v5430 = vpack.c.b16 %v4509, %v4508
  %v5431 = vpack.c.b16 %v4511, %v4510
  %v5432 = vpack.c.b16 %v4513, %v4512
  %v5433 = vpack.c.b16 %v4515, %v4514
  %v5434 = vpack.c.b16 %v4517, %v4516
  %v5435 = vpack.c.b16 %v4519, %v4518
  %v5436 = vpack.c.b16 %v4521, %v4520
  %v5437 = vpack.c.b16 %v4523, %v4522
  %v5438 = vpack.c.b16 %v4525, %v4524
  %v5439 = vpack.c.b16 %v4527, %v4526
  %v5440 = vpack.c.b16 %v4529, %v4528
  %v5441 = vpack.c.b16 %v4531, %v4530
  %v5442 = vpack.c.b16 %v4533, %v4532
  %v5443 = vpack.c.b16 %v4535, %v4534
  %v5444 = vpack.c.b16 %v4537, %v4536
  %v5445 = vpack.c.b16 %v4539, %v4538
  %v5446 = vpack.c.b16 %v4541, %v4540
  %v5447 = vpack.c.b16 %v4543, %v4542
  %v5448 = vpack.c.b16 %v4545, %v4544
  %v5449 = vpack.c.b16 %v4547, %v4546
  %v5450 = vpack.c.b16 %v4549, %v4548
  %v5451 = vpack.c.b16 %v4551, %v4550
  %v5452 = vpack.c.b16 %v4553, %v4552
  %v5453 = vpack.c.b16 %v4555, %v4554
  %v5454 = vpack.c.b16 %v4557, %v4556
  %v5455 = vpack.c.b16 %v4559, %v4558
  %v5456 = vpack.c.b16 %v4561, %v4560
  %v5457 = vpack.c.b16 %v4563, %v4562
  %v5458 = vpack.c.b16 %v4565, %v4564
  %v5459 = vpack.c.b16 %v4567, %v4566
  %v5460 = vpack.c.b16 %v4569, %v4568
  %v5461 = vpack.c.b16 %v4571, %v4570
  %v5462 = vpack.c.b16 %v4573, %v4572
  %v5463 = vpack.c.b16 %v4575, %v4574
  %v5464 = vpack.c.b16 %v4577, %v4576
  %v5465 = vpack.c.b16 %v4579, %v4578
  %v5466 = vpack.c.b16 %v4581, %v4580
  %v5467 = vpack.c.b16 %v4583, %v4582
  %v5468 = vpack.c.b16 %v4585, %v4584
  %v5469 = vpack.c.b16 %v4587, %v4586
  %v5470 = vpack.c.b16 %v4589, %v4588
  %v5471 = vpack.c.b16 %v4591, %v4590
  %v5472 = vpack.c.b16 %v4593, %v4592
  %v5473 = vpack.c.b16 %v4595, %v4594
  %v5474 = vpack.c.b16 %v4597, %v4596
  %v5475 = vpack.c.b16 %v4599, %v4598
  %v5476 = vpack.c.b16 %v4601, %v4600
  %v5477 = vpack.c.b16 %v4603, %v4602
  %v5478 = vpack.c.b16 %v4605, %v4604
  %v5479 = vpack.c.b16 %v4607, %v4606
  %v5480 = vpack.c.b16 %v4609, %v4608
  %v5481 = vpack.c.b16 %v4611, %v4610
  %v5482 = vpack.c.b16 %v4613, %v4612
  %v5483 = vpack.c.b16 %v4615, %v4614
  %v5484 = vpack.c.b16 %v4617, %v4616
  %v5485 = vpack.c.b16 %v4619, %v4618
  %v5486 = vpack.c.b16 %v4621, %v4620
  %v5487 = vpack.c.b16 %v4623, %v4622
  %v5488 = vpack.c.b16 %v4625, %v4624
  %v5489 = vpack.c.b16 %v4627, %v4626
  %v5490 = vpack.c.b16 %v4629, %v4628
  %v5491 = vpack.c.b16 %v4631, %v4630
  %v5492 = vpack.c.b16 %v4633, %v4632
  %v5493 = vpack.c.b16 %v4635, %v4634
  %v5494 = vpack.c.b16 %v4637, %v4636
  %v5495 = vpack.c.b16 %v4639, %v4638
  %v5496 = vpack.c.b16 %v4641, %v4640
  %v5497 = vpack.c.b16 %v4643, %v4642
  %v5498 = vpack.c.b16 %v4645, %v4644
  %v5499 = vpack.c.b16 %v4647, %v4646
  %v5500 = vpack.c.b16 %v4649, %v4648
  %v5501 = vpack.c.b16 %v4651, %v4650
  %v5502 = vpack.c.b16 %v4653, %v4652
  %v5503 = vpack.c.b16 %v4655, %v4654
  %v5504 = vpack.c.b16 %v4657, %v4656
  %v5505 = vpack.c.b16 %v4659, %v4658
  %v5506 = vpack.c.b16 %v4661, %v4660
  %v5507 = vpack.c.b16 %v4663, %v4662
  %v5508 = vpack.c.b16 %v4665, %v4664
  %v5509 = vpack.c.b16 %v4667, %v4666
  %v5510 = vpack.c.b16 %v4669, %v4668
  %v5511 = vpack.c.b16 %v4671, %v4670
  %v5512 = vpack.c.b16 %v4673, %v4672
  %v5513 = vpack.c.b16 %v4675, %v4674
  %v5514 = vpack.c.b16 %v4677, %v4676
  %v5515 = vpack.c.b16 %v4679, %v4678
  %v5516 = vpack.c.b16 %v4681, %v4680
  %v5517 = vpack.c.b16 %v4683, %v4682
  %v5518 = vpack.c.b16 %v4685, %v4684
  %v5519 = vpack.c.b16 %v4687, %v4686
  %v5520 = vpack.c.b16 %v4689, %v4688
  %v5521 = vpack.c.b16 %v4691, %v4690
  %v5522 = vpack.c.b16 %v4693, %v4692
  %v5523 = vpack.c.b16 %v4695, %v4694
  %v5524 = vpack.c.b16 %v4697, %v4696
  %v5525 = vpack.c.b16 %v4699, %v4698
  %v5526 = vpack.c.b16 %v4701, %v4700
  %v5527 = vpack.c.b16 %v4703, %v4702
  %v5528 = vpack.c.b16 %v4705, %v4704
  %v5529 = vpack.c.b16 %v4707, %v4706
  %v5530 = vpack.c.b16 %v4709, %v4708
  %v5531 = vpack.c.b16 %v4711, %v4710
  %v5532 = vpack.c.b16 %v4713, %v4712
  %v5533 = vpack.c.b16 %v4715, %v4714
  %v5534 = vpack.c.b16 %v4717, %v4716
  %v5535 = vpack.c.b16 %v4719, %v4718
  %v5536 = vpack.c.b16 %v4721, %v4720
  %v5537 = vpack.c.b16 %v4723, %v4722
  %v5538 = vpack.c.b16 %v4725, %v4724
  %v5539 = vpack.c.b16 %v4727, %v4726
  %v5540 = vpack.c.b16 %v4729, %v4728
  %v5541 = vpack.c.b16 %v4731, %v4730
  %v5542 = vpack.c.b16 %v4733, %v4732
  %v5543 = vpack.c.b16 %v4735, %v4734
  %v5544 = vpack.c.b16 %v4737, %v4736
  %v5545 = vpack.c.b16 %v4739, %v4738
  %v5546 = vpack.c.b16 %v4741, %v4740
  %v5547 = vpack.c.b16 %v4743, %v4742
  %v5548 = vpack.c.b16 %v4745, %v4744
  %v5549 = vpack.c.b16 %v4747, %v4746
  %v5550 = vpack.c.b16 %v4749, %v4748
  %v5551 = vpack.c.b16 %v4751, %v4750
  %v5552 = vpack.c.b16 %v4753, %v4752
  %v5553 = vpack.c.b16 %v4755, %v4754
  %v5554 = vpack.c.b16 %v4757, %v4756
  %v5555 = vpack.c.b16 %v4759, %v4758
  %v5556 = vpack.c.b16 %v4761, %v4760
  %v5557 = vpack.c.b16 %v4763, %v4762
  %v5558 = vpack.c.b16 %v4765, %v4764
  %v5559 = vpack.c.b16 %v4767, %v4766
  %v5560 = vpack.c.b16 %v4769, %v4768
  %v5561 = vpack.c.b16 %v4771, %v4770
  %v5562 = vpack.c.b16 %v4773, %v4772
  %v5563 = vpack.c.b16 %v4775, %v4774
  %v5564 = vpack.c.b16 %v4777, %v4776
  %v5565 = vpack.c.b16 %v4779, %v4778
  %v5566 = vpack.c.b16 %v4781, %v4780
  %v5567 = vpack.c.b16 %v4783, %v4782
  %v5568 = vpack.c.b16 %v4785, %v4784
  %v5569 = vpack.c.b16 %v4787, %v4786
  %v5570 = vpack.c.b16 %v4789, %v4788
  %v5571 = vpack.c.b16 %v4791, %v4790
  %v5572 = vpack.c.b16 %v4793, %v4792
  %v5573 = vpack.c.b16 %v4795, %v4794
  %v5574 = vpack.c.b16 %v4797, %v4796
  %v5575 = vpack.c.b16 %v4799, %v4798
  %v5576 = vpack.c.b16 %v4801, %v4800
  %v5577 = vpack.c.b16 %v4803, %v4802
  %v5578 = vpack.c.b16 %v4805, %v4804
  %v5579 = vpack.c.b16 %v4807, %v4806
  %v5580 = vpack.c.b16 %v4809, %v4808
  %v5581 = vpack.c.b16 %v4811, %v4810
  %v5582 = vpack.c.b16 %v4813, %v4812
  %v5583 = vpack.c.b16 %v4815, %v4814
  %v5584 = vpack.c.b16 %v4817, %v4816
  %v5585 = vpack.c.b16 %v4819, %v4818
  %v5586 = vpack.c.b16 %v4821, %v4820
  %v5587 = vpack.c.b16 %v4823, %v4822
  %v5588 = vpack.c.b16 %v4825, %v4824
  %v5589 = vpack.c.b16 %v4827, %v4826
  %v5590 = vpack.c.b16 %v4829, %v4828
  %v5591 = vpack.c.b16 %v4831, %v4830
  %v5592 = vpack.c.b16 %v4833, %v4832
  %v5593 = vpack.c.b16 %v4835, %v4834
  %v5594 = vpack.c.b16 %v4837, %v4836
  %v5595 = vpack.c.b16 %v4839, %v4838
  %v5596 = vpack.c.b16 %v4841, %v4840
  %v5597 = vpack.c.b16 %v4843, %v4842
  %v5598 = vpack.c.b16 %v4845, %v4844
  %v5599 = vpack.c.b16 %v4847, %v4846
  %v5600 = vpack.c.b16 %v4849, %v4848
  %v5601 = vpack.c.b16 %v4851, %v4850
  %v5602 = vpack.c.b16 %v4853, %v4852
  %v5603 = vpack.c.b16 %v4855, %v4854
  %v5604 = vpack.c.b16 %v4857, %v4856
  %v5605 = vpack.c.b16 %v4859, %v4858
  %v5606 = vpack.c.b16 %v4861, %v4860
  %v5607 = vpack.c.b16 %v4863, %v4862
  %v5608 = vpack.c.b16 %v4865, %v4864
  %v5609 = vpack.c.b16 %v4867, %v4866
  %v5610 = vpack.c.b16 %v4869, %v4868
  %v5611 = vpack.c.b16 %v4871, %v4870
  %v5612 = vpack.c.b16 %v4873, %v4872
  %v5613 = vpack.c.b16 %v4875, %v4874
  %v5614 = vpack.c.b16 %v4877, %v4876
  %v5615 = vpack.c.b16 %v4879, %v4878
  %v5616 = vpack.c.b16 %v4881, %v4880
  %v5617 = vpack.c.b16 %v4883, %v4882
  %v5618 = vpack.c.b16 %v4885, %v4884
  %v5619 = vpack.c.b16 %v4887, %v4886
  %v5620 = vpack.c.b16 %v4889, %v4888
  %v5621 = vpack.c.b16 %v4891, %v4890
  %v5622 = vpack.c.b16 %v4893, %v4892
  %v5623 = vpack.c.b16 %v4895, %v4894
  %v5624 = vpack.c.b16 %v4897, %v4896
  %v5625 = vpack.c.b16 %v4899, %v4898
  %v5626 = vpack.c.b16 %v4901, %v4900
  %v5627 = vpack.c.b16 %v4903, %v4902
  %v5628 = vpack.c.b16 %v4905, %v4904
  %v5629 = vpack.c.b16 %v4907, %v4906
  %v5630 = vpack.c.b16 %v4909, %v4908
  %v5631 = vpack.c.b16 %v4911, %v4910
  %v5632 = vpack.c.b16 %v4913, %v4912
  %v5633 = vpack.c.b16 %v4915, %v4914
  %v5634 = vpack.c.b16 %v4917, %v4916
  %v5635 = vpack.c.b16 %v4919, %v4918
  %v5636 = vpack.c.b16 %v4921, %v4920
  %v5637 = vpack.c.b16 %v4923, %v4922
  %v5638 = vpack.c.b16 %v4925, %v4924
  %v5639 = vpack.c.b16 %v4927, %v4926
  %v5640 = vpack.c.b16 %v4929, %v4928
  %v5641 = vpack.c.b16 %v4931, %v4930
  %v5642 = vpack.c.b16 %v4933, %v4932
  %v5643 = vpack.c.b16 %v4935, %v4934
  %v5644 = vpack.c.b16 %v4937, %v4936
  %v5645 = vpack.c.b16 %v4939, %v4938
  %v5646 = vpack.c.b16 %v4941, %v4940
  %v5647 = vpack.c.b16 %v4943, %v4942
  %v5648 = vpack.c.b16 %v4945, %v4944
  %v5649 = vpack.c.b16 %v4947, %v4946
  %v5650 = vpack.c.b16 %v4949, %v4948
  %v5651 = vpack.c.b16 %v4951, %v4950
  %v5652 = vpack.c.b16 %v4953, %v4952
  %v5653 = vpack.c.b16 %v4955, %v4954
  %v5654 = vpack.c.b16 %v4957, %v4956
  %v5655 = vpack.c.b16 %v4959, %v4958
  %v5656 = vpack.c.b16 %v4961, %v4960
  %v5657 = vpack.c.b16 %v4963, %v4962
  %v5658 = vpack.c.b16 %v4965, %v4964
  %v5659 = vpack.c.b16 %v4967, %v4966
  %v5660 = vpack.c.b16 %v4969, %v4968
  %v5661 = vpack.c.b16 %v4971, %v4970
  %v5662 = vpack.c.b16 %v4973, %v4972
  %v5663 = vpack.c.b16 %v4975, %v4974
  %v5664 = vpack.c.b16 %v4977, %v4976
  %v5665 = vpack.c.b16 %v4979, %v4978
  %v5666 = vpack.c.b16 %v4981, %v4980
  %v5667 = vpack.c.b16 %v4983, %v4982
  %v5668 = vpack.c.b16 %v4985, %v4984
  %v5669 = vpack.c.b16 %v4987, %v4986
  %v5670 = vpack.c.b16 %v4989, %v4988
  %v5671 = vpack.c.b16 %v4991, %v4990
  %v5672 = vpack.c.b16 %v4993, %v4992
  %v5673 = vpack.c.b16 %v4995, %v4994
  %v5674 = vpack.c.b16 %v4997, %v4996
  %v5675 = vpack.c.b16 %v4999, %v4998
  %v5676 = vpack.c.b16 %v5001, %v5000
  %v5677 = vpack.c.b16 %v5003, %v5002
  %v5678 = vpack.c.b16 %v5005, %v5004
  %v5679 = vpack.c.b16 %v5007, %v5006
  %v5680 = vpack.c.b16 %v5009, %v5008
  %v5681 = vpack.c.b16 %v5011, %v5010
  %v5682 = vpack.c.b16 %v5013, %v5012
  %v5683 = vpack.c.b16 %v5015, %v5014
  %v5684 = vpack.c.b16 %v5017, %v5016
  %v5685 = vpack.c.b16 %v5019, %v5018
  %v5686 = vpack.c.b16 %v5021, %v5020
  %v5687 = vpack.c.b16 %v5023, %v5022
  %v5688 = vpack.c.b16 %v5025, %v5024
  %v5689 = vpack.c.b16 %v5027, %v5026
  %v5690 = vpack.c.b16 %v5029, %v5028
  %v5691 = vpack.c.b16 %v5031, %v5030
  %v5692 = vpack.c.b16 %v5033, %v5032
  %v5693 = vpack.c.b16 %v5035, %v5034
  %v5694 = vpack.c.b16 %v5037, %v5036
  %v5695 = vpack.c.b16 %v5039, %v5038
  %v5696 = vpack.c.b16 %v5041, %v5040
  %v5697 = vpack.c.b16 %v5043, %v5042
  %v5698 = vpack.c.b16 %v5045, %v5044
  %v5699 = vpack.c.b16 %v5047, %v5046
  %v5700 = vpack.c.b16 %v5049, %v5048
  %v5701 = vpack.c.b16 %v5051, %v5050
  %v5702 = vpack.c.b16 %v5053, %v5052
  %v5703 = vpack.c.b16 %v5055, %v5054
  %v5704 = vpack.c.b16 %v5057, %v5056
  %v5705 = vpack.c.b16 %v5059, %v5058
  %v5706 = vpack.c.b16 %v5061, %v5060
  %v5707 = vpack.c.b16 %v5063, %v5062
  %v5708 = vpack.c.b16 %v5065, %v5064
  %v5709 = vpack.c.b16 %v5067, %v5066
  %v5710 = vpack.c.b16 %v5069, %v5068
  %v5711 = vpack.c.b16 %v5071, %v5070
  %v5712 = vpack.c.b16 %v5073, %v5072
  %v5713 = vpack.c.b16 %v5075, %v5074
  %v5714 = vpack.c.b16 %v5077, %v5076
  %v5715 = vpack.c.b16 %v5079, %v5078
  %v5716 = vpack.c.b16 %v5081, %v5080
  %v5717 = vpack.c.b16 %v5083, %v5082
  %v5718 = vpack.c.b16 %v5085, %v5084
  %v5719 = vpack.c.b16 %v5087, %v5086
  %v5720 = vpack.c.b16 %v5089, %v5088
  %v5721 = vpack.c.b16 %v5091, %v5090
  %v5722 = vpack.c.b16 %v5093, %v5092
  %v5723 = vpack.c.b16 %v5095, %v5094
  %v5724 = vpack.c.b16 %v5097, %v5096
  %v5725 = vpack.c.b16 %v5099, %v5098
  %v5726 = vpack.c.b16 %v5101, %v5100
  %v5727 = vpack.c.b16 %v5103, %v5102
  %v5728 = vpack.c.b16 %v5105, %v5104
  %v5729 = vpack.c.b16 %v5107, %v5106
  %v5730 = vpack.c.b16 %v5109, %v5108
  %v5731 = vpack.c.b16 %v5111, %v5110
  %v5732 = vpack.c.b16 %v5113, %v5112
  %v5733 = vpack.c.b16 %v5115, %v5114
  %v5734 = vpack.c.b16 %v5117, %v5116
  %v5735 = vpack.c.b16 %v5119, %v5118
  %v5736 = vpack.c.b16 %v5121, %v5120
  %v5737 = vpack.c.b16 %v5123, %v5122
  %v5738 = vpack.c.b16 %v5125, %v5124
  %v5739 = vpack.c.b16 %v5127, %v5126
  %v5740 = vpack.c.b16 %v5129, %v5128
  %v5741 = vpack.c.b16 %v5131, %v5130
  %v5742 = vpack.c.b16 %v5133, %v5132
  %v5743 = vpack.c.b16 %v5135, %v5134
  %v5744 = vpack.c.b16 %v5137, %v5136
  %v5745 = vpack.c.b16 %v5139, %v5138
  %v5746 = vpack.c.b16 %v5141, %v5140
  %v5747 = vpack.c.b16 %v5143, %v5142
  %v5748 = vpack.c.b16 %v5145, %v5144
  %v5749 = vpack.c.b16 %v5147, %v5146
  %v5750 = vpack.c.b16 %v5149, %v5148
  %v5751 = vpack.c.b16 %v5151, %v5150
  %v5752 = vpack.c.b16 %v5153, %v5152
  %v5753 = vpack.c.b16 %v5155, %v5154
  %v5754 = vpack.c.b16 %v5157, %v5156
  %v5755 = vpack.c.b16 %v5159, %v5158
  %v5756 = vpack.c.b16 %v5161, %v5160
  %v5757 = vpack.c.b16 %v5163, %v5162
  %v5758 = vpack.c.b16 %v5165, %v5164
  %v5759 = vpack.c.b16 %v5167, %v5166
  %v5760 = vpack.c.b16 %v5169, %v5168
  %v5761 = vpack.c.b16 %v5171, %v5170
  %v5762 = vpack.c.b16 %v5173, %v5172
  %v5763 = vpack.c.b16 %v5175, %v5174
  %v5764 = vpack.c.b16 %v5177, %v5176
  %v5765 = vpack.c.b16 %v5179, %v5178
  %v5766 = vpack.c.b16 %v5181, %v5180
  %v5767 = vpack.c.b16 %v5183, %v5182
  %v5768 = vpack.c.b16 %v5185, %v5184
  %v5769 = vpack.c.b16 %v5187, %v5186
  %v5770 = vpack.c.b16 %v5189, %v5188
  %v5771 = vpack.c.b16 %v5191, %v5190
  %v5772 = vpack.c.b16 %v5193, %v5192
  %v5773 = vpack.c.b16 %v5195, %v5194
  %v5774 = vpack.c.b16 %v5197, %v5196
  %v5775 = vpack.c.b16 %v5199, %v5198
  %v5776 = vpack.c.b16 %v5201, %v5200
  %v5777 = vpack.c.b16 %v5203, %v5202
  %v5778 = vpack.c.b16 %v5205, %v5204
  %v5779 = vpack.c.b16 %v5207, %v5206
  %v5780 = vpack.c.b16 %v5209, %v5208
  %v5781 = vpack.c.b16 %v5211, %v5210
  %v5782 = vpack.c.b16 %v5213, %v5212
  %v5783 = vpack.c.b16 %v5215, %v5214
  %v5784 = vpack.c.b16 %v5217, %v5216
  %v5785 = vpack.c.b16 %v5219, %v5218
  %v5786 = vpack.c.b16 %v5221, %v5220
  %v5787 = vpack.c.b16 %v5223, %v5222
  %v5788 = vpack.c.b16 %v5225, %v5224
  %v5789 = vpack.c.b16 %v5227, %v5226
  %v5790 = vpack.c.b16 %v5229, %v5228
  %v5791 = vpack.c.b16 %v5231, %v5230
  %v5792 = vpack.c.b16 %v5233, %v5232
  %v5793 = vpack.c.b16 %v5235, %v5234
  %v5794 = vpack.c.b16 %v5237, %v5236
  %v5795 = vpack.c.b16 %v5239, %v5238
  %v5796 = vpack.c.b16 %v5241, %v5240
  %v5797 = vpack.c.b16 %v5243, %v5242
  %v5798 = vpack.c.b16 %v5245, %v5244
  %v5799 = vpack.c.b16 %v5247, %v5246
  %v5800 = vpack.c.b16 %v5249, %v5248
  %v5801 = vpack.c.b16 %v5251, %v5250
  %v5802 = vpack.c.b16 %v5253, %v5252
  %v5803 = vpack.c.b16 %v5255, %v5254
  %v5804 = vpack.c.b16 %v5257, %v5256
  %v5805 = vpack.c.b16 %v5259, %v5258
  %v5806 = vpack.c.b16 %v5261, %v5260
  %v5807 = vpack.c.b16 %v5263, %v5262
  %v5808 = vpack.c.b16 %v5265, %v5264
  %v5809 = vpack.c.b16 %v5267, %v5266
  %v5810 = vpack.c.b16 %v5269, %v5268
  %v5811 = vpack.c.b16 %v5271, %v5270
  %v5812 = vpack.c.b16 %v5273, %v5272
  %v5813 = vpack.c.b16 %v5275, %v5274
  %v5814 = vpack.c.b16 %v5277, %v5276
  %v5815 = vpack.c.b16 %v5279, %v5278
  %v5816 = vpack.c.b16 %v5281, %v5280
  %v5817 = vpack.c.b16 %v5283, %v5282
  %v5818 = vpack.c.b16 %v5285, %v5284
  %v5819 = vpack.c.b16 %v5287, %v5286
  %v5820 = vpack.c.b16 %v5289, %v5288
  %v5821 = vpack.c.b16 %v5291, %v5290
  %v5822 = vpack.c.b16 %v5293, %v5292
  %v5823 = vpack.c.b16 %v5295, %v5294
  %v5824 = vpack.c.b16 %v5297, %v5296
  %v5825 = vpack.c.b16 %v5299, %v5298
  %v5826 = vpack.c.b16 %v5301, %v5300
  %v5827 = vpack.c.b16 %v5303, %v5302
  %v5828 = vpack.c.b16 %v5305, %v5304
  %v5829 = vpack.c.b16 %v5307, %v5306
  %v5830 = vpack.c.b16 %v5309, %v5308
  %v5831 = vpack.c.b16 %v5311, %v5310
  %v5832 = vpack.c.b16 %v5313, %v5312
  %v5833 = vpack.c.b16 %v5315, %v5314
  %v5834 = vpack.c.b16 %v5317, %v5316
  %v5835 = vpack.c.b16 %v5319, %v5318
  %v5836 = vpack.c.b16 %v5321, %v5320
  %v5837 = vpack.c.b16 %v5323, %v5322
  %v5838 = vpack.c.b16 %v5325, %v5324
  %v5839 = vpack.c.b16 %v5327, %v5326
  %v5840 = vpack.c.b16 %v5329, %v5328
  %v5841 = vpack.c.b16 %v5331, %v5330
  %v5842 = vpack.c.b16 %v5333, %v5332
  %v5843 = vpack.c.b16 %v5335, %v5334
  %v5844 = vpack.c.b16 %v5337, %v5336
  %v5845 = vpack.c.b16 %v5339, %v5338
  %v5846 = vpack.c.b16 %v5341, %v5340
  %v5847 = vpack.c.b16 %v5343, %v5342
  %6352 = vmatprep.subr.bf16.mxu0 0
  %6353 = vmatpush1.bf16.msra.mxu0 %v5344
  %6354 = vmatprep.subr.bf16.mxu0 0
  %6355 = vmatpush1.bf16.msra.mxu0 %v5345
  %6356 = vmatprep.subr.bf16.mxu0 0
  %6357 = vmatpush1.bf16.msra.mxu0 %v5346
  %6358 = vmatprep.subr.bf16.mxu0 0
  %6359 = vmatpush1.bf16.msra.mxu0 %v5347
  %6360 = vmatprep.subr.bf16.mxu0 0
  %6361 = vmatpush1.bf16.msra.mxu0 %v5348
  %6362 = vmatprep.subr.bf16.mxu0 0
  %6363 = vmatpush1.bf16.msra.mxu0 %v5349
  %6364 = vmatprep.subr.bf16.mxu0 0
  %6365 = vmatpush1.bf16.msra.mxu0 %v5350
  %6366 = vmatprep.subr.bf16.mxu0 0
  %6367 = vmatpush1.bf16.msra.mxu0 %v5351
  %6368 = vmatprep.subr.bf16.mxu0 0
  %6369 = vmatpush1.bf16.msra.mxu0 %v5352
  %6370 = vmatprep.subr.bf16.mxu0 0
  %6371 = vmatpush1.bf16.msra.mxu0 %v5353
  %6372 = vmatprep.subr.bf16.mxu0 0
  %6373 = vmatpush1.bf16.msra.mxu0 %v5354
  %6374 = vmatprep.subr.bf16.mxu0 0
  %6375 = vmatpush1.bf16.msra.mxu0 %v5355
  %6376 = vmatprep.subr.bf16.mxu0 0
  %6377 = vmatpush1.bf16.msra.mxu0 %v5356
  %6378 = vmatprep.subr.bf16.mxu0 0
  %6379 = vmatpush1.bf16.msra.mxu0 %v5357
  %6380 = vmatprep.subr.bf16.mxu0 0
  %6381 = vmatpush1.bf16.msra.mxu0 %v5358
  %6382 = vmatprep.subr.bf16.mxu0 0
  %6383 = vmatpush1.bf16.msra.mxu0 %v5359
  %6384 = vmatprep.mubr.bf16.mxu0 %v3203
  %6385 = vmatmul.mubr.bf16.gmra.mrb[0].mxu0 %v3202
  %v6386 = vpop.f32.mrb[0].mxu0
  %v6387 = vadd.f32 0.0, %v6386
  %v6388 = vpop.f32.mrb[0].mxu0
  %v6389 = vpop.f32.mrb[0].mxu0
  %v6390 = vadd.f32 0.0, %v6389
  %v6391 = vpop.f32.mrb[0].mxu0
  %6392 = vdwg.mxu0
  %6393 = vmatprep.subr.bf16.mxu0 0
  %6394 = vmatpush1.bf16.msra.mxu0 %v5360
  %6395 = vmatprep.subr.bf16.mxu0 0
  %6396 = vmatpush1.bf16.msra.mxu0 %v5361
  %6397 = vmatprep.subr.bf16.mxu0 0
  %6398 = vmatpush1.bf16.msra.mxu0 %v5362
  %6399 = vmatprep.subr.bf16.mxu0 0
  %6400 = vmatpush1.bf16.msra.mxu0 %v5363
  %6401 = vmatprep.subr.bf16.mxu0 0
  %6402 = vmatpush1.bf16.msra.mxu0 %v5364
  %6403 = vmatprep.subr.bf16.mxu0 0
  %6404 = vmatpush1.bf16.msra.mxu0 %v5365
  %6405 = vmatprep.subr.bf16.mxu0 0
  %6406 = vmatpush1.bf16.msra.mxu0 %v5366
  %6407 = vmatprep.subr.bf16.mxu0 0
  %6408 = vmatpush1.bf16.msra.mxu0 %v5367
  %6409 = vmatprep.subr.bf16.mxu0 0
  %6410 = vmatpush1.bf16.msra.mxu0 %v5368
  %6411 = vmatprep.subr.bf16.mxu0 0
  %6412 = vmatpush1.bf16.msra.mxu0 %v5369
  %6413 = vmatprep.subr.bf16.mxu0 0
  %6414 = vmatpush1.bf16.msra.mxu0 %v5370
  %6415 = vmatprep.subr.bf16.mxu0 0
  %6416 = vmatpush1.bf16.msra.mxu0 %v5371
  %6417 = vmatprep.subr.bf16.mxu0 0
  %6418 = vmatpush1.bf16.msra.mxu0 %v5372
  %6419 = vmatprep.subr.bf16.mxu0 0
  %6420 = vmatpush1.bf16.msra.mxu0 %v5373
  %6421 = vmatprep.subr.bf16.mxu0 0
  %6422 = vmatpush1.bf16.msra.mxu0 %v5374
  %6423 = vmatprep.subr.bf16.mxu0 0
  %6424 = vmatpush1.bf16.msra.mxu0 %v5375
  %6425 = vmatprep.mubr.bf16.mxu0 %v3205
  %6426 = vmatmul.mubr.bf16.gmra.mrb[0].mxu0 %v3204
  %v6427 = vpop.f32.mrb[0].mxu0
  %v6428 = vadd.f32 %v6387, %v6427
  %v6429 = vpop.f32.mrb[0].mxu0
  %v6430 = vpop.f32.mrb[0].mxu0
  %v6431 = vadd.f32 %v6390, %v6430
  %v6432 = vpop.f32.mrb[0].mxu0
  %6433 = vdwg.mxu0
  %6434 = vmatprep.subr.bf16.mxu0 0
  %6435 = vmatpush1.bf16.msra.mxu0 %v5376
  %6436 = vmatprep.subr.bf16.mxu0 0
  %6437 = vmatpush1.bf16.msra.mxu0 %v5377
  %6438 = vmatprep.subr.bf16.mxu0 0
  %6439 = vmatpush1.bf16.msra.mxu0 %v5378
  %6440 = vmatprep.subr.bf16.mxu0 0
  %6441 = vmatpush1.bf16.msra.mxu0 %v5379
  %6442 = vmatprep.subr.bf16.mxu0 0
  %6443 = vmatpush1.bf16.msra.mxu0 %v5380
  %6444 = vmatprep.subr.bf16.mxu0 0
  %6445 = vmatpush1.bf16.msra.mxu0 %v5381
  %6446 = vmatprep.subr.bf16.mxu0 0
  %6447 = vmatpush1.bf16.msra.mxu0 %v5382
  %6448 = vmatprep.subr.bf16.mxu0 0
  %6449 = vmatpush1.bf16.msra.mxu0 %v5383
  %6450 = vmatprep.subr.bf16.mxu0 0
  %6451 = vmatpush1.bf16.msra.mxu0 %v5384
  %6452 = vmatprep.subr.bf16.mxu0 0
  %6453 = vmatpush1.bf16.msra.mxu0 %v5385
  %6454 = vmatprep.subr.bf16.mxu0 0
  %6455 = vmatpush1.bf16.msra.mxu0 %v5386
  %6456 = vmatprep.subr.bf16.mxu0 0
  %6457 = vmatpush1.bf16.msra.mxu0 %v5387
  %6458 = vmatprep.subr.bf16.mxu0 0
  %6459 = vmatpush1.bf16.msra.mxu0 %v5388
  %6460 = vmatprep.subr.bf16.mxu0 0
  %6461 = vmatpush1.bf16.msra.mxu0 %v5389
  %6462 = vmatprep.subr.bf16.mxu0 0
  %6463 = vmatpush1.bf16.msra.mxu0 %v5390
  %6464 = vmatprep.subr.bf16.mxu0 0
  %6465 = vmatpush1.bf16.msra.mxu0 %v5391
  %6466 = vmatprep.mubr.bf16.mxu0 %v3207
  %6467 = vmatmul.mubr.bf16.gmra.mrb[0].mxu0 %v3206
  %v6468 = vpop.f32.mrb[0].mxu0
  %v6469 = vadd.f32 %v6428, %v6468
  %v6470 = vpop.f32.mrb[0].mxu0
  %v6471 = vpop.f32.mrb[0].mxu0
  %v6472 = vadd.f32 %v6431, %v6471
  %v6473 = vpop.f32.mrb[0].mxu0
  %6474 = vdwg.mxu0
  %6475 = vmatprep.subr.bf16.mxu0 0
  %6476 = vmatpush1.bf16.msra.mxu0 %v5392
  %6477 = vmatprep.subr.bf16.mxu0 0
  %6478 = vmatpush1.bf16.msra.mxu0 %v5393
  %6479 = vmatprep.subr.bf16.mxu0 0
  %6480 = vmatpush1.bf16.msra.mxu0 %v5394
  %6481 = vmatprep.subr.bf16.mxu0 0
  %6482 = vmatpush1.bf16.msra.mxu0 %v5395
  %6483 = vmatprep.subr.bf16.mxu0 0
  %6484 = vmatpush1.bf16.msra.mxu0 %v5396
  %6485 = vmatprep.subr.bf16.mxu0 0
  %6486 = vmatpush1.bf16.msra.mxu0 %v5397
  %6487 = vmatprep.subr.bf16.mxu0 0
  %6488 = vmatpush1.bf16.msra.mxu0 %v5398
  %6489 = vmatprep.subr.bf16.mxu0 0
  %6490 = vmatpush1.bf16.msra.mxu0 %v5399
  %6491 = vmatprep.subr.bf16.mxu0 0
  %6492 = vmatpush1.bf16.msra.mxu0 %v5400
  %6493 = vmatprep.subr.bf16.mxu0 0
  %6494 = vmatpush1.bf16.msra.mxu0 %v5401
  %6495 = vmatprep.subr.bf16.mxu0 0
  %6496 = vmatpush1.bf16.msra.mxu0 %v5402
  %6497 = vmatprep.subr.bf16.mxu0 0
  %6498 = vmatpush1.bf16.msra.mxu0 %v5403
  %6499 = vmatprep.subr.bf16.mxu0 0
  %6500 = vmatpush1.bf16.msra.mxu0 %v5404
  %6501 = vmatprep.subr.bf16.mxu0 0
  %6502 = vmatpush1.bf16.msra.mxu0 %v5405
  %6503 = vmatprep.subr.bf16.mxu0 0
  %6504 = vmatpush1.bf16.msra.mxu0 %v5406
  %6505 = vmatprep.subr.bf16.mxu0 0
  %6506 = vmatpush1.bf16.msra.mxu0 %v5407
  %6507 = vmatprep.mubr.bf16.mxu0 %v3209
  %6508 = vmatmul.mubr.bf16.gmra.mrb[0].mxu0 %v3208
  %v6509 = vpop.f32.mrb[0].mxu0
  %v6510 = vadd.f32 %v6469, %v6509
  %v6511 = vpop.f32.mrb[0].mxu0
  %v6512 = vpop.f32.mrb[0].mxu0
  %v6513 = vadd.f32 %v6472, %v6512
  %v6514 = vpop.f32.mrb[0].mxu0
  %6515 = vdwg.mxu0
  %6516 = vmatprep.subr.bf16.mxu0 0
  %6517 = vmatpush1.bf16.msra.mxu0 %v5408
  %6518 = vmatprep.subr.bf16.mxu0 0
  %6519 = vmatpush1.bf16.msra.mxu0 %v5409
  %6520 = vmatprep.subr.bf16.mxu0 0
  %6521 = vmatpush1.bf16.msra.mxu0 %v5410
  %6522 = vmatprep.subr.bf16.mxu0 0
  %6523 = vmatpush1.bf16.msra.mxu0 %v5411
  %6524 = vmatprep.subr.bf16.mxu0 0
  %6525 = vmatpush1.bf16.msra.mxu0 %v5412
  %6526 = vmatprep.subr.bf16.mxu0 0
  %6527 = vmatpush1.bf16.msra.mxu0 %v5413
  %6528 = vmatprep.subr.bf16.mxu0 0
  %6529 = vmatpush1.bf16.msra.mxu0 %v5414
  %6530 = vmatprep.subr.bf16.mxu0 0
  %6531 = vmatpush1.bf16.msra.mxu0 %v5415
  %6532 = vmatprep.subr.bf16.mxu0 0
  %6533 = vmatpush1.bf16.msra.mxu0 %v5416
  %6534 = vmatprep.subr.bf16.mxu0 0
  %6535 = vmatpush1.bf16.msra.mxu0 %v5417
  %6536 = vmatprep.subr.bf16.mxu0 0
  %6537 = vmatpush1.bf16.msra.mxu0 %v5418
  %6538 = vmatprep.subr.bf16.mxu0 0
  %6539 = vmatpush1.bf16.msra.mxu0 %v5419
  %6540 = vmatprep.subr.bf16.mxu0 0
  %6541 = vmatpush1.bf16.msra.mxu0 %v5420
  %6542 = vmatprep.subr.bf16.mxu0 0
  %6543 = vmatpush1.bf16.msra.mxu0 %v5421
  %6544 = vmatprep.subr.bf16.mxu0 0
  %6545 = vmatpush1.bf16.msra.mxu0 %v5422
  %6546 = vmatprep.subr.bf16.mxu0 0
  %6547 = vmatpush1.bf16.msra.mxu0 %v5423
  %6548 = vmatprep.mubr.bf16.mxu0 %v3211
  %6549 = vmatmul.mubr.bf16.gmra.mrb[0].mxu0 %v3210
  %v6550 = vpop.f32.mrb[0].mxu0
  %v6551 = vadd.f32 %v6510, %v6550
  %v6552 = vpop.f32.mrb[0].mxu0
  %v6553 = vpop.f32.mrb[0].mxu0
  %v6554 = vadd.f32 %v6513, %v6553
  %v6555 = vpop.f32.mrb[0].mxu0
  %6556 = vdwg.mxu0
  %6557 = vmatprep.subr.bf16.mxu0 0
  %6558 = vmatpush1.bf16.msra.mxu0 %v5424
  %6559 = vmatprep.subr.bf16.mxu0 0
  %6560 = vmatpush1.bf16.msra.mxu0 %v5425
  %6561 = vmatprep.subr.bf16.mxu0 0
  %6562 = vmatpush1.bf16.msra.mxu0 %v5426
  %6563 = vmatprep.subr.bf16.mxu0 0
  %6564 = vmatpush1.bf16.msra.mxu0 %v5427
  %6565 = vmatprep.subr.bf16.mxu0 0
  %6566 = vmatpush1.bf16.msra.mxu0 %v5428
  %6567 = vmatprep.subr.bf16.mxu0 0
  %6568 = vmatpush1.bf16.msra.mxu0 %v5429
  %6569 = vmatprep.subr.bf16.mxu0 0
  %6570 = vmatpush1.bf16.msra.mxu0 %v5430
  %6571 = vmatprep.subr.bf16.mxu0 0
  %6572 = vmatpush1.bf16.msra.mxu0 %v5431
  %6573 = vmatprep.subr.bf16.mxu0 0
  %6574 = vmatpush1.bf16.msra.mxu0 %v5432
  %6575 = vmatprep.subr.bf16.mxu0 0
  %6576 = vmatpush1.bf16.msra.mxu0 %v5433
  %6577 = vmatprep.subr.bf16.mxu0 0
  %6578 = vmatpush1.bf16.msra.mxu0 %v5434
  %6579 = vmatprep.subr.bf16.mxu0 0
  %6580 = vmatpush1.bf16.msra.mxu0 %v5435
  %6581 = vmatprep.subr.bf16.mxu0 0
  %6582 = vmatpush1.bf16.msra.mxu0 %v5436
  %6583 = vmatprep.subr.bf16.mxu0 0
  %6584 = vmatpush1.bf16.msra.mxu0 %v5437
  %6585 = vmatprep.subr.bf16.mxu0 0
  %6586 = vmatpush1.bf16.msra.mxu0 %v5438
  %6587 = vmatprep.subr.bf16.mxu0 0
  %6588 = vmatpush1.bf16.msra.mxu0 %v5439
  %6589 = vmatprep.mubr.bf16.mxu0 %v3213
  %6590 = vmatmul.mubr.bf16.gmra.mrb[0].mxu0 %v3212
  %v6591 = vpop.f32.mrb[0].mxu0
  %v6592 = vadd.f32 %v6551, %v6591
  %v6593 = vpop.f32.mrb[0].mxu0
  %v6594 = vpop.f32.mrb[0].mxu0
  %v6595 = vadd.f32 %v6554, %v6594
  %v6596 = vpop.f32.mrb[0].mxu0
  %6597 = vdwg.mxu0
  %6598 = vmatprep.subr.bf16.mxu0 0
  %6599 = vmatpush1.bf16.msra.mxu0 %v5440
  %6600 = vmatprep.subr.bf16.mxu0 0
  %6601 = vmatpush1.bf16.msra.mxu0 %v5441
  %6602 = vmatprep.subr.bf16.mxu0 0
  %6603 = vmatpush1.bf16.msra.mxu0 %v5442
  %6604 = vmatprep.subr.bf16.mxu0 0
  %6605 = vmatpush1.bf16.msra.mxu0 %v5443
  %6606 = vmatprep.subr.bf16.mxu0 0
  %6607 = vmatpush1.bf16.msra.mxu0 %v5444
  %6608 = vmatprep.subr.bf16.mxu0 0
  %6609 = vmatpush1.bf16.msra.mxu0 %v5445
  %6610 = vmatprep.subr.bf16.mxu0 0
  %6611 = vmatpush1.bf16.msra.mxu0 %v5446
  %6612 = vmatprep.subr.bf16.mxu0 0
  %6613 = vmatpush1.bf16.msra.mxu0 %v5447
  %6614 = vmatprep.subr.bf16.mxu0 0
  %6615 = vmatpush1.bf16.msra.mxu0 %v5448
  %6616 = vmatprep.subr.bf16.mxu0 0
  %6617 = vmatpush1.bf16.msra.mxu0 %v5449
  %6618 = vmatprep.subr.bf16.mxu0 0
  %6619 = vmatpush1.bf16.msra.mxu0 %v5450
  %6620 = vmatprep.subr.bf16.mxu0 0
  %6621 = vmatpush1.bf16.msra.mxu0 %v5451
  %6622 = vmatprep.subr.bf16.mxu0 0
  %6623 = vmatpush1.bf16.msra.mxu0 %v5452
  %6624 = vmatprep.subr.bf16.mxu0 0
  %6625 = vmatpush1.bf16.msra.mxu0 %v5453
  %6626 = vmatprep.subr.bf16.mxu0 0
  %6627 = vmatpush1.bf16.msra.mxu0 %v5454
  %6628 = vmatprep.subr.bf16.mxu0 0
  %6629 = vmatpush1.bf16.msra.mxu0 %v5455
  %6630 = vmatprep.mubr.bf16.mxu0 %v3215
  %6631 = vmatmul.mubr.bf16.gmra.mrb[0].mxu0 %v3214
  %v6632 = vpop.f32.mrb[0].mxu0
  %v6633 = vadd.f32 %v6592, %v6632
  %v6634 = vpop.f32.mrb[0].mxu0
  %v6635 = vpop.f32.mrb[0].mxu0
  %v6636 = vadd.f32 %v6595, %v6635
  %v6637 = vpop.f32.mrb[0].mxu0
  %6638 = vdwg.mxu0
  %6639 = vmatprep.subr.bf16.mxu0 0
  %6640 = vmatpush1.bf16.msra.mxu0 %v5456
  %6641 = vmatprep.subr.bf16.mxu0 0
  %6642 = vmatpush1.bf16.msra.mxu0 %v5457
  %6643 = vmatprep.subr.bf16.mxu0 0
  %6644 = vmatpush1.bf16.msra.mxu0 %v5458
  %6645 = vmatprep.subr.bf16.mxu0 0
  %6646 = vmatpush1.bf16.msra.mxu0 %v5459
  %6647 = vmatprep.subr.bf16.mxu0 0
  %6648 = vmatpush1.bf16.msra.mxu0 %v5460
  %6649 = vmatprep.subr.bf16.mxu0 0
  %6650 = vmatpush1.bf16.msra.mxu0 %v5461
  %6651 = vmatprep.subr.bf16.mxu0 0
  %6652 = vmatpush1.bf16.msra.mxu0 %v5462
  %6653 = vmatprep.subr.bf16.mxu0 0
  %6654 = vmatpush1.bf16.msra.mxu0 %v5463
  %6655 = vmatprep.subr.bf16.mxu0 0
  %6656 = vmatpush1.bf16.msra.mxu0 %v5464
  %6657 = vmatprep.subr.bf16.mxu0 0
  %6658 = vmatpush1.bf16.msra.mxu0 %v5465
  %6659 = vmatprep.subr.bf16.mxu0 0
  %6660 = vmatpush1.bf16.msra.mxu0 %v5466
  %6661 = vmatprep.subr.bf16.mxu0 0
  %6662 = vmatpush1.bf16.msra.mxu0 %v5467
  %6663 = vmatprep.subr.bf16.mxu0 0
  %6664 = vmatpush1.bf16.msra.mxu0 %v5468
  %6665 = vmatprep.subr.bf16.mxu0 0
  %6666 = vmatpush1.bf16.msra.mxu0 %v5469
  %6667 = vmatprep.subr.bf16.mxu0 0
  %6668 = vmatpush1.bf16.msra.mxu0 %v5470
  %6669 = vmatprep.subr.bf16.mxu0 0
  %6670 = vmatpush1.bf16.msra.mxu0 %v5471
  %6671 = vmatprep.mubr.bf16.mxu0 %v3217
  %6672 = vmatmul.mubr.bf16.gmra.mrb[0].mxu0 %v3216
  %v6673 = vpop.f32.mrb[0].mxu0
  %v6674 = vadd.f32 %v6633, %v6673
  %v6675 = vpop.f32.mrb[0].mxu0
  %v6676 = vpop.f32.mrb[0].mxu0
  %v6677 = vadd.f32 %v6636, %v6676
  %v6678 = vpop.f32.mrb[0].mxu0
  %6679 = vdwg.mxu0
  %6680 = vmatprep.subr.bf16.mxu0 0
  %6681 = vmatpush1.bf16.msra.mxu0 %v5472
  %6682 = vmatprep.subr.bf16.mxu0 0
  %6683 = vmatpush1.bf16.msra.mxu0 %v5473
  %6684 = vmatprep.subr.bf16.mxu0 0
  %6685 = vmatpush1.bf16.msra.mxu0 %v5474
  %6686 = vmatprep.subr.bf16.mxu0 0
  %6687 = vmatpush1.bf16.msra.mxu0 %v5475
  %6688 = vmatprep.subr.bf16.mxu0 0
  %6689 = vmatpush1.bf16.msra.mxu0 %v5476
  %6690 = vmatprep.subr.bf16.mxu0 0
  %6691 = vmatpush1.bf16.msra.mxu0 %v5477
  %6692 = vmatprep.subr.bf16.mxu0 0
  %6693 = vmatpush1.bf16.msra.mxu0 %v5478
  %6694 = vmatprep.subr.bf16.mxu0 0
  %6695 = vmatpush1.bf16.msra.mxu0 %v5479
  %6696 = vmatprep.subr.bf16.mxu0 0
  %6697 = vmatpush1.bf16.msra.mxu0 %v5480
  %6698 = vmatprep.subr.bf16.mxu0 0
  %6699 = vmatpush1.bf16.msra.mxu0 %v5481
  %6700 = vmatprep.subr.bf16.mxu0 0
  %6701 = vmatpush1.bf16.msra.mxu0 %v5482
  %6702 = vmatprep.subr.bf16.mxu0 0
  %6703 = vmatpush1.bf16.msra.mxu0 %v5483
  %6704 = vmatprep.subr.bf16.mxu0 0
  %6705 = vmatpush1.bf16.msra.mxu0 %v5484
  %6706 = vmatprep.subr.bf16.mxu0 0
  %6707 = vmatpush1.bf16.msra.mxu0 %v5485
  %6708 = vmatprep.subr.bf16.mxu0 0
  %6709 = vmatpush1.bf16.msra.mxu0 %v5486
  %6710 = vmatprep.subr.bf16.mxu0 0
  %6711 = vmatpush1.bf16.msra.mxu0 %v5487
  %6712 = vmatprep.mubr.bf16.mxu0 %v3219
  %6713 = vmatmul.mubr.bf16.gmra.mrb[0].mxu0 %v3218
  %v6714 = vpop.f32.mrb[0].mxu0
  %v6715 = vadd.f32 %v6674, %v6714
  %v6716 = vpop.f32.mrb[0].mxu0
  %v6717 = vpop.f32.mrb[0].mxu0
  %v6718 = vadd.f32 %v6677, %v6717
  %v6719 = vpop.f32.mrb[0].mxu0
  %6720 = vdwg.mxu0
  %6721 = vmatprep.subr.bf16.mxu0 0
  %6722 = vmatpush1.bf16.msra.mxu0 %v5488
  %6723 = vmatprep.subr.bf16.mxu0 0
  %6724 = vmatpush1.bf16.msra.mxu0 %v5489
  %6725 = vmatprep.subr.bf16.mxu0 0
  %6726 = vmatpush1.bf16.msra.mxu0 %v5490
  %6727 = vmatprep.subr.bf16.mxu0 0
  %6728 = vmatpush1.bf16.msra.mxu0 %v5491
  %6729 = vmatprep.subr.bf16.mxu0 0
  %6730 = vmatpush1.bf16.msra.mxu0 %v5492
  %6731 = vmatprep.subr.bf16.mxu0 0
  %6732 = vmatpush1.bf16.msra.mxu0 %v5493
  %6733 = vmatprep.subr.bf16.mxu0 0
  %6734 = vmatpush1.bf16.msra.mxu0 %v5494
  %6735 = vmatprep.subr.bf16.mxu0 0
  %6736 = vmatpush1.bf16.msra.mxu0 %v5495
  %6737 = vmatprep.subr.bf16.mxu0 0
  %6738 = vmatpush1.bf16.msra.mxu0 %v5496
  %6739 = vmatprep.subr.bf16.mxu0 0
  %6740 = vmatpush1.bf16.msra.mxu0 %v5497
  %6741 = vmatprep.subr.bf16.mxu0 0
  %6742 = vmatpush1.bf16.msra.mxu0 %v5498
  %6743 = vmatprep.subr.bf16.mxu0 0
  %6744 = vmatpush1.bf16.msra.mxu0 %v5499
  %6745 = vmatprep.subr.bf16.mxu0 0
  %6746 = vmatpush1.bf16.msra.mxu0 %v5500
  %6747 = vmatprep.subr.bf16.mxu0 0
  %6748 = vmatpush1.bf16.msra.mxu0 %v5501
  %6749 = vmatprep.subr.bf16.mxu0 0
  %6750 = vmatpush1.bf16.msra.mxu0 %v5502
  %6751 = vmatprep.subr.bf16.mxu0 0
  %6752 = vmatpush1.bf16.msra.mxu0 %v5503
  %6753 = vmatprep.mubr.bf16.mxu0 %v3221
  %6754 = vmatmul.mubr.bf16.gmra.mrb[0].mxu0 %v3220
  %v6755 = vpop.f32.mrb[0].mxu0
  %v6756 = vadd.f32 %v6715, %v6755
  %v6757 = vpop.f32.mrb[0].mxu0
  %v6758 = vpop.f32.mrb[0].mxu0
  %v6759 = vadd.f32 %v6718, %v6758
  %v6760 = vpop.f32.mrb[0].mxu0
  %6761 = vdwg.mxu0
  %6762 = vmatprep.subr.bf16.mxu0 0
  %6763 = vmatpush1.bf16.msra.mxu0 %v5504
  %6764 = vmatprep.subr.bf16.mxu0 0
  %6765 = vmatpush1.bf16.msra.mxu0 %v5505
  %6766 = vmatprep.subr.bf16.mxu0 0
  %6767 = vmatpush1.bf16.msra.mxu0 %v5506
  %6768 = vmatprep.subr.bf16.mxu0 0
  %6769 = vmatpush1.bf16.msra.mxu0 %v5507
  %6770 = vmatprep.subr.bf16.mxu0 0
  %6771 = vmatpush1.bf16.msra.mxu0 %v5508
  %6772 = vmatprep.subr.bf16.mxu0 0
  %6773 = vmatpush1.bf16.msra.mxu0 %v5509
  %6774 = vmatprep.subr.bf16.mxu0 0
  %6775 = vmatpush1.bf16.msra.mxu0 %v5510
  %6776 = vmatprep.subr.bf16.mxu0 0
  %6777 = vmatpush1.bf16.msra.mxu0 %v5511
  %6778 = vmatprep.subr.bf16.mxu0 0
  %6779 = vmatpush1.bf16.msra.mxu0 %v5512
  %6780 = vmatprep.subr.bf16.mxu0 0
  %6781 = vmatpush1.bf16.msra.mxu0 %v5513
  %6782 = vmatprep.subr.bf16.mxu0 0
  %6783 = vmatpush1.bf16.msra.mxu0 %v5514
  %6784 = vmatprep.subr.bf16.mxu0 0
  %6785 = vmatpush1.bf16.msra.mxu0 %v5515
  %6786 = vmatprep.subr.bf16.mxu0 0
  %6787 = vmatpush1.bf16.msra.mxu0 %v5516
  %6788 = vmatprep.subr.bf16.mxu0 0
  %6789 = vmatpush1.bf16.msra.mxu0 %v5517
  %6790 = vmatprep.subr.bf16.mxu0 0
  %6791 = vmatpush1.bf16.msra.mxu0 %v5518
  %6792 = vmatprep.subr.bf16.mxu0 0
  %6793 = vmatpush1.bf16.msra.mxu0 %v5519
  %6794 = vmatprep.mubr.bf16.mxu0 %v3223
  %6795 = vmatmul.mubr.bf16.gmra.mrb[0].mxu0 %v3222
  %v6796 = vpop.f32.mrb[0].mxu0
  %v6797 = vadd.f32 %v6756, %v6796
  %v6798 = vpop.f32.mrb[0].mxu0
  %v6799 = vpop.f32.mrb[0].mxu0
  %v6800 = vadd.f32 %v6759, %v6799
  %v6801 = vpop.f32.mrb[0].mxu0
  %6802 = vdwg.mxu0
  %6803 = vmatprep.subr.bf16.mxu0 0
  %6804 = vmatpush1.bf16.msra.mxu0 %v5520
  %6805 = vmatprep.subr.bf16.mxu0 0
  %6806 = vmatpush1.bf16.msra.mxu0 %v5521
  %6807 = vmatprep.subr.bf16.mxu0 0
  %6808 = vmatpush1.bf16.msra.mxu0 %v5522
  %6809 = vmatprep.subr.bf16.mxu0 0
  %6810 = vmatpush1.bf16.msra.mxu0 %v5523
  %6811 = vmatprep.subr.bf16.mxu0 0
  %6812 = vmatpush1.bf16.msra.mxu0 %v5524
  %6813 = vmatprep.subr.bf16.mxu0 0
  %6814 = vmatpush1.bf16.msra.mxu0 %v5525
  %6815 = vmatprep.subr.bf16.mxu0 0
  %6816 = vmatpush1.bf16.msra.mxu0 %v5526
  %6817 = vmatprep.subr.bf16.mxu0 0
  %6818 = vmatpush1.bf16.msra.mxu0 %v5527
  %6819 = vmatprep.subr.bf16.mxu0 0
  %6820 = vmatpush1.bf16.msra.mxu0 %v5528
  %6821 = vmatprep.subr.bf16.mxu0 0
  %6822 = vmatpush1.bf16.msra.mxu0 %v5529
  %6823 = vmatprep.subr.bf16.mxu0 0
  %6824 = vmatpush1.bf16.msra.mxu0 %v5530
  %6825 = vmatprep.subr.bf16.mxu0 0
  %6826 = vmatpush1.bf16.msra.mxu0 %v5531
  %6827 = vmatprep.subr.bf16.mxu0 0
  %6828 = vmatpush1.bf16.msra.mxu0 %v5532
  %6829 = vmatprep.subr.bf16.mxu0 0
  %6830 = vmatpush1.bf16.msra.mxu0 %v5533
  %6831 = vmatprep.subr.bf16.mxu0 0
  %6832 = vmatpush1.bf16.msra.mxu0 %v5534
  %6833 = vmatprep.subr.bf16.mxu0 0
  %6834 = vmatpush1.bf16.msra.mxu0 %v5535
  %6835 = vmatprep.mubr.bf16.mxu0 %v3225
  %6836 = vmatmul.mubr.bf16.gmra.mrb[0].mxu0 %v3224
  %v6837 = vpop.f32.mrb[0].mxu0
  %v6838 = vadd.f32 %v6797, %v6837
  %v6839 = vpop.f32.mrb[0].mxu0
  %v6840 = vpop.f32.mrb[0].mxu0
  %v6841 = vadd.f32 %v6800, %v6840
  %v6842 = vpop.f32.mrb[0].mxu0
  %6843 = vdwg.mxu0
  %6844 = vmatprep.subr.bf16.mxu0 0
  %6845 = vmatpush1.bf16.msra.mxu0 %v5536
  %6846 = vmatprep.subr.bf16.mxu0 0
  %6847 = vmatpush1.bf16.msra.mxu0 %v5537
  %6848 = vmatprep.subr.bf16.mxu0 0
  %6849 = vmatpush1.bf16.msra.mxu0 %v5538
  %6850 = vmatprep.subr.bf16.mxu0 0
  %6851 = vmatpush1.bf16.msra.mxu0 %v5539
  %6852 = vmatprep.subr.bf16.mxu0 0
  %6853 = vmatpush1.bf16.msra.mxu0 %v5540
  %6854 = vmatprep.subr.bf16.mxu0 0
  %6855 = vmatpush1.bf16.msra.mxu0 %v5541
  %6856 = vmatprep.subr.bf16.mxu0 0
  %6857 = vmatpush1.bf16.msra.mxu0 %v5542
  %6858 = vmatprep.subr.bf16.mxu0 0
  %6859 = vmatpush1.bf16.msra.mxu0 %v5543
  %6860 = vmatprep.subr.bf16.mxu0 0
  %6861 = vmatpush1.bf16.msra.mxu0 %v5544
  %6862 = vmatprep.subr.bf16.mxu0 0
  %6863 = vmatpush1.bf16.msra.mxu0 %v5545
  %6864 = vmatprep.subr.bf16.mxu0 0
  %6865 = vmatpush1.bf16.msra.mxu0 %v5546
  %6866 = vmatprep.subr.bf16.mxu0 0
  %6867 = vmatpush1.bf16.msra.mxu0 %v5547
  %6868 = vmatprep.subr.bf16.mxu0 0
  %6869 = vmatpush1.bf16.msra.mxu0 %v5548
  %6870 = vmatprep.subr.bf16.mxu0 0
  %6871 = vmatpush1.bf16.msra.mxu0 %v5549
  %6872 = vmatprep.subr.bf16.mxu0 0
  %6873 = vmatpush1.bf16.msra.mxu0 %v5550
  %6874 = vmatprep.subr.bf16.mxu0 0
  %6875 = vmatpush1.bf16.msra.mxu0 %v5551
  %6876 = vmatprep.mubr.bf16.mxu0 %v3227
  %6877 = vmatmul.mubr.bf16.gmra.mrb[0].mxu0 %v3226
  %v6878 = vpop.f32.mrb[0].mxu0
  %v6879 = vadd.f32 %v6838, %v6878
  %v6880 = vpop.f32.mrb[0].mxu0
  %v6881 = vpop.f32.mrb[0].mxu0
  %v6882 = vadd.f32 %v6841, %v6881
  %v6883 = vpop.f32.mrb[0].mxu0
  %6884 = vdwg.mxu0
  %6885 = vmatprep.subr.bf16.mxu0 0
  %6886 = vmatpush1.bf16.msra.mxu0 %v5552
  %6887 = vmatprep.subr.bf16.mxu0 0
  %6888 = vmatpush1.bf16.msra.mxu0 %v5553
  %6889 = vmatprep.subr.bf16.mxu0 0
  %6890 = vmatpush1.bf16.msra.mxu0 %v5554
  %6891 = vmatprep.subr.bf16.mxu0 0
  %6892 = vmatpush1.bf16.msra.mxu0 %v5555
  %6893 = vmatprep.subr.bf16.mxu0 0
  %6894 = vmatpush1.bf16.msra.mxu0 %v5556
  %6895 = vmatprep.subr.bf16.mxu0 0
  %6896 = vmatpush1.bf16.msra.mxu0 %v5557
  %6897 = vmatprep.subr.bf16.mxu0 0
  %6898 = vmatpush1.bf16.msra.mxu0 %v5558
  %6899 = vmatprep.subr.bf16.mxu0 0
  %6900 = vmatpush1.bf16.msra.mxu0 %v5559
  %6901 = vmatprep.subr.bf16.mxu0 0
  %6902 = vmatpush1.bf16.msra.mxu0 %v5560
  %6903 = vmatprep.subr.bf16.mxu0 0
  %6904 = vmatpush1.bf16.msra.mxu0 %v5561
  %6905 = vmatprep.subr.bf16.mxu0 0
  %6906 = vmatpush1.bf16.msra.mxu0 %v5562
  %6907 = vmatprep.subr.bf16.mxu0 0
  %6908 = vmatpush1.bf16.msra.mxu0 %v5563
  %6909 = vmatprep.subr.bf16.mxu0 0
  %6910 = vmatpush1.bf16.msra.mxu0 %v5564
  %6911 = vmatprep.subr.bf16.mxu0 0
  %6912 = vmatpush1.bf16.msra.mxu0 %v5565
  %6913 = vmatprep.subr.bf16.mxu0 0
  %6914 = vmatpush1.bf16.msra.mxu0 %v5566
  %6915 = vmatprep.subr.bf16.mxu0 0
  %6916 = vmatpush1.bf16.msra.mxu0 %v5567
  %6917 = vmatprep.mubr.bf16.mxu0 %v3229
  %6918 = vmatmul.mubr.bf16.gmra.mrb[0].mxu0 %v3228
  %v6919 = vpop.f32.mrb[0].mxu0
  %v6920 = vadd.f32 %v6879, %v6919
  %v6921 = vpop.f32.mrb[0].mxu0
  %v6922 = vpop.f32.mrb[0].mxu0
  %v6923 = vadd.f32 %v6882, %v6922
  %v6924 = vpop.f32.mrb[0].mxu0
  %6925 = vdwg.mxu0
  %6926 = vmatprep.subr.bf16.mxu0 0
  %6927 = vmatpush1.bf16.msra.mxu0 %v5568
  %6928 = vmatprep.subr.bf16.mxu0 0
  %6929 = vmatpush1.bf16.msra.mxu0 %v5569
  %6930 = vmatprep.subr.bf16.mxu0 0
  %6931 = vmatpush1.bf16.msra.mxu0 %v5570
  %6932 = vmatprep.subr.bf16.mxu0 0
  %6933 = vmatpush1.bf16.msra.mxu0 %v5571
  %6934 = vmatprep.subr.bf16.mxu0 0
  %6935 = vmatpush1.bf16.msra.mxu0 %v5572
  %6936 = vmatprep.subr.bf16.mxu0 0
  %6937 = vmatpush1.bf16.msra.mxu0 %v5573
  %6938 = vmatprep.subr.bf16.mxu0 0
  %6939 = vmatpush1.bf16.msra.mxu0 %v5574
  %6940 = vmatprep.subr.bf16.mxu0 0
  %6941 = vmatpush1.bf16.msra.mxu0 %v5575
  %6942 = vmatprep.subr.bf16.mxu0 0
  %6943 = vmatpush1.bf16.msra.mxu0 %v5576
  %6944 = vmatprep.subr.bf16.mxu0 0
  %6945 = vmatpush1.bf16.msra.mxu0 %v5577
  %6946 = vmatprep.subr.bf16.mxu0 0
  %6947 = vmatpush1.bf16.msra.mxu0 %v5578
  %6948 = vmatprep.subr.bf16.mxu0 0
  %6949 = vmatpush1.bf16.msra.mxu0 %v5579
  %6950 = vmatprep.subr.bf16.mxu0 0
  %6951 = vmatpush1.bf16.msra.mxu0 %v5580
  %6952 = vmatprep.subr.bf16.mxu0 0
  %6953 = vmatpush1.bf16.msra.mxu0 %v5581
  %6954 = vmatprep.subr.bf16.mxu0 0
  %6955 = vmatpush1.bf16.msra.mxu0 %v5582
  %6956 = vmatprep.subr.bf16.mxu0 0
  %6957 = vmatpush1.bf16.msra.mxu0 %v5583
  %6958 = vmatprep.mubr.bf16.mxu0 %v3231
  %6959 = vmatmul.mubr.bf16.gmra.mrb[0].mxu0 %v3230
  %v6960 = vpop.f32.mrb[0].mxu0
  %v6961 = vadd.f32 %v6920, %v6960
  %v6962 = vpop.f32.mrb[0].mxu0
  %v6963 = vpop.f32.mrb[0].mxu0
  %v6964 = vadd.f32 %v6923, %v6963
  %v6965 = vpop.f32.mrb[0].mxu0
  %6966 = vdwg.mxu0
  %6967 = vmatprep.subr.bf16.mxu0 0
  %6968 = vmatpush1.bf16.msra.mxu0 %v5584
  %6969 = vmatprep.subr.bf16.mxu0 0
  %6970 = vmatpush1.bf16.msra.mxu0 %v5585
  %6971 = vmatprep.subr.bf16.mxu0 0
  %6972 = vmatpush1.bf16.msra.mxu0 %v5586
  %6973 = vmatprep.subr.bf16.mxu0 0
  %6974 = vmatpush1.bf16.msra.mxu0 %v5587
  %6975 = vmatprep.subr.bf16.mxu0 0
  %6976 = vmatpush1.bf16.msra.mxu0 %v5588
  %6977 = vmatprep.subr.bf16.mxu0 0
  %6978 = vmatpush1.bf16.msra.mxu0 %v5589
  %6979 = vmatprep.subr.bf16.mxu0 0
  %6980 = vmatpush1.bf16.msra.mxu0 %v5590
  %6981 = vmatprep.subr.bf16.mxu0 0
  %6982 = vmatpush1.bf16.msra.mxu0 %v5591
  %6983 = vmatprep.subr.bf16.mxu0 0
  %6984 = vmatpush1.bf16.msra.mxu0 %v5592
  %6985 = vmatprep.subr.bf16.mxu0 0
  %6986 = vmatpush1.bf16.msra.mxu0 %v5593
  %6987 = vmatprep.subr.bf16.mxu0 0
  %6988 = vmatpush1.bf16.msra.mxu0 %v5594
  %6989 = vmatprep.subr.bf16.mxu0 0
  %6990 = vmatpush1.bf16.msra.mxu0 %v5595
  %6991 = vmatprep.subr.bf16.mxu0 0
  %6992 = vmatpush1.bf16.msra.mxu0 %v5596
  %6993 = vmatprep.subr.bf16.mxu0 0
  %6994 = vmatpush1.bf16.msra.mxu0 %v5597
  %6995 = vmatprep.subr.bf16.mxu0 0
  %6996 = vmatpush1.bf16.msra.mxu0 %v5598
  %6997 = vmatprep.subr.bf16.mxu0 0
  %6998 = vmatpush1.bf16.msra.mxu0 %v5599
  %6999 = vmatprep.mubr.bf16.mxu0 %v3233
  %7000 = vmatmul.mubr.bf16.gmra.mrb[0].mxu0 %v3232
  %v7001 = vpop.f32.mrb[0].mxu0
  %v7002 = vadd.f32 %v6961, %v7001
  %v7003 = vpop.f32.mrb[0].mxu0
  %v7004 = vpop.f32.mrb[0].mxu0
  %v7005 = vadd.f32 %v6964, %v7004
  %v7006 = vpop.f32.mrb[0].mxu0
  %7007 = vdwg.mxu0
  %7008 = vmatprep.subr.bf16.mxu0 0
  %7009 = vmatpush1.bf16.msra.mxu0 %v5600
  %7010 = vmatprep.subr.bf16.mxu0 0
  %7011 = vmatpush1.bf16.msra.mxu0 %v5601
  %7012 = vmatprep.subr.bf16.mxu0 0
  %7013 = vmatpush1.bf16.msra.mxu0 %v5602
  %7014 = vmatprep.subr.bf16.mxu0 0
  %7015 = vmatpush1.bf16.msra.mxu0 %v5603
  %7016 = vmatprep.subr.bf16.mxu0 0
  %7017 = vmatpush1.bf16.msra.mxu0 %v5604
  %7018 = vmatprep.subr.bf16.mxu0 0
  %7019 = vmatpush1.bf16.msra.mxu0 %v5605
  %7020 = vmatprep.subr.bf16.mxu0 0
  %7021 = vmatpush1.bf16.msra.mxu0 %v5606
  %7022 = vmatprep.subr.bf16.mxu0 0
  %7023 = vmatpush1.bf16.msra.mxu0 %v5607
  %7024 = vmatprep.subr.bf16.mxu0 0
  %7025 = vmatpush1.bf16.msra.mxu0 %v5608
  %7026 = vmatprep.subr.bf16.mxu0 0
  %7027 = vmatpush1.bf16.msra.mxu0 %v5609
  %7028 = vmatprep.subr.bf16.mxu0 0
  %7029 = vmatpush1.bf16.msra.mxu0 %v5610
  %7030 = vmatprep.subr.bf16.mxu0 0
  %7031 = vmatpush1.bf16.msra.mxu0 %v5611
  %7032 = vmatprep.subr.bf16.mxu0 0
  %7033 = vmatpush1.bf16.msra.mxu0 %v5612
  %7034 = vmatprep.subr.bf16.mxu0 0
  %7035 = vmatpush1.bf16.msra.mxu0 %v5613
  %7036 = vmatprep.subr.bf16.mxu0 0
  %7037 = vmatpush1.bf16.msra.mxu0 %v5614
  %7038 = vmatprep.subr.bf16.mxu0 0
  %7039 = vmatpush1.bf16.msra.mxu0 %v5615
  %7040 = vmatprep.mubr.bf16.mxu0 %v3235
  %7041 = vmatmul.mubr.bf16.gmra.mrb[0].mxu0 %v3234
  %v7042 = vpop.f32.mrb[0].mxu0
  %v7043 = vadd.f32 %v7002, %v7042
  %v7044 = vpop.f32.mrb[0].mxu0
  %v7045 = vpop.f32.mrb[0].mxu0
  %v7046 = vadd.f32 %v7005, %v7045
  %v7047 = vpop.f32.mrb[0].mxu0
  %7048 = vdwg.mxu0
  %7049 = vmatprep.subr.bf16.mxu0 0
  %7050 = vmatpush1.bf16.msra.mxu0 %v5616
  %7051 = vmatprep.subr.bf16.mxu0 0
  %7052 = vmatpush1.bf16.msra.mxu0 %v5617
  %7053 = vmatprep.subr.bf16.mxu0 0
  %7054 = vmatpush1.bf16.msra.mxu0 %v5618
  %7055 = vmatprep.subr.bf16.mxu0 0
  %7056 = vmatpush1.bf16.msra.mxu0 %v5619
  %7057 = vmatprep.subr.bf16.mxu0 0
  %7058 = vmatpush1.bf16.msra.mxu0 %v5620
  %7059 = vmatprep.subr.bf16.mxu0 0
  %7060 = vmatpush1.bf16.msra.mxu0 %v5621
  %7061 = vmatprep.subr.bf16.mxu0 0
  %7062 = vmatpush1.bf16.msra.mxu0 %v5622
  %7063 = vmatprep.subr.bf16.mxu0 0
  %7064 = vmatpush1.bf16.msra.mxu0 %v5623
  %7065 = vmatprep.subr.bf16.mxu0 0
  %7066 = vmatpush1.bf16.msra.mxu0 %v5624
  %7067 = vmatprep.subr.bf16.mxu0 0
  %7068 = vmatpush1.bf16.msra.mxu0 %v5625
  %7069 = vmatprep.subr.bf16.mxu0 0
  %7070 = vmatpush1.bf16.msra.mxu0 %v5626
  %7071 = vmatprep.subr.bf16.mxu0 0
  %7072 = vmatpush1.bf16.msra.mxu0 %v5627
  %7073 = vmatprep.subr.bf16.mxu0 0
  %7074 = vmatpush1.bf16.msra.mxu0 %v5628
  %7075 = vmatprep.subr.bf16.mxu0 0
  %7076 = vmatpush1.bf16.msra.mxu0 %v5629
  %7077 = vmatprep.subr.bf16.mxu0 0
  %7078 = vmatpush1.bf16.msra.mxu0 %v5630
  %7079 = vmatprep.subr.bf16.mxu0 0
  %7080 = vmatpush1.bf16.msra.mxu0 %v5631
  %7081 = vmatprep.mubr.bf16.mxu0 %v3237
  %7082 = vmatmul.mubr.bf16.gmra.mrb[0].mxu0 %v3236
  %v7083 = vpop.f32.mrb[0].mxu0
  %v7084 = vadd.f32 %v7043, %v7083
  %v7085 = vpop.f32.mrb[0].mxu0
  %v7086 = vpop.f32.mrb[0].mxu0
  %v7087 = vadd.f32 %v7046, %v7086
  %v7088 = vpop.f32.mrb[0].mxu0
  %7089 = vdwg.mxu0
  %7090 = vmatprep.subr.bf16.mxu0 0
  %7091 = vmatpush1.bf16.msra.mxu0 %v5632
  %7092 = vmatprep.subr.bf16.mxu0 0
  %7093 = vmatpush1.bf16.msra.mxu0 %v5633
  %7094 = vmatprep.subr.bf16.mxu0 0
  %7095 = vmatpush1.bf16.msra.mxu0 %v5634
  %7096 = vmatprep.subr.bf16.mxu0 0
  %7097 = vmatpush1.bf16.msra.mxu0 %v5635
  %7098 = vmatprep.subr.bf16.mxu0 0
  %7099 = vmatpush1.bf16.msra.mxu0 %v5636
  %7100 = vmatprep.subr.bf16.mxu0 0
  %7101 = vmatpush1.bf16.msra.mxu0 %v5637
  %7102 = vmatprep.subr.bf16.mxu0 0
  %7103 = vmatpush1.bf16.msra.mxu0 %v5638
  %7104 = vmatprep.subr.bf16.mxu0 0
  %7105 = vmatpush1.bf16.msra.mxu0 %v5639
  %7106 = vmatprep.subr.bf16.mxu0 0
  %7107 = vmatpush1.bf16.msra.mxu0 %v5640
  %7108 = vmatprep.subr.bf16.mxu0 0
  %7109 = vmatpush1.bf16.msra.mxu0 %v5641
  %7110 = vmatprep.subr.bf16.mxu0 0
  %7111 = vmatpush1.bf16.msra.mxu0 %v5642
  %7112 = vmatprep.subr.bf16.mxu0 0
  %7113 = vmatpush1.bf16.msra.mxu0 %v5643
  %7114 = vmatprep.subr.bf16.mxu0 0
  %7115 = vmatpush1.bf16.msra.mxu0 %v5644
  %7116 = vmatprep.subr.bf16.mxu0 0
  %7117 = vmatpush1.bf16.msra.mxu0 %v5645
  %7118 = vmatprep.subr.bf16.mxu0 0
  %7119 = vmatpush1.bf16.msra.mxu0 %v5646
  %7120 = vmatprep.subr.bf16.mxu0 0
  %7121 = vmatpush1.bf16.msra.mxu0 %v5647
  %7122 = vmatprep.mubr.bf16.mxu0 %v3239
  %7123 = vmatmul.mubr.bf16.gmra.mrb[0].mxu0 %v3238
  %v7124 = vpop.f32.mrb[0].mxu0
  %v7125 = vadd.f32 %v7084, %v7124
  %v7126 = vpop.f32.mrb[0].mxu0
  %v7127 = vpop.f32.mrb[0].mxu0
  %v7128 = vadd.f32 %v7087, %v7127
  %v7129 = vpop.f32.mrb[0].mxu0
  %7130 = vdwg.mxu0
  %7131 = vmatprep.subr.bf16.mxu0 0
  %7132 = vmatpush1.bf16.msra.mxu0 %v5648
  %7133 = vmatprep.subr.bf16.mxu0 0
  %7134 = vmatpush1.bf16.msra.mxu0 %v5649
  %7135 = vmatprep.subr.bf16.mxu0 0
  %7136 = vmatpush1.bf16.msra.mxu0 %v5650
  %7137 = vmatprep.subr.bf16.mxu0 0
  %7138 = vmatpush1.bf16.msra.mxu0 %v5651
  %7139 = vmatprep.subr.bf16.mxu0 0
  %7140 = vmatpush1.bf16.msra.mxu0 %v5652
  %7141 = vmatprep.subr.bf16.mxu0 0
  %7142 = vmatpush1.bf16.msra.mxu0 %v5653
  %7143 = vmatprep.subr.bf16.mxu0 0
  %7144 = vmatpush1.bf16.msra.mxu0 %v5654
  %7145 = vmatprep.subr.bf16.mxu0 0
  %7146 = vmatpush1.bf16.msra.mxu0 %v5655
  %7147 = vmatprep.subr.bf16.mxu0 0
  %7148 = vmatpush1.bf16.msra.mxu0 %v5656
  %7149 = vmatprep.subr.bf16.mxu0 0
  %7150 = vmatpush1.bf16.msra.mxu0 %v5657
  %7151 = vmatprep.subr.bf16.mxu0 0
  %7152 = vmatpush1.bf16.msra.mxu0 %v5658
  %7153 = vmatprep.subr.bf16.mxu0 0
  %7154 = vmatpush1.bf16.msra.mxu0 %v5659
  %7155 = vmatprep.subr.bf16.mxu0 0
  %7156 = vmatpush1.bf16.msra.mxu0 %v5660
  %7157 = vmatprep.subr.bf16.mxu0 0
  %7158 = vmatpush1.bf16.msra.mxu0 %v5661
  %7159 = vmatprep.subr.bf16.mxu0 0
  %7160 = vmatpush1.bf16.msra.mxu0 %v5662
  %7161 = vmatprep.subr.bf16.mxu0 0
  %7162 = vmatpush1.bf16.msra.mxu0 %v5663
  %7163 = vmatprep.mubr.bf16.mxu0 %v3241
  %7164 = vmatmul.mubr.bf16.gmra.mrb[0].mxu0 %v3240
  %v7165 = vpop.f32.mrb[0].mxu0
  %v7166 = vadd.f32 %v7125, %v7165
  %v7167 = vpop.f32.mrb[0].mxu0
  %v7168 = vpop.f32.mrb[0].mxu0
  %v7169 = vadd.f32 %v7128, %v7168
  %v7170 = vpop.f32.mrb[0].mxu0
  %7171 = vdwg.mxu0
  %7172 = vmatprep.subr.bf16.mxu0 0
  %7173 = vmatpush1.bf16.msra.mxu0 %v5664
  %7174 = vmatprep.subr.bf16.mxu0 0
  %7175 = vmatpush1.bf16.msra.mxu0 %v5665
  %7176 = vmatprep.subr.bf16.mxu0 0
  %7177 = vmatpush1.bf16.msra.mxu0 %v5666
  %7178 = vmatprep.subr.bf16.mxu0 0
  %7179 = vmatpush1.bf16.msra.mxu0 %v5667
  %7180 = vmatprep.subr.bf16.mxu0 0
  %7181 = vmatpush1.bf16.msra.mxu0 %v5668
  %7182 = vmatprep.subr.bf16.mxu0 0
  %7183 = vmatpush1.bf16.msra.mxu0 %v5669
  %7184 = vmatprep.subr.bf16.mxu0 0
  %7185 = vmatpush1.bf16.msra.mxu0 %v5670
  %7186 = vmatprep.subr.bf16.mxu0 0
  %7187 = vmatpush1.bf16.msra.mxu0 %v5671
  %7188 = vmatprep.subr.bf16.mxu0 0
  %7189 = vmatpush1.bf16.msra.mxu0 %v5672
  %7190 = vmatprep.subr.bf16.mxu0 0
  %7191 = vmatpush1.bf16.msra.mxu0 %v5673
  %7192 = vmatprep.subr.bf16.mxu0 0
  %7193 = vmatpush1.bf16.msra.mxu0 %v5674
  %7194 = vmatprep.subr.bf16.mxu0 0
  %7195 = vmatpush1.bf16.msra.mxu0 %v5675
  %7196 = vmatprep.subr.bf16.mxu0 0
  %7197 = vmatpush1.bf16.msra.mxu0 %v5676
  %7198 = vmatprep.subr.bf16.mxu0 0
  %7199 = vmatpush1.bf16.msra.mxu0 %v5677
  %7200 = vmatprep.subr.bf16.mxu0 0
  %7201 = vmatpush1.bf16.msra.mxu0 %v5678
  %7202 = vmatprep.subr.bf16.mxu0 0
  %7203 = vmatpush1.bf16.msra.mxu0 %v5679
  %7204 = vmatprep.mubr.bf16.mxu0 %v3243
  %7205 = vmatmul.mubr.bf16.gmra.mrb[0].mxu0 %v3242
  %v7206 = vpop.f32.mrb[0].mxu0
  %v7207 = vadd.f32 %v7166, %v7206
  %v7208 = vpop.f32.mrb[0].mxu0
  %v7209 = vpop.f32.mrb[0].mxu0
  %v7210 = vadd.f32 %v7169, %v7209
  %v7211 = vpop.f32.mrb[0].mxu0
  %7212 = vdwg.mxu0
  %7213 = vmatprep.subr.bf16.mxu0 0
  %7214 = vmatpush1.bf16.msra.mxu0 %v5680
  %7215 = vmatprep.subr.bf16.mxu0 0
  %7216 = vmatpush1.bf16.msra.mxu0 %v5681
  %7217 = vmatprep.subr.bf16.mxu0 0
  %7218 = vmatpush1.bf16.msra.mxu0 %v5682
  %7219 = vmatprep.subr.bf16.mxu0 0
  %7220 = vmatpush1.bf16.msra.mxu0 %v5683
  %7221 = vmatprep.subr.bf16.mxu0 0
  %7222 = vmatpush1.bf16.msra.mxu0 %v5684
  %7223 = vmatprep.subr.bf16.mxu0 0
  %7224 = vmatpush1.bf16.msra.mxu0 %v5685
  %7225 = vmatprep.subr.bf16.mxu0 0
  %7226 = vmatpush1.bf16.msra.mxu0 %v5686
  %7227 = vmatprep.subr.bf16.mxu0 0
  %7228 = vmatpush1.bf16.msra.mxu0 %v5687
  %7229 = vmatprep.subr.bf16.mxu0 0
  %7230 = vmatpush1.bf16.msra.mxu0 %v5688
  %7231 = vmatprep.subr.bf16.mxu0 0
  %7232 = vmatpush1.bf16.msra.mxu0 %v5689
  %7233 = vmatprep.subr.bf16.mxu0 0
  %7234 = vmatpush1.bf16.msra.mxu0 %v5690
  %7235 = vmatprep.subr.bf16.mxu0 0
  %7236 = vmatpush1.bf16.msra.mxu0 %v5691
  %7237 = vmatprep.subr.bf16.mxu0 0
  %7238 = vmatpush1.bf16.msra.mxu0 %v5692
  %7239 = vmatprep.subr.bf16.mxu0 0
  %7240 = vmatpush1.bf16.msra.mxu0 %v5693
  %7241 = vmatprep.subr.bf16.mxu0 0
  %7242 = vmatpush1.bf16.msra.mxu0 %v5694
  %7243 = vmatprep.subr.bf16.mxu0 0
  %7244 = vmatpush1.bf16.msra.mxu0 %v5695
  %7245 = vmatprep.mubr.bf16.mxu0 %v3245
  %7246 = vmatmul.mubr.bf16.gmra.mrb[0].mxu0 %v3244
  %v7247 = vpop.f32.mrb[0].mxu0
  %v7248 = vadd.f32 %v7207, %v7247
  %v7249 = vpop.f32.mrb[0].mxu0
  %v7250 = vpop.f32.mrb[0].mxu0
  %v7251 = vadd.f32 %v7210, %v7250
  %v7252 = vpop.f32.mrb[0].mxu0
  %7253 = vdwg.mxu0
  %7254 = vmatprep.subr.bf16.mxu0 0
  %7255 = vmatpush1.bf16.msra.mxu0 %v5696
  %7256 = vmatprep.subr.bf16.mxu0 0
  %7257 = vmatpush1.bf16.msra.mxu0 %v5697
  %7258 = vmatprep.subr.bf16.mxu0 0
  %7259 = vmatpush1.bf16.msra.mxu0 %v5698
  %7260 = vmatprep.subr.bf16.mxu0 0
  %7261 = vmatpush1.bf16.msra.mxu0 %v5699
  %7262 = vmatprep.subr.bf16.mxu0 0
  %7263 = vmatpush1.bf16.msra.mxu0 %v5700
  %7264 = vmatprep.subr.bf16.mxu0 0
  %7265 = vmatpush1.bf16.msra.mxu0 %v5701
  %7266 = vmatprep.subr.bf16.mxu0 0
  %7267 = vmatpush1.bf16.msra.mxu0 %v5702
  %7268 = vmatprep.subr.bf16.mxu0 0
  %7269 = vmatpush1.bf16.msra.mxu0 %v5703
  %7270 = vmatprep.subr.bf16.mxu0 0
  %7271 = vmatpush1.bf16.msra.mxu0 %v5704
  %7272 = vmatprep.subr.bf16.mxu0 0
  %7273 = vmatpush1.bf16.msra.mxu0 %v5705
  %7274 = vmatprep.subr.bf16.mxu0 0
  %7275 = vmatpush1.bf16.msra.mxu0 %v5706
  %7276 = vmatprep.subr.bf16.mxu0 0
  %7277 = vmatpush1.bf16.msra.mxu0 %v5707
  %7278 = vmatprep.subr.bf16.mxu0 0
  %7279 = vmatpush1.bf16.msra.mxu0 %v5708
  %7280 = vmatprep.subr.bf16.mxu0 0
  %7281 = vmatpush1.bf16.msra.mxu0 %v5709
  %7282 = vmatprep.subr.bf16.mxu0 0
  %7283 = vmatpush1.bf16.msra.mxu0 %v5710
  %7284 = vmatprep.subr.bf16.mxu0 0
  %7285 = vmatpush1.bf16.msra.mxu0 %v5711
  %7286 = vmatprep.mubr.bf16.mxu0 %v3247
  %7287 = vmatmul.mubr.bf16.gmra.mrb[0].mxu0 %v3246
  %v7288 = vpop.f32.mrb[0].mxu0
  %v7289 = vadd.f32 %v7248, %v7288
  %v7290 = vpop.f32.mrb[0].mxu0
  %v7291 = vpop.f32.mrb[0].mxu0
  %v7292 = vadd.f32 %v7251, %v7291
  %v7293 = vpop.f32.mrb[0].mxu0
  %7294 = vdwg.mxu0
  %7295 = vmatprep.subr.bf16.mxu0 0
  %7296 = vmatpush1.bf16.msra.mxu0 %v5712
  %7297 = vmatprep.subr.bf16.mxu0 0
  %7298 = vmatpush1.bf16.msra.mxu0 %v5713
  %7299 = vmatprep.subr.bf16.mxu0 0
  %7300 = vmatpush1.bf16.msra.mxu0 %v5714
  %7301 = vmatprep.subr.bf16.mxu0 0
  %7302 = vmatpush1.bf16.msra.mxu0 %v5715
  %7303 = vmatprep.subr.bf16.mxu0 0
  %7304 = vmatpush1.bf16.msra.mxu0 %v5716
  %7305 = vmatprep.subr.bf16.mxu0 0
  %7306 = vmatpush1.bf16.msra.mxu0 %v5717
  %7307 = vmatprep.subr.bf16.mxu0 0
  %7308 = vmatpush1.bf16.msra.mxu0 %v5718
  %7309 = vmatprep.subr.bf16.mxu0 0
  %7310 = vmatpush1.bf16.msra.mxu0 %v5719
  %7311 = vmatprep.subr.bf16.mxu0 0
  %7312 = vmatpush1.bf16.msra.mxu0 %v5720
  %7313 = vmatprep.subr.bf16.mxu0 0
  %7314 = vmatpush1.bf16.msra.mxu0 %v5721
  %7315 = vmatprep.subr.bf16.mxu0 0
  %7316 = vmatpush1.bf16.msra.mxu0 %v5722
  %7317 = vmatprep.subr.bf16.mxu0 0
  %7318 = vmatpush1.bf16.msra.mxu0 %v5723
  %7319 = vmatprep.subr.bf16.mxu0 0
  %7320 = vmatpush1.bf16.msra.mxu0 %v5724
  %7321 = vmatprep.subr.bf16.mxu0 0
  %7322 = vmatpush1.bf16.msra.mxu0 %v5725
  %7323 = vmatprep.subr.bf16.mxu0 0
  %7324 = vmatpush1.bf16.msra.mxu0 %v5726
  %7325 = vmatprep.subr.bf16.mxu0 0
  %7326 = vmatpush1.bf16.msra.mxu0 %v5727
  %7327 = vmatprep.mubr.bf16.mxu0 %v3249
  %7328 = vmatmul.mubr.bf16.gmra.mrb[0].mxu0 %v3248
  %v7329 = vpop.f32.mrb[0].mxu0
  %v7330 = vadd.f32 %v7289, %v7329
  %v7331 = vpop.f32.mrb[0].mxu0
  %v7332 = vpop.f32.mrb[0].mxu0
  %v7333 = vadd.f32 %v7292, %v7332
  %v7334 = vpop.f32.mrb[0].mxu0
  %7335 = vdwg.mxu0
  %7336 = vmatprep.subr.bf16.mxu0 0
  %7337 = vmatpush1.bf16.msra.mxu0 %v5728
  %7338 = vmatprep.subr.bf16.mxu0 0
  %7339 = vmatpush1.bf16.msra.mxu0 %v5729
  %7340 = vmatprep.subr.bf16.mxu0 0
  %7341 = vmatpush1.bf16.msra.mxu0 %v5730
  %7342 = vmatprep.subr.bf16.mxu0 0
  %7343 = vmatpush1.bf16.msra.mxu0 %v5731
  %7344 = vmatprep.subr.bf16.mxu0 0
  %7345 = vmatpush1.bf16.msra.mxu0 %v5732
  %7346 = vmatprep.subr.bf16.mxu0 0
  %7347 = vmatpush1.bf16.msra.mxu0 %v5733
  %7348 = vmatprep.subr.bf16.mxu0 0
  %7349 = vmatpush1.bf16.msra.mxu0 %v5734
  %7350 = vmatprep.subr.bf16.mxu0 0
  %7351 = vmatpush1.bf16.msra.mxu0 %v5735
  %7352 = vmatprep.subr.bf16.mxu0 0
  %7353 = vmatpush1.bf16.msra.mxu0 %v5736
  %7354 = vmatprep.subr.bf16.mxu0 0
  %7355 = vmatpush1.bf16.msra.mxu0 %v5737
  %7356 = vmatprep.subr.bf16.mxu0 0
  %7357 = vmatpush1.bf16.msra.mxu0 %v5738
  %7358 = vmatprep.subr.bf16.mxu0 0
  %7359 = vmatpush1.bf16.msra.mxu0 %v5739
  %7360 = vmatprep.subr.bf16.mxu0 0
  %7361 = vmatpush1.bf16.msra.mxu0 %v5740
  %7362 = vmatprep.subr.bf16.mxu0 0
  %7363 = vmatpush1.bf16.msra.mxu0 %v5741
  %7364 = vmatprep.subr.bf16.mxu0 0
  %7365 = vmatpush1.bf16.msra.mxu0 %v5742
  %7366 = vmatprep.subr.bf16.mxu0 0
  %7367 = vmatpush1.bf16.msra.mxu0 %v5743
  %7368 = vmatprep.mubr.bf16.mxu0 %v3251
  %7369 = vmatmul.mubr.bf16.gmra.mrb[0].mxu0 %v3250
  %v7370 = vpop.f32.mrb[0].mxu0
  %v7371 = vadd.f32 %v7330, %v7370
  %v7372 = vpop.f32.mrb[0].mxu0
  %v7373 = vpop.f32.mrb[0].mxu0
  %v7374 = vadd.f32 %v7333, %v7373
  %v7375 = vpop.f32.mrb[0].mxu0
  %7376 = vdwg.mxu0
  %7377 = vmatprep.subr.bf16.mxu0 0
  %7378 = vmatpush1.bf16.msra.mxu0 %v5744
  %7379 = vmatprep.subr.bf16.mxu0 0
  %7380 = vmatpush1.bf16.msra.mxu0 %v5745
  %7381 = vmatprep.subr.bf16.mxu0 0
  %7382 = vmatpush1.bf16.msra.mxu0 %v5746
  %7383 = vmatprep.subr.bf16.mxu0 0
  %7384 = vmatpush1.bf16.msra.mxu0 %v5747
  %7385 = vmatprep.subr.bf16.mxu0 0
  %7386 = vmatpush1.bf16.msra.mxu0 %v5748
  %7387 = vmatprep.subr.bf16.mxu0 0
  %7388 = vmatpush1.bf16.msra.mxu0 %v5749
  %7389 = vmatprep.subr.bf16.mxu0 0
  %7390 = vmatpush1.bf16.msra.mxu0 %v5750
  %7391 = vmatprep.subr.bf16.mxu0 0
  %7392 = vmatpush1.bf16.msra.mxu0 %v5751
  %7393 = vmatprep.subr.bf16.mxu0 0
  %7394 = vmatpush1.bf16.msra.mxu0 %v5752
  %7395 = vmatprep.subr.bf16.mxu0 0
  %7396 = vmatpush1.bf16.msra.mxu0 %v5753
  %7397 = vmatprep.subr.bf16.mxu0 0
  %7398 = vmatpush1.bf16.msra.mxu0 %v5754
  %7399 = vmatprep.subr.bf16.mxu0 0
  %7400 = vmatpush1.bf16.msra.mxu0 %v5755
  %7401 = vmatprep.subr.bf16.mxu0 0
  %7402 = vmatpush1.bf16.msra.mxu0 %v5756
  %7403 = vmatprep.subr.bf16.mxu0 0
  %7404 = vmatpush1.bf16.msra.mxu0 %v5757
  %7405 = vmatprep.subr.bf16.mxu0 0
  %7406 = vmatpush1.bf16.msra.mxu0 %v5758
  %7407 = vmatprep.subr.bf16.mxu0 0
  %7408 = vmatpush1.bf16.msra.mxu0 %v5759
  %7409 = vmatprep.mubr.bf16.mxu0 %v3253
  %7410 = vmatmul.mubr.bf16.gmra.mrb[0].mxu0 %v3252
  %v7411 = vpop.f32.mrb[0].mxu0
  %v7412 = vadd.f32 %v7371, %v7411
  %v7413 = vpop.f32.mrb[0].mxu0
  %v7414 = vpop.f32.mrb[0].mxu0
  %v7415 = vadd.f32 %v7374, %v7414
  %v7416 = vpop.f32.mrb[0].mxu0
  %7417 = vdwg.mxu0
  %7418 = vmatprep.subr.bf16.mxu0 0
  %7419 = vmatpush1.bf16.msra.mxu0 %v5760
  %7420 = vmatprep.subr.bf16.mxu0 0
  %7421 = vmatpush1.bf16.msra.mxu0 %v5761
  %7422 = vmatprep.subr.bf16.mxu0 0
  %7423 = vmatpush1.bf16.msra.mxu0 %v5762
  %7424 = vmatprep.subr.bf16.mxu0 0
  %7425 = vmatpush1.bf16.msra.mxu0 %v5763
  %7426 = vmatprep.subr.bf16.mxu0 0
  %7427 = vmatpush1.bf16.msra.mxu0 %v5764
  %7428 = vmatprep.subr.bf16.mxu0 0
  %7429 = vmatpush1.bf16.msra.mxu0 %v5765
  %7430 = vmatprep.subr.bf16.mxu0 0
  %7431 = vmatpush1.bf16.msra.mxu0 %v5766
  %7432 = vmatprep.subr.bf16.mxu0 0
  %7433 = vmatpush1.bf16.msra.mxu0 %v5767
  %7434 = vmatprep.subr.bf16.mxu0 0
  %7435 = vmatpush1.bf16.msra.mxu0 %v5768
  %7436 = vmatprep.subr.bf16.mxu0 0
  %7437 = vmatpush1.bf16.msra.mxu0 %v5769
  %7438 = vmatprep.subr.bf16.mxu0 0
  %7439 = vmatpush1.bf16.msra.mxu0 %v5770
  %7440 = vmatprep.subr.bf16.mxu0 0
  %7441 = vmatpush1.bf16.msra.mxu0 %v5771
  %7442 = vmatprep.subr.bf16.mxu0 0
  %7443 = vmatpush1.bf16.msra.mxu0 %v5772
  %7444 = vmatprep.subr.bf16.mxu0 0
  %7445 = vmatpush1.bf16.msra.mxu0 %v5773
  %7446 = vmatprep.subr.bf16.mxu0 0
  %7447 = vmatpush1.bf16.msra.mxu0 %v5774
  %7448 = vmatprep.subr.bf16.mxu0 0
  %7449 = vmatpush1.bf16.msra.mxu0 %v5775
  %7450 = vmatprep.mubr.bf16.mxu0 %v3255
  %7451 = vmatmul.mubr.bf16.gmra.mrb[0].mxu0 %v3254
  %v7452 = vpop.f32.mrb[0].mxu0
  %v7453 = vadd.f32 %v7412, %v7452
  %v7454 = vpop.f32.mrb[0].mxu0
  %v7455 = vpop.f32.mrb[0].mxu0
  %v7456 = vadd.f32 %v7415, %v7455
  %v7457 = vpop.f32.mrb[0].mxu0
  %7458 = vdwg.mxu0
  %7459 = vmatprep.subr.bf16.mxu0 0
  %7460 = vmatpush1.bf16.msra.mxu0 %v5776
  %7461 = vmatprep.subr.bf16.mxu0 0
  %7462 = vmatpush1.bf16.msra.mxu0 %v5777
  %7463 = vmatprep.subr.bf16.mxu0 0
  %7464 = vmatpush1.bf16.msra.mxu0 %v5778
  %7465 = vmatprep.subr.bf16.mxu0 0
  %7466 = vmatpush1.bf16.msra.mxu0 %v5779
  %7467 = vmatprep.subr.bf16.mxu0 0
  %7468 = vmatpush1.bf16.msra.mxu0 %v5780
  %7469 = vmatprep.subr.bf16.mxu0 0
  %7470 = vmatpush1.bf16.msra.mxu0 %v5781
  %7471 = vmatprep.subr.bf16.mxu0 0
  %7472 = vmatpush1.bf16.msra.mxu0 %v5782
  %7473 = vmatprep.subr.bf16.mxu0 0
  %7474 = vmatpush1.bf16.msra.mxu0 %v5783
  %7475 = vmatprep.subr.bf16.mxu0 0
  %7476 = vmatpush1.bf16.msra.mxu0 %v5784
  %7477 = vmatprep.subr.bf16.mxu0 0
  %7478 = vmatpush1.bf16.msra.mxu0 %v5785
  %7479 = vmatprep.subr.bf16.mxu0 0
  %7480 = vmatpush1.bf16.msra.mxu0 %v5786
  %7481 = vmatprep.subr.bf16.mxu0 0
  %7482 = vmatpush1.bf16.msra.mxu0 %v5787
  %7483 = vmatprep.subr.bf16.mxu0 0
  %7484 = vmatpush1.bf16.msra.mxu0 %v5788
  %7485 = vmatprep.subr.bf16.mxu0 0
  %7486 = vmatpush1.bf16.msra.mxu0 %v5789
  %7487 = vmatprep.subr.bf16.mxu0 0
  %7488 = vmatpush1.bf16.msra.mxu0 %v5790
  %7489 = vmatprep.subr.bf16.mxu0 0
  %7490 = vmatpush1.bf16.msra.mxu0 %v5791
  %7491 = vmatprep.mubr.bf16.mxu0 %v3257
  %7492 = vmatmul.mubr.bf16.gmra.mrb[0].mxu0 %v3256
  %v7493 = vpop.f32.mrb[0].mxu0
  %v7494 = vadd.f32 %v7453, %v7493
  %v7495 = vpop.f32.mrb[0].mxu0
  %v7496 = vpop.f32.mrb[0].mxu0
  %v7497 = vadd.f32 %v7456, %v7496
  %v7498 = vpop.f32.mrb[0].mxu0
  %7499 = vdwg.mxu0
  %7500 = vmatprep.subr.bf16.mxu0 0
  %7501 = vmatpush1.bf16.msra.mxu0 %v5792
  %7502 = vmatprep.subr.bf16.mxu0 0
  %7503 = vmatpush1.bf16.msra.mxu0 %v5793
  %7504 = vmatprep.subr.bf16.mxu0 0
  %7505 = vmatpush1.bf16.msra.mxu0 %v5794
  %7506 = vmatprep.subr.bf16.mxu0 0
  %7507 = vmatpush1.bf16.msra.mxu0 %v5795
  %7508 = vmatprep.subr.bf16.mxu0 0
  %7509 = vmatpush1.bf16.msra.mxu0 %v5796
  %7510 = vmatprep.subr.bf16.mxu0 0
  %7511 = vmatpush1.bf16.msra.mxu0 %v5797
  %7512 = vmatprep.subr.bf16.mxu0 0
  %7513 = vmatpush1.bf16.msra.mxu0 %v5798
  %7514 = vmatprep.subr.bf16.mxu0 0
  %7515 = vmatpush1.bf16.msra.mxu0 %v5799
  %7516 = vmatprep.subr.bf16.mxu0 0
  %7517 = vmatpush1.bf16.msra.mxu0 %v5800
  %7518 = vmatprep.subr.bf16.mxu0 0
  %7519 = vmatpush1.bf16.msra.mxu0 %v5801
  %7520 = vmatprep.subr.bf16.mxu0 0
  %7521 = vmatpush1.bf16.msra.mxu0 %v5802
  %7522 = vmatprep.subr.bf16.mxu0 0
  %7523 = vmatpush1.bf16.msra.mxu0 %v5803
  %7524 = vmatprep.subr.bf16.mxu0 0
  %7525 = vmatpush1.bf16.msra.mxu0 %v5804
  %7526 = vmatprep.subr.bf16.mxu0 0
  %7527 = vmatpush1.bf16.msra.mxu0 %v5805
  %7528 = vmatprep.subr.bf16.mxu0 0
  %7529 = vmatpush1.bf16.msra.mxu0 %v5806
  %7530 = vmatprep.subr.bf16.mxu0 0
  %7531 = vmatpush1.bf16.msra.mxu0 %v5807
  %7532 = vmatprep.mubr.bf16.mxu0 %v3259
  %7533 = vmatmul.mubr.bf16.gmra.mrb[0].mxu0 %v3258
  %v7534 = vpop.f32.mrb[0].mxu0
  %v7535 = vadd.f32 %v7494, %v7534
  %v7536 = vpop.f32.mrb[0].mxu0
  %v7537 = vpop.f32.mrb[0].mxu0
  %v7538 = vadd.f32 %v7497, %v7537
  %v7539 = vpop.f32.mrb[0].mxu0
  %7540 = vdwg.mxu0
  %7541 = vmatprep.subr.bf16.mxu0 0
  %7542 = vmatpush1.bf16.msra.mxu0 %v5808
  %7543 = vmatprep.subr.bf16.mxu0 0
  %7544 = vmatpush1.bf16.msra.mxu0 %v5809
  %7545 = vmatprep.subr.bf16.mxu0 0
  %7546 = vmatpush1.bf16.msra.mxu0 %v5810
  %7547 = vmatprep.subr.bf16.mxu0 0
  %7548 = vmatpush1.bf16.msra.mxu0 %v5811
  %7549 = vmatprep.subr.bf16.mxu0 0
  %7550 = vmatpush1.bf16.msra.mxu0 %v5812
  %7551 = vmatprep.subr.bf16.mxu0 0
  %7552 = vmatpush1.bf16.msra.mxu0 %v5813
  %7553 = vmatprep.subr.bf16.mxu0 0
  %7554 = vmatpush1.bf16.msra.mxu0 %v5814
  %7555 = vmatprep.subr.bf16.mxu0 0
  %7556 = vmatpush1.bf16.msra.mxu0 %v5815
  %7557 = vmatprep.subr.bf16.mxu0 0
  %7558 = vmatpush1.bf16.msra.mxu0 %v5816
  %7559 = vmatprep.subr.bf16.mxu0 0
  %7560 = vmatpush1.bf16.msra.mxu0 %v5817
  %7561 = vmatprep.subr.bf16.mxu0 0
  %7562 = vmatpush1.bf16.msra.mxu0 %v5818
  %7563 = vmatprep.subr.bf16.mxu0 0
  %7564 = vmatpush1.bf16.msra.mxu0 %v5819
  %7565 = vmatprep.subr.bf16.mxu0 0
  %7566 = vmatpush1.bf16.msra.mxu0 %v5820
  %7567 = vmatprep.subr.bf16.mxu0 0
  %7568 = vmatpush1.bf16.msra.mxu0 %v5821
  %7569 = vmatprep.subr.bf16.mxu0 0
  %7570 = vmatpush1.bf16.msra.mxu0 %v5822
  %7571 = vmatprep.subr.bf16.mxu0 0
  %7572 = vmatpush1.bf16.msra.mxu0 %v5823
  %7573 = vmatprep.mubr.bf16.mxu0 %v3261
  %7574 = vmatmul.mubr.bf16.gmra.mrb[0].mxu0 %v3260
  %v7575 = vpop.f32.mrb[0].mxu0
  %v7576 = vadd.f32 %v7535, %v7575
  %v7577 = vpop.f32.mrb[0].mxu0
  %v7578 = vpop.f32.mrb[0].mxu0
  %v7579 = vadd.f32 %v7538, %v7578
  %v7580 = vpop.f32.mrb[0].mxu0
  %7581 = vdwg.mxu0
  %7582 = vmatprep.subr.bf16.mxu0 0
  %7583 = vmatpush1.bf16.msra.mxu0 %v5824
  %7584 = vmatprep.subr.bf16.mxu0 0
  %7585 = vmatpush1.bf16.msra.mxu0 %v5825
  %7586 = vmatprep.subr.bf16.mxu0 0
  %7587 = vmatpush1.bf16.msra.mxu0 %v5826
  %7588 = vmatprep.subr.bf16.mxu0 0
  %7589 = vmatpush1.bf16.msra.mxu0 %v5827
  %7590 = vmatprep.subr.bf16.mxu0 0
  %7591 = vmatpush1.bf16.msra.mxu0 %v5828
  %7592 = vmatprep.subr.bf16.mxu0 0
  %7593 = vmatpush1.bf16.msra.mxu0 %v5829
  %7594 = vmatprep.subr.bf16.mxu0 0
  %7595 = vmatpush1.bf16.msra.mxu0 %v5830
  %7596 = vmatprep.subr.bf16.mxu0 0
  %7597 = vmatpush1.bf16.msra.mxu0 %v5831
  %7598 = vmatprep.subr.bf16.mxu0 0
  %7599 = vmatpush1.bf16.msra.mxu0 %v5832
  %7600 = vmatprep.subr.bf16.mxu0 0
  %7601 = vmatpush1.bf16.msra.mxu0 %v5833
  %7602 = vmatprep.subr.bf16.mxu0 0
  %7603 = vmatpush1.bf16.msra.mxu0 %v5834
  %7604 = vmatprep.subr.bf16.mxu0 0
  %7605 = vmatpush1.bf16.msra.mxu0 %v5835
  %7606 = vmatprep.subr.bf16.mxu0 0
  %7607 = vmatpush1.bf16.msra.mxu0 %v5836
  %7608 = vmatprep.subr.bf16.mxu0 0
  %7609 = vmatpush1.bf16.msra.mxu0 %v5837
  %7610 = vmatprep.subr.bf16.mxu0 0
  %7611 = vmatpush1.bf16.msra.mxu0 %v5838
  %7612 = vmatprep.subr.bf16.mxu0 0
  %7613 = vmatpush1.bf16.msra.mxu0 %v5839
  %7614 = vmatprep.mubr.bf16.mxu0 %v3263
  %7615 = vmatmul.mubr.bf16.gmra.mrb[0].mxu0 %v3262
  %v7616 = vpop.f32.mrb[0].mxu0
  %v7617 = vadd.f32 %v7576, %v7616
  %v7618 = vpop.f32.mrb[0].mxu0
  %v7619 = vpop.f32.mrb[0].mxu0
  %v7620 = vadd.f32 %v7579, %v7619
  %v7621 = vpop.f32.mrb[0].mxu0
  %7622 = vdwg.mxu0
  %7623 = vmatprep.subr.bf16.mxu0 0
  %7624 = vmatpush1.bf16.msra.mxu0 %v5840
  %7625 = vmatprep.subr.bf16.mxu0 0
  %7626 = vmatpush1.bf16.msra.mxu0 %v5841
  %7627 = vmatprep.subr.bf16.mxu0 0
  %7628 = vmatpush1.bf16.msra.mxu0 %v5842
  %7629 = vmatprep.subr.bf16.mxu0 0
  %7630 = vmatpush1.bf16.msra.mxu0 %v5843
  %7631 = vmatprep.subr.bf16.mxu0 0
  %7632 = vmatpush1.bf16.msra.mxu0 %v5844
  %7633 = vmatprep.subr.bf16.mxu0 0
  %7634 = vmatpush1.bf16.msra.mxu0 %v5845
  %7635 = vmatprep.subr.bf16.mxu0 0
  %7636 = vmatpush1.bf16.msra.mxu0 %v5846
  %7637 = vmatprep.subr.bf16.mxu0 0
  %7638 = vmatpush1.bf16.msra.mxu0 %v5847
  %7639 = vmatprep.subr.bf16.mxu0 0
  %7640 = vmatpush1.bf16.msra.mxu0 0
  %7641 = vmatprep.subr.bf16.mxu0 0
  %7642 = vmatpush1.bf16.msra.mxu0 0
  %7643 = vmatprep.subr.bf16.mxu0 0
  %7644 = vmatpush1.bf16.msra.mxu0 0
  %7645 = vmatprep.subr.bf16.mxu0 0
  %7646 = vmatpush1.bf16.msra.mxu0 0
  %7647 = vmatprep.subr.bf16.mxu0 0
  %7648 = vmatpush1.bf16.msra.mxu0 0
  %7649 = vmatprep.subr.bf16.mxu0 0
  %7650 = vmatpush1.bf16.msra.mxu0 0
  %7651 = vmatprep.subr.bf16.mxu0 0
  %7652 = vmatpush1.bf16.msra.mxu0 0
  %7653 = vmatprep.subr.bf16.mxu0 0
  %7654 = vmatpush1.bf16.msra.mxu0 0
  %7655 = vmatprep.mubr.bf16.mxu0 0
  %7656 = vmatmul.mubr.bf16.gmra.mrb[0].mxu0 %v3264
  %v7657 = vpop.f32.mrb[0].mxu0
  %v7658 = vadd.f32 %v7617, %v7657
  %v7659 = vpop.f32.mrb[0].mxu0
  %v7660 = vpop.f32.mrb[0].mxu0
  %v7661 = vadd.f32 %v7620, %v7660
  %v7662 = vpop.f32.mrb[0].mxu0
  %7663 = vdwg.mxu0
  %7664 = vset.pattern.permute.xlu0 2
  %7665 = vperm.xlu0 %7664, %v174
  %v7666 = vpop.permute.xlu0 %7665
  %7668 = vset.pattern.permute.xlu0 2
  %7669 = vperm.xlu0 %7668, %v175
  %v7670 = vpop.permute.xlu0 %7669
  %v7672 = vmul.f32 %v7658, %v7666
  %v7673 = vmul.f32 %v7661, %v7670
  %v7674 = vld [vmem:[%s1] sm:$0xff]
  %v7675 = vld [vmem:[%s1 + $0x8] sm:$0xff]
  %v7676 = vld [vmem:[%s8] sm:$0xff]
  %v7677 = vld [vmem:[%s8 + $0x8] sm:$0xff]
  %v7678 = vld [vmem:[%s8 + $0x10] sm:$0xff]
  %v7679 = vld [vmem:[%s8 + $0x18] sm:$0xff]
  %v7680 = vld [vmem:[%s8 + $0x20] sm:$0xff]
  %v7681 = vld [vmem:[%s8 + $0x28] sm:$0xff]
  %v7682 = vld [vmem:[%s8 + $0x30] sm:$0xff]
  %v7683 = vld [vmem:[%s8 + $0x38] sm:$0xff]
  %vm7684 = vcmask 523264
  %v7686 = vsel %vm7684, %v7674, 0
  %v7689 = vsel %vm7684, %v7675, 0
  %7691 = vmatprep.subr.mxu0 0.0
  %7692 = vmatpush1.msra.mxu0 %v7676
  %7693 = vmatprep.subr.mxu0 0.0
  %7694 = vmatpush1.msra.mxu0 %v7677
  %7695 = vmatprep.subr.mxu0 0.0
  %7696 = vmatpush1.msra.mxu0 %v7678
  %7697 = vmatprep.subr.mxu0 0.0
  %7698 = vmatpush1.msra.mxu0 %v7679
  %7699 = vmatprep.subr.mxu0 0.0
  %7700 = vmatpush1.msra.mxu0 %v7680
  %7701 = vmatprep.subr.mxu0 0.0
  %7702 = vmatpush1.msra.mxu0 %v7681
  %7703 = vmatprep.subr.mxu0 0.0
  %7704 = vmatpush1.msra.mxu0 %v7682
  %7705 = vmatprep.subr.mxu0 0.0
  %7706 = vmatpush1.msra.mxu0 %v7683
  %7707 = vmatprep.subr.mxu0 0.0
  %7708 = vmatpush1.msra.mxu0 0.0
  %7709 = vmatprep.subr.mxu0 0.0
  %7710 = vmatpush1.msra.mxu0 0.0
  %7711 = vmatprep.subr.mxu0 0.0
  %7712 = vmatpush1.msra.mxu0 0.0
  %7713 = vmatprep.subr.mxu0 0.0
  %7714 = vmatpush1.msra.mxu0 0.0
  %7715 = vmatprep.subr.mxu0 0.0
  %7716 = vmatpush1.msra.mxu0 0.0
  %7717 = vmatprep.subr.mxu0 0.0
  %7718 = vmatpush1.msra.mxu0 0.0
  %7719 = vmatprep.subr.mxu0 0.0
  %7720 = vmatpush1.msra.mxu0 0.0
  %7721 = vmatprep.subr.mxu0 0.0
  %7722 = vmatpush1.msra.mxu0 0.0
  %7723 = vmatprep.subr.mxu0 0.0
  %7724 = vmatpush1.msra.mxu0 0.0
  %7725 = vmatprep.subr.mxu0 0.0
  %7726 = vmatpush1.msra.mxu0 0.0
  %7727 = vmatprep.subr.mxu0 0.0
  %7728 = vmatpush1.msra.mxu0 0.0
  %7729 = vmatprep.subr.mxu0 0.0
  %7730 = vmatpush1.msra.mxu0 0.0
  %7731 = vmatprep.subr.mxu0 0.0
  %7732 = vmatpush1.msra.mxu0 0.0
  %7733 = vmatprep.subr.mxu0 0.0
  %7734 = vmatpush1.msra.mxu0 0.0
  %7735 = vmatprep.subr.mxu0 0.0
  %7736 = vmatpush1.msra.mxu0 0.0
  %7737 = vmatprep.subr.mxu0 0.0
  %7738 = vmatpush1.msra.mxu0 0.0
  %7739 = vmatprep.subr.mxu0 0.0
  %7740 = vmatpush1.msra.mxu0 0.0
  %7741 = vmatprep.subr.mxu0 0.0
  %7742 = vmatpush1.msra.mxu0 0.0
  %7743 = vmatprep.subr.mxu0 0.0
  %7744 = vmatpush1.msra.mxu0 0.0
  %7745 = vmatprep.subr.mxu0 0.0
  %7746 = vmatpush1.msra.mxu0 0.0
  %7747 = vmatprep.subr.mxu0 0.0
  %7748 = vmatpush1.msra.mxu0 0.0
  %7749 = vmatprep.subr.mxu0 0.0
  %7750 = vmatpush1.msra.mxu0 0.0
  %7751 = vmatprep.subr.mxu0 0.0
  %7752 = vmatpush1.msra.mxu0 0.0
  %7753 = vmatprep.subr.mxu0 0.0
  %7754 = vmatpush1.msra.mxu0 0.0
  %7755 = vmatprep.mubr.f32.mxu0 0.0
  %7756 = vmatmul.mubr.f32.gmra.mrb[0].mxu0 %v7686
  %v7757 = vpop.f32.mrb[0].mxu0
  %v7758 = vadd.f32 %v299, %v7757
  %v7759 = vpop.f32.mrb[0].mxu0
  %7760 = vmatprep.mubr.f32.mxu0 0.0
  %7761 = vmatmul.mubr.f32.gmra.mrb[0].mxu0 %v7689
  %v7762 = vpop.f32.mrb[0].mxu0
  %v7763 = vadd.f32 %v300, %v7762
  %v7764 = vpop.f32.mrb[0].mxu0
  %7765 = vdwg.mxu0
  %v7766 = vadd.f32 %v7758, %v1938
  %v7767 = vadd.f32 %v7763, %v1939
  %v7768 = vadd.f32 %v7766, %v7672
  %v7769 = vadd.f32 %v7767, %v7673
  %v7770 = vld [vmem:[%s9] sm:$0x1]
  %v7772 = vlaneseq
  %v7773 = vshrl.u32 %v7772, 7
  %v7774 = vsub.s32 0, %v7773
  %v7775 = vrot.slane %v7770, %v7774
  %v7777 = vadd.f32 %v7768, %v7775
  %v7778 = vadd.f32 %v7769, %v7775
  %v7779 = vmul.f32 %v7777, 0.12
  %v7780 = vmul.f32 %v7778, 0.12
  %v7781 = vld [vmem:[%s13] sm:$0x1]
  %v7782 = vmul.f32 %v7781, 0.12
  %v7784 = vlaneseq
  %v7785 = vshrl.u32 %v7784, 7
  %v7786 = vsub.s32 0, %v7785
  %v7787 = vrot.slane %v7782, %v7786
  %v7789 = vmul.f32 %v172, %v7787
  %v7790 = vmul.f32 %v173, %v7787
  %v7791 = vmul.f32 %v7779, %v7787
  %v7792 = vmul.f32 %v7780, %v7787
  %v7793 = vld [vmem:[%s14] sm:$0xf]
  %v7794 = vlaneseq
  %v7795 = vshrl.u32 %v7794, 7
  %v7796 = vsub.s32 0, %v7795
  %v7797 = vrot.slane %v7793, %v7796
  %v7798 = vmul.f32 %v7789, %v7797
  %v7799 = vmul.f32 %v7790, %v7797
  %v7800 = vsel %vm7684, %v7798, 0.0
  %7801 = vadd.xlane.f32.xlu0 %v7800
  %v7802 = vpop.xlane.xlu0 %7801
  %v7803 = vsel %vm7684, %v7799, 0.0
  %7804 = vadd.xlane.f32.xlu0 %v7803
  %v7805 = vpop.xlane.xlu0 %7804
  %v7806 = vlaneseq
  %v7807 = vshrl.u32 %v7806, 7
  %v7808 = vsub.s32 1, %v7807
  %v7809 = vrot.slane %v7793, %v7808
  %v7810 = vmul.f32 %v7789, %v7809
  %v7811 = vmul.f32 %v7790, %v7809
  %v7812 = vsel %vm7684, %v7810, 0.0
  %7813 = vadd.xlane.f32.xlu0 %v7812
  %v7814 = vpop.xlane.xlu0 %7813
  %v7815 = vsel %vm7684, %v7811, 0.0
  %7816 = vadd.xlane.f32.xlu0 %v7815
  %v7817 = vpop.xlane.xlu0 %7816
  %v7818 = vmul.f32 %v7791, %v7809
  %v7819 = vmul.f32 %v7792, %v7809
  %v7820 = vsel %vm7684, %v7818, 0.0
  %7821 = vadd.xlane.f32.xlu0 %v7820
  %v7822 = vpop.xlane.xlu0 %7821
  %v7823 = vsel %vm7684, %v7819, 0.0
  %7824 = vadd.xlane.f32.xlu0 %v7823
  %v7825 = vpop.xlane.xlu0 %7824
  %v7826 = vlaneseq
  %v7827 = vshrl.u32 %v7826, 7
  %v7828 = vsub.s32 3, %v7827
  %v7829 = vrot.slane %v7793, %v7828
  %v7830 = vmul.f32 %v7791, %v7829
  %v7831 = vmul.f32 %v7792, %v7829
  %v7832 = vsel %vm7684, %v7830, 0.0
  %7833 = vadd.xlane.f32.xlu0 %v7832
  %v7834 = vpop.xlane.xlu0 %7833
  %v7835 = vsel %vm7684, %v7831, 0.0
  %7836 = vadd.xlane.f32.xlu0 %v7835
  %v7837 = vpop.xlane.xlu0 %7836
  %v7838 = vlaneseq
  %v7839 = vshrl.u32 %v7838, 7
  %v7840 = vsub.s32 2, %v7839
  %v7841 = vrot.slane %v7793, %v7840
  %v7842 = vmul.f32 %v7791, %v7841
  %v7843 = vmul.f32 %v7792, %v7841
  %v7844 = vsel %vm7684, %v7842, 0.0
  %7845 = vadd.xlane.f32.xlu0 %v7844
  %v7846 = vpop.xlane.xlu0 %7845
  %v7847 = vsel %vm7684, %v7843, 0.0
  %7848 = vadd.xlane.f32.xlu0 %v7847
  %v7849 = vpop.xlane.xlu0 %7848
  %v7850 = vmul.f32 %v7789, %v7841
  %v7851 = vmul.f32 %v7790, %v7841
  %v7852 = vsel %vm7684, %v7850, 0.0
  %7853 = vadd.xlane.f32.xlu0 %v7852
  %v7854 = vpop.xlane.xlu0 %7853
  %v7855 = vsel %vm7684, %v7851, 0.0
  %7856 = vadd.xlane.f32.xlu0 %v7855
  %v7857 = vpop.xlane.xlu0 %7856
  %v7858 = vmul.f32 %v174, %v7802
  %v7859 = vmul.f32 %v175, %v7805
  %7861 = vset.pattern.permute.xlu0 3
  %7862 = vperm.xlu0 %7861, %v7858
  %v7863 = vpop.permute.xlu0 %7862
  %7866 = vset.pattern.permute.xlu0 3
  %7867 = vperm.xlu0 %7866, %v7859
  %v7868 = vpop.permute.xlu0 %7867
  %v7870 = vmul.f32 %v7863, %v172
  %v7871 = vmul.f32 %v7868, %v173
  %v7872 = vsel %vm7684, %v7870, 0.0
  %v7873 = vsel %vm7684, %v7871, 0.0
  %v7874 = vadd.f32 %v7872, %v7873
  %v7875 = vrot.slane %v7874, 4
  %v7876 = vadd.f32 %v7874, %v7875
  %v7877 = vrot.slane %v7876, 2
  %v7878 = vadd.f32 %v7876, %v7877
  %v7879 = vrot.slane %v7878, 1
  %v7880 = vadd.f32 %v7878, %v7879
  %v7881 = vmul.f32 %v174, %v7822
  %v7882 = vmul.f32 %v175, %v7825
  %7884 = vset.pattern.permute.xlu0 3
  %7885 = vperm.xlu0 %7884, %v7881
  %v7886 = vpop.permute.xlu0 %7885
  %7889 = vset.pattern.permute.xlu0 3
  %7890 = vperm.xlu0 %7889, %v7882
  %v7891 = vpop.permute.xlu0 %7890
  %v7893 = vmul.f32 %v7886, %v7779
  %v7894 = vmul.f32 %v7891, %v7780
  %v7895 = vsel %vm7684, %v7893, 0.0
  %v7896 = vsel %vm7684, %v7894, 0.0
  %v7897 = vadd.f32 %v7895, %v7896
  %v7898 = vrot.slane %v7897, 4
  %v7899 = vadd.f32 %v7897, %v7898
  %v7900 = vrot.slane %v7899, 2
  %v7901 = vadd.f32 %v7899, %v7900
  %v7902 = vrot.slane %v7901, 1
  %v7903 = vadd.f32 %v7901, %v7902
  %v7904 = vmul.f32 %v174, %v7834
  %v7905 = vmul.f32 %v175, %v7837
  %7907 = vset.pattern.permute.xlu0 3
  %7908 = vperm.xlu0 %7907, %v7904
  %v7909 = vpop.permute.xlu0 %7908
  %7912 = vset.pattern.permute.xlu0 3
  %7913 = vperm.xlu0 %7912, %v7905
  %v7914 = vpop.permute.xlu0 %7913
  %v7916 = vmul.f32 %v7909, %v7779
  %v7917 = vmul.f32 %v7914, %v7780
  %v7918 = vsel %vm7684, %v7916, 0.0
  %v7919 = vsel %vm7684, %v7917, 0.0
  %v7920 = vadd.f32 %v7918, %v7919
  %v7921 = vrot.slane %v7920, 4
  %v7922 = vadd.f32 %v7920, %v7921
  %v7923 = vrot.slane %v7922, 2
  %v7924 = vadd.f32 %v7922, %v7923
  %v7925 = vrot.slane %v7924, 1
  %v7926 = vadd.f32 %v7924, %v7925
  %v7927 = vmul.f32 %v174, %v7854
  %v7928 = vmul.f32 %v175, %v7857
  %7930 = vset.pattern.permute.xlu0 3
  %7931 = vperm.xlu0 %7930, %v7927
  %v7932 = vpop.permute.xlu0 %7931
  %7935 = vset.pattern.permute.xlu0 3
  %7936 = vperm.xlu0 %7935, %v7928
  %v7937 = vpop.permute.xlu0 %7936
  %v7939 = vmul.f32 %v7932, %v172
  %v7940 = vmul.f32 %v7937, %v173
  %v7941 = vsel %vm7684, %v7939, 0.0
  %v7942 = vsel %vm7684, %v7940, 0.0
  %v7943 = vadd.f32 %v7941, %v7942
  %v7944 = vrot.slane %v7943, 4
  %v7945 = vadd.f32 %v7943, %v7944
  %v7946 = vrot.slane %v7945, 2
  %v7947 = vadd.f32 %v7945, %v7946
  %v7948 = vrot.slane %v7947, 1
  %v7949 = vadd.f32 %v7947, %v7948
  %7952 = vrot.lane.b32.xlu0 %v7779, 64
  %v7953 = vpop.permute.xlu0 %7952
  %7954 = vrot.lane.b32.xlu0 %v7780, 64
  %v7955 = vpop.permute.xlu0 %7954
  %v7958 = vsel %vm7684, %v172, %v7953
  %v7959 = vsel %vm7684, %v173, %v7955
  %7960 = vst [vmem:[%s15] sm:$0xff] %v7958
  %7961 = vst [vmem:[%s15 + $0x8] sm:$0xff] %v7959
  %vm7962 = vcmask 7168
  %v7963 = vsel %vm7962, %v7802, %v7814
  %v7964 = vsel %vm7962, %v7805, %v7817
  %vm7965 = vcmask 15360
  %v7966 = vsel %vm7965, %v7963, %v7834
  %v7967 = vsel %vm7965, %v7964, %v7837
  %vm7968 = vcmask 23552
  %v7969 = vsel %vm7968, %v7966, %v7846
  %v7970 = vsel %vm7968, %v7967, %v7849
  %vm7971 = vcmask 31744
  %7972 = vst.msk [vmem:[%s16] sm:$0xff] %vm7971, %v7969
  %7973 = vst.msk [vmem:[%s16 + $0x8] sm:$0xff] %vm7971, %v7970
  %vm7974 = vcmask 1040384
  %v7975 = vsel %vm7974, %v7880, %v7903
  %vm7976 = vcmask 1041408
  %v7977 = vsel %vm7976, %v7975, %v7926
  %vm7978 = vcmask 1042432
  %v7979 = vsel %vm7978, %v7977, %v7949
  %vm7980 = vcmask 1043456
  %v7981 = vsel %vm7980, %v7979, 0.0
  %7982 = vst.msk [vmem:[%s17] sm:$0xff] %vm7684, %v7981
  // Predicated region
  $region62: #{gln_feat_forward.2} parent=0 // pred_check
    _
  $region63: #{gln_feat_forward.2} parent=0 // pred_check_branch
    %7984 = sbr.rel (0) target = $region65
  $region64: #{gln_feat_forward.2} parent=0 // pred_region
    _
  $region65: #{gln_feat_forward.2} parent=0 // pred_fallthru
    _
  // Predicated region
  $region66: #{gln_feat_forward.2} parent=0 // pred_check
    _
  $region67: #{gln_feat_forward.2} parent=0 // pred_check_branch
    %7986 = sbr.rel (0) target = $region69
  $region68: #{gln_feat_forward.2} parent=0 // pred_region
    _
  $region69: #{gln_feat_forward.2} parent=0 // pred_fallthru
    _
  // Predicated region
  $region70: #{gln_feat_forward.2} parent=0 // pred_check
    _
  $region71: #{gln_feat_forward.2} parent=0 // pred_check_branch
    %7988 = sbr.rel (0) target = $region73
  $region72: #{gln_feat_forward.2} parent=0 // pred_region
    _
  $region73: #{gln_feat_forward.2} parent=0 // pred_fallthru
    _
  // Predicated region
  $region74: #{gln_feat_forward.2} parent=0 // pred_check
    _
  $region75: #{gln_feat_forward.2} parent=0 // pred_check_branch
    %7990 = sbr.rel (0) target = $region77
  $region76: #{gln_feat_forward.2} parent=0 // pred_region
    _
  $region77: #{gln_feat_forward.2} parent=0 // pred_fallthru
    _
  // Predicated region
  $region78: #{gln_feat_forward.2} parent=0 // pred_check
    _
  $region79: #{gln_feat_forward.2} parent=0 // pred_check_branch
    %7992 = sbr.rel (0) target = $region81
  $region80: #{gln_feat_forward.2} parent=0 // pred_region
    _
  $region81: #{gln_feat_forward.2} parent=0 // pred_fallthru
    _
  // Predicated region
  $region82: #{gln_feat_forward.2} parent=0 // pred_check
    _
  $region83: #{gln_feat_forward.2} parent=0 // pred_check_branch
    %7994 = sbr.rel (0) target = $region85
  $region84: #{gln_feat_forward.2} parent=0 // pred_region
    _
  $region85: #{gln_feat_forward.2} parent=0 // pred_fallthru
    _

</llo_original>
